<compile_context>
chip_gen: v6e
topology: v6e:2x2x1
jax: 0.10.0
libtpu: 0.0.40
codegen_flags: <defaults>
</compile_context>

<pallas_src>
import math

import jax
import jax.numpy as jnp
from jax import lax
from jax.experimental import pallas as pl
from jax.experimental.pallas import tpu as pltpu

_LANES = 128


# ----------------------------------------------------------------------------
# Pallas kernel: one batch element per grid step, everything resident in VMEM.
# ----------------------------------------------------------------------------
def _make_decoder_kernel(H, W, Cin, Cout, NPAD):
    HW = H * W

    def kernel(x_ref,
               dw1_ref, b1a_ref, pw1_ref, b1_ref,
               dw2_ref, b2a_ref, pw2sc_ref, bres_ref, dcw_ref,
               o_ref,
               pad2, ypad):
        f32 = jnp.float32
        bf16 = jnp.bfloat16

        # x arrives pre-padded with a 1-pixel zero ring: (H+2, W+2, Cin)
        xw = x_ref.at[0]
        xc = xw[1:H + 1, 1:W + 1, :]                      # (H, W, Cin) centre

        # ---- SeparableConv2d #1: depthwise 3x3 (BN scale pre-folded) --------
        dw1 = dw1_ref[...]                                # (9, 1, Cin)
        a1 = xc * dw1[4]
        c1 = xw[0:H, 0:W, :] * dw1[0]
        a1 = a1 + xw[0:H, 1:W + 1, :] * dw1[1]
        c1 = c1 + xw[0:H, 2:W + 2, :] * dw1[2]
        a1 = a1 + xw[1:H + 1, 0:W, :] * dw1[3]
        c1 = c1 + xw[1:H + 1, 2:W + 2, :] * dw1[5]
        a1 = a1 + xw[2:H + 2, 0:W, :] * dw1[6]
        c1 = c1 + xw[2:H + 2, 1:W + 1, :] * dw1[7]
        a1 = a1 + xw[2:H + 2, 2:W + 2, :] * dw1[8]
        h = jnp.maximum(a1 + c1 + b1a_ref[...], 0.0)      # (H, W, Cin)

        # pointwise 1x1 (bn1 scale folded into columns) + bias + ReLU  (MXU)
        h = jnp.dot(h.reshape(HW, Cin).astype(bf16), pw1_ref[...],
                    preferred_element_type=f32)
        h = jnp.maximum(h + b1_ref[...], 0.0)             # (HW, Cout)
        h3 = h.reshape(H, W, Cout)

        # ---- SeparableConv2d #2: depthwise 3x3 (bn scale folded) ------------
        # halo buffer: thin border clears + interior store (known-good pattern)
        zr2 = jnp.zeros((1, W + 2, Cout), f32)
        zc2 = jnp.zeros((H + 2, 1, Cout), f32)
        pad2[0:1, :, :] = zr2
        pad2[H + 1:H + 2, :, :] = zr2
        pad2[:, 0:1, :] = zc2
        pad2[:, W + 1:W + 2, :] = zc2
        pad2[1:H + 1, 1:W + 1, :] = h3

        dw2 = dw2_ref[...]                                # (9, 1, Cout)
        a2 = h3 * dw2[4]
        c2 = pad2[0:H, 0:W, :] * dw2[0]
        a2 = a2 + pad2[0:H, 1:W + 1, :] * dw2[1]
        c2 = c2 + pad2[0:H, 2:W + 2, :] * dw2[2]
        a2 = a2 + pad2[1:H + 1, 0:W, :] * dw2[3]
        c2 = c2 + pad2[1:H + 1, 2:W + 2, :] * dw2[5]
        a2 = a2 + pad2[2:H + 2, 0:W, :] * dw2[6]
        c2 = c2 + pad2[2:H + 2, 1:W + 1, :] * dw2[7]
        a2 = a2 + pad2[2:H + 2, 2:W + 2, :] * dw2[8]
        g = jnp.maximum(a2 + c2 + b2a_ref[...], 0.0)      # (H, W, Cout)

        # ---- fused pointwise #2 + shortcut 1x1: single MXU matmul -----------
        lhs2 = jnp.concatenate(
            [g.reshape(HW, Cout).astype(bf16),
             xc.reshape(HW, Cin).astype(bf16)], axis=-1)  # (HW, Cout+Cin)
        y = jnp.dot(lhs2, pw2sc_ref[...], preferred_element_type=f32)
        y = jnp.maximum(y + bres_ref[...], 0.0).reshape(H, W, Cout)

        # ---- ConvTranspose2d(4, s=2, p=1): single fused im2col matmul -------
        # y goes once into a bf16 halo buffer; the 9 shifted taps are assembled
        # in-register (lane concat) right before the matmul — no scatter stores
        # and no (H, W, 9*Cout) scratch round-trip.
        yb = y.astype(bf16)
        zry = jnp.zeros((1, W + 2, Cout), bf16)
        zcy = jnp.zeros((H + 2, 1, Cout), bf16)
        ypad[0:1, :, :] = zry
        ypad[H + 1:H + 2, :, :] = zry
        ypad[:, 0:1, :] = zcy
        ypad[:, W + 1:W + 2, :] = zcy
        ypad[1:H + 1, 1:W + 1, :] = yb

        taps = [ypad[s // 3:s // 3 + H, s % 3:s % 3 + W, :].reshape(HW, Cout)
                for s in range(9)]
        lhs = jnp.concatenate(taps, axis=-1)              # (HW, 9*Cout) bf16

        # dcw columns are (ey, ex, c) parities zero-padded to NPAD lanes so the
        # output store is an unmasked full-128-lane store.
        o_ref[0] = jnp.dot(lhs, dcw_ref[...],             # (HW, NPAD) f32
                           preferred_element_type=f32)

    return kernel


# ----------------------------------------------------------------------------
# Fold BN affines into weights / biases and stack the deconv taps (wrapper).
# ----------------------------------------------------------------------------
def _fold_params(p, Cin, Cout):
    f32, bf16 = jnp.float32, jnp.bfloat16
    dw1 = (p["dw1_raw"].reshape(9, 1, Cin) * p["s1a"].reshape(1, 1, Cin)).astype(f32)
    dw2 = (p["dw2_raw"].reshape(9, 1, Cout) * p["s2a"].reshape(1, 1, Cout)).astype(f32)
    pw1 = (p["pw1"] * p["s1"]).astype(bf16)              # bn1 scale into columns
    # fused pw2 + shortcut RHS (rows: [Cout of pw2*bn2 ; Cin of scw*bn_sc])
    pw2sc = jnp.concatenate([p["pw2"] * p["s2"], p["scw"] * p["ssc"]],
                            axis=0).astype(bf16)         # (Cout+Cin, Cout)
    bres = (p["b2"] + p["bsc"]).astype(f32)              # merged residual bias

    # Stack ConvTranspose2d taps into one (9*Cout, NPAD) im2col RHS.
    # Row block s=(sy+1)*3+(sx+1) multiplies the tap y[h+sy, w+sx];
    # column block p=2*ey+ex is the output parity (oy=2h+ey, ox=2w+ex).
    # Columns beyond 4*Cout are zero padding for lane-dense output stores.
    npad = -(-(4 * Cout) // _LANES) * _LANES
    dcw = jnp.transpose(p["wt_raw"], (2, 3, 0, 1))       # (ky, kx, ci, co)
    taps = {0: ((1, 0), (3, -1)), 1: ((0, 1), (2, 0))}   # ey/ex -> (k, shift)
    rhs = jnp.zeros((9 * Cout, npad), f32)
    for ey in range(2):
        for ex in range(2):
            col = (2 * ey + ex) * Cout
            for (ky, sy) in taps[ey]:
                for (kx, sx) in taps[ex]:
                    row = ((sy + 1) * 3 + (sx + 1)) * Cout
                    rhs = rhs.at[row:row + Cout, col:col + Cout].set(dcw[ky, kx])

    return dict(dw1=dw1, b1a=p["b1a"], pw1=pw1, b1=p["b1"],
                dw2=dw2, b2a=p["b2a"], pw2sc=pw2sc, bres=bres,
                dcw=rhs.astype(bf16))


# ----------------------------------------------------------------------------
# Wrapper (glue): layout transposes, pallas_call, parity re-interleave.
# ----------------------------------------------------------------------------
def decoder_block_pallas(x_nchw, params):
    N, Cin, H, W = x_nchw.shape
    Cout = params["pw1"].shape[1]
    x = jnp.transpose(x_nchw, (0, 2, 3, 1)).astype(jnp.float32)    # NHWC
    # pre-apply the 1-pixel zero ring for depthwise conv #1 (removes the
    # in-kernel input halo buffer and its per-step fill / border clears)
    xp = jnp.pad(x, ((0, 0), (1, 1), (1, 1), (0, 0)))

    fp = _fold_params(params, Cin, Cout)
    order = ["dw1", "b1a", "pw1", "b1", "dw2", "b2a", "pw2sc", "bres", "dcw"]
    p_args = [fp[k] for k in order]
    npad = fp["dcw"].shape[1]

    def full_spec(shape):
        nd = len(shape)
        return pl.BlockSpec(shape, lambda n, nd=nd: (0,) * nd)

    kernel = _make_decoder_kernel(H, W, Cin, Cout, npad)
    out = pl.pallas_call(
        kernel,
        out_shape=jax.ShapeDtypeStruct((N, H * W, npad), jnp.float32),
        grid=(N,),
        in_specs=[pl.BlockSpec((1, H + 2, W + 2, Cin),
                               lambda n: (n, 0, 0, 0))] +
                 [full_spec(a.shape) for a in p_args],
        out_specs=pl.BlockSpec((1, H * W, npad), lambda n: (n, 0, 0)),
        scratch_shapes=[
            pltpu.VMEM((H + 2, W + 2, Cout), jnp.float32),
            pltpu.VMEM((H + 2, W + 2, Cout), jnp.bfloat16),
        ],
        compiler_params=pltpu.CompilerParams(
            dimension_semantics=("parallel",)),
    )(xp, *p_args)

    # kernel output columns are (ey, ex, c) parities (lane-padded to npad);
    # slice the real columns and interleave back to (2H, 2W)
    out = out[:, :, :4 * Cout]
    out = out.reshape(N, H, W, 2, 2, Cout)
    out = jnp.transpose(out, (0, 1, 3, 2, 4, 5)).reshape(N, 2 * H, 2 * W, Cout)
    return jnp.transpose(out, (0, 3, 1, 2))                        # NCHW


# ----------------------------------------------------------------------------
# Deterministic parameter construction (synthetic, no checkpoint load).
# ----------------------------------------------------------------------------
def init_params(key, Cin, Cout):
    ks = jax.random.split(key, 11)

    def u(k, shape, fan_in):
        b = 1.0 / math.sqrt(fan_in)
        return jax.random.uniform(k, shape, jnp.float32, -b, b)

    def bn(k, C):
        k1, k2, k3, k4 = jax.random.split(k, 4)
        gamma = jax.random.uniform(k1, (C,), jnp.float32, 0.8, 1.2)
        beta = 0.1 * jax.random.normal(k2, (C,), jnp.float32)
        mean = 0.1 * jax.random.normal(k3, (C,), jnp.float32)
        var = jax.random.uniform(k4, (C,), jnp.float32, 0.5, 1.5)
        scale = gamma * lax.rsqrt(var + 1e-5)
        bias = beta - mean * scale
        return scale.reshape(1, C), bias.reshape(1, C)

    dw1 = u(ks[0], (3, 3, Cin), 9)                 # depthwise 3x3 (Cin groups)
    pw1 = u(ks[1], (Cin, Cout), Cin)               # pointwise 1x1
    dw2 = u(ks[2], (3, 3, Cout), 9)
    pw2 = u(ks[3], (Cout, Cout), Cout)
    scw = u(ks[4], (Cin, Cout), Cin)               # shortcut 1x1
    wt = u(ks[5], (Cout, Cout, 4, 4), Cout * 16)   # ConvTranspose2d (ci,co,kh,kw)
    s1a, b1a = bn(ks[6], Cin)                      # BN inside SeparableConv2d #1
    s1, b1 = bn(ks[7], Cout)                       # bn1
    s2a, b2a = bn(ks[8], Cout)                     # BN inside SeparableConv2d #2
    s2, b2 = bn(ks[9], Cout)                       # bn2
    ssc, bsc = bn(ks[10], Cout)                    # shortcut BN

    return dict(dw1_raw=dw1, s1a=s1a, b1a=b1a, pw1=pw1, s1=s1, b1=b1,
                dw2_raw=dw2, s2a=s2a, b2a=b2a, pw2=pw2, s2=s2, b2=b2,
                scw=scw, ssc=ssc, bsc=bsc, wt_raw=wt)


# ----------------------------------------------------------------------------
# Pure-JAX reference (lax convs) used only to verify the kernel.
# ----------------------------------------------------------------------------
def decoder_block_reference(x_nchw, p):
    x = jnp.transpose(x_nchw, (0, 2, 3, 1)).astype(jnp.float32)
    hi = lax.Precision.HIGHEST

    def dwconv(h, w):  # w: (3, 3, C) depthwise
        return lax.conv_general_dilated(
            h, w[:, :, None, :], (1, 1), ((1, 1), (1, 1)),
            dimension_numbers=("NHWC", "HWIO", "NHWC"),
            feature_group_count=h.shape[-1], precision=hi)

    h = jnp.maximum(dwconv(x, p["dw1_raw"]) * p["s1a"] + p["b1a"], 0.0)
    h = jnp.einsum("nhwc,cd->nhwd", h, p["pw1"], precision=hi)
    h = jnp.maximum(h * p["s1"] + p["b1"], 0.0)
    g = jnp.maximum(dwconv(h, p["dw2_raw"]) * p["s2a"] + p["b2a"], 0.0)
    g = jnp.einsum("nhwc,cd->nhwd", g, p["pw2"], precision=hi)
    g = g * p["s2"] + p["b2"]
    sc = jnp.einsum("nhwc,cd->nhwd", x, p["scw"], precision=hi) * p["ssc"] + p["bsc"]
    y = jnp.maximum(g + sc, 0.0)
    # ConvTranspose2d(k=4, s=2, p=1) == lhs-dilated conv with flipped kernel
    wf = jnp.transpose(jnp.flip(p["wt_raw"], (2, 3)), (2, 3, 0, 1))  # HWIO
    out = lax.conv_general_dilated(
        y, wf, (1, 1), ((2, 2), (2, 2)), lhs_dilation=(2, 2),
        dimension_numbers=("NHWC", "HWIO", "NHWC"), precision=hi)
    return jnp.transpose(out, (0, 3, 1, 2))


if __name__ == "__main__":
    N, Cin, Cout, H, W = 2, 8, 16, 16, 16
    key = jax.random.PRNGKey(0)
    kx, kp = jax.random.split(key)
    x = 0.5 * jax.random.normal(kx, (N, Cin, H, W), jnp.float32)
    params = init_params(kp, Cin, Cout)

    out = decoder_block_pallas(x, params)
    out = jax.block_until_ready(out)
    assert out.shape == (N, Cout, 2 * H, 2 * W), out.shape

    ref = decoder_block_reference(x, params)
    err = float(jnp.max(jnp.abs(out - ref)))
    scale = max(1.0, float(jnp.max(jnp.abs(ref))))
    assert err <= 5e-2 * scale, f"max abs err {err}"
    print("KERNEL_OK")
</pallas_src>

<mosaic_0001>
module attributes {stable_mosaic.version = 11 : i64} {
  func.func @kernel(%arg0: i32, %arg1: memref<1x18x18x8xf32, #tpu.memory_space<vmem>>, %arg2: memref<9x1x8xf32, #tpu.memory_space<vmem>>, %arg3: memref<1x8xf32, #tpu.memory_space<vmem>>, %arg4: memref<8x16xbf16, #tpu.memory_space<vmem>>, %arg5: memref<1x16xf32, #tpu.memory_space<vmem>>, %arg6: memref<9x1x16xf32, #tpu.memory_space<vmem>>, %arg7: memref<1x16xf32, #tpu.memory_space<vmem>>, %arg8: memref<24x16xbf16, #tpu.memory_space<vmem>>, %arg9: memref<1x16xf32, #tpu.memory_space<vmem>>, %arg10: memref<144x128xbf16, #tpu.memory_space<vmem>>, %arg11: memref<1x256x128xf32, #tpu.memory_space<vmem>>, %arg12: memref<18x18x16xf32, #tpu.memory_space<vmem>>, %arg13: memref<18x18x16xbf16, #tpu.memory_space<vmem>>) attributes {dimension_semantics = [#tpu.dimension_semantics<parallel>], iteration_bounds = array<i64: 2>, scalar_prefetch = 0 : i64, scratch_operands = 2 : i64, tpu.core_type = #tpu.core_type<tc>, window_params = [{transform_indices = @transform_0, window_bounds = array<i64: 1, 18, 18, 8>}, {pipeline_mode = #tpu.pipeline_mode<synchronous>, transform_indices = @transform_1, window_bounds = array<i64: 9, 1, 8>}, {pipeline_mode = #tpu.pipeline_mode<synchronous>, transform_indices = @transform_2, window_bounds = array<i64: 1, 8>}, {pipeline_mode = #tpu.pipeline_mode<synchronous>, transform_indices = @transform_3, window_bounds = array<i64: 8, 16>}, {pipeline_mode = #tpu.pipeline_mode<synchronous>, transform_indices = @transform_4, window_bounds = array<i64: 1, 16>}, {pipeline_mode = #tpu.pipeline_mode<synchronous>, transform_indices = @transform_5, window_bounds = array<i64: 9, 1, 16>}, {pipeline_mode = #tpu.pipeline_mode<synchronous>, transform_indices = @transform_6, window_bounds = array<i64: 1, 16>}, {pipeline_mode = #tpu.pipeline_mode<synchronous>, transform_indices = @transform_7, window_bounds = array<i64: 24, 16>}, {pipeline_mode = #tpu.pipeline_mode<synchronous>, transform_indices = @transform_8, window_bounds = array<i64: 1, 16>}, {pipeline_mode = #tpu.pipeline_mode<synchronous>, transform_indices = @transform_9, window_bounds = array<i64: 144, 128>}, {transform_indices = @transform_10, window_bounds = array<i64: 1, 256, 128>}]} {
    %c0_i32 = arith.constant 0 : i32
    %c0_i32_0 = arith.constant 0 : i32
    %c0_i32_1 = arith.constant 0 : i32
    %c0_i32_2 = arith.constant 0 : i32
    %0 = tpu.memref_slice %arg1[%c0_i32, %c0_i32_0, %c0_i32_1, %c0_i32_2] : memref<1x18x18x8xf32, #tpu.memory_space<vmem>> -> memref<1x18x18x8xf32, #tpu.memory_space<vmem>>
    %1 = tpu.memref_squeeze %0 : memref<1x18x18x8xf32, #tpu.memory_space<vmem>> -> memref<18x18x8xf32, #tpu.memory_space<vmem>>
    %c1 = arith.constant 1 : index
    %c1_3 = arith.constant 1 : index
    %c0 = arith.constant 0 : index
    %2 = vector.load %1[%c1, %c1_3, %c0] : memref<18x18x8xf32, #tpu.memory_space<vmem>>, vector<16x16x8xf32>
    %c0_4 = arith.constant 0 : index
    %c0_5 = arith.constant 0 : index
    %c0_6 = arith.constant 0 : index
    %3 = vector.load %arg2[%c0_4, %c0_5, %c0_6] : memref<9x1x8xf32, #tpu.memory_space<vmem>>, vector<9x1x8xf32>
    %4 = vector.extract_strided_slice %3 {offsets = [4, 0, 0], sizes = [1, 1, 8], strides = [1, 1, 1]} : vector<9x1x8xf32> to vector<1x1x8xf32>
    %5 = vector.shape_cast %4 : vector<1x1x8xf32> to vector<1x8xf32>
    %6 = vector.shape_cast %5 : vector<1x8xf32> to vector<1x1x8xf32>
    %7 = vector.broadcast %6 : vector<1x1x8xf32> to vector<16x16x8xf32>
    %8 = arith.mulf %2, %7 : vector<16x16x8xf32>
    %c0_i32_7 = arith.constant 0 : i32
    %c0_i32_8 = arith.constant 0 : i32
    %c0_i32_9 = arith.constant 0 : i32
    %c0_i32_10 = arith.constant 0 : i32
    %9 = tpu.memref_slice %arg1[%c0_i32_7, %c0_i32_8, %c0_i32_9, %c0_i32_10] : memref<1x18x18x8xf32, #tpu.memory_space<vmem>> -> memref<1x18x18x8xf32, #tpu.memory_space<vmem>>
    %10 = tpu.memref_squeeze %9 : memref<1x18x18x8xf32, #tpu.memory_space<vmem>> -> memref<18x18x8xf32, #tpu.memory_space<vmem>>
    %c0_11 = arith.constant 0 : index
    %c0_12 = arith.constant 0 : index
    %c0_13 = arith.constant 0 : index
    %11 = vector.load %10[%c0_11, %c0_12, %c0_13] : memref<18x18x8xf32, #tpu.memory_space<vmem>>, vector<16x16x8xf32>
    %12 = vector.extract_strided_slice %3 {offsets = [0, 0, 0], sizes = [1, 1, 8], strides = [1, 1, 1]} : vector<9x1x8xf32> to vector<1x1x8xf32>
    %13 = vector.shape_cast %12 : vector<1x1x8xf32> to vector<1x8xf32>
    %14 = vector.shape_cast %13 : vector<1x8xf32> to vector<1x1x8xf32>
    %15 = vector.broadcast %14 : vector<1x1x8xf32> to vector<16x16x8xf32>
    %16 = arith.mulf %11, %15 : vector<16x16x8xf32>
    %c0_i32_14 = arith.constant 0 : i32
    %c0_i32_15 = arith.constant 0 : i32
    %c0_i32_16 = arith.constant 0 : i32
    %c0_i32_17 = arith.constant 0 : i32
    %17 = tpu.memref_slice %arg1[%c0_i32_14, %c0_i32_15, %c0_i32_16, %c0_i32_17] : memref<1x18x18x8xf32, #tpu.memory_space<vmem>> -> memref<1x18x18x8xf32, #tpu.memory_space<vmem>>
    %18 = tpu.memref_squeeze %17 : memref<1x18x18x8xf32, #tpu.memory_space<vmem>> -> memref<18x18x8xf32, #tpu.memory_space<vmem>>
    %c0_18 = arith.constant 0 : index
    %c1_19 = arith.constant 1 : index
    %c0_20 = arith.constant 0 : index
    %19 = vector.load %18[%c0_18, %c1_19, %c0_20] : memref<18x18x8xf32, #tpu.memory_space<vmem>>, vector<16x16x8xf32>
    %20 = vector.extract_strided_slice %3 {offsets = [1, 0, 0], sizes = [1, 1, 8], strides = [1, 1, 1]} : vector<9x1x8xf32> to vector<1x1x8xf32>
    %21 = vector.shape_cast %20 : vector<1x1x8xf32> to vector<1x8xf32>
    %22 = vector.shape_cast %21 : vector<1x8xf32> to vector<1x1x8xf32>
    %23 = vector.broadcast %22 : vector<1x1x8xf32> to vector<16x16x8xf32>
    %24 = arith.mulf %19, %23 : vector<16x16x8xf32>
    %25 = arith.addf %8, %24 : vector<16x16x8xf32>
    %c0_i32_21 = arith.constant 0 : i32
    %c0_i32_22 = arith.constant 0 : i32
    %c0_i32_23 = arith.constant 0 : i32
    %c0_i32_24 = arith.constant 0 : i32
    %26 = tpu.memref_slice %arg1[%c0_i32_21, %c0_i32_22, %c0_i32_23, %c0_i32_24] : memref<1x18x18x8xf32, #tpu.memory_space<vmem>> -> memref<1x18x18x8xf32, #tpu.memory_space<vmem>>
    %27 = tpu.memref_squeeze %26 : memref<1x18x18x8xf32, #tpu.memory_space<vmem>> -> memref<18x18x8xf32, #tpu.memory_space<vmem>>
    %c0_25 = arith.constant 0 : index
    %c2 = arith.constant 2 : index
    %c0_26 = arith.constant 0 : index
    %28 = vector.load %27[%c0_25, %c2, %c0_26] : memref<18x18x8xf32, #tpu.memory_space<vmem>>, vector<16x16x8xf32>
    %29 = vector.extract_strided_slice %3 {offsets = [2, 0, 0], sizes = [1, 1, 8], strides = [1, 1, 1]} : vector<9x1x8xf32> to vector<1x1x8xf32>
    %30 = vector.shape_cast %29 : vector<1x1x8xf32> to vector<1x8xf32>
    %31 = vector.shape_cast %30 : vector<1x8xf32> to vector<1x1x8xf32>
    %32 = vector.broadcast %31 : vector<1x1x8xf32> to vector<16x16x8xf32>
    %33 = arith.mulf %28, %32 : vector<16x16x8xf32>
    %34 = arith.addf %16, %33 : vector<16x16x8xf32>
    %c0_i32_27 = arith.constant 0 : i32
    %c0_i32_28 = arith.constant 0 : i32
    %c0_i32_29 = arith.constant 0 : i32
    %c0_i32_30 = arith.constant 0 : i32
    %35 = tpu.memref_slice %arg1[%c0_i32_27, %c0_i32_28, %c0_i32_29, %c0_i32_30] : memref<1x18x18x8xf32, #tpu.memory_space<vmem>> -> memref<1x18x18x8xf32, #tpu.memory_space<vmem>>
    %36 = tpu.memref_squeeze %35 : memref<1x18x18x8xf32, #tpu.memory_space<vmem>> -> memref<18x18x8xf32, #tpu.memory_space<vmem>>
    %c1_31 = arith.constant 1 : index
    %c0_32 = arith.constant 0 : index
    %c0_33 = arith.constant 0 : index
    %37 = vector.load %36[%c1_31, %c0_32, %c0_33] : memref<18x18x8xf32, #tpu.memory_space<vmem>>, vector<16x16x8xf32>
    %38 = vector.extract_strided_slice %3 {offsets = [3, 0, 0], sizes = [1, 1, 8], strides = [1, 1, 1]} : vector<9x1x8xf32> to vector<1x1x8xf32>
    %39 = vector.shape_cast %38 : vector<1x1x8xf32> to vector<1x8xf32>
    %40 = vector.shape_cast %39 : vector<1x8xf32> to vector<1x1x8xf32>
    %41 = vector.broadcast %40 : vector<1x1x8xf32> to vector<16x16x8xf32>
    %42 = arith.mulf %37, %41 : vector<16x16x8xf32>
    %43 = arith.addf %25, %42 : vector<16x16x8xf32>
    %c0_i32_34 = arith.constant 0 : i32
    %c0_i32_35 = arith.constant 0 : i32
    %c0_i32_36 = arith.constant 0 : i32
    %c0_i32_37 = arith.constant 0 : i32
    %44 = tpu.memref_slice %arg1[%c0_i32_34, %c0_i32_35, %c0_i32_36, %c0_i32_37] : memref<1x18x18x8xf32, #tpu.memory_space<vmem>> -> memref<1x18x18x8xf32, #tpu.memory_space<vmem>>
    %45 = tpu.memref_squeeze %44 : memref<1x18x18x8xf32, #tpu.memory_space<vmem>> -> memref<18x18x8xf32, #tpu.memory_space<vmem>>
    %c1_38 = arith.constant 1 : index
    %c2_39 = arith.constant 2 : index
    %c0_40 = arith.constant 0 : index
    %46 = vector.load %45[%c1_38, %c2_39, %c0_40] : memref<18x18x8xf32, #tpu.memory_space<vmem>>, vector<16x16x8xf32>
    %47 = vector.extract_strided_slice %3 {offsets = [5, 0, 0], sizes = [1, 1, 8], strides = [1, 1, 1]} : vector<9x1x8xf32> to vector<1x1x8xf32>
    %48 = vector.shape_cast %47 : vector<1x1x8xf32> to vector<1x8xf32>
    %49 = vector.shape_cast %48 : vector<1x8xf32> to vector<1x1x8xf32>
    %50 = vector.broadcast %49 : vector<1x1x8xf32> to vector<16x16x8xf32>
    %51 = arith.mulf %46, %50 : vector<16x16x8xf32>
    %52 = arith.addf %34, %51 : vector<16x16x8xf32>
    %c0_i32_41 = arith.constant 0 : i32
    %c0_i32_42 = arith.constant 0 : i32
    %c0_i32_43 = arith.constant 0 : i32
    %c0_i32_44 = arith.constant 0 : i32
    %53 = tpu.memref_slice %arg1[%c0_i32_41, %c0_i32_42, %c0_i32_43, %c0_i32_44] : memref<1x18x18x8xf32, #tpu.memory_space<vmem>> -> memref<1x18x18x8xf32, #tpu.memory_space<vmem>>
    %54 = tpu.memref_squeeze %53 : memref<1x18x18x8xf32, #tpu.memory_space<vmem>> -> memref<18x18x8xf32, #tpu.memory_space<vmem>>
    %c2_45 = arith.constant 2 : index
    %c0_46 = arith.constant 0 : index
    %c0_47 = arith.constant 0 : index
    %55 = vector.load %54[%c2_45, %c0_46, %c0_47] : memref<18x18x8xf32, #tpu.memory_space<vmem>>, vector<16x16x8xf32>
    %56 = vector.extract_strided_slice %3 {offsets = [6, 0, 0], sizes = [1, 1, 8], strides = [1, 1, 1]} : vector<9x1x8xf32> to vector<1x1x8xf32>
    %57 = vector.shape_cast %56 : vector<1x1x8xf32> to vector<1x8xf32>
    %58 = vector.shape_cast %57 : vector<1x8xf32> to vector<1x1x8xf32>
    %59 = vector.broadcast %58 : vector<1x1x8xf32> to vector<16x16x8xf32>
    %60 = arith.mulf %55, %59 : vector<16x16x8xf32>
    %61 = arith.addf %43, %60 : vector<16x16x8xf32>
    %c0_i32_48 = arith.constant 0 : i32
    %c0_i32_49 = arith.constant 0 : i32
    %c0_i32_50 = arith.constant 0 : i32
    %c0_i32_51 = arith.constant 0 : i32
    %62 = tpu.memref_slice %arg1[%c0_i32_48, %c0_i32_49, %c0_i32_50, %c0_i32_51] : memref<1x18x18x8xf32, #tpu.memory_space<vmem>> -> memref<1x18x18x8xf32, #tpu.memory_space<vmem>>
    %63 = tpu.memref_squeeze %62 : memref<1x18x18x8xf32, #tpu.memory_space<vmem>> -> memref<18x18x8xf32, #tpu.memory_space<vmem>>
    %c2_52 = arith.constant 2 : index
    %c1_53 = arith.constant 1 : index
    %c0_54 = arith.constant 0 : index
    %64 = vector.load %63[%c2_52, %c1_53, %c0_54] : memref<18x18x8xf32, #tpu.memory_space<vmem>>, vector<16x16x8xf32>
    %65 = vector.extract_strided_slice %3 {offsets = [7, 0, 0], sizes = [1, 1, 8], strides = [1, 1, 1]} : vector<9x1x8xf32> to vector<1x1x8xf32>
    %66 = vector.shape_cast %65 : vector<1x1x8xf32> to vector<1x8xf32>
    %67 = vector.shape_cast %66 : vector<1x8xf32> to vector<1x1x8xf32>
    %68 = vector.broadcast %67 : vector<1x1x8xf32> to vector<16x16x8xf32>
    %69 = arith.mulf %64, %68 : vector<16x16x8xf32>
    %70 = arith.addf %52, %69 : vector<16x16x8xf32>
    %c0_i32_55 = arith.constant 0 : i32
    %c0_i32_56 = arith.constant 0 : i32
    %c0_i32_57 = arith.constant 0 : i32
    %c0_i32_58 = arith.constant 0 : i32
    %71 = tpu.memref_slice %arg1[%c0_i32_55, %c0_i32_56, %c0_i32_57, %c0_i32_58] : memref<1x18x18x8xf32, #tpu.memory_space<vmem>> -> memref<1x18x18x8xf32, #tpu.memory_space<vmem>>
    %72 = tpu.memref_squeeze %71 : memref<1x18x18x8xf32, #tpu.memory_space<vmem>> -> memref<18x18x8xf32, #tpu.memory_space<vmem>>
    %c2_59 = arith.constant 2 : index
    %c2_60 = arith.constant 2 : index
    %c0_61 = arith.constant 0 : index
    %73 = vector.load %72[%c2_59, %c2_60, %c0_61] : memref<18x18x8xf32, #tpu.memory_space<vmem>>, vector<16x16x8xf32>
    %74 = vector.extract_strided_slice %3 {offsets = [8, 0, 0], sizes = [1, 1, 8], strides = [1, 1, 1]} : vector<9x1x8xf32> to vector<1x1x8xf32>
    %75 = vector.shape_cast %74 : vector<1x1x8xf32> to vector<1x8xf32>
    %76 = vector.shape_cast %75 : vector<1x8xf32> to vector<1x1x8xf32>
    %77 = vector.broadcast %76 : vector<1x1x8xf32> to vector<16x16x8xf32>
    %78 = arith.mulf %73, %77 : vector<16x16x8xf32>
    %79 = arith.addf %61, %78 : vector<16x16x8xf32>
    %80 = arith.addf %79, %70 : vector<16x16x8xf32>
    %c0_62 = arith.constant 0 : index
    %c0_63 = arith.constant 0 : index
    %81 = vector.load %arg3[%c0_62, %c0_63] : memref<1x8xf32, #tpu.memory_space<vmem>>, vector<1x8xf32>
    %82 = vector.shape_cast %81 : vector<1x8xf32> to vector<1x1x8xf32>
    %83 = vector.broadcast %82 : vector<1x1x8xf32> to vector<16x16x8xf32>
    %84 = arith.addf %80, %83 : vector<16x16x8xf32>
    %cst = arith.constant 0.000000e+00 : f32
    %85 = vector.broadcast %cst : f32 to vector<16x16x8xf32>
    %86 = arith.maximumf %84, %85 : vector<16x16x8xf32>
    %87 = vector.shape_cast %86 : vector<16x16x8xf32> to vector<256x8xf32>
    %88 = arith.truncf %87 : vector<256x8xf32> to vector<256x8xbf16>
    %c0_64 = arith.constant 0 : index
    %c0_65 = arith.constant 0 : index
    %89 = vector.load %arg4[%c0_64, %c0_65] : memref<8x16xbf16, #tpu.memory_space<vmem>>, vector<8x16xbf16>
    %cst_66 = arith.constant dense<0.000000e+00> : vector<256x16xf32>
    %90 = tpu.matmul %88, %89, %cst_66 {dimension_numbers = #tpu.dot_dimension_numbers<[1], [0], [0], [1], [0, 0, 1, 1], [], []>} : vector<256x8xbf16>, vector<8x16xbf16>, vector<256x16xf32> -> vector<256x16xf32>
    %c0_67 = arith.constant 0 : index
    %c0_68 = arith.constant 0 : index
    %91 = vector.load %arg5[%c0_67, %c0_68] : memref<1x16xf32, #tpu.memory_space<vmem>>, vector<1x16xf32>
    %92 = vector.broadcast %91 : vector<1x16xf32> to vector<256x16xf32>
    %93 = arith.addf %90, %92 : vector<256x16xf32>
    %cst_69 = arith.constant 0.000000e+00 : f32
    %94 = vector.broadcast %cst_69 : f32 to vector<256x16xf32>
    %95 = arith.maximumf %93, %94 : vector<256x16xf32>
    %96 = vector.shape_cast %95 : vector<256x16xf32> to vector<16x16x16xf32>
    %cst_70 = arith.constant 0.000000e+00 : f32
    %97 = vector.broadcast %cst_70 : f32 to vector<1x18x16xf32>
    %cst_71 = arith.constant 0.000000e+00 : f32
    %98 = vector.broadcast %cst_71 : f32 to vector<18x1x16xf32>
    %c0_72 = arith.constant 0 : index
    %c0_73 = arith.constant 0 : index
    %c0_74 = arith.constant 0 : index
    %99 = vector.load %arg12[%c0_72, %c0_73, %c0_74] : memref<18x18x16xf32, #tpu.memory_space<vmem>>, vector<1x18x16xf32>
    tpu.vector_store %arg12[%c0_72, %c0_73, %c0_74], %97 {strides = array<i32>} : memref<18x18x16xf32, #tpu.memory_space<vmem>>, vector<1x18x16xf32>,
    %c17 = arith.constant 17 : index
    %c0_75 = arith.constant 0 : index
    %c0_76 = arith.constant 0 : index
    %100 = vector.load %arg12[%c17, %c0_75, %c0_76] : memref<18x18x16xf32, #tpu.memory_space<vmem>>, vector<1x18x16xf32>
    tpu.vector_store %arg12[%c17, %c0_75, %c0_76], %97 {strides = array<i32>} : memref<18x18x16xf32, #tpu.memory_space<vmem>>, vector<1x18x16xf32>,
    %c0_77 = arith.constant 0 : index
    %c0_78 = arith.constant 0 : index
    %c0_79 = arith.constant 0 : index
    %101 = vector.load %arg12[%c0_77, %c0_78, %c0_79] : memref<18x18x16xf32, #tpu.memory_space<vmem>>, vector<18x1x16xf32>
    tpu.vector_store %arg12[%c0_77, %c0_78, %c0_79], %98 {strides = array<i32>} : memref<18x18x16xf32, #tpu.memory_space<vmem>>, vector<18x1x16xf32>,
    %c0_80 = arith.constant 0 : index
    %c17_81 = arith.constant 17 : index
    %c0_82 = arith.constant 0 : index
    %102 = vector.load %arg12[%c0_80, %c17_81, %c0_82] : memref<18x18x16xf32, #tpu.memory_space<vmem>>, vector<18x1x16xf32>
    tpu.vector_store %arg12[%c0_80, %c17_81, %c0_82], %98 {strides = array<i32>} : memref<18x18x16xf32, #tpu.memory_space<vmem>>, vector<18x1x16xf32>,
    %c1_83 = arith.constant 1 : index
    %c1_84 = arith.constant 1 : index
    %c0_85 = arith.constant 0 : index
    %103 = vector.load %arg12[%c1_83, %c1_84, %c0_85] : memref<18x18x16xf32, #tpu.memory_space<vmem>>, vector<16x16x16xf32>
    tpu.vector_store %arg12[%c1_83, %c1_84, %c0_85], %96 {strides = array<i32>} : memref<18x18x16xf32, #tpu.memory_space<vmem>>, vector<16x16x16xf32>,
    %c0_86 = arith.constant 0 : index
    %c0_87 = arith.constant 0 : index
    %c0_88 = arith.constant 0 : index
    %104 = vector.load %arg6[%c0_86, %c0_87, %c0_88] : memref<9x1x16xf32, #tpu.memory_space<vmem>>, vector<9x1x16xf32>
    %105 = vector.extract_strided_slice %104 {offsets = [4, 0, 0], sizes = [1, 1, 16], strides = [1, 1, 1]} : vector<9x1x16xf32> to vector<1x1x16xf32>
    %106 = vector.shape_cast %105 : vector<1x1x16xf32> to vector<1x16xf32>
    %107 = vector.shape_cast %106 : vector<1x16xf32> to vector<1x1x16xf32>
    %108 = vector.broadcast %107 : vector<1x1x16xf32> to vector<16x16x16xf32>
    %109 = arith.mulf %96, %108 : vector<16x16x16xf32>
    %c0_89 = arith.constant 0 : index
    %c0_90 = arith.constant 0 : index
    %c0_91 = arith.constant 0 : index
    %110 = vector.load %arg12[%c0_89, %c0_90, %c0_91] : memref<18x18x16xf32, #tpu.memory_space<vmem>>, vector<16x16x16xf32>
    %111 = vector.extract_strided_slice %104 {offsets = [0, 0, 0], sizes = [1, 1, 16], strides = [1, 1, 1]} : vector<9x1x16xf32> to vector<1x1x16xf32>
    %112 = vector.shape_cast %111 : vector<1x1x16xf32> to vector<1x16xf32>
    %113 = vector.shape_cast %112 : vector<1x16xf32> to vector<1x1x16xf32>
    %114 = vector.broadcast %113 : vector<1x1x16xf32> to vector<16x16x16xf32>
    %115 = arith.mulf %110, %114 : vector<16x16x16xf32>
    %c0_92 = arith.constant 0 : index
    %c1_93 = arith.constant 1 : index
    %c0_94 = arith.constant 0 : index
    %116 = vector.load %arg12[%c0_92, %c1_93, %c0_94] : memref<18x18x16xf32, #tpu.memory_space<vmem>>, vector<16x16x16xf32>
    %117 = vector.extract_strided_slice %104 {offsets = [1, 0, 0], sizes = [1, 1, 16], strides = [1, 1, 1]} : vector<9x1x16xf32> to vector<1x1x16xf32>
    %118 = vector.shape_cast %117 : vector<1x1x16xf32> to vector<1x16xf32>
    %119 = vector.shape_cast %118 : vector<1x16xf32> to vector<1x1x16xf32>
    %120 = vector.broadcast %119 : vector<1x1x16xf32> to vector<16x16x16xf32>
    %121 = arith.mulf %116, %120 : vector<16x16x16xf32>
    %122 = arith.addf %109, %121 : vector<16x16x16xf32>
    %c0_95 = arith.constant 0 : index
    %c2_96 = arith.constant 2 : index
    %c0_97 = arith.constant 0 : index
    %123 = vector.load %arg12[%c0_95, %c2_96, %c0_97] : memref<18x18x16xf32, #tpu.memory_space<vmem>>, vector<16x16x16xf32>
    %124 = vector.extract_strided_slice %104 {offsets = [2, 0, 0], sizes = [1, 1, 16], strides = [1, 1, 1]} : vector<9x1x16xf32> to vector<1x1x16xf32>
    %125 = vector.shape_cast %124 : vector<1x1x16xf32> to vector<1x16xf32>
    %126 = vector.shape_cast %125 : vector<1x16xf32> to vector<1x1x16xf32>
    %127 = vector.broadcast %126 : vector<1x1x16xf32> to vector<16x16x16xf32>
    %128 = arith.mulf %123, %127 : vector<16x16x16xf32>
    %129 = arith.addf %115, %128 : vector<16x16x16xf32>
    %c1_98 = arith.constant 1 : index
    %c0_99 = arith.constant 0 : index
    %c0_100 = arith.constant 0 : index
    %130 = vector.load %arg12[%c1_98, %c0_99, %c0_100] : memref<18x18x16xf32, #tpu.memory_space<vmem>>, vector<16x16x16xf32>
    %131 = vector.extract_strided_slice %104 {offsets = [3, 0, 0], sizes = [1, 1, 16], strides = [1, 1, 1]} : vector<9x1x16xf32> to vector<1x1x16xf32>
    %132 = vector.shape_cast %131 : vector<1x1x16xf32> to vector<1x16xf32>
    %133 = vector.shape_cast %132 : vector<1x16xf32> to vector<1x1x16xf32>
    %134 = vector.broadcast %133 : vector<1x1x16xf32> to vector<16x16x16xf32>
    %135 = arith.mulf %130, %134 : vector<16x16x16xf32>
    %136 = arith.addf %122, %135 : vector<16x16x16xf32>
    %c1_101 = arith.constant 1 : index
    %c2_102 = arith.constant 2 : index
    %c0_103 = arith.constant 0 : index
    %137 = vector.load %arg12[%c1_101, %c2_102, %c0_103] : memref<18x18x16xf32, #tpu.memory_space<vmem>>, vector<16x16x16xf32>
    %138 = vector.extract_strided_slice %104 {offsets = [5, 0, 0], sizes = [1, 1, 16], strides = [1, 1, 1]} : vector<9x1x16xf32> to vector<1x1x16xf32>
    %139 = vector.shape_cast %138 : vector<1x1x16xf32> to vector<1x16xf32>
    %140 = vector.shape_cast %139 : vector<1x16xf32> to vector<1x1x16xf32>
    %141 = vector.broadcast %140 : vector<1x1x16xf32> to vector<16x16x16xf32>
    %142 = arith.mulf %137, %141 : vector<16x16x16xf32>
    %143 = arith.addf %129, %142 : vector<16x16x16xf32>
    %c2_104 = arith.constant 2 : index
    %c0_105 = arith.constant 0 : index
    %c0_106 = arith.constant 0 : index
    %144 = vector.load %arg12[%c2_104, %c0_105, %c0_106] : memref<18x18x16xf32, #tpu.memory_space<vmem>>, vector<16x16x16xf32>
    %145 = vector.extract_strided_slice %104 {offsets = [6, 0, 0], sizes = [1, 1, 16], strides = [1, 1, 1]} : vector<9x1x16xf32> to vector<1x1x16xf32>
    %146 = vector.shape_cast %145 : vector<1x1x16xf32> to vector<1x16xf32>
    %147 = vector.shape_cast %146 : vector<1x16xf32> to vector<1x1x16xf32>
    %148 = vector.broadcast %147 : vector<1x1x16xf32> to vector<16x16x16xf32>
    %149 = arith.mulf %144, %148 : vector<16x16x16xf32>
    %150 = arith.addf %136, %149 : vector<16x16x16xf32>
    %c2_107 = arith.constant 2 : index
    %c1_108 = arith.constant 1 : index
    %c0_109 = arith.constant 0 : index
    %151 = vector.load %arg12[%c2_107, %c1_108, %c0_109] : memref<18x18x16xf32, #tpu.memory_space<vmem>>, vector<16x16x16xf32>
    %152 = vector.extract_strided_slice %104 {offsets = [7, 0, 0], sizes = [1, 1, 16], strides = [1, 1, 1]} : vector<9x1x16xf32> to vector<1x1x16xf32>
    %153 = vector.shape_cast %152 : vector<1x1x16xf32> to vector<1x16xf32>
    %154 = vector.shape_cast %153 : vector<1x16xf32> to vector<1x1x16xf32>
    %155 = vector.broadcast %154 : vector<1x1x16xf32> to vector<16x16x16xf32>
    %156 = arith.mulf %151, %155 : vector<16x16x16xf32>
    %157 = arith.addf %143, %156 : vector<16x16x16xf32>
    %c2_110 = arith.constant 2 : index
    %c2_111 = arith.constant 2 : index
    %c0_112 = arith.constant 0 : index
    %158 = vector.load %arg12[%c2_110, %c2_111, %c0_112] : memref<18x18x16xf32, #tpu.memory_space<vmem>>, vector<16x16x16xf32>
    %159 = vector.extract_strided_slice %104 {offsets = [8, 0, 0], sizes = [1, 1, 16], strides = [1, 1, 1]} : vector<9x1x16xf32> to vector<1x1x16xf32>
    %160 = vector.shape_cast %159 : vector<1x1x16xf32> to vector<1x16xf32>
    %161 = vector.shape_cast %160 : vector<1x16xf32> to vector<1x1x16xf32>
    %162 = vector.broadcast %161 : vector<1x1x16xf32> to vector<16x16x16xf32>
    %163 = arith.mulf %158, %162 : vector<16x16x16xf32>
    %164 = arith.addf %150, %163 : vector<16x16x16xf32>
    %165 = arith.addf %164, %157 : vector<16x16x16xf32>
    %c0_113 = arith.constant 0 : index
    %c0_114 = arith.constant 0 : index
    %166 = vector.load %arg7[%c0_113, %c0_114] : memref<1x16xf32, #tpu.memory_space<vmem>>, vector<1x16xf32>
    %167 = vector.shape_cast %166 : vector<1x16xf32> to vector<1x1x16xf32>
    %168 = vector.broadcast %167 : vector<1x1x16xf32> to vector<16x16x16xf32>
    %169 = arith.addf %165, %168 : vector<16x16x16xf32>
    %cst_115 = arith.constant 0.000000e+00 : f32
    %170 = vector.broadcast %cst_115 : f32 to vector<16x16x16xf32>
    %171 = arith.maximumf %169, %170 : vector<16x16x16xf32>
    %172 = vector.shape_cast %171 : vector<16x16x16xf32> to vector<256x16xf32>
    %173 = arith.truncf %172 : vector<256x16xf32> to vector<256x16xbf16>
    %174 = vector.shape_cast %2 : vector<16x16x8xf32> to vector<256x8xf32>
    %175 = arith.truncf %174 : vector<256x8xf32> to vector<256x8xbf16>
    %176 = tpu.concatenate %173, %175 in 1 : vector<256x16xbf16>, vector<256x8xbf16> -> vector<256x24xbf16>
    %c0_116 = arith.constant 0 : index
    %c0_117 = arith.constant 0 : index
    %177 = vector.load %arg8[%c0_116, %c0_117] : memref<24x16xbf16, #tpu.memory_space<vmem>>, vector<24x16xbf16>
    %cst_118 = arith.constant dense<0.000000e+00> : vector<256x16xf32>
    %178 = tpu.matmul %176, %177, %cst_118 {dimension_numbers = #tpu.dot_dimension_numbers<[1], [0], [0], [1], [0, 0, 1, 1], [], []>} : vector<256x24xbf16>, vector<24x16xbf16>, vector<256x16xf32> -> vector<256x16xf32>
    %c0_119 = arith.constant 0 : index
    %c0_120 = arith.constant 0 : index
    %179 = vector.load %arg9[%c0_119, %c0_120] : memref<1x16xf32, #tpu.memory_space<vmem>>, vector<1x16xf32>
    %180 = vector.broadcast %179 : vector<1x16xf32> to vector<256x16xf32>
    %181 = arith.addf %178, %180 : vector<256x16xf32>
    %cst_121 = arith.constant 0.000000e+00 : f32
    %182 = vector.broadcast %cst_121 : f32 to vector<256x16xf32>
    %183 = arith.maximumf %181, %182 : vector<256x16xf32>
    %184 = vector.shape_cast %183 : vector<256x16xf32> to vector<16x16x16xf32>
    %185 = arith.truncf %184 : vector<16x16x16xf32> to vector<16x16x16xbf16>
    %cst_122 = arith.constant 0.000000e+00 : bf16
    %186 = vector.broadcast %cst_122 : bf16 to vector<1x18x16xbf16>
    %cst_123 = arith.constant 0.000000e+00 : bf16
    %187 = vector.broadcast %cst_123 : bf16 to vector<18x1x16xbf16>
    %c0_124 = arith.constant 0 : index
    %c0_125 = arith.constant 0 : index
    %c0_126 = arith.constant 0 : index
    %188 = vector.load %arg13[%c0_124, %c0_125, %c0_126] : memref<18x18x16xbf16, #tpu.memory_space<vmem>>, vector<1x18x16xbf16>
    tpu.vector_store %arg13[%c0_124, %c0_125, %c0_126], %186 {strides = array<i32>} : memref<18x18x16xbf16, #tpu.memory_space<vmem>>, vector<1x18x16xbf16>,
    %c17_127 = arith.constant 17 : index
    %c0_128 = arith.constant 0 : index
    %c0_129 = arith.constant 0 : index
    %189 = vector.load %arg13[%c17_127, %c0_128, %c0_129] : memref<18x18x16xbf16, #tpu.memory_space<vmem>>, vector<1x18x16xbf16>
    tpu.vector_store %arg13[%c17_127, %c0_128, %c0_129], %186 {strides = array<i32>} : memref<18x18x16xbf16, #tpu.memory_space<vmem>>, vector<1x18x16xbf16>,
    %c0_130 = arith.constant 0 : index
    %c0_131 = arith.constant 0 : index
    %c0_132 = arith.constant 0 : index
    %190 = vector.load %arg13[%c0_130, %c0_131, %c0_132] : memref<18x18x16xbf16, #tpu.memory_space<vmem>>, vector<18x1x16xbf16>
    tpu.vector_store %arg13[%c0_130, %c0_131, %c0_132], %187 {strides = array<i32>} : memref<18x18x16xbf16, #tpu.memory_space<vmem>>, vector<18x1x16xbf16>,
    %c0_133 = arith.constant 0 : index
    %c17_134 = arith.constant 17 : index
    %c0_135 = arith.constant 0 : index
    %191 = vector.load %arg13[%c0_133, %c17_134, %c0_135] : memref<18x18x16xbf16, #tpu.memory_space<vmem>>, vector<18x1x16xbf16>
    tpu.vector_store %arg13[%c0_133, %c17_134, %c0_135], %187 {strides = array<i32>} : memref<18x18x16xbf16, #tpu.memory_space<vmem>>, vector<18x1x16xbf16>,
    %c1_136 = arith.constant 1 : index
    %c1_137 = arith.constant 1 : index
    %c0_138 = arith.constant 0 : index
    %192 = vector.load %arg13[%c1_136, %c1_137, %c0_138] : memref<18x18x16xbf16, #tpu.memory_space<vmem>>, vector<16x16x16xbf16>
    tpu.vector_store %arg13[%c1_136, %c1_137, %c0_138], %185 {strides = array<i32>} : memref<18x18x16xbf16, #tpu.memory_space<vmem>>, vector<16x16x16xbf16>,
    %c0_139 = arith.constant 0 : index
    %c0_140 = arith.constant 0 : index
    %c0_141 = arith.constant 0 : index
    %193 = vector.load %arg13[%c0_139, %c0_140, %c0_141] : memref<18x18x16xbf16, #tpu.memory_space<vmem>>, vector<16x16x16xbf16>
    %194 = vector.shape_cast %193 : vector<16x16x16xbf16> to vector<256x16xbf16>
    %c0_142 = arith.constant 0 : index
    %c1_143 = arith.constant 1 : index
    %c0_144 = arith.constant 0 : index
    %195 = vector.load %arg13[%c0_142, %c1_143, %c0_144] : memref<18x18x16xbf16, #tpu.memory_space<vmem>>, vector<16x16x16xbf16>
    %196 = vector.shape_cast %195 : vector<16x16x16xbf16> to vector<256x16xbf16>
    %c0_145 = arith.constant 0 : index
    %c2_146 = arith.constant 2 : index
    %c0_147 = arith.constant 0 : index
    %197 = vector.load %arg13[%c0_145, %c2_146, %c0_147] : memref<18x18x16xbf16, #tpu.memory_space<vmem>>, vector<16x16x16xbf16>
    %198 = vector.shape_cast %197 : vector<16x16x16xbf16> to vector<256x16xbf16>
    %c1_148 = arith.constant 1 : index
    %c0_149 = arith.constant 0 : index
    %c0_150 = arith.constant 0 : index
    %199 = vector.load %arg13[%c1_148, %c0_149, %c0_150] : memref<18x18x16xbf16, #tpu.memory_space<vmem>>, vector<16x16x16xbf16>
    %200 = vector.shape_cast %199 : vector<16x16x16xbf16> to vector<256x16xbf16>
    %c1_151 = arith.constant 1 : index
    %c1_152 = arith.constant 1 : index
    %c0_153 = arith.constant 0 : index
    %201 = vector.load %arg13[%c1_151, %c1_152, %c0_153] : memref<18x18x16xbf16, #tpu.memory_space<vmem>>, vector<16x16x16xbf16>
    %202 = vector.shape_cast %201 : vector<16x16x16xbf16> to vector<256x16xbf16>
    %c1_154 = arith.constant 1 : index
    %c2_155 = arith.constant 2 : index
    %c0_156 = arith.constant 0 : index
    %203 = vector.load %arg13[%c1_154, %c2_155, %c0_156] : memref<18x18x16xbf16, #tpu.memory_space<vmem>>, vector<16x16x16xbf16>
    %204 = vector.shape_cast %203 : vector<16x16x16xbf16> to vector<256x16xbf16>
    %c2_157 = arith.constant 2 : index
    %c0_158 = arith.constant 0 : index
    %c0_159 = arith.constant 0 : index
    %205 = vector.load %arg13[%c2_157, %c0_158, %c0_159] : memref<18x18x16xbf16, #tpu.memory_space<vmem>>, vector<16x16x16xbf16>
    %206 = vector.shape_cast %205 : vector<16x16x16xbf16> to vector<256x16xbf16>
    %c2_160 = arith.constant 2 : index
    %c1_161 = arith.constant 1 : index
    %c0_162 = arith.constant 0 : index
    %207 = vector.load %arg13[%c2_160, %c1_161, %c0_162] : memref<18x18x16xbf16, #tpu.memory_space<vmem>>, vector<16x16x16xbf16>
    %208 = vector.shape_cast %207 : vector<16x16x16xbf16> to vector<256x16xbf16>
    %c2_163 = arith.constant 2 : index
    %c2_164 = arith.constant 2 : index
    %c0_165 = arith.constant 0 : index
    %209 = vector.load %arg13[%c2_163, %c2_164, %c0_165] : memref<18x18x16xbf16, #tpu.memory_space<vmem>>, vector<16x16x16xbf16>
    %210 = vector.shape_cast %209 : vector<16x16x16xbf16> to vector<256x16xbf16>
    %211 = tpu.concatenate %194, %196, %198, %200, %202, %204, %206, %208, %210 in 1 : vector<256x16xbf16>, vector<256x16xbf16>, vector<256x16xbf16>, vector<256x16xbf16>, vector<256x16xbf16>, vector<256x16xbf16>, vector<256x16xbf16>, vector<256x16xbf16>, vector<256x16xbf16> -> vector<256x144xbf16>
    %c0_166 = arith.constant 0 : index
    %c0_167 = arith.constant 0 : index
    %212 = vector.load %arg10[%c0_166, %c0_167] : memref<144x128xbf16, #tpu.memory_space<vmem>>, vector<144x128xbf16>
    %cst_168 = arith.constant dense<0.000000e+00> : vector<256x128xf32>
    %213 = tpu.matmul %211, %212, %cst_168 {dimension_numbers = #tpu.dot_dimension_numbers<[1], [0], [0], [1], [0, 0, 1, 1], [], []>} : vector<256x144xbf16>, vector<144x128xbf16>, vector<256x128xf32> -> vector<256x128xf32>
    %c0_169 = arith.constant 0 : index
    %c0_170 = arith.constant 0 : index
    %c0_171 = arith.constant 0 : index
    %214 = vector.load %arg11[%c0_169, %c0_170, %c0_171] : memref<1x256x128xf32, #tpu.memory_space<vmem>>, vector<1x256x128xf32>
    %215 = vector.shape_cast %214 : vector<1x256x128xf32> to vector<256x128xf32>
    %216 = vector.shape_cast %213 : vector<256x128xf32> to vector<1x256x128xf32>
    tpu.vector_store %arg11[%c0_169, %c0_170, %c0_171], %216 {strides = array<i32>} : memref<1x256x128xf32, #tpu.memory_space<vmem>>, vector<1x256x128xf32>,
    return
  }
  func.func @transform_0(%arg0: i32) -> (i32, i32, i32, i32) {
    %c0_i32 = arith.constant 0 : i32
    %c0_i32_0 = arith.constant 0 : i32
    %c0_i32_1 = arith.constant 0 : i32
    %c0_i32_2 = arith.constant 0 : i32
    return %arg0, %c0_i32, %c0_i32_0, %c0_i32_1 : i32, i32, i32, i32
  }
  func.func @transform_1(%arg0: i32) -> (i32, i32, i32) {
    %c0_i32 = arith.constant 0 : i32
    %c0_i32_0 = arith.constant 0 : i32
    %c0_i32_1 = arith.constant 0 : i32
    %c0_i32_2 = arith.constant 0 : i32
    return %c0_i32, %c0_i32_0, %c0_i32_1 : i32, i32, i32
  }
  func.func @transform_2(%arg0: i32) -> (i32, i32) {
    %c0_i32 = arith.constant 0 : i32
    %c0_i32_0 = arith.constant 0 : i32
    %c0_i32_1 = arith.constant 0 : i32
    return %c0_i32, %c0_i32_0 : i32, i32
  }
  func.func @transform_3(%arg0: i32) -> (i32, i32) {
    %c0_i32 = arith.constant 0 : i32
    %c0_i32_0 = arith.constant 0 : i32
    %c0_i32_1 = arith.constant 0 : i32
    return %c0_i32, %c0_i32_0 : i32, i32
  }
  func.func @transform_4(%arg0: i32) -> (i32, i32) {
    %c0_i32 = arith.constant 0 : i32
    %c0_i32_0 = arith.constant 0 : i32
    %c0_i32_1 = arith.constant 0 : i32
    return %c0_i32, %c0_i32_0 : i32, i32
  }
  func.func @transform_5(%arg0: i32) -> (i32, i32, i32) {
    %c0_i32 = arith.constant 0 : i32
    %c0_i32_0 = arith.constant 0 : i32
    %c0_i32_1 = arith.constant 0 : i32
    %c0_i32_2 = arith.constant 0 : i32
    return %c0_i32, %c0_i32_0, %c0_i32_1 : i32, i32, i32
  }
  func.func @transform_6(%arg0: i32) -> (i32, i32) {
    %c0_i32 = arith.constant 0 : i32
    %c0_i32_0 = arith.constant 0 : i32
    %c0_i32_1 = arith.constant 0 : i32
    return %c0_i32, %c0_i32_0 : i32, i32
  }
  func.func @transform_7(%arg0: i32) -> (i32, i32) {
    %c0_i32 = arith.constant 0 : i32
    %c0_i32_0 = arith.constant 0 : i32
    %c0_i32_1 = arith.constant 0 : i32
    return %c0_i32, %c0_i32_0 : i32, i32
  }
  func.func @transform_8(%arg0: i32) -> (i32, i32) {
    %c0_i32 = arith.constant 0 : i32
    %c0_i32_0 = arith.constant 0 : i32
    %c0_i32_1 = arith.constant 0 : i32
    return %c0_i32, %c0_i32_0 : i32, i32
  }
  func.func @transform_9(%arg0: i32) -> (i32, i32) {
    %c0_i32 = arith.constant 0 : i32
    %c0_i32_0 = arith.constant 0 : i32
    %c0_i32_1 = arith.constant 0 : i32
    return %c0_i32, %c0_i32_0 : i32, i32
  }
  func.func @transform_10(%arg0: i32) -> (i32, i32, i32) {
    %c0_i32 = arith.constant 0 : i32
    %c0_i32_0 = arith.constant 0 : i32
    %c0_i32_1 = arith.constant 0 : i32
    return %arg0, %c0_i32, %c0_i32_0 : i32, i32, i32
  }
}

</mosaic_0001>

<llo_original>
// kernel: tpu_custom_call.1
$region0: #{tpu_custom_call.1}
  #allocation0 [shape = 'u32[]', space=smem, size = 0x4, offset = 0x4, fixed_abs, tag = 'smem constant byte address 0x4 - core index']
  #allocation1 [shape = 'u32[144,128]{1,0:T(1,128)}', space=vmem, size = 0x12000, scoped, tag = 'internal scratch']
  #allocation2 [shape = 'f32[18,18,16]{2,1,0:T(8,128)}', space=vmem, size = 0x36000, scoped, tag = 'scratch operand']
  #allocation3 [shape = 'bf16[18,18,16]{2,1,0:T(8,128)(2,1)}', space=vmem, size = 0x1b000, scoped, tag = 'scratch operand']
  %s0 = inlined_call_operand.vmem [shape: f32[2,18,18,8], index: 0, kind: input, shape index: {}]
  %s1 = inlined_call_operand.vmem [shape: f32[9,1,8], index: 1, kind: input, shape index: {}]
  %s2 = inlined_call_operand.vmem [shape: f32[1,8], index: 2, kind: input, shape index: {}]
  %s3 = inlined_call_operand.vmem [shape: bf16[8,16], index: 3, kind: input, shape index: {}]
  %s4 = inlined_call_operand.vmem [shape: f32[1,16], index: 4, kind: input, shape index: {}]
  %s5 = inlined_call_operand.vmem [shape: f32[9,1,16], index: 5, kind: input, shape index: {}]
  %s6 = inlined_call_operand.vmem [shape: f32[1,16], index: 6, kind: input, shape index: {}]
  %s7 = inlined_call_operand.vmem [shape: bf16[24,16], index: 7, kind: input, shape index: {}]
  %s8 = inlined_call_operand.vmem [shape: f32[1,16], index: 8, kind: input, shape index: {}]
  %s9 = inlined_call_operand.vmem [shape: bf16[144,128], index: 9, kind: input, shape index: {}]
  %s10 = inlined_call_operand.hbm [shape: f32[2,256,128], index: 10, kind: output, shape index: {}]
  %s11 = sld [smem:[#allocation0]]
  $region73: #{tpu_custom_call.1} parent=0
    _
  %s13 = ssub.s32 1, %s11
  %s14 = scalar_select 0, %s13, %s11
  $region1: #{tpu_custom_call.1} parent=0
    #allocation4 [shape = 'u8[262144]{0}', space=vmem, size = 0x40000, scoped, tag = 'output window, operand 0']
    #allocation5 [shape = 's32[2]{0}', space=sflag, size = 0x8, scoped, tag = 'scoped memory for tpu_custom_call.1']
    %15 = vsyncpa [#allocation5], 0
    %s16 = scalar_lea.sflag [#allocation5], 1
    %17 = vsyncpa %s16, 0
    loop: start=0, step=1, limit=4
    $region2: #{tpu_custom_call.1} parent=1 // loop_pre_header
      _
    $region3: #{tpu_custom_call.1} parent=1 // loop_header
      %s19 = sphi 0, %s23
      %p20 = scmp.ge.s32.totalorder %s19, 4
      %s29 = sphi 0, %s31
      %s32 = sphi 0, %s29
      %s33 = sphi 0, %s32
      %s49 = sphi 0, %s33
      %s53 = sphi 0, %s53
      %s55 = sphi 0, %s53
      %s56 = sphi 0, %s55
      %s70 = sphi 0, %s56
      %s74 = sphi 0, %s74
      %s76 = sphi 0, %s74
      %s77 = sphi 0, %s76
      %s91 = sphi 0, %s77
      %s95 = sphi 0, %s95
      %s97 = sphi 0, %s95
      %s98 = sphi 0, %s97
      %s112 = sphi 0, %s98
      %s116 = sphi 0, %s116
      %s118 = sphi 0, %s116
      %s119 = sphi 0, %s118
      %s133 = sphi 0, %s119
      %s137 = sphi 0, %s137
      %s139 = sphi 0, %s137
      %s140 = sphi 0, %s139
      %s154 = sphi 0, %s140
      %s158 = sphi 0, %s158
      %s160 = sphi 0, %s158
      %s161 = sphi 0, %s160
      %s175 = sphi 0, %s161
      %s179 = sphi 0, %s179
      %s181 = sphi 0, %s179
      %s182 = sphi 0, %s181
      %s196 = sphi 0, %s182
      %s200 = sphi 0, %s200
      %s202 = sphi 0, %s200
      %s203 = sphi 0, %s202
      %s217 = sphi 0, %s203
      %s221 = sphi 0, %s221
      %s223 = sphi 0, %s221
      %s224 = sphi 0, %s223
      %s238 = sphi 0, %s224
      %s244 = sphi 0, %s246
      %s247 = sphi 0, %s244
      %s248 = sphi 0, %s247
      %s264 = sphi 0, %s248
    $region4: #{tpu_custom_call.1} parent=1 // loop_header_branch
      %22 = sbr.rel (%p20) target = $region8
    $region5: #{tpu_custom_call.1} parent=1 // loop_body
      %s24 = ssub.s32 %s19, 1
      %s25 = ssub.s32 %s19, 2
      %s26 = sadd.s32 %s19, 1
      %s27 = ssub.s32 %s19, %s26
      %p28 = scmp.eq.s32.totalorder %s27, 0
      %s30 = sadd.s32 %s29, 1
      %s31 = scalar_select %p28, %s29, %s30
      %p34 = pneg %p28
      %p35 = scmp.eq.s32.totalorder %s19, 1
      %p36 = por %p34, %p35
      %p37 = scmp.ne.s32.totalorder %s29, %s32
      %p38 = scmp.eq.s32.totalorder %s19, 0
      %p39 = por %p37, %p38
      %p40 = scmp.ne.s32.totalorder %s29, %s32
      %p41 = scmp.eq.s32.totalorder %s24, 1
      %p42 = por %p40, %p41
      %p43 = scmp.ne.s32.totalorder %s32, %s33
      %p44 = scmp.eq.s32.totalorder %s24, 0
      %p45 = por %p43, %p44
      %p46 = scmp.ne.s32.totalorder %s32, %s33
      %p47 = scmp.eq.s32.totalorder %s25, 1
      %p48 = por %p46, %p47
      %p50 = scmp.ne.s32.totalorder %s33, %s49
      %p51 = scmp.eq.s32.totalorder %s25, 0
      %p52 = por %p50, %p51
      %s54 = sadd.s32 %s53, 1
      %p57 = scmp.eq.s32.totalorder %s19, 1
      %p58 = scmp.ne.s32.totalorder %s53, %s55
      %p59 = scmp.eq.s32.totalorder %s19, 0
      %p60 = por %p58, %p59
      %p61 = scmp.ne.s32.totalorder %s53, %s55
      %p62 = scmp.eq.s32.totalorder %s24, 1
      %p63 = por %p61, %p62
      %p64 = scmp.ne.s32.totalorder %s55, %s56
      %p65 = scmp.eq.s32.totalorder %s24, 0
      %p66 = por %p64, %p65
      %p67 = scmp.ne.s32.totalorder %s55, %s56
      %p68 = scmp.eq.s32.totalorder %s25, 1
      %p69 = por %p67, %p68
      %p71 = scmp.ne.s32.totalorder %s56, %s70
      %p72 = scmp.eq.s32.totalorder %s25, 0
      %p73 = por %p71, %p72
      %s75 = sadd.s32 %s74, 1
      %p78 = scmp.eq.s32.totalorder %s19, 1
      %p79 = scmp.ne.s32.totalorder %s74, %s76
      %p80 = scmp.eq.s32.totalorder %s19, 0
      %p81 = por %p79, %p80
      %p82 = scmp.ne.s32.totalorder %s74, %s76
      %p83 = scmp.eq.s32.totalorder %s24, 1
      %p84 = por %p82, %p83
      %p85 = scmp.ne.s32.totalorder %s76, %s77
      %p86 = scmp.eq.s32.totalorder %s24, 0
      %p87 = por %p85, %p86
      %p88 = scmp.ne.s32.totalorder %s76, %s77
      %p89 = scmp.eq.s32.totalorder %s25, 1
      %p90 = por %p88, %p89
      %p92 = scmp.ne.s32.totalorder %s77, %s91
      %p93 = scmp.eq.s32.totalorder %s25, 0
      %p94 = por %p92, %p93
      %s96 = sadd.s32 %s95, 1
      %p99 = scmp.eq.s32.totalorder %s19, 1
      %p100 = scmp.ne.s32.totalorder %s95, %s97
      %p101 = scmp.eq.s32.totalorder %s19, 0
      %p102 = por %p100, %p101
      %p103 = scmp.ne.s32.totalorder %s95, %s97
      %p104 = scmp.eq.s32.totalorder %s24, 1
      %p105 = por %p103, %p104
      %p106 = scmp.ne.s32.totalorder %s97, %s98
      %p107 = scmp.eq.s32.totalorder %s24, 0
      %p108 = por %p106, %p107
      %p109 = scmp.ne.s32.totalorder %s97, %s98
      %p110 = scmp.eq.s32.totalorder %s25, 1
      %p111 = por %p109, %p110
      %p113 = scmp.ne.s32.totalorder %s98, %s112
      %p114 = scmp.eq.s32.totalorder %s25, 0
      %p115 = por %p113, %p114
      %s117 = sadd.s32 %s116, 1
      %p120 = scmp.eq.s32.totalorder %s19, 1
      %p121 = scmp.ne.s32.totalorder %s116, %s118
      %p122 = scmp.eq.s32.totalorder %s19, 0
      %p123 = por %p121, %p122
      %p124 = scmp.ne.s32.totalorder %s116, %s118
      %p125 = scmp.eq.s32.totalorder %s24, 1
      %p126 = por %p124, %p125
      %p127 = scmp.ne.s32.totalorder %s118, %s119
      %p128 = scmp.eq.s32.totalorder %s24, 0
      %p129 = por %p127, %p128
      %p130 = scmp.ne.s32.totalorder %s118, %s119
      %p131 = scmp.eq.s32.totalorder %s25, 1
      %p132 = por %p130, %p131
      %p134 = scmp.ne.s32.totalorder %s119, %s133
      %p135 = scmp.eq.s32.totalorder %s25, 0
      %p136 = por %p134, %p135
      %s138 = sadd.s32 %s137, 1
      %p141 = scmp.eq.s32.totalorder %s19, 1
      %p142 = scmp.ne.s32.totalorder %s137, %s139
      %p143 = scmp.eq.s32.totalorder %s19, 0
      %p144 = por %p142, %p143
      %p145 = scmp.ne.s32.totalorder %s137, %s139
      %p146 = scmp.eq.s32.totalorder %s24, 1
      %p147 = por %p145, %p146
      %p148 = scmp.ne.s32.totalorder %s139, %s140
      %p149 = scmp.eq.s32.totalorder %s24, 0
      %p150 = por %p148, %p149
      %p151 = scmp.ne.s32.totalorder %s139, %s140
      %p152 = scmp.eq.s32.totalorder %s25, 1
      %p153 = por %p151, %p152
      %p155 = scmp.ne.s32.totalorder %s140, %s154
      %p156 = scmp.eq.s32.totalorder %s25, 0
      %p157 = por %p155, %p156
      %s159 = sadd.s32 %s158, 1
      %p162 = scmp.eq.s32.totalorder %s19, 1
      %p163 = scmp.ne.s32.totalorder %s158, %s160
      %p164 = scmp.eq.s32.totalorder %s19, 0
      %p165 = por %p163, %p164
      %p166 = scmp.ne.s32.totalorder %s158, %s160
      %p167 = scmp.eq.s32.totalorder %s24, 1
      %p168 = por %p166, %p167
      %p169 = scmp.ne.s32.totalorder %s160, %s161
      %p170 = scmp.eq.s32.totalorder %s24, 0
      %p171 = por %p169, %p170
      %p172 = scmp.ne.s32.totalorder %s160, %s161
      %p173 = scmp.eq.s32.totalorder %s25, 1
      %p174 = por %p172, %p173
      %p176 = scmp.ne.s32.totalorder %s161, %s175
      %p177 = scmp.eq.s32.totalorder %s25, 0
      %p178 = por %p176, %p177
      %s180 = sadd.s32 %s179, 1
      %p183 = scmp.eq.s32.totalorder %s19, 1
      %p184 = scmp.ne.s32.totalorder %s179, %s181
      %p185 = scmp.eq.s32.totalorder %s19, 0
      %p186 = por %p184, %p185
      %p187 = scmp.ne.s32.totalorder %s179, %s181
      %p188 = scmp.eq.s32.totalorder %s24, 1
      %p189 = por %p187, %p188
      %p190 = scmp.ne.s32.totalorder %s181, %s182
      %p191 = scmp.eq.s32.totalorder %s24, 0
      %p192 = por %p190, %p191
      %p193 = scmp.ne.s32.totalorder %s181, %s182
      %p194 = scmp.eq.s32.totalorder %s25, 1
      %p195 = por %p193, %p194
      %p197 = scmp.ne.s32.totalorder %s182, %s196
      %p198 = scmp.eq.s32.totalorder %s25, 0
      %p199 = por %p197, %p198
      %s201 = sadd.s32 %s200, 1
      %p204 = scmp.eq.s32.totalorder %s19, 1
      %p205 = scmp.ne.s32.totalorder %s200, %s202
      %p206 = scmp.eq.s32.totalorder %s19, 0
      %p207 = por %p205, %p206
      %p208 = scmp.ne.s32.totalorder %s200, %s202
      %p209 = scmp.eq.s32.totalorder %s24, 1
      %p210 = por %p208, %p209
      %p211 = scmp.ne.s32.totalorder %s202, %s203
      %p212 = scmp.eq.s32.totalorder %s24, 0
      %p213 = por %p211, %p212
      %p214 = scmp.ne.s32.totalorder %s202, %s203
      %p215 = scmp.eq.s32.totalorder %s25, 1
      %p216 = por %p214, %p215
      %p218 = scmp.ne.s32.totalorder %s203, %s217
      %p219 = scmp.eq.s32.totalorder %s25, 0
      %p220 = por %p218, %p219
      %s222 = sadd.s32 %s221, 1
      %p225 = scmp.eq.s32.totalorder %s19, 1
      %p226 = scmp.ne.s32.totalorder %s221, %s223
      %p227 = scmp.eq.s32.totalorder %s19, 0
      %p228 = por %p226, %p227
      %p229 = scmp.ne.s32.totalorder %s221, %s223
      %p230 = scmp.eq.s32.totalorder %s24, 1
      %p231 = por %p229, %p230
      %p232 = scmp.ne.s32.totalorder %s223, %s224
      %p233 = scmp.eq.s32.totalorder %s24, 0
      %p234 = por %p232, %p233
      %p235 = scmp.ne.s32.totalorder %s223, %s224
      %p236 = scmp.eq.s32.totalorder %s25, 1
      %p237 = por %p235, %p236
      %p239 = scmp.ne.s32.totalorder %s224, %s238
      %p240 = scmp.eq.s32.totalorder %s25, 0
      %p241 = por %p239, %p240
      %s242 = ssub.s32 %s19, %s26
      %p243 = scmp.eq.s32.totalorder %s242, 0
      %s245 = sadd.s32 %s244, 1
      %s246 = scalar_select %p243, %s244, %s245
      %p249 = pneg %p243
      %p250 = scmp.eq.s32.totalorder %s19, 1
      %p251 = por %p249, %p250
      %p252 = scmp.ne.s32.totalorder %s244, %s247
      %p253 = scmp.eq.s32.totalorder %s19, 0
      %p254 = por %p252, %p253
      %p255 = scmp.ne.s32.totalorder %s244, %s247
      %p256 = scmp.eq.s32.totalorder %s24, 1
      %p257 = por %p255, %p256
      %p258 = scmp.ne.s32.totalorder %s247, %s248
      %p259 = scmp.eq.s32.totalorder %s24, 0
      %p260 = por %p258, %p259
      %p261 = scmp.ne.s32.totalorder %s247, %s248
      %p262 = scmp.eq.s32.totalorder %s25, 1
      %p263 = por %p261, %p262
      %p265 = scmp.ne.s32.totalorder %s248, %s264
      %p266 = scmp.eq.s32.totalorder %s25, 0
      %p267 = por %p265, %p266
      %p268 = scmp.le.s32.totalorder 1, %s19
      %p269 = scmp.lt.s32.totalorder %s19, 3
      %p270 = pnand %p268, %p269
      %p271 = pneg %p270
      // Predicated region
      $region9: #{tpu_custom_call.1} parent=5 // pred_check
        _
      $region10: #{tpu_custom_call.1} parent=5 // pred_check_branch
        %273 = sbr.rel (%p270) target = $region12
      $region11: #{tpu_custom_call.1} parent=5 // pred_region
        %s274 = ssub.s32 %s19, 1
        // Predicated region
        $region13: #{tpu_custom_call.1} parent=11 // pred_check
          %p275 = pneg %p66
        $region14: #{tpu_custom_call.1} parent=11 // pred_check_branch
          %277 = sbr.rel (%p275) target = $region16
        $region15: #{tpu_custom_call.1} parent=11 // pred_region
          _
        $region16: #{tpu_custom_call.1} parent=11 // pred_fallthru
          _
        // Predicated region
        $region17: #{tpu_custom_call.1} parent=11 // pred_check
          %p278 = pneg %p87
        $region18: #{tpu_custom_call.1} parent=11 // pred_check_branch
          %280 = sbr.rel (%p278) target = $region20
        $region19: #{tpu_custom_call.1} parent=11 // pred_region
          _
        $region20: #{tpu_custom_call.1} parent=11 // pred_fallthru
          _
        // Predicated region
        $region21: #{tpu_custom_call.1} parent=11 // pred_check
          %p281 = pneg %p108
        $region22: #{tpu_custom_call.1} parent=11 // pred_check_branch
          %283 = sbr.rel (%p281) target = $region24
        $region23: #{tpu_custom_call.1} parent=11 // pred_region
          _
        $region24: #{tpu_custom_call.1} parent=11 // pred_fallthru
          _
        // Predicated region
        $region25: #{tpu_custom_call.1} parent=11 // pred_check
          %p284 = pneg %p129
        $region26: #{tpu_custom_call.1} parent=11 // pred_check_branch
          %286 = sbr.rel (%p284) target = $region28
        $region27: #{tpu_custom_call.1} parent=11 // pred_region
          _
        $region28: #{tpu_custom_call.1} parent=11 // pred_fallthru
          _
        // Predicated region
        $region29: #{tpu_custom_call.1} parent=11 // pred_check
          %p287 = pneg %p150
        $region30: #{tpu_custom_call.1} parent=11 // pred_check_branch
          %289 = sbr.rel (%p287) target = $region32
        $region31: #{tpu_custom_call.1} parent=11 // pred_region
          _
        $region32: #{tpu_custom_call.1} parent=11 // pred_fallthru
          _
        // Predicated region
        $region33: #{tpu_custom_call.1} parent=11 // pred_check
          %p290 = pneg %p171
        $region34: #{tpu_custom_call.1} parent=11 // pred_check_branch
          %292 = sbr.rel (%p290) target = $region36
        $region35: #{tpu_custom_call.1} parent=11 // pred_region
          _
        $region36: #{tpu_custom_call.1} parent=11 // pred_fallthru
          _
        // Predicated region
        $region37: #{tpu_custom_call.1} parent=11 // pred_check
          %p293 = pneg %p192
        $region38: #{tpu_custom_call.1} parent=11 // pred_check_branch
          %295 = sbr.rel (%p293) target = $region40
        $region39: #{tpu_custom_call.1} parent=11 // pred_region
          _
        $region40: #{tpu_custom_call.1} parent=11 // pred_fallthru
          _
        // Predicated region
        $region41: #{tpu_custom_call.1} parent=11 // pred_check
          %p296 = pneg %p213
        $region42: #{tpu_custom_call.1} parent=11 // pred_check_branch
          %298 = sbr.rel (%p296) target = $region44
        $region43: #{tpu_custom_call.1} parent=11 // pred_region
          _
        $region44: #{tpu_custom_call.1} parent=11 // pred_fallthru
          _
        // Predicated region
        $region45: #{tpu_custom_call.1} parent=11 // pred_check
          %p299 = pneg %p234
        $region46: #{tpu_custom_call.1} parent=11 // pred_check_branch
          %301 = sbr.rel (%p299) target = $region48
        $region47: #{tpu_custom_call.1} parent=11 // pred_region
          _
        $region48: #{tpu_custom_call.1} parent=11 // pred_fallthru
          _
      $region12: #{tpu_custom_call.1} parent=5 // pred_fallthru
        _
      %p302 = scmp.lt.s32.totalorder %s19, 2
      // Predicated region
      $region49: #{tpu_custom_call.1} parent=5 // pred_check
        %p303 = pneg %p302
      $region50: #{tpu_custom_call.1} parent=5 // pred_check_branch
        %305 = sbr.rel (%p303) target = $region52
      $region51: #{tpu_custom_call.1} parent=5 // pred_region
        // Predicated region
        $region53: #{tpu_custom_call.1} parent=51 // pred_check
          %p306 = pneg %p39
        $region54: #{tpu_custom_call.1} parent=51 // pred_check_branch
          %308 = sbr.rel (%p306) target = $region56
        $region55: #{tpu_custom_call.1} parent=51 // pred_region
          %p309 = scmp.lt.s32.totalorder %s19, 1
          %s310 = scalar_select %p309, %s19, 1
          %s311 = smul.addr %s310, 54
          %s312 = smul.addr %s311, 8
          %s313 = scalar_lea.vmem %s0, %s312
        $region56: #{tpu_custom_call.1} parent=51 // pred_fallthru
          _
      $region52: #{tpu_custom_call.1} parent=5 // pred_fallthru
        _
      %p314 = scmp.le.s32.totalorder 1, %s19
      %p315 = scmp.lt.s32.totalorder %s19, 3
      %p316 = pnand %p314, %p315
      %p317 = pneg %p316
      // Predicated region
      $region57: #{tpu_custom_call.1} parent=5 // pred_check
        _
      $region58: #{tpu_custom_call.1} parent=5 // pred_check_branch
        %319 = sbr.rel (%p316) target = $region60
      $region59: #{tpu_custom_call.1} parent=5 // pred_region
        %s320 = ssub.s32 %s19, 1
        %p321 = scmp.lt.s32.totalorder %s24, 1
        %s322 = scalar_select %p321, %s24, 1
        %s323 = smul.addr %s322, 54
        %s324 = smul.addr %s323, 8
        %s325 = scalar_lea.vmem %s0, %s324
        %p326 = pneg %p45
        %p327 = pneg %p42
        %p328 = pneg %p66
        %p329 = pneg %p63
        %p330 = pneg %p87
        %p331 = pneg %p84
        %p332 = pneg %p108
        %p333 = pneg %p105
        %p334 = pneg %p129
        %p335 = pneg %p126
        %p336 = pneg %p150
        %p337 = pneg %p147
        %p338 = pneg %p171
        %p339 = pneg %p168
        %p340 = pneg %p192
        %p341 = pneg %p189
        %p342 = pneg %p213
        %p343 = pneg %p210
        %p344 = pneg %p234
        %p345 = pneg %p231
        %p346 = pneg %p260
        %p347 = pneg %p257
        %s348 = sand.u32 %s247, 1
        %s349 = scalar_lea.sflag [#allocation5], %s348
        %s350 = sand.u32 %s247, 1
        %s351 = smul.addr %s350, 256
        %s352 = scalar_lea.vmem [#allocation4], %s351
        %p353 = scmp.lt.s32.totalorder %s24, 1
        %s354 = scalar_select %p353, %s24, 1
        %s355 = smul.addr %s354, 54
        %s356 = smul.addr %s355, 8
        %s357 = scalar_lea.vmem %s0, %s356
        %s359 = scalar_lea.vmem %s357, 24
        %v360 = vld [vmem:[%s359 + $0x1] sm:$0xff]
        %v361 = vld [vmem:[%s359 + $0x9] sm:$0xff]
        %v362 = vld [vmem:[%s359 + $0x19] sm:$0xff]
        %v363 = vld [vmem:[%s359 + $0x21] sm:$0xff]
        %v364 = vld [vmem:[%s359 + $0x31] sm:$0xff]
        %v365 = vld [vmem:[%s359 + $0x39] sm:$0xff]
        %v366 = vld [vmem:[%s359 + $0x49] sm:$0xff]
        %v367 = vld [vmem:[%s359 + $0x51] sm:$0xff]
        %v368 = vld [vmem:[%s359 + $0x61] sm:$0xff]
        %v369 = vld [vmem:[%s359 + $0x69] sm:$0xff]
        %v370 = vld [vmem:[%s359 + $0x79] sm:$0xff]
        %v371 = vld [vmem:[%s359 + $0x81] sm:$0xff]
        %v372 = vld [vmem:[%s359 + $0x91] sm:$0xff]
        %v373 = vld [vmem:[%s359 + $0x99] sm:$0xff]
        %v374 = vld [vmem:[%s359 + $0xa9] sm:$0xff]
        %v375 = vld [vmem:[%s359 + $0xb1] sm:$0xff]
        %v376 = vld [vmem:[%s359 + $0xc1] sm:$0xff]
        %v377 = vld [vmem:[%s359 + $0xc9] sm:$0xff]
        %v378 = vld [vmem:[%s359 + $0xd9] sm:$0xff]
        %v379 = vld [vmem:[%s359 + $0xe1] sm:$0xff]
        %v380 = vld [vmem:[%s359 + $0xf1] sm:$0xff]
        %v381 = vld [vmem:[%s359 + $0xf9] sm:$0xff]
        %v382 = vld [vmem:[%s359 + $0x109] sm:$0xff]
        %v383 = vld [vmem:[%s359 + $0x111] sm:$0xff]
        %v384 = vld [vmem:[%s359 + $0x121] sm:$0xff]
        %v385 = vld [vmem:[%s359 + $0x129] sm:$0xff]
        %v386 = vld [vmem:[%s359 + $0x139] sm:$0xff]
        %v387 = vld [vmem:[%s359 + $0x141] sm:$0xff]
        %v388 = vld [vmem:[%s359 + $0x151] sm:$0xff]
        %v389 = vld [vmem:[%s359 + $0x159] sm:$0xff]
        %v390 = vld [vmem:[%s359 + $0x169] sm:$0xff]
        %v391 = vld [vmem:[%s359 + $0x171] sm:$0xff]
        %v392 = vld [vmem:[%s1] sm:$0x1]
        %v393 = vld [vmem:[%s1 + $0x1] sm:$0x1]
        %v394 = vld [vmem:[%s1 + $0x2] sm:$0x1]
        %v395 = vld [vmem:[%s1 + $0x3] sm:$0x1]
        %v396 = vld [vmem:[%s1 + $0x4] sm:$0x1]
        %v397 = vld [vmem:[%s1 + $0x5] sm:$0x1]
        %v398 = vld [vmem:[%s1 + $0x6] sm:$0x1]
        %v399 = vld [vmem:[%s1 + $0x7] sm:$0x1]
        %v400 = vld [vmem:[%s1 + $0x8] sm:$0x1]
        %v402 = vlaneseq
        %v403 = vshrl.u32 %v402, 7
        %v404 = vsub.s32 0, %v403
        %v405 = vrot.slane %v396, %v404
        %v407 = vmul.f32 %v360, %v405
        %v408 = vmul.f32 %v361, %v405
        %v409 = vmul.f32 %v362, %v405
        %v410 = vmul.f32 %v363, %v405
        %v411 = vmul.f32 %v364, %v405
        %v412 = vmul.f32 %v365, %v405
        %v413 = vmul.f32 %v366, %v405
        %v414 = vmul.f32 %v367, %v405
        %v415 = vmul.f32 %v368, %v405
        %v416 = vmul.f32 %v369, %v405
        %v417 = vmul.f32 %v370, %v405
        %v418 = vmul.f32 %v371, %v405
        %v419 = vmul.f32 %v372, %v405
        %v420 = vmul.f32 %v373, %v405
        %v421 = vmul.f32 %v374, %v405
        %v422 = vmul.f32 %v375, %v405
        %v423 = vmul.f32 %v376, %v405
        %v424 = vmul.f32 %v377, %v405
        %v425 = vmul.f32 %v378, %v405
        %v426 = vmul.f32 %v379, %v405
        %v427 = vmul.f32 %v380, %v405
        %v428 = vmul.f32 %v381, %v405
        %v429 = vmul.f32 %v382, %v405
        %v430 = vmul.f32 %v383, %v405
        %v431 = vmul.f32 %v384, %v405
        %v432 = vmul.f32 %v385, %v405
        %v433 = vmul.f32 %v386, %v405
        %v434 = vmul.f32 %v387, %v405
        %v435 = vmul.f32 %v388, %v405
        %v436 = vmul.f32 %v389, %v405
        %v437 = vmul.f32 %v390, %v405
        %v438 = vmul.f32 %v391, %v405
        %v439 = vld [vmem:[%s357] sm:$0xff]
        %v440 = vld [vmem:[%s357 + $0x8] sm:$0xff]
        %v441 = vld [vmem:[%s357 + $0x18] sm:$0xff]
        %v442 = vld [vmem:[%s357 + $0x20] sm:$0xff]
        %v443 = vld [vmem:[%s357 + $0x30] sm:$0xff]
        %v444 = vld [vmem:[%s357 + $0x38] sm:$0xff]
        %v445 = vld [vmem:[%s357 + $0x48] sm:$0xff]
        %v446 = vld [vmem:[%s357 + $0x50] sm:$0xff]
        %v447 = vld [vmem:[%s357 + $0x60] sm:$0xff]
        %v448 = vld [vmem:[%s357 + $0x68] sm:$0xff]
        %v449 = vld [vmem:[%s357 + $0x78] sm:$0xff]
        %v450 = vld [vmem:[%s357 + $0x80] sm:$0xff]
        %v451 = vld [vmem:[%s357 + $0x90] sm:$0xff]
        %v452 = vld [vmem:[%s357 + $0x98] sm:$0xff]
        %v453 = vld [vmem:[%s357 + $0xa8] sm:$0xff]
        %v454 = vld [vmem:[%s357 + $0xb0] sm:$0xff]
        %v455 = vld [vmem:[%s357 + $0xc0] sm:$0xff]
        %v456 = vld [vmem:[%s357 + $0xc8] sm:$0xff]
        %v457 = vld [vmem:[%s357 + $0xd8] sm:$0xff]
        %v458 = vld [vmem:[%s357 + $0xe0] sm:$0xff]
        %v459 = vld [vmem:[%s357 + $0xf0] sm:$0xff]
        %v460 = vld [vmem:[%s357 + $0xf8] sm:$0xff]
        %v461 = vld [vmem:[%s357 + $0x108] sm:$0xff]
        %v462 = vld [vmem:[%s357 + $0x110] sm:$0xff]
        %v463 = vld [vmem:[%s357 + $0x120] sm:$0xff]
        %v464 = vld [vmem:[%s357 + $0x128] sm:$0xff]
        %v465 = vld [vmem:[%s357 + $0x138] sm:$0xff]
        %v466 = vld [vmem:[%s357 + $0x140] sm:$0xff]
        %v467 = vld [vmem:[%s357 + $0x150] sm:$0xff]
        %v468 = vld [vmem:[%s357 + $0x158] sm:$0xff]
        %v469 = vld [vmem:[%s357 + $0x168] sm:$0xff]
        %v470 = vld [vmem:[%s357 + $0x170] sm:$0xff]
        %v472 = vlaneseq
        %v473 = vshrl.u32 %v472, 7
        %v474 = vsub.s32 0, %v473
        %v475 = vrot.slane %v392, %v474
        %v477 = vmul.f32 %v439, %v475
        %v478 = vmul.f32 %v440, %v475
        %v479 = vmul.f32 %v441, %v475
        %v480 = vmul.f32 %v442, %v475
        %v481 = vmul.f32 %v443, %v475
        %v482 = vmul.f32 %v444, %v475
        %v483 = vmul.f32 %v445, %v475
        %v484 = vmul.f32 %v446, %v475
        %v485 = vmul.f32 %v447, %v475
        %v486 = vmul.f32 %v448, %v475
        %v487 = vmul.f32 %v449, %v475
        %v488 = vmul.f32 %v450, %v475
        %v489 = vmul.f32 %v451, %v475
        %v490 = vmul.f32 %v452, %v475
        %v491 = vmul.f32 %v453, %v475
        %v492 = vmul.f32 %v454, %v475
        %v493 = vmul.f32 %v455, %v475
        %v494 = vmul.f32 %v456, %v475
        %v495 = vmul.f32 %v457, %v475
        %v496 = vmul.f32 %v458, %v475
        %v497 = vmul.f32 %v459, %v475
        %v498 = vmul.f32 %v460, %v475
        %v499 = vmul.f32 %v461, %v475
        %v500 = vmul.f32 %v462, %v475
        %v501 = vmul.f32 %v463, %v475
        %v502 = vmul.f32 %v464, %v475
        %v503 = vmul.f32 %v465, %v475
        %v504 = vmul.f32 %v466, %v475
        %v505 = vmul.f32 %v467, %v475
        %v506 = vmul.f32 %v468, %v475
        %v507 = vmul.f32 %v469, %v475
        %v508 = vmul.f32 %v470, %v475
        %v509 = vld [vmem:[%s357 + $0x1] sm:$0xff]
        %v510 = vld [vmem:[%s357 + $0x9] sm:$0xff]
        %v511 = vld [vmem:[%s357 + $0x19] sm:$0xff]
        %v512 = vld [vmem:[%s357 + $0x21] sm:$0xff]
        %v513 = vld [vmem:[%s357 + $0x31] sm:$0xff]
        %v514 = vld [vmem:[%s357 + $0x39] sm:$0xff]
        %v515 = vld [vmem:[%s357 + $0x49] sm:$0xff]
        %v516 = vld [vmem:[%s357 + $0x51] sm:$0xff]
        %v517 = vld [vmem:[%s357 + $0x61] sm:$0xff]
        %v518 = vld [vmem:[%s357 + $0x69] sm:$0xff]
        %v519 = vld [vmem:[%s357 + $0x79] sm:$0xff]
        %v520 = vld [vmem:[%s357 + $0x81] sm:$0xff]
        %v521 = vld [vmem:[%s357 + $0x91] sm:$0xff]
        %v522 = vld [vmem:[%s357 + $0x99] sm:$0xff]
        %v523 = vld [vmem:[%s357 + $0xa9] sm:$0xff]
        %v524 = vld [vmem:[%s357 + $0xb1] sm:$0xff]
        %v525 = vld [vmem:[%s357 + $0xc1] sm:$0xff]
        %v526 = vld [vmem:[%s357 + $0xc9] sm:$0xff]
        %v527 = vld [vmem:[%s357 + $0xd9] sm:$0xff]
        %v528 = vld [vmem:[%s357 + $0xe1] sm:$0xff]
        %v529 = vld [vmem:[%s357 + $0xf1] sm:$0xff]
        %v530 = vld [vmem:[%s357 + $0xf9] sm:$0xff]
        %v531 = vld [vmem:[%s357 + $0x109] sm:$0xff]
        %v532 = vld [vmem:[%s357 + $0x111] sm:$0xff]
        %v533 = vld [vmem:[%s357 + $0x121] sm:$0xff]
        %v534 = vld [vmem:[%s357 + $0x129] sm:$0xff]
        %v535 = vld [vmem:[%s357 + $0x139] sm:$0xff]
        %v536 = vld [vmem:[%s357 + $0x141] sm:$0xff]
        %v537 = vld [vmem:[%s357 + $0x151] sm:$0xff]
        %v538 = vld [vmem:[%s357 + $0x159] sm:$0xff]
        %v539 = vld [vmem:[%s357 + $0x169] sm:$0xff]
        %v540 = vld [vmem:[%s357 + $0x171] sm:$0xff]
        %v542 = vlaneseq
        %v543 = vshrl.u32 %v542, 7
        %v544 = vsub.s32 0, %v543
        %v545 = vrot.slane %v393, %v544
        %v547 = vmul.f32 %v509, %v545
        %v548 = vmul.f32 %v510, %v545
        %v549 = vmul.f32 %v511, %v545
        %v550 = vmul.f32 %v512, %v545
        %v551 = vmul.f32 %v513, %v545
        %v552 = vmul.f32 %v514, %v545
        %v553 = vmul.f32 %v515, %v545
        %v554 = vmul.f32 %v516, %v545
        %v555 = vmul.f32 %v517, %v545
        %v556 = vmul.f32 %v518, %v545
        %v557 = vmul.f32 %v519, %v545
        %v558 = vmul.f32 %v520, %v545
        %v559 = vmul.f32 %v521, %v545
        %v560 = vmul.f32 %v522, %v545
        %v561 = vmul.f32 %v523, %v545
        %v562 = vmul.f32 %v524, %v545
        %v563 = vmul.f32 %v525, %v545
        %v564 = vmul.f32 %v526, %v545
        %v565 = vmul.f32 %v527, %v545
        %v566 = vmul.f32 %v528, %v545
        %v567 = vmul.f32 %v529, %v545
        %v568 = vmul.f32 %v530, %v545
        %v569 = vmul.f32 %v531, %v545
        %v570 = vmul.f32 %v532, %v545
        %v571 = vmul.f32 %v533, %v545
        %v572 = vmul.f32 %v534, %v545
        %v573 = vmul.f32 %v535, %v545
        %v574 = vmul.f32 %v536, %v545
        %v575 = vmul.f32 %v537, %v545
        %v576 = vmul.f32 %v538, %v545
        %v577 = vmul.f32 %v539, %v545
        %v578 = vmul.f32 %v540, %v545
        %v579 = vadd.f32 %v407, %v547
        %v580 = vadd.f32 %v408, %v548
        %v581 = vadd.f32 %v409, %v549
        %v582 = vadd.f32 %v410, %v550
        %v583 = vadd.f32 %v411, %v551
        %v584 = vadd.f32 %v412, %v552
        %v585 = vadd.f32 %v413, %v553
        %v586 = vadd.f32 %v414, %v554
        %v587 = vadd.f32 %v415, %v555
        %v588 = vadd.f32 %v416, %v556
        %v589 = vadd.f32 %v417, %v557
        %v590 = vadd.f32 %v418, %v558
        %v591 = vadd.f32 %v419, %v559
        %v592 = vadd.f32 %v420, %v560
        %v593 = vadd.f32 %v421, %v561
        %v594 = vadd.f32 %v422, %v562
        %v595 = vadd.f32 %v423, %v563
        %v596 = vadd.f32 %v424, %v564
        %v597 = vadd.f32 %v425, %v565
        %v598 = vadd.f32 %v426, %v566
        %v599 = vadd.f32 %v427, %v567
        %v600 = vadd.f32 %v428, %v568
        %v601 = vadd.f32 %v429, %v569
        %v602 = vadd.f32 %v430, %v570
        %v603 = vadd.f32 %v431, %v571
        %v604 = vadd.f32 %v432, %v572
        %v605 = vadd.f32 %v433, %v573
        %v606 = vadd.f32 %v434, %v574
        %v607 = vadd.f32 %v435, %v575
        %v608 = vadd.f32 %v436, %v576
        %v609 = vadd.f32 %v437, %v577
        %v610 = vadd.f32 %v438, %v578
        %v611 = vld [vmem:[%s357 + $0x2] sm:$0xff]
        %v612 = vld [vmem:[%s357 + $0xa] sm:$0xff]
        %v613 = vld [vmem:[%s357 + $0x1a] sm:$0xff]
        %v614 = vld [vmem:[%s357 + $0x22] sm:$0xff]
        %v615 = vld [vmem:[%s357 + $0x32] sm:$0xff]
        %v616 = vld [vmem:[%s357 + $0x3a] sm:$0xff]
        %v617 = vld [vmem:[%s357 + $0x4a] sm:$0xff]
        %v618 = vld [vmem:[%s357 + $0x52] sm:$0xff]
        %v619 = vld [vmem:[%s357 + $0x62] sm:$0xff]
        %v620 = vld [vmem:[%s357 + $0x6a] sm:$0xff]
        %v621 = vld [vmem:[%s357 + $0x7a] sm:$0xff]
        %v622 = vld [vmem:[%s357 + $0x82] sm:$0xff]
        %v623 = vld [vmem:[%s357 + $0x92] sm:$0xff]
        %v624 = vld [vmem:[%s357 + $0x9a] sm:$0xff]
        %v625 = vld [vmem:[%s357 + $0xaa] sm:$0xff]
        %v626 = vld [vmem:[%s357 + $0xb2] sm:$0xff]
        %v627 = vld [vmem:[%s357 + $0xc2] sm:$0xff]
        %v628 = vld [vmem:[%s357 + $0xca] sm:$0xff]
        %v629 = vld [vmem:[%s357 + $0xda] sm:$0xff]
        %v630 = vld [vmem:[%s357 + $0xe2] sm:$0xff]
        %v631 = vld [vmem:[%s357 + $0xf2] sm:$0xff]
        %v632 = vld [vmem:[%s357 + $0xfa] sm:$0xff]
        %v633 = vld [vmem:[%s357 + $0x10a] sm:$0xff]
        %v634 = vld [vmem:[%s357 + $0x112] sm:$0xff]
        %v635 = vld [vmem:[%s357 + $0x122] sm:$0xff]
        %v636 = vld [vmem:[%s357 + $0x12a] sm:$0xff]
        %v637 = vld [vmem:[%s357 + $0x13a] sm:$0xff]
        %v638 = vld [vmem:[%s357 + $0x142] sm:$0xff]
        %v639 = vld [vmem:[%s357 + $0x152] sm:$0xff]
        %v640 = vld [vmem:[%s357 + $0x15a] sm:$0xff]
        %v641 = vld [vmem:[%s357 + $0x16a] sm:$0xff]
        %v642 = vld [vmem:[%s357 + $0x172] sm:$0xff]
        %v644 = vlaneseq
        %v645 = vshrl.u32 %v644, 7
        %v646 = vsub.s32 0, %v645
        %v647 = vrot.slane %v394, %v646
        %v649 = vmul.f32 %v611, %v647
        %v650 = vmul.f32 %v612, %v647
        %v651 = vmul.f32 %v613, %v647
        %v652 = vmul.f32 %v614, %v647
        %v653 = vmul.f32 %v615, %v647
        %v654 = vmul.f32 %v616, %v647
        %v655 = vmul.f32 %v617, %v647
        %v656 = vmul.f32 %v618, %v647
        %v657 = vmul.f32 %v619, %v647
        %v658 = vmul.f32 %v620, %v647
        %v659 = vmul.f32 %v621, %v647
        %v660 = vmul.f32 %v622, %v647
        %v661 = vmul.f32 %v623, %v647
        %v662 = vmul.f32 %v624, %v647
        %v663 = vmul.f32 %v625, %v647
        %v664 = vmul.f32 %v626, %v647
        %v665 = vmul.f32 %v627, %v647
        %v666 = vmul.f32 %v628, %v647
        %v667 = vmul.f32 %v629, %v647
        %v668 = vmul.f32 %v630, %v647
        %v669 = vmul.f32 %v631, %v647
        %v670 = vmul.f32 %v632, %v647
        %v671 = vmul.f32 %v633, %v647
        %v672 = vmul.f32 %v634, %v647
        %v673 = vmul.f32 %v635, %v647
        %v674 = vmul.f32 %v636, %v647
        %v675 = vmul.f32 %v637, %v647
        %v676 = vmul.f32 %v638, %v647
        %v677 = vmul.f32 %v639, %v647
        %v678 = vmul.f32 %v640, %v647
        %v679 = vmul.f32 %v641, %v647
        %v680 = vmul.f32 %v642, %v647
        %v681 = vadd.f32 %v477, %v649
        %v682 = vadd.f32 %v478, %v650
        %v683 = vadd.f32 %v479, %v651
        %v684 = vadd.f32 %v480, %v652
        %v685 = vadd.f32 %v481, %v653
        %v686 = vadd.f32 %v482, %v654
        %v687 = vadd.f32 %v483, %v655
        %v688 = vadd.f32 %v484, %v656
        %v689 = vadd.f32 %v485, %v657
        %v690 = vadd.f32 %v486, %v658
        %v691 = vadd.f32 %v487, %v659
        %v692 = vadd.f32 %v488, %v660
        %v693 = vadd.f32 %v489, %v661
        %v694 = vadd.f32 %v490, %v662
        %v695 = vadd.f32 %v491, %v663
        %v696 = vadd.f32 %v492, %v664
        %v697 = vadd.f32 %v493, %v665
        %v698 = vadd.f32 %v494, %v666
        %v699 = vadd.f32 %v495, %v667
        %v700 = vadd.f32 %v496, %v668
        %v701 = vadd.f32 %v497, %v669
        %v702 = vadd.f32 %v498, %v670
        %v703 = vadd.f32 %v499, %v671
        %v704 = vadd.f32 %v500, %v672
        %v705 = vadd.f32 %v501, %v673
        %v706 = vadd.f32 %v502, %v674
        %v707 = vadd.f32 %v503, %v675
        %v708 = vadd.f32 %v504, %v676
        %v709 = vadd.f32 %v505, %v677
        %v710 = vadd.f32 %v506, %v678
        %v711 = vadd.f32 %v507, %v679
        %v712 = vadd.f32 %v508, %v680
        %v713 = vld [vmem:[%s359] sm:$0xff]
        %v714 = vld [vmem:[%s359 + $0x8] sm:$0xff]
        %v715 = vld [vmem:[%s359 + $0x18] sm:$0xff]
        %v716 = vld [vmem:[%s359 + $0x20] sm:$0xff]
        %v717 = vld [vmem:[%s359 + $0x30] sm:$0xff]
        %v718 = vld [vmem:[%s359 + $0x38] sm:$0xff]
        %v719 = vld [vmem:[%s359 + $0x48] sm:$0xff]
        %v720 = vld [vmem:[%s359 + $0x50] sm:$0xff]
        %v721 = vld [vmem:[%s359 + $0x60] sm:$0xff]
        %v722 = vld [vmem:[%s359 + $0x68] sm:$0xff]
        %v723 = vld [vmem:[%s359 + $0x78] sm:$0xff]
        %v724 = vld [vmem:[%s359 + $0x80] sm:$0xff]
        %v725 = vld [vmem:[%s359 + $0x90] sm:$0xff]
        %v726 = vld [vmem:[%s359 + $0x98] sm:$0xff]
        %v727 = vld [vmem:[%s359 + $0xa8] sm:$0xff]
        %v728 = vld [vmem:[%s359 + $0xb0] sm:$0xff]
        %v729 = vld [vmem:[%s359 + $0xc0] sm:$0xff]
        %v730 = vld [vmem:[%s359 + $0xc8] sm:$0xff]
        %v731 = vld [vmem:[%s359 + $0xd8] sm:$0xff]
        %v732 = vld [vmem:[%s359 + $0xe0] sm:$0xff]
        %v733 = vld [vmem:[%s359 + $0xf0] sm:$0xff]
        %v734 = vld [vmem:[%s359 + $0xf8] sm:$0xff]
        %v735 = vld [vmem:[%s359 + $0x108] sm:$0xff]
        %v736 = vld [vmem:[%s359 + $0x110] sm:$0xff]
        %v737 = vld [vmem:[%s359 + $0x120] sm:$0xff]
        %v738 = vld [vmem:[%s359 + $0x128] sm:$0xff]
        %v739 = vld [vmem:[%s359 + $0x138] sm:$0xff]
        %v740 = vld [vmem:[%s359 + $0x140] sm:$0xff]
        %v741 = vld [vmem:[%s359 + $0x150] sm:$0xff]
        %v742 = vld [vmem:[%s359 + $0x158] sm:$0xff]
        %v743 = vld [vmem:[%s359 + $0x168] sm:$0xff]
        %v744 = vld [vmem:[%s359 + $0x170] sm:$0xff]
        %v746 = vlaneseq
        %v747 = vshrl.u32 %v746, 7
        %v748 = vsub.s32 0, %v747
        %v749 = vrot.slane %v395, %v748
        %v751 = vmul.f32 %v713, %v749
        %v752 = vmul.f32 %v714, %v749
        %v753 = vmul.f32 %v715, %v749
        %v754 = vmul.f32 %v716, %v749
        %v755 = vmul.f32 %v717, %v749
        %v756 = vmul.f32 %v718, %v749
        %v757 = vmul.f32 %v719, %v749
        %v758 = vmul.f32 %v720, %v749
        %v759 = vmul.f32 %v721, %v749
        %v760 = vmul.f32 %v722, %v749
        %v761 = vmul.f32 %v723, %v749
        %v762 = vmul.f32 %v724, %v749
        %v763 = vmul.f32 %v725, %v749
        %v764 = vmul.f32 %v726, %v749
        %v765 = vmul.f32 %v727, %v749
        %v766 = vmul.f32 %v728, %v749
        %v767 = vmul.f32 %v729, %v749
        %v768 = vmul.f32 %v730, %v749
        %v769 = vmul.f32 %v731, %v749
        %v770 = vmul.f32 %v732, %v749
        %v771 = vmul.f32 %v733, %v749
        %v772 = vmul.f32 %v734, %v749
        %v773 = vmul.f32 %v735, %v749
        %v774 = vmul.f32 %v736, %v749
        %v775 = vmul.f32 %v737, %v749
        %v776 = vmul.f32 %v738, %v749
        %v777 = vmul.f32 %v739, %v749
        %v778 = vmul.f32 %v740, %v749
        %v779 = vmul.f32 %v741, %v749
        %v780 = vmul.f32 %v742, %v749
        %v781 = vmul.f32 %v743, %v749
        %v782 = vmul.f32 %v744, %v749
        %v783 = vadd.f32 %v579, %v751
        %v784 = vadd.f32 %v580, %v752
        %v785 = vadd.f32 %v581, %v753
        %v786 = vadd.f32 %v582, %v754
        %v787 = vadd.f32 %v583, %v755
        %v788 = vadd.f32 %v584, %v756
        %v789 = vadd.f32 %v585, %v757
        %v790 = vadd.f32 %v586, %v758
        %v791 = vadd.f32 %v587, %v759
        %v792 = vadd.f32 %v588, %v760
        %v793 = vadd.f32 %v589, %v761
        %v794 = vadd.f32 %v590, %v762
        %v795 = vadd.f32 %v591, %v763
        %v796 = vadd.f32 %v592, %v764
        %v797 = vadd.f32 %v593, %v765
        %v798 = vadd.f32 %v594, %v766
        %v799 = vadd.f32 %v595, %v767
        %v800 = vadd.f32 %v596, %v768
        %v801 = vadd.f32 %v597, %v769
        %v802 = vadd.f32 %v598, %v770
        %v803 = vadd.f32 %v599, %v771
        %v804 = vadd.f32 %v600, %v772
        %v805 = vadd.f32 %v601, %v773
        %v806 = vadd.f32 %v602, %v774
        %v807 = vadd.f32 %v603, %v775
        %v808 = vadd.f32 %v604, %v776
        %v809 = vadd.f32 %v605, %v777
        %v810 = vadd.f32 %v606, %v778
        %v811 = vadd.f32 %v607, %v779
        %v812 = vadd.f32 %v608, %v780
        %v813 = vadd.f32 %v609, %v781
        %v814 = vadd.f32 %v610, %v782
        %v815 = vld [vmem:[%s359 + $0x2] sm:$0xff]
        %v816 = vld [vmem:[%s359 + $0xa] sm:$0xff]
        %v817 = vld [vmem:[%s359 + $0x1a] sm:$0xff]
        %v818 = vld [vmem:[%s359 + $0x22] sm:$0xff]
        %v819 = vld [vmem:[%s359 + $0x32] sm:$0xff]
        %v820 = vld [vmem:[%s359 + $0x3a] sm:$0xff]
        %v821 = vld [vmem:[%s359 + $0x4a] sm:$0xff]
        %v822 = vld [vmem:[%s359 + $0x52] sm:$0xff]
        %v823 = vld [vmem:[%s359 + $0x62] sm:$0xff]
        %v824 = vld [vmem:[%s359 + $0x6a] sm:$0xff]
        %v825 = vld [vmem:[%s359 + $0x7a] sm:$0xff]
        %v826 = vld [vmem:[%s359 + $0x82] sm:$0xff]
        %v827 = vld [vmem:[%s359 + $0x92] sm:$0xff]
        %v828 = vld [vmem:[%s359 + $0x9a] sm:$0xff]
        %v829 = vld [vmem:[%s359 + $0xaa] sm:$0xff]
        %v830 = vld [vmem:[%s359 + $0xb2] sm:$0xff]
        %v831 = vld [vmem:[%s359 + $0xc2] sm:$0xff]
        %v832 = vld [vmem:[%s359 + $0xca] sm:$0xff]
        %v833 = vld [vmem:[%s359 + $0xda] sm:$0xff]
        %v834 = vld [vmem:[%s359 + $0xe2] sm:$0xff]
        %v835 = vld [vmem:[%s359 + $0xf2] sm:$0xff]
        %v836 = vld [vmem:[%s359 + $0xfa] sm:$0xff]
        %v837 = vld [vmem:[%s359 + $0x10a] sm:$0xff]
        %v838 = vld [vmem:[%s359 + $0x112] sm:$0xff]
        %v839 = vld [vmem:[%s359 + $0x122] sm:$0xff]
        %v840 = vld [vmem:[%s359 + $0x12a] sm:$0xff]
        %v841 = vld [vmem:[%s359 + $0x13a] sm:$0xff]
        %v842 = vld [vmem:[%s359 + $0x142] sm:$0xff]
        %v843 = vld [vmem:[%s359 + $0x152] sm:$0xff]
        %v844 = vld [vmem:[%s359 + $0x15a] sm:$0xff]
        %v845 = vld [vmem:[%s359 + $0x16a] sm:$0xff]
        %v846 = vld [vmem:[%s359 + $0x172] sm:$0xff]
        %v848 = vlaneseq
        %v849 = vshrl.u32 %v848, 7
        %v850 = vsub.s32 0, %v849
        %v851 = vrot.slane %v397, %v850
        %v853 = vmul.f32 %v815, %v851
        %v854 = vmul.f32 %v816, %v851
        %v855 = vmul.f32 %v817, %v851
        %v856 = vmul.f32 %v818, %v851
        %v857 = vmul.f32 %v819, %v851
        %v858 = vmul.f32 %v820, %v851
        %v859 = vmul.f32 %v821, %v851
        %v860 = vmul.f32 %v822, %v851
        %v861 = vmul.f32 %v823, %v851
        %v862 = vmul.f32 %v824, %v851
        %v863 = vmul.f32 %v825, %v851
        %v864 = vmul.f32 %v826, %v851
        %v865 = vmul.f32 %v827, %v851
        %v866 = vmul.f32 %v828, %v851
        %v867 = vmul.f32 %v829, %v851
        %v868 = vmul.f32 %v830, %v851
        %v869 = vmul.f32 %v831, %v851
        %v870 = vmul.f32 %v832, %v851
        %v871 = vmul.f32 %v833, %v851
        %v872 = vmul.f32 %v834, %v851
        %v873 = vmul.f32 %v835, %v851
        %v874 = vmul.f32 %v836, %v851
        %v875 = vmul.f32 %v837, %v851
        %v876 = vmul.f32 %v838, %v851
        %v877 = vmul.f32 %v839, %v851
        %v878 = vmul.f32 %v840, %v851
        %v879 = vmul.f32 %v841, %v851
        %v880 = vmul.f32 %v842, %v851
        %v881 = vmul.f32 %v843, %v851
        %v882 = vmul.f32 %v844, %v851
        %v883 = vmul.f32 %v845, %v851
        %v884 = vmul.f32 %v846, %v851
        %v885 = vadd.f32 %v681, %v853
        %v886 = vadd.f32 %v682, %v854
        %v887 = vadd.f32 %v683, %v855
        %v888 = vadd.f32 %v684, %v856
        %v889 = vadd.f32 %v685, %v857
        %v890 = vadd.f32 %v686, %v858
        %v891 = vadd.f32 %v687, %v859
        %v892 = vadd.f32 %v688, %v860
        %v893 = vadd.f32 %v689, %v861
        %v894 = vadd.f32 %v690, %v862
        %v895 = vadd.f32 %v691, %v863
        %v896 = vadd.f32 %v692, %v864
        %v897 = vadd.f32 %v693, %v865
        %v898 = vadd.f32 %v694, %v866
        %v899 = vadd.f32 %v695, %v867
        %v900 = vadd.f32 %v696, %v868
        %v901 = vadd.f32 %v697, %v869
        %v902 = vadd.f32 %v698, %v870
        %v903 = vadd.f32 %v699, %v871
        %v904 = vadd.f32 %v700, %v872
        %v905 = vadd.f32 %v701, %v873
        %v906 = vadd.f32 %v702, %v874
        %v907 = vadd.f32 %v703, %v875
        %v908 = vadd.f32 %v704, %v876
        %v909 = vadd.f32 %v705, %v877
        %v910 = vadd.f32 %v706, %v878
        %v911 = vadd.f32 %v707, %v879
        %v912 = vadd.f32 %v708, %v880
        %v913 = vadd.f32 %v709, %v881
        %v914 = vadd.f32 %v710, %v882
        %v915 = vadd.f32 %v711, %v883
        %v916 = vadd.f32 %v712, %v884
        %s917 = scalar_lea.vmem %s357, 48
        %v918 = vld [vmem:[%s917] sm:$0xff]
        %v919 = vld [vmem:[%s917 + $0x8] sm:$0xff]
        %v920 = vld [vmem:[%s917 + $0x18] sm:$0xff]
        %v921 = vld [vmem:[%s917 + $0x20] sm:$0xff]
        %v922 = vld [vmem:[%s917 + $0x30] sm:$0xff]
        %v923 = vld [vmem:[%s917 + $0x38] sm:$0xff]
        %v924 = vld [vmem:[%s917 + $0x48] sm:$0xff]
        %v925 = vld [vmem:[%s917 + $0x50] sm:$0xff]
        %v926 = vld [vmem:[%s917 + $0x60] sm:$0xff]
        %v927 = vld [vmem:[%s917 + $0x68] sm:$0xff]
        %v928 = vld [vmem:[%s917 + $0x78] sm:$0xff]
        %v929 = vld [vmem:[%s917 + $0x80] sm:$0xff]
        %v930 = vld [vmem:[%s917 + $0x90] sm:$0xff]
        %v931 = vld [vmem:[%s917 + $0x98] sm:$0xff]
        %v932 = vld [vmem:[%s917 + $0xa8] sm:$0xff]
        %v933 = vld [vmem:[%s917 + $0xb0] sm:$0xff]
        %v934 = vld [vmem:[%s917 + $0xc0] sm:$0xff]
        %v935 = vld [vmem:[%s917 + $0xc8] sm:$0xff]
        %v936 = vld [vmem:[%s917 + $0xd8] sm:$0xff]
        %v937 = vld [vmem:[%s917 + $0xe0] sm:$0xff]
        %v938 = vld [vmem:[%s917 + $0xf0] sm:$0xff]
        %v939 = vld [vmem:[%s917 + $0xf8] sm:$0xff]
        %v940 = vld [vmem:[%s917 + $0x108] sm:$0xff]
        %v941 = vld [vmem:[%s917 + $0x110] sm:$0xff]
        %v942 = vld [vmem:[%s917 + $0x120] sm:$0xff]
        %v943 = vld [vmem:[%s917 + $0x128] sm:$0xff]
        %v944 = vld [vmem:[%s917 + $0x138] sm:$0xff]
        %v945 = vld [vmem:[%s917 + $0x140] sm:$0xff]
        %v946 = vld [vmem:[%s917 + $0x150] sm:$0xff]
        %v947 = vld [vmem:[%s917 + $0x158] sm:$0xff]
        %v948 = vld [vmem:[%s917 + $0x168] sm:$0xff]
        %v949 = vld [vmem:[%s917 + $0x170] sm:$0xff]
        %v951 = vlaneseq
        %v952 = vshrl.u32 %v951, 7
        %v953 = vsub.s32 0, %v952
        %v954 = vrot.slane %v398, %v953
        %v956 = vmul.f32 %v918, %v954
        %v957 = vmul.f32 %v919, %v954
        %v958 = vmul.f32 %v920, %v954
        %v959 = vmul.f32 %v921, %v954
        %v960 = vmul.f32 %v922, %v954
        %v961 = vmul.f32 %v923, %v954
        %v962 = vmul.f32 %v924, %v954
        %v963 = vmul.f32 %v925, %v954
        %v964 = vmul.f32 %v926, %v954
        %v965 = vmul.f32 %v927, %v954
        %v966 = vmul.f32 %v928, %v954
        %v967 = vmul.f32 %v929, %v954
        %v968 = vmul.f32 %v930, %v954
        %v969 = vmul.f32 %v931, %v954
        %v970 = vmul.f32 %v932, %v954
        %v971 = vmul.f32 %v933, %v954
        %v972 = vmul.f32 %v934, %v954
        %v973 = vmul.f32 %v935, %v954
        %v974 = vmul.f32 %v936, %v954
        %v975 = vmul.f32 %v937, %v954
        %v976 = vmul.f32 %v938, %v954
        %v977 = vmul.f32 %v939, %v954
        %v978 = vmul.f32 %v940, %v954
        %v979 = vmul.f32 %v941, %v954
        %v980 = vmul.f32 %v942, %v954
        %v981 = vmul.f32 %v943, %v954
        %v982 = vmul.f32 %v944, %v954
        %v983 = vmul.f32 %v945, %v954
        %v984 = vmul.f32 %v946, %v954
        %v985 = vmul.f32 %v947, %v954
        %v986 = vmul.f32 %v948, %v954
        %v987 = vmul.f32 %v949, %v954
        %v988 = vadd.f32 %v783, %v956
        %v989 = vadd.f32 %v784, %v957
        %v990 = vadd.f32 %v785, %v958
        %v991 = vadd.f32 %v786, %v959
        %v992 = vadd.f32 %v787, %v960
        %v993 = vadd.f32 %v788, %v961
        %v994 = vadd.f32 %v789, %v962
        %v995 = vadd.f32 %v790, %v963
        %v996 = vadd.f32 %v791, %v964
        %v997 = vadd.f32 %v792, %v965
        %v998 = vadd.f32 %v793, %v966
        %v999 = vadd.f32 %v794, %v967
        %v1000 = vadd.f32 %v795, %v968
        %v1001 = vadd.f32 %v796, %v969
        %v1002 = vadd.f32 %v797, %v970
        %v1003 = vadd.f32 %v798, %v971
        %v1004 = vadd.f32 %v799, %v972
        %v1005 = vadd.f32 %v800, %v973
        %v1006 = vadd.f32 %v801, %v974
        %v1007 = vadd.f32 %v802, %v975
        %v1008 = vadd.f32 %v803, %v976
        %v1009 = vadd.f32 %v804, %v977
        %v1010 = vadd.f32 %v805, %v978
        %v1011 = vadd.f32 %v806, %v979
        %v1012 = vadd.f32 %v807, %v980
        %v1013 = vadd.f32 %v808, %v981
        %v1014 = vadd.f32 %v809, %v982
        %v1015 = vadd.f32 %v810, %v983
        %v1016 = vadd.f32 %v811, %v984
        %v1017 = vadd.f32 %v812, %v985
        %v1018 = vadd.f32 %v813, %v986
        %v1019 = vadd.f32 %v814, %v987
        %v1020 = vld [vmem:[%s917 + $0x1] sm:$0xff]
        %v1021 = vld [vmem:[%s917 + $0x9] sm:$0xff]
        %v1022 = vld [vmem:[%s917 + $0x19] sm:$0xff]
        %v1023 = vld [vmem:[%s917 + $0x21] sm:$0xff]
        %v1024 = vld [vmem:[%s917 + $0x31] sm:$0xff]
        %v1025 = vld [vmem:[%s917 + $0x39] sm:$0xff]
        %v1026 = vld [vmem:[%s917 + $0x49] sm:$0xff]
        %v1027 = vld [vmem:[%s917 + $0x51] sm:$0xff]
        %v1028 = vld [vmem:[%s917 + $0x61] sm:$0xff]
        %v1029 = vld [vmem:[%s917 + $0x69] sm:$0xff]
        %v1030 = vld [vmem:[%s917 + $0x79] sm:$0xff]
        %v1031 = vld [vmem:[%s917 + $0x81] sm:$0xff]
        %v1032 = vld [vmem:[%s917 + $0x91] sm:$0xff]
        %v1033 = vld [vmem:[%s917 + $0x99] sm:$0xff]
        %v1034 = vld [vmem:[%s917 + $0xa9] sm:$0xff]
        %v1035 = vld [vmem:[%s917 + $0xb1] sm:$0xff]
        %v1036 = vld [vmem:[%s917 + $0xc1] sm:$0xff]
        %v1037 = vld [vmem:[%s917 + $0xc9] sm:$0xff]
        %v1038 = vld [vmem:[%s917 + $0xd9] sm:$0xff]
        %v1039 = vld [vmem:[%s917 + $0xe1] sm:$0xff]
        %v1040 = vld [vmem:[%s917 + $0xf1] sm:$0xff]
        %v1041 = vld [vmem:[%s917 + $0xf9] sm:$0xff]
        %v1042 = vld [vmem:[%s917 + $0x109] sm:$0xff]
        %v1043 = vld [vmem:[%s917 + $0x111] sm:$0xff]
        %v1044 = vld [vmem:[%s917 + $0x121] sm:$0xff]
        %v1045 = vld [vmem:[%s917 + $0x129] sm:$0xff]
        %v1046 = vld [vmem:[%s917 + $0x139] sm:$0xff]
        %v1047 = vld [vmem:[%s917 + $0x141] sm:$0xff]
        %v1048 = vld [vmem:[%s917 + $0x151] sm:$0xff]
        %v1049 = vld [vmem:[%s917 + $0x159] sm:$0xff]
        %v1050 = vld [vmem:[%s917 + $0x169] sm:$0xff]
        %v1051 = vld [vmem:[%s917 + $0x171] sm:$0xff]
        %v1053 = vlaneseq
        %v1054 = vshrl.u32 %v1053, 7
        %v1055 = vsub.s32 0, %v1054
        %v1056 = vrot.slane %v399, %v1055
        %v1058 = vmul.f32 %v1020, %v1056
        %v1059 = vmul.f32 %v1021, %v1056
        %v1060 = vmul.f32 %v1022, %v1056
        %v1061 = vmul.f32 %v1023, %v1056
        %v1062 = vmul.f32 %v1024, %v1056
        %v1063 = vmul.f32 %v1025, %v1056
        %v1064 = vmul.f32 %v1026, %v1056
        %v1065 = vmul.f32 %v1027, %v1056
        %v1066 = vmul.f32 %v1028, %v1056
        %v1067 = vmul.f32 %v1029, %v1056
        %v1068 = vmul.f32 %v1030, %v1056
        %v1069 = vmul.f32 %v1031, %v1056
        %v1070 = vmul.f32 %v1032, %v1056
        %v1071 = vmul.f32 %v1033, %v1056
        %v1072 = vmul.f32 %v1034, %v1056
        %v1073 = vmul.f32 %v1035, %v1056
        %v1074 = vmul.f32 %v1036, %v1056
        %v1075 = vmul.f32 %v1037, %v1056
        %v1076 = vmul.f32 %v1038, %v1056
        %v1077 = vmul.f32 %v1039, %v1056
        %v1078 = vmul.f32 %v1040, %v1056
        %v1079 = vmul.f32 %v1041, %v1056
        %v1080 = vmul.f32 %v1042, %v1056
        %v1081 = vmul.f32 %v1043, %v1056
        %v1082 = vmul.f32 %v1044, %v1056
        %v1083 = vmul.f32 %v1045, %v1056
        %v1084 = vmul.f32 %v1046, %v1056
        %v1085 = vmul.f32 %v1047, %v1056
        %v1086 = vmul.f32 %v1048, %v1056
        %v1087 = vmul.f32 %v1049, %v1056
        %v1088 = vmul.f32 %v1050, %v1056
        %v1089 = vmul.f32 %v1051, %v1056
        %v1090 = vadd.f32 %v885, %v1058
        %v1091 = vadd.f32 %v886, %v1059
        %v1092 = vadd.f32 %v887, %v1060
        %v1093 = vadd.f32 %v888, %v1061
        %v1094 = vadd.f32 %v889, %v1062
        %v1095 = vadd.f32 %v890, %v1063
        %v1096 = vadd.f32 %v891, %v1064
        %v1097 = vadd.f32 %v892, %v1065
        %v1098 = vadd.f32 %v893, %v1066
        %v1099 = vadd.f32 %v894, %v1067
        %v1100 = vadd.f32 %v895, %v1068
        %v1101 = vadd.f32 %v896, %v1069
        %v1102 = vadd.f32 %v897, %v1070
        %v1103 = vadd.f32 %v898, %v1071
        %v1104 = vadd.f32 %v899, %v1072
        %v1105 = vadd.f32 %v900, %v1073
        %v1106 = vadd.f32 %v901, %v1074
        %v1107 = vadd.f32 %v902, %v1075
        %v1108 = vadd.f32 %v903, %v1076
        %v1109 = vadd.f32 %v904, %v1077
        %v1110 = vadd.f32 %v905, %v1078
        %v1111 = vadd.f32 %v906, %v1079
        %v1112 = vadd.f32 %v907, %v1080
        %v1113 = vadd.f32 %v908, %v1081
        %v1114 = vadd.f32 %v909, %v1082
        %v1115 = vadd.f32 %v910, %v1083
        %v1116 = vadd.f32 %v911, %v1084
        %v1117 = vadd.f32 %v912, %v1085
        %v1118 = vadd.f32 %v913, %v1086
        %v1119 = vadd.f32 %v914, %v1087
        %v1120 = vadd.f32 %v915, %v1088
        %v1121 = vadd.f32 %v916, %v1089
        %v1122 = vld [vmem:[%s917 + $0x2] sm:$0xff]
        %v1123 = vld [vmem:[%s917 + $0xa] sm:$0xff]
        %v1124 = vld [vmem:[%s917 + $0x1a] sm:$0xff]
        %v1125 = vld [vmem:[%s917 + $0x22] sm:$0xff]
        %v1126 = vld [vmem:[%s917 + $0x32] sm:$0xff]
        %v1127 = vld [vmem:[%s917 + $0x3a] sm:$0xff]
        %v1128 = vld [vmem:[%s917 + $0x4a] sm:$0xff]
        %v1129 = vld [vmem:[%s917 + $0x52] sm:$0xff]
        %v1130 = vld [vmem:[%s917 + $0x62] sm:$0xff]
        %v1131 = vld [vmem:[%s917 + $0x6a] sm:$0xff]
        %v1132 = vld [vmem:[%s917 + $0x7a] sm:$0xff]
        %v1133 = vld [vmem:[%s917 + $0x82] sm:$0xff]
        %v1134 = vld [vmem:[%s917 + $0x92] sm:$0xff]
        %v1135 = vld [vmem:[%s917 + $0x9a] sm:$0xff]
        %v1136 = vld [vmem:[%s917 + $0xaa] sm:$0xff]
        %v1137 = vld [vmem:[%s917 + $0xb2] sm:$0xff]
        %v1138 = vld [vmem:[%s917 + $0xc2] sm:$0xff]
        %v1139 = vld [vmem:[%s917 + $0xca] sm:$0xff]
        %v1140 = vld [vmem:[%s917 + $0xda] sm:$0xff]
        %v1141 = vld [vmem:[%s917 + $0xe2] sm:$0xff]
        %v1142 = vld [vmem:[%s917 + $0xf2] sm:$0xff]
        %v1143 = vld [vmem:[%s917 + $0xfa] sm:$0xff]
        %v1144 = vld [vmem:[%s917 + $0x10a] sm:$0xff]
        %v1145 = vld [vmem:[%s917 + $0x112] sm:$0xff]
        %v1146 = vld [vmem:[%s917 + $0x122] sm:$0xff]
        %v1147 = vld [vmem:[%s917 + $0x12a] sm:$0xff]
        %v1148 = vld [vmem:[%s917 + $0x13a] sm:$0xff]
        %v1149 = vld [vmem:[%s917 + $0x142] sm:$0xff]
        %v1150 = vld [vmem:[%s917 + $0x152] sm:$0xff]
        %v1151 = vld [vmem:[%s917 + $0x15a] sm:$0xff]
        %v1152 = vld [vmem:[%s917 + $0x16a] sm:$0xff]
        %v1153 = vld [vmem:[%s917 + $0x172] sm:$0xff]
        %v1155 = vlaneseq
        %v1156 = vshrl.u32 %v1155, 7
        %v1157 = vsub.s32 0, %v1156
        %v1158 = vrot.slane %v400, %v1157
        %v1160 = vmul.f32 %v1122, %v1158
        %v1161 = vmul.f32 %v1123, %v1158
        %v1162 = vmul.f32 %v1124, %v1158
        %v1163 = vmul.f32 %v1125, %v1158
        %v1164 = vmul.f32 %v1126, %v1158
        %v1165 = vmul.f32 %v1127, %v1158
        %v1166 = vmul.f32 %v1128, %v1158
        %v1167 = vmul.f32 %v1129, %v1158
        %v1168 = vmul.f32 %v1130, %v1158
        %v1169 = vmul.f32 %v1131, %v1158
        %v1170 = vmul.f32 %v1132, %v1158
        %v1171 = vmul.f32 %v1133, %v1158
        %v1172 = vmul.f32 %v1134, %v1158
        %v1173 = vmul.f32 %v1135, %v1158
        %v1174 = vmul.f32 %v1136, %v1158
        %v1175 = vmul.f32 %v1137, %v1158
        %v1176 = vmul.f32 %v1138, %v1158
        %v1177 = vmul.f32 %v1139, %v1158
        %v1178 = vmul.f32 %v1140, %v1158
        %v1179 = vmul.f32 %v1141, %v1158
        %v1180 = vmul.f32 %v1142, %v1158
        %v1181 = vmul.f32 %v1143, %v1158
        %v1182 = vmul.f32 %v1144, %v1158
        %v1183 = vmul.f32 %v1145, %v1158
        %v1184 = vmul.f32 %v1146, %v1158
        %v1185 = vmul.f32 %v1147, %v1158
        %v1186 = vmul.f32 %v1148, %v1158
        %v1187 = vmul.f32 %v1149, %v1158
        %v1188 = vmul.f32 %v1150, %v1158
        %v1189 = vmul.f32 %v1151, %v1158
        %v1190 = vmul.f32 %v1152, %v1158
        %v1191 = vmul.f32 %v1153, %v1158
        %v1192 = vadd.f32 %v988, %v1160
        %v1193 = vadd.f32 %v989, %v1161
        %v1194 = vadd.f32 %v990, %v1162
        %v1195 = vadd.f32 %v991, %v1163
        %v1196 = vadd.f32 %v992, %v1164
        %v1197 = vadd.f32 %v993, %v1165
        %v1198 = vadd.f32 %v994, %v1166
        %v1199 = vadd.f32 %v995, %v1167
        %v1200 = vadd.f32 %v996, %v1168
        %v1201 = vadd.f32 %v997, %v1169
        %v1202 = vadd.f32 %v998, %v1170
        %v1203 = vadd.f32 %v999, %v1171
        %v1204 = vadd.f32 %v1000, %v1172
        %v1205 = vadd.f32 %v1001, %v1173
        %v1206 = vadd.f32 %v1002, %v1174
        %v1207 = vadd.f32 %v1003, %v1175
        %v1208 = vadd.f32 %v1004, %v1176
        %v1209 = vadd.f32 %v1005, %v1177
        %v1210 = vadd.f32 %v1006, %v1178
        %v1211 = vadd.f32 %v1007, %v1179
        %v1212 = vadd.f32 %v1008, %v1180
        %v1213 = vadd.f32 %v1009, %v1181
        %v1214 = vadd.f32 %v1010, %v1182
        %v1215 = vadd.f32 %v1011, %v1183
        %v1216 = vadd.f32 %v1012, %v1184
        %v1217 = vadd.f32 %v1013, %v1185
        %v1218 = vadd.f32 %v1014, %v1186
        %v1219 = vadd.f32 %v1015, %v1187
        %v1220 = vadd.f32 %v1016, %v1188
        %v1221 = vadd.f32 %v1017, %v1189
        %v1222 = vadd.f32 %v1018, %v1190
        %v1223 = vadd.f32 %v1019, %v1191
        %v1224 = vadd.f32 %v1192, %v1090
        %v1225 = vadd.f32 %v1193, %v1091
        %v1226 = vadd.f32 %v1194, %v1092
        %v1227 = vadd.f32 %v1195, %v1093
        %v1228 = vadd.f32 %v1196, %v1094
        %v1229 = vadd.f32 %v1197, %v1095
        %v1230 = vadd.f32 %v1198, %v1096
        %v1231 = vadd.f32 %v1199, %v1097
        %v1232 = vadd.f32 %v1200, %v1098
        %v1233 = vadd.f32 %v1201, %v1099
        %v1234 = vadd.f32 %v1202, %v1100
        %v1235 = vadd.f32 %v1203, %v1101
        %v1236 = vadd.f32 %v1204, %v1102
        %v1237 = vadd.f32 %v1205, %v1103
        %v1238 = vadd.f32 %v1206, %v1104
        %v1239 = vadd.f32 %v1207, %v1105
        %v1240 = vadd.f32 %v1208, %v1106
        %v1241 = vadd.f32 %v1209, %v1107
        %v1242 = vadd.f32 %v1210, %v1108
        %v1243 = vadd.f32 %v1211, %v1109
        %v1244 = vadd.f32 %v1212, %v1110
        %v1245 = vadd.f32 %v1213, %v1111
        %v1246 = vadd.f32 %v1214, %v1112
        %v1247 = vadd.f32 %v1215, %v1113
        %v1248 = vadd.f32 %v1216, %v1114
        %v1249 = vadd.f32 %v1217, %v1115
        %v1250 = vadd.f32 %v1218, %v1116
        %v1251 = vadd.f32 %v1219, %v1117
        %v1252 = vadd.f32 %v1220, %v1118
        %v1253 = vadd.f32 %v1221, %v1119
        %v1254 = vadd.f32 %v1222, %v1120
        %v1255 = vadd.f32 %v1223, %v1121
        %v1256 = vld [vmem:[%s2] sm:$0x1]
        %v1258 = vlaneseq
        %v1259 = vshrl.u32 %v1258, 7
        %v1260 = vsub.s32 0, %v1259
        %v1261 = vrot.slane %v1256, %v1260
        %v1263 = vadd.f32 %v1224, %v1261
        %v1264 = vadd.f32 %v1225, %v1261
        %v1265 = vadd.f32 %v1226, %v1261
        %v1266 = vadd.f32 %v1227, %v1261
        %v1267 = vadd.f32 %v1228, %v1261
        %v1268 = vadd.f32 %v1229, %v1261
        %v1269 = vadd.f32 %v1230, %v1261
        %v1270 = vadd.f32 %v1231, %v1261
        %v1271 = vadd.f32 %v1232, %v1261
        %v1272 = vadd.f32 %v1233, %v1261
        %v1273 = vadd.f32 %v1234, %v1261
        %v1274 = vadd.f32 %v1235, %v1261
        %v1275 = vadd.f32 %v1236, %v1261
        %v1276 = vadd.f32 %v1237, %v1261
        %v1277 = vadd.f32 %v1238, %v1261
        %v1278 = vadd.f32 %v1239, %v1261
        %v1279 = vadd.f32 %v1240, %v1261
        %v1280 = vadd.f32 %v1241, %v1261
        %v1281 = vadd.f32 %v1242, %v1261
        %v1282 = vadd.f32 %v1243, %v1261
        %v1283 = vadd.f32 %v1244, %v1261
        %v1284 = vadd.f32 %v1245, %v1261
        %v1285 = vadd.f32 %v1246, %v1261
        %v1286 = vadd.f32 %v1247, %v1261
        %v1287 = vadd.f32 %v1248, %v1261
        %v1288 = vadd.f32 %v1249, %v1261
        %v1289 = vadd.f32 %v1250, %v1261
        %v1290 = vadd.f32 %v1251, %v1261
        %v1291 = vadd.f32 %v1252, %v1261
        %v1292 = vadd.f32 %v1253, %v1261
        %v1293 = vadd.f32 %v1254, %v1261
        %v1294 = vadd.f32 %v1255, %v1261
        %v1295 = vmax.f32 %v1263, 0.0
        %v1296 = vmax.f32 %v1264, 0.0
        %v1297 = vmax.f32 %v1265, 0.0
        %v1298 = vmax.f32 %v1266, 0.0
        %v1299 = vmax.f32 %v1267, 0.0
        %v1300 = vmax.f32 %v1268, 0.0
        %v1301 = vmax.f32 %v1269, 0.0
        %v1302 = vmax.f32 %v1270, 0.0
        %v1303 = vmax.f32 %v1271, 0.0
        %v1304 = vmax.f32 %v1272, 0.0
        %v1305 = vmax.f32 %v1273, 0.0
        %v1306 = vmax.f32 %v1274, 0.0
        %v1307 = vmax.f32 %v1275, 0.0
        %v1308 = vmax.f32 %v1276, 0.0
        %v1309 = vmax.f32 %v1277, 0.0
        %v1310 = vmax.f32 %v1278, 0.0
        %v1311 = vmax.f32 %v1279, 0.0
        %v1312 = vmax.f32 %v1280, 0.0
        %v1313 = vmax.f32 %v1281, 0.0
        %v1314 = vmax.f32 %v1282, 0.0
        %v1315 = vmax.f32 %v1283, 0.0
        %v1316 = vmax.f32 %v1284, 0.0
        %v1317 = vmax.f32 %v1285, 0.0
        %v1318 = vmax.f32 %v1286, 0.0
        %v1319 = vmax.f32 %v1287, 0.0
        %v1320 = vmax.f32 %v1288, 0.0
        %v1321 = vmax.f32 %v1289, 0.0
        %v1322 = vmax.f32 %v1290, 0.0
        %v1323 = vmax.f32 %v1291, 0.0
        %v1324 = vmax.f32 %v1292, 0.0
        %v1325 = vmax.f32 %v1293, 0.0
        %v1326 = vmax.f32 %v1294, 0.0
        %v1327 = vpack.c.bf16 %v1296, %v1295
        %v1328 = vpack.c.bf16 %v1298, %v1297
        %v1329 = vpack.c.bf16 %v1300, %v1299
        %v1330 = vpack.c.bf16 %v1302, %v1301
        %v1331 = vpack.c.bf16 %v1304, %v1303
        %v1332 = vpack.c.bf16 %v1306, %v1305
        %v1333 = vpack.c.bf16 %v1308, %v1307
        %v1334 = vpack.c.bf16 %v1310, %v1309
        %v1335 = vpack.c.bf16 %v1312, %v1311
        %v1336 = vpack.c.bf16 %v1314, %v1313
        %v1337 = vpack.c.bf16 %v1316, %v1315
        %v1338 = vpack.c.bf16 %v1318, %v1317
        %v1339 = vpack.c.bf16 %v1320, %v1319
        %v1340 = vpack.c.bf16 %v1322, %v1321
        %v1341 = vpack.c.bf16 %v1324, %v1323
        %v1342 = vpack.c.bf16 %v1326, %v1325
        %v1343 = vld [vmem:[%s3] sm:$0xf]
        %v1344 = vld [vmem:[%s4] sm:$0x1]
        %v1346 = vlaneseq
        %v1347 = vshrl.u32 %v1346, 7
        %v1348 = vsub.s32 0, %v1347
        %v1349 = vrot.slane %v1344, %v1348
        %vm1351 = vcmask 64512
        %v1353 = vsel %vm1351, %v1327, 0
        %v1356 = vsel %vm1351, %v1328, 0
        %v1359 = vsel %vm1351, %v1329, 0
        %v1362 = vsel %vm1351, %v1330, 0
        %v1365 = vsel %vm1351, %v1331, 0
        %v1368 = vsel %vm1351, %v1332, 0
        %v1371 = vsel %vm1351, %v1333, 0
        %v1374 = vsel %vm1351, %v1334, 0
        %v1377 = vsel %vm1351, %v1335, 0
        %v1380 = vsel %vm1351, %v1336, 0
        %v1383 = vsel %vm1351, %v1337, 0
        %v1386 = vsel %vm1351, %v1338, 0
        %v1389 = vsel %vm1351, %v1339, 0
        %v1392 = vsel %vm1351, %v1340, 0
        %v1395 = vsel %vm1351, %v1341, 0
        %v1398 = vsel %vm1351, %v1342, 0
        %vm1400 = vcmask 1043456
        %v1402 = vsel %vm1400, %v1343, 0
        %1404 = vmatprep.subr.bf16.mxu0 0
        %1405 = vmatpush1.bf16.msra.mxu0 0
        %1406 = vmatprep.subr.bf16.mxu0 0
        %1407 = vmatpush1.bf16.msra.mxu0 0
        %1408 = vmatprep.subr.bf16.mxu0 0
        %1409 = vmatpush1.bf16.msra.mxu0 0
        %1410 = vmatprep.subr.bf16.mxu0 0
        %1411 = vmatpush1.bf16.msra.mxu0 0
        %1412 = vmatprep.subr.bf16.mxu0 0
        %1413 = vmatpush1.bf16.msra.mxu0 0
        %1414 = vmatprep.subr.bf16.mxu0 0
        %1415 = vmatpush1.bf16.msra.mxu0 0
        %1416 = vmatprep.subr.bf16.mxu0 0
        %1417 = vmatpush1.bf16.msra.mxu0 0
        %1418 = vmatprep.subr.bf16.mxu0 0
        %1419 = vmatpush1.bf16.msra.mxu0 %v1402
        %1420 = vmatprep.subr.bf16.mxu0 0
        %1421 = vmatpush2.bf16.msra.mxu0 0
        %1422 = vmatprep.subr.bf16.mxu0 0
        %1423 = vmatpush2.bf16.msra.mxu0 0
        %1424 = vmatprep.subr.bf16.mxu0 0
        %1425 = vmatpush2.bf16.msra.mxu0 0
        %1426 = vmatprep.subr.bf16.mxu0 0
        %1427 = vmatpush2.bf16.msra.mxu0 0
        %1428 = vmatprep.subr.bf16.mxu0 0
        %1429 = vmatpush2.bf16.msra.mxu0 0
        %1430 = vmatprep.subr.bf16.mxu0 0
        %1431 = vmatpush2.bf16.msra.mxu0 0
        %1432 = vmatprep.subr.bf16.mxu0 0
        %1433 = vmatpush2.bf16.msra.mxu0 0
        %1434 = vmatprep.subr.bf16.mxu0 0
        %1435 = vmatpush2.bf16.msra.mxu0 0
        %1436 = vmatprep.mubr.bf16.mxu0 0
        %1437 = vmatmul.mubr.bf16.gmra.mxu0 %v1353
        %v1438 = vpop.f32.mrf.mxu0
        %v1439 = vadd.f32 %v1349, %v1438
        %v1440 = vpop.f32.mrf.mxu0
        %v1441 = vpop.f32.mrf.mxu0
        %v1442 = vadd.f32 %v1349, %v1441
        %v1443 = vpop.f32.mrf.mxu0
        %1444 = vmatprep.mubr.bf16.mxu0 0
        %1445 = vmatmul.mubr.bf16.gmra.mxu0 %v1356
        %v1446 = vpop.f32.mrf.mxu0
        %v1447 = vadd.f32 %v1349, %v1446
        %v1448 = vpop.f32.mrf.mxu0
        %v1449 = vpop.f32.mrf.mxu0
        %v1450 = vadd.f32 %v1349, %v1449
        %v1451 = vpop.f32.mrf.mxu0
        %1452 = vmatprep.mubr.bf16.mxu0 0
        %1453 = vmatmul.mubr.bf16.gmra.mxu0 %v1359
        %v1454 = vpop.f32.mrf.mxu0
        %v1455 = vadd.f32 %v1349, %v1454
        %v1456 = vpop.f32.mrf.mxu0
        %v1457 = vpop.f32.mrf.mxu0
        %v1458 = vadd.f32 %v1349, %v1457
        %v1459 = vpop.f32.mrf.mxu0
        %1460 = vmatprep.mubr.bf16.mxu0 0
        %1461 = vmatmul.mubr.bf16.gmra.mxu0 %v1362
        %v1462 = vpop.f32.mrf.mxu0
        %v1463 = vadd.f32 %v1349, %v1462
        %v1464 = vpop.f32.mrf.mxu0
        %v1465 = vpop.f32.mrf.mxu0
        %v1466 = vadd.f32 %v1349, %v1465
        %v1467 = vpop.f32.mrf.mxu0
        %1468 = vmatprep.mubr.bf16.mxu0 0
        %1469 = vmatmul.mubr.bf16.gmra.mxu0 %v1365
        %v1470 = vpop.f32.mrf.mxu0
        %v1471 = vadd.f32 %v1349, %v1470
        %v1472 = vpop.f32.mrf.mxu0
        %v1473 = vpop.f32.mrf.mxu0
        %v1474 = vadd.f32 %v1349, %v1473
        %v1475 = vpop.f32.mrf.mxu0
        %1476 = vmatprep.mubr.bf16.mxu0 0
        %1477 = vmatmul.mubr.bf16.gmra.mxu0 %v1368
        %v1478 = vpop.f32.mrf.mxu0
        %v1479 = vadd.f32 %v1349, %v1478
        %v1480 = vpop.f32.mrf.mxu0
        %v1481 = vpop.f32.mrf.mxu0
        %v1482 = vadd.f32 %v1349, %v1481
        %v1483 = vpop.f32.mrf.mxu0
        %1484 = vmatprep.mubr.bf16.mxu0 0
        %1485 = vmatmul.mubr.bf16.gmra.mxu0 %v1371
        %v1486 = vpop.f32.mrf.mxu0
        %v1487 = vadd.f32 %v1349, %v1486
        %v1488 = vpop.f32.mrf.mxu0
        %v1489 = vpop.f32.mrf.mxu0
        %v1490 = vadd.f32 %v1349, %v1489
        %v1491 = vpop.f32.mrf.mxu0
        %1492 = vmatprep.mubr.bf16.mxu0 0
        %1493 = vmatmul.mubr.bf16.gmra.mxu0 %v1374
        %v1494 = vpop.f32.mrf.mxu0
        %v1495 = vadd.f32 %v1349, %v1494
        %v1496 = vpop.f32.mrf.mxu0
        %v1497 = vpop.f32.mrf.mxu0
        %v1498 = vadd.f32 %v1349, %v1497
        %v1499 = vpop.f32.mrf.mxu0
        %1500 = vmatprep.mubr.bf16.mxu0 0
        %1501 = vmatmul.mubr.bf16.gmra.mxu0 %v1377
        %v1502 = vpop.f32.mrf.mxu0
        %v1503 = vadd.f32 %v1349, %v1502
        %v1504 = vpop.f32.mrf.mxu0
        %v1505 = vpop.f32.mrf.mxu0
        %v1506 = vadd.f32 %v1349, %v1505
        %v1507 = vpop.f32.mrf.mxu0
        %1508 = vmatprep.mubr.bf16.mxu0 0
        %1509 = vmatmul.mubr.bf16.gmra.mxu0 %v1380
        %v1510 = vpop.f32.mrf.mxu0
        %v1511 = vadd.f32 %v1349, %v1510
        %v1512 = vpop.f32.mrf.mxu0
        %v1513 = vpop.f32.mrf.mxu0
        %v1514 = vadd.f32 %v1349, %v1513
        %v1515 = vpop.f32.mrf.mxu0
        %1516 = vmatprep.mubr.bf16.mxu0 0
        %1517 = vmatmul.mubr.bf16.gmra.mxu0 %v1383
        %v1518 = vpop.f32.mrf.mxu0
        %v1519 = vadd.f32 %v1349, %v1518
        %v1520 = vpop.f32.mrf.mxu0
        %v1521 = vpop.f32.mrf.mxu0
        %v1522 = vadd.f32 %v1349, %v1521
        %v1523 = vpop.f32.mrf.mxu0
        %1524 = vmatprep.mubr.bf16.mxu0 0
        %1525 = vmatmul.mubr.bf16.gmra.mxu0 %v1386
        %v1526 = vpop.f32.mrf.mxu0
        %v1527 = vadd.f32 %v1349, %v1526
        %v1528 = vpop.f32.mrf.mxu0
        %v1529 = vpop.f32.mrf.mxu0
        %v1530 = vadd.f32 %v1349, %v1529
        %v1531 = vpop.f32.mrf.mxu0
        %1532 = vmatprep.mubr.bf16.mxu0 0
        %1533 = vmatmul.mubr.bf16.gmra.mxu0 %v1389
        %v1534 = vpop.f32.mrf.mxu0
        %v1535 = vadd.f32 %v1349, %v1534
        %v1536 = vpop.f32.mrf.mxu0
        %v1537 = vpop.f32.mrf.mxu0
        %v1538 = vadd.f32 %v1349, %v1537
        %v1539 = vpop.f32.mrf.mxu0
        %1540 = vmatprep.mubr.bf16.mxu0 0
        %1541 = vmatmul.mubr.bf16.gmra.mxu0 %v1392
        %v1542 = vpop.f32.mrf.mxu0
        %v1543 = vadd.f32 %v1349, %v1542
        %v1544 = vpop.f32.mrf.mxu0
        %v1545 = vpop.f32.mrf.mxu0
        %v1546 = vadd.f32 %v1349, %v1545
        %v1547 = vpop.f32.mrf.mxu0
        %1548 = vmatprep.mubr.bf16.mxu0 0
        %1549 = vmatmul.mubr.bf16.gmra.mxu0 %v1395
        %v1550 = vpop.f32.mrf.mxu0
        %v1551 = vadd.f32 %v1349, %v1550
        %v1552 = vpop.f32.mrf.mxu0
        %v1553 = vpop.f32.mrf.mxu0
        %v1554 = vadd.f32 %v1349, %v1553
        %v1555 = vpop.f32.mrf.mxu0
        %1556 = vmatprep.mubr.bf16.mxu0 0
        %1557 = vmatmul.mubr.bf16.gmra.mxu0 %v1398
        %v1558 = vpop.f32.mrf.mxu0
        %v1559 = vadd.f32 %v1349, %v1558
        %v1560 = vpop.f32.mrf.mxu0
        %v1561 = vpop.f32.mrf.mxu0
        %v1562 = vadd.f32 %v1349, %v1561
        %v1563 = vpop.f32.mrf.mxu0
        %1564 = vdwg.mxu0
        %v1565 = vmax.f32 %v1439, 0.0
        %v1566 = vmax.f32 %v1442, 0.0
        %v1567 = vmax.f32 %v1447, 0.0
        %v1568 = vmax.f32 %v1450, 0.0
        %v1569 = vmax.f32 %v1455, 0.0
        %v1570 = vmax.f32 %v1458, 0.0
        %v1571 = vmax.f32 %v1463, 0.0
        %v1572 = vmax.f32 %v1466, 0.0
        %v1573 = vmax.f32 %v1471, 0.0
        %v1574 = vmax.f32 %v1474, 0.0
        %v1575 = vmax.f32 %v1479, 0.0
        %v1576 = vmax.f32 %v1482, 0.0
        %v1577 = vmax.f32 %v1487, 0.0
        %v1578 = vmax.f32 %v1490, 0.0
        %v1579 = vmax.f32 %v1495, 0.0
        %v1580 = vmax.f32 %v1498, 0.0
        %v1581 = vmax.f32 %v1503, 0.0
        %v1582 = vmax.f32 %v1506, 0.0
        %v1583 = vmax.f32 %v1511, 0.0
        %v1584 = vmax.f32 %v1514, 0.0
        %v1585 = vmax.f32 %v1519, 0.0
        %v1586 = vmax.f32 %v1522, 0.0
        %v1587 = vmax.f32 %v1527, 0.0
        %v1588 = vmax.f32 %v1530, 0.0
        %v1589 = vmax.f32 %v1535, 0.0
        %v1590 = vmax.f32 %v1538, 0.0
        %v1591 = vmax.f32 %v1543, 0.0
        %v1592 = vmax.f32 %v1546, 0.0
        %v1593 = vmax.f32 %v1551, 0.0
        %v1594 = vmax.f32 %v1554, 0.0
        %v1595 = vmax.f32 %v1559, 0.0
        %v1596 = vmax.f32 %v1562, 0.0
        %vm1597 = vcmask 130048
        %1598 = vst.msk [vmem:[#allocation2] sm:$0xff] %vm1597, 0.0
        %1599 = vst.msk [vmem:[#allocation2 + $0x8] sm:$0xff] %vm1597, 0.0
        %vm1600 = vcmask 123904
        %1601 = vst.msk [vmem:[#allocation2 + $0x10] sm:$0x3] %vm1600, 0.0
        %s1602 = scalar_lea.vmem [#allocation2], 408
        %1603 = vst.msk [vmem:[%s1602] sm:$0xff] %vm1597, 0.0
        %1604 = vst.msk [vmem:[%s1602 + $0x8] sm:$0xff] %vm1597, 0.0
        %1605 = vst.msk [vmem:[%s1602 + $0x10] sm:$0x3] %vm1600, 0.0
        %vm1606 = vcmask 122880
        %1607 = vst.msk [vmem:[#allocation2] sm:$0x1] %vm1606, 0.0
        %1608 = vst.msk [vmem:[#allocation2 + $0x18] sm:$0x1] %vm1606, 0.0
        %1609 = vst.msk [vmem:[#allocation2 + $0x30] sm:$0x1] %vm1606, 0.0
        %1610 = vst.msk [vmem:[#allocation2 + $0x48] sm:$0x1] %vm1606, 0.0
        %1611 = vst.msk [vmem:[#allocation2 + $0x60] sm:$0x1] %vm1606, 0.0
        %1612 = vst.msk [vmem:[#allocation2 + $0x78] sm:$0x1] %vm1606, 0.0
        %1613 = vst.msk [vmem:[#allocation2 + $0x90] sm:$0x1] %vm1606, 0.0
        %1614 = vst.msk [vmem:[#allocation2 + $0xa8] sm:$0x1] %vm1606, 0.0
        %1615 = vst.msk [vmem:[#allocation2 + $0xc0] sm:$0x1] %vm1606, 0.0
        %1616 = vst.msk [vmem:[#allocation2 + $0xd8] sm:$0x1] %vm1606, 0.0
        %1617 = vst.msk [vmem:[#allocation2 + $0xf0] sm:$0x1] %vm1606, 0.0
        %1618 = vst.msk [vmem:[#allocation2 + $0x108] sm:$0x1] %vm1606, 0.0
        %1619 = vst.msk [vmem:[#allocation2 + $0x120] sm:$0x1] %vm1606, 0.0
        %1620 = vst.msk [vmem:[#allocation2 + $0x138] sm:$0x1] %vm1606, 0.0
        %1621 = vst.msk [vmem:[#allocation2 + $0x150] sm:$0x1] %vm1606, 0.0
        %1622 = vst.msk [vmem:[#allocation2 + $0x168] sm:$0x1] %vm1606, 0.0
        %1623 = vst.msk [vmem:[#allocation2 + $0x180] sm:$0x1] %vm1606, 0.0
        %1624 = vst.msk [vmem:[#allocation2 + $0x198] sm:$0x1] %vm1606, 0.0
        %1625 = vst.msk [vmem:[#allocation2 + $0x11] sm:$0x1] %vm1606, 0.0
        %1626 = vst.msk [vmem:[#allocation2 + $0x29] sm:$0x1] %vm1606, 0.0
        %1627 = vst.msk [vmem:[#allocation2 + $0x41] sm:$0x1] %vm1606, 0.0
        %1628 = vst.msk [vmem:[#allocation2 + $0x59] sm:$0x1] %vm1606, 0.0
        %1629 = vst.msk [vmem:[#allocation2 + $0x71] sm:$0x1] %vm1606, 0.0
        %1630 = vst.msk [vmem:[#allocation2 + $0x89] sm:$0x1] %vm1606, 0.0
        %1631 = vst.msk [vmem:[#allocation2 + $0xa1] sm:$0x1] %vm1606, 0.0
        %1632 = vst.msk [vmem:[#allocation2 + $0xb9] sm:$0x1] %vm1606, 0.0
        %1633 = vst.msk [vmem:[#allocation2 + $0xd1] sm:$0x1] %vm1606, 0.0
        %1634 = vst.msk [vmem:[#allocation2 + $0xe9] sm:$0x1] %vm1606, 0.0
        %1635 = vst.msk [vmem:[#allocation2 + $0x101] sm:$0x1] %vm1606, 0.0
        %1636 = vst.msk [vmem:[#allocation2 + $0x119] sm:$0x1] %vm1606, 0.0
        %1637 = vst.msk [vmem:[#allocation2 + $0x131] sm:$0x1] %vm1606, 0.0
        %1638 = vst.msk [vmem:[#allocation2 + $0x149] sm:$0x1] %vm1606, 0.0
        %1639 = vst.msk [vmem:[#allocation2 + $0x161] sm:$0x1] %vm1606, 0.0
        %1640 = vst.msk [vmem:[#allocation2 + $0x179] sm:$0x1] %vm1606, 0.0
        %1641 = vst.msk [vmem:[#allocation2 + $0x191] sm:$0x1] %vm1606, 0.0
        %1642 = vst.msk [vmem:[#allocation2 + $0x1a9] sm:$0x1] %vm1606, 0.0
        %s1643 = scalar_lea.vmem [#allocation2], 24
        %1644 = vst.msk [vmem:[%s1643 + $0x1] sm:$0xff] %vm1597, %v1565
        %1645 = vst.msk [vmem:[%s1643 + $0x9] sm:$0xff] %vm1597, %v1566
        %1646 = vst.msk [vmem:[%s1643 + $0x19] sm:$0xff] %vm1597, %v1567
        %1647 = vst.msk [vmem:[%s1643 + $0x21] sm:$0xff] %vm1597, %v1568
        %1648 = vst.msk [vmem:[%s1643 + $0x31] sm:$0xff] %vm1597, %v1569
        %1649 = vst.msk [vmem:[%s1643 + $0x39] sm:$0xff] %vm1597, %v1570
        %1650 = vst.msk [vmem:[%s1643 + $0x49] sm:$0xff] %vm1597, %v1571
        %1651 = vst.msk [vmem:[%s1643 + $0x51] sm:$0xff] %vm1597, %v1572
        %1652 = vst.msk [vmem:[%s1643 + $0x61] sm:$0xff] %vm1597, %v1573
        %1653 = vst.msk [vmem:[%s1643 + $0x69] sm:$0xff] %vm1597, %v1574
        %1654 = vst.msk [vmem:[%s1643 + $0x79] sm:$0xff] %vm1597, %v1575
        %1655 = vst.msk [vmem:[%s1643 + $0x81] sm:$0xff] %vm1597, %v1576
        %1656 = vst.msk [vmem:[%s1643 + $0x91] sm:$0xff] %vm1597, %v1577
        %1657 = vst.msk [vmem:[%s1643 + $0x99] sm:$0xff] %vm1597, %v1578
        %1658 = vst.msk [vmem:[%s1643 + $0xa9] sm:$0xff] %vm1597, %v1579
        %1659 = vst.msk [vmem:[%s1643 + $0xb1] sm:$0xff] %vm1597, %v1580
        %1660 = vst.msk [vmem:[%s1643 + $0xc1] sm:$0xff] %vm1597, %v1581
        %1661 = vst.msk [vmem:[%s1643 + $0xc9] sm:$0xff] %vm1597, %v1582
        %1662 = vst.msk [vmem:[%s1643 + $0xd9] sm:$0xff] %vm1597, %v1583
        %1663 = vst.msk [vmem:[%s1643 + $0xe1] sm:$0xff] %vm1597, %v1584
        %1664 = vst.msk [vmem:[%s1643 + $0xf1] sm:$0xff] %vm1597, %v1585
        %1665 = vst.msk [vmem:[%s1643 + $0xf9] sm:$0xff] %vm1597, %v1586
        %1666 = vst.msk [vmem:[%s1643 + $0x109] sm:$0xff] %vm1597, %v1587
        %1667 = vst.msk [vmem:[%s1643 + $0x111] sm:$0xff] %vm1597, %v1588
        %1668 = vst.msk [vmem:[%s1643 + $0x121] sm:$0xff] %vm1597, %v1589
        %1669 = vst.msk [vmem:[%s1643 + $0x129] sm:$0xff] %vm1597, %v1590
        %1670 = vst.msk [vmem:[%s1643 + $0x139] sm:$0xff] %vm1597, %v1591
        %1671 = vst.msk [vmem:[%s1643 + $0x141] sm:$0xff] %vm1597, %v1592
        %1672 = vst.msk [vmem:[%s1643 + $0x151] sm:$0xff] %vm1597, %v1593
        %1673 = vst.msk [vmem:[%s1643 + $0x159] sm:$0xff] %vm1597, %v1594
        %1674 = vst.msk [vmem:[%s1643 + $0x169] sm:$0xff] %vm1597, %v1595
        %1675 = vst.msk [vmem:[%s1643 + $0x171] sm:$0xff] %vm1597, %v1596
        %v1676 = vld [vmem:[%s5] sm:$0x1]
        %v1677 = vld [vmem:[%s5 + $0x1] sm:$0x1]
        %v1678 = vld [vmem:[%s5 + $0x2] sm:$0x1]
        %v1679 = vld [vmem:[%s5 + $0x3] sm:$0x1]
        %v1680 = vld [vmem:[%s5 + $0x4] sm:$0x1]
        %v1681 = vld [vmem:[%s5 + $0x5] sm:$0x1]
        %v1682 = vld [vmem:[%s5 + $0x6] sm:$0x1]
        %v1683 = vld [vmem:[%s5 + $0x7] sm:$0x1]
        %v1684 = vld [vmem:[%s5 + $0x8] sm:$0x1]
        %v1686 = vlaneseq
        %v1687 = vshrl.u32 %v1686, 7
        %v1688 = vsub.s32 0, %v1687
        %v1689 = vrot.slane %v1680, %v1688
        %v1691 = vmul.f32 %v1565, %v1689
        %v1692 = vmul.f32 %v1566, %v1689
        %v1693 = vmul.f32 %v1567, %v1689
        %v1694 = vmul.f32 %v1568, %v1689
        %v1695 = vmul.f32 %v1569, %v1689
        %v1696 = vmul.f32 %v1570, %v1689
        %v1697 = vmul.f32 %v1571, %v1689
        %v1698 = vmul.f32 %v1572, %v1689
        %v1699 = vmul.f32 %v1573, %v1689
        %v1700 = vmul.f32 %v1574, %v1689
        %v1701 = vmul.f32 %v1575, %v1689
        %v1702 = vmul.f32 %v1576, %v1689
        %v1703 = vmul.f32 %v1577, %v1689
        %v1704 = vmul.f32 %v1578, %v1689
        %v1705 = vmul.f32 %v1579, %v1689
        %v1706 = vmul.f32 %v1580, %v1689
        %v1707 = vmul.f32 %v1581, %v1689
        %v1708 = vmul.f32 %v1582, %v1689
        %v1709 = vmul.f32 %v1583, %v1689
        %v1710 = vmul.f32 %v1584, %v1689
        %v1711 = vmul.f32 %v1585, %v1689
        %v1712 = vmul.f32 %v1586, %v1689
        %v1713 = vmul.f32 %v1587, %v1689
        %v1714 = vmul.f32 %v1588, %v1689
        %v1715 = vmul.f32 %v1589, %v1689
        %v1716 = vmul.f32 %v1590, %v1689
        %v1717 = vmul.f32 %v1591, %v1689
        %v1718 = vmul.f32 %v1592, %v1689
        %v1719 = vmul.f32 %v1593, %v1689
        %v1720 = vmul.f32 %v1594, %v1689
        %v1721 = vmul.f32 %v1595, %v1689
        %v1722 = vmul.f32 %v1596, %v1689
        %v1723 = vld [vmem:[#allocation2] sm:$0xff]
        %v1724 = vld [vmem:[#allocation2 + $0x8] sm:$0xff]
        %v1725 = vld [vmem:[#allocation2 + $0x18] sm:$0xff]
        %v1726 = vld [vmem:[#allocation2 + $0x20] sm:$0xff]
        %v1727 = vld [vmem:[#allocation2 + $0x30] sm:$0xff]
        %v1728 = vld [vmem:[#allocation2 + $0x38] sm:$0xff]
        %v1729 = vld [vmem:[#allocation2 + $0x48] sm:$0xff]
        %v1730 = vld [vmem:[#allocation2 + $0x50] sm:$0xff]
        %v1731 = vld [vmem:[#allocation2 + $0x60] sm:$0xff]
        %v1732 = vld [vmem:[#allocation2 + $0x68] sm:$0xff]
        %v1733 = vld [vmem:[#allocation2 + $0x78] sm:$0xff]
        %v1734 = vld [vmem:[#allocation2 + $0x80] sm:$0xff]
        %v1735 = vld [vmem:[#allocation2 + $0x90] sm:$0xff]
        %v1736 = vld [vmem:[#allocation2 + $0x98] sm:$0xff]
        %v1737 = vld [vmem:[#allocation2 + $0xa8] sm:$0xff]
        %v1738 = vld [vmem:[#allocation2 + $0xb0] sm:$0xff]
        %v1739 = vld [vmem:[#allocation2 + $0xc0] sm:$0xff]
        %v1740 = vld [vmem:[#allocation2 + $0xc8] sm:$0xff]
        %v1741 = vld [vmem:[#allocation2 + $0xd8] sm:$0xff]
        %v1742 = vld [vmem:[#allocation2 + $0xe0] sm:$0xff]
        %v1743 = vld [vmem:[#allocation2 + $0xf0] sm:$0xff]
        %v1744 = vld [vmem:[#allocation2 + $0xf8] sm:$0xff]
        %v1745 = vld [vmem:[#allocation2 + $0x108] sm:$0xff]
        %v1746 = vld [vmem:[#allocation2 + $0x110] sm:$0xff]
        %v1747 = vld [vmem:[#allocation2 + $0x120] sm:$0xff]
        %v1748 = vld [vmem:[#allocation2 + $0x128] sm:$0xff]
        %v1749 = vld [vmem:[#allocation2 + $0x138] sm:$0xff]
        %v1750 = vld [vmem:[#allocation2 + $0x140] sm:$0xff]
        %v1751 = vld [vmem:[#allocation2 + $0x150] sm:$0xff]
        %v1752 = vld [vmem:[#allocation2 + $0x158] sm:$0xff]
        %v1753 = vld [vmem:[#allocation2 + $0x168] sm:$0xff]
        %v1754 = vld [vmem:[#allocation2 + $0x170] sm:$0xff]
        %v1756 = vlaneseq
        %v1757 = vshrl.u32 %v1756, 7
        %v1758 = vsub.s32 0, %v1757
        %v1759 = vrot.slane %v1676, %v1758
        %v1761 = vmul.f32 %v1723, %v1759
        %v1762 = vmul.f32 %v1724, %v1759
        %v1763 = vmul.f32 %v1725, %v1759
        %v1764 = vmul.f32 %v1726, %v1759
        %v1765 = vmul.f32 %v1727, %v1759
        %v1766 = vmul.f32 %v1728, %v1759
        %v1767 = vmul.f32 %v1729, %v1759
        %v1768 = vmul.f32 %v1730, %v1759
        %v1769 = vmul.f32 %v1731, %v1759
        %v1770 = vmul.f32 %v1732, %v1759
        %v1771 = vmul.f32 %v1733, %v1759
        %v1772 = vmul.f32 %v1734, %v1759
        %v1773 = vmul.f32 %v1735, %v1759
        %v1774 = vmul.f32 %v1736, %v1759
        %v1775 = vmul.f32 %v1737, %v1759
        %v1776 = vmul.f32 %v1738, %v1759
        %v1777 = vmul.f32 %v1739, %v1759
        %v1778 = vmul.f32 %v1740, %v1759
        %v1779 = vmul.f32 %v1741, %v1759
        %v1780 = vmul.f32 %v1742, %v1759
        %v1781 = vmul.f32 %v1743, %v1759
        %v1782 = vmul.f32 %v1744, %v1759
        %v1783 = vmul.f32 %v1745, %v1759
        %v1784 = vmul.f32 %v1746, %v1759
        %v1785 = vmul.f32 %v1747, %v1759
        %v1786 = vmul.f32 %v1748, %v1759
        %v1787 = vmul.f32 %v1749, %v1759
        %v1788 = vmul.f32 %v1750, %v1759
        %v1789 = vmul.f32 %v1751, %v1759
        %v1790 = vmul.f32 %v1752, %v1759
        %v1791 = vmul.f32 %v1753, %v1759
        %v1792 = vmul.f32 %v1754, %v1759
        %v1793 = vld [vmem:[#allocation2 + $0x1] sm:$0xff]
        %v1794 = vld [vmem:[#allocation2 + $0x9] sm:$0xff]
        %v1795 = vld [vmem:[#allocation2 + $0x19] sm:$0xff]
        %v1796 = vld [vmem:[#allocation2 + $0x21] sm:$0xff]
        %v1797 = vld [vmem:[#allocation2 + $0x31] sm:$0xff]
        %v1798 = vld [vmem:[#allocation2 + $0x39] sm:$0xff]
        %v1799 = vld [vmem:[#allocation2 + $0x49] sm:$0xff]
        %v1800 = vld [vmem:[#allocation2 + $0x51] sm:$0xff]
        %v1801 = vld [vmem:[#allocation2 + $0x61] sm:$0xff]
        %v1802 = vld [vmem:[#allocation2 + $0x69] sm:$0xff]
        %v1803 = vld [vmem:[#allocation2 + $0x79] sm:$0xff]
        %v1804 = vld [vmem:[#allocation2 + $0x81] sm:$0xff]
        %v1805 = vld [vmem:[#allocation2 + $0x91] sm:$0xff]
        %v1806 = vld [vmem:[#allocation2 + $0x99] sm:$0xff]
        %v1807 = vld [vmem:[#allocation2 + $0xa9] sm:$0xff]
        %v1808 = vld [vmem:[#allocation2 + $0xb1] sm:$0xff]
        %v1809 = vld [vmem:[#allocation2 + $0xc1] sm:$0xff]
        %v1810 = vld [vmem:[#allocation2 + $0xc9] sm:$0xff]
        %v1811 = vld [vmem:[#allocation2 + $0xd9] sm:$0xff]
        %v1812 = vld [vmem:[#allocation2 + $0xe1] sm:$0xff]
        %v1813 = vld [vmem:[#allocation2 + $0xf1] sm:$0xff]
        %v1814 = vld [vmem:[#allocation2 + $0xf9] sm:$0xff]
        %v1815 = vld [vmem:[#allocation2 + $0x109] sm:$0xff]
        %v1816 = vld [vmem:[#allocation2 + $0x111] sm:$0xff]
        %v1817 = vld [vmem:[#allocation2 + $0x121] sm:$0xff]
        %v1818 = vld [vmem:[#allocation2 + $0x129] sm:$0xff]
        %v1819 = vld [vmem:[#allocation2 + $0x139] sm:$0xff]
        %v1820 = vld [vmem:[#allocation2 + $0x141] sm:$0xff]
        %v1821 = vld [vmem:[#allocation2 + $0x151] sm:$0xff]
        %v1822 = vld [vmem:[#allocation2 + $0x159] sm:$0xff]
        %v1823 = vld [vmem:[#allocation2 + $0x169] sm:$0xff]
        %v1824 = vld [vmem:[#allocation2 + $0x171] sm:$0xff]
        %v1826 = vlaneseq
        %v1827 = vshrl.u32 %v1826, 7
        %v1828 = vsub.s32 0, %v1827
        %v1829 = vrot.slane %v1677, %v1828
        %v1831 = vmul.f32 %v1793, %v1829
        %v1832 = vmul.f32 %v1794, %v1829
        %v1833 = vmul.f32 %v1795, %v1829
        %v1834 = vmul.f32 %v1796, %v1829
        %v1835 = vmul.f32 %v1797, %v1829
        %v1836 = vmul.f32 %v1798, %v1829
        %v1837 = vmul.f32 %v1799, %v1829
        %v1838 = vmul.f32 %v1800, %v1829
        %v1839 = vmul.f32 %v1801, %v1829
        %v1840 = vmul.f32 %v1802, %v1829
        %v1841 = vmul.f32 %v1803, %v1829
        %v1842 = vmul.f32 %v1804, %v1829
        %v1843 = vmul.f32 %v1805, %v1829
        %v1844 = vmul.f32 %v1806, %v1829
        %v1845 = vmul.f32 %v1807, %v1829
        %v1846 = vmul.f32 %v1808, %v1829
        %v1847 = vmul.f32 %v1809, %v1829
        %v1848 = vmul.f32 %v1810, %v1829
        %v1849 = vmul.f32 %v1811, %v1829
        %v1850 = vmul.f32 %v1812, %v1829
        %v1851 = vmul.f32 %v1813, %v1829
        %v1852 = vmul.f32 %v1814, %v1829
        %v1853 = vmul.f32 %v1815, %v1829
        %v1854 = vmul.f32 %v1816, %v1829
        %v1855 = vmul.f32 %v1817, %v1829
        %v1856 = vmul.f32 %v1818, %v1829
        %v1857 = vmul.f32 %v1819, %v1829
        %v1858 = vmul.f32 %v1820, %v1829
        %v1859 = vmul.f32 %v1821, %v1829
        %v1860 = vmul.f32 %v1822, %v1829
        %v1861 = vmul.f32 %v1823, %v1829
        %v1862 = vmul.f32 %v1824, %v1829
        %v1863 = vadd.f32 %v1691, %v1831
        %v1864 = vadd.f32 %v1692, %v1832
        %v1865 = vadd.f32 %v1693, %v1833
        %v1866 = vadd.f32 %v1694, %v1834
        %v1867 = vadd.f32 %v1695, %v1835
        %v1868 = vadd.f32 %v1696, %v1836
        %v1869 = vadd.f32 %v1697, %v1837
        %v1870 = vadd.f32 %v1698, %v1838
        %v1871 = vadd.f32 %v1699, %v1839
        %v1872 = vadd.f32 %v1700, %v1840
        %v1873 = vadd.f32 %v1701, %v1841
        %v1874 = vadd.f32 %v1702, %v1842
        %v1875 = vadd.f32 %v1703, %v1843
        %v1876 = vadd.f32 %v1704, %v1844
        %v1877 = vadd.f32 %v1705, %v1845
        %v1878 = vadd.f32 %v1706, %v1846
        %v1879 = vadd.f32 %v1707, %v1847
        %v1880 = vadd.f32 %v1708, %v1848
        %v1881 = vadd.f32 %v1709, %v1849
        %v1882 = vadd.f32 %v1710, %v1850
        %v1883 = vadd.f32 %v1711, %v1851
        %v1884 = vadd.f32 %v1712, %v1852
        %v1885 = vadd.f32 %v1713, %v1853
        %v1886 = vadd.f32 %v1714, %v1854
        %v1887 = vadd.f32 %v1715, %v1855
        %v1888 = vadd.f32 %v1716, %v1856
        %v1889 = vadd.f32 %v1717, %v1857
        %v1890 = vadd.f32 %v1718, %v1858
        %v1891 = vadd.f32 %v1719, %v1859
        %v1892 = vadd.f32 %v1720, %v1860
        %v1893 = vadd.f32 %v1721, %v1861
        %v1894 = vadd.f32 %v1722, %v1862
        %v1895 = vld [vmem:[#allocation2 + $0x2] sm:$0xff]
        %v1896 = vld [vmem:[#allocation2 + $0xa] sm:$0xff]
        %v1897 = vld [vmem:[#allocation2 + $0x1a] sm:$0xff]
        %v1898 = vld [vmem:[#allocation2 + $0x22] sm:$0xff]
        %v1899 = vld [vmem:[#allocation2 + $0x32] sm:$0xff]
        %v1900 = vld [vmem:[#allocation2 + $0x3a] sm:$0xff]
        %v1901 = vld [vmem:[#allocation2 + $0x4a] sm:$0xff]
        %v1902 = vld [vmem:[#allocation2 + $0x52] sm:$0xff]
        %v1903 = vld [vmem:[#allocation2 + $0x62] sm:$0xff]
        %v1904 = vld [vmem:[#allocation2 + $0x6a] sm:$0xff]
        %v1905 = vld [vmem:[#allocation2 + $0x7a] sm:$0xff]
        %v1906 = vld [vmem:[#allocation2 + $0x82] sm:$0xff]
        %v1907 = vld [vmem:[#allocation2 + $0x92] sm:$0xff]
        %v1908 = vld [vmem:[#allocation2 + $0x9a] sm:$0xff]
        %v1909 = vld [vmem:[#allocation2 + $0xaa] sm:$0xff]
        %v1910 = vld [vmem:[#allocation2 + $0xb2] sm:$0xff]
        %v1911 = vld [vmem:[#allocation2 + $0xc2] sm:$0xff]
        %v1912 = vld [vmem:[#allocation2 + $0xca] sm:$0xff]
        %v1913 = vld [vmem:[#allocation2 + $0xda] sm:$0xff]
        %v1914 = vld [vmem:[#allocation2 + $0xe2] sm:$0xff]
        %v1915 = vld [vmem:[#allocation2 + $0xf2] sm:$0xff]
        %v1916 = vld [vmem:[#allocation2 + $0xfa] sm:$0xff]
        %v1917 = vld [vmem:[#allocation2 + $0x10a] sm:$0xff]
        %v1918 = vld [vmem:[#allocation2 + $0x112] sm:$0xff]
        %v1919 = vld [vmem:[#allocation2 + $0x122] sm:$0xff]
        %v1920 = vld [vmem:[#allocation2 + $0x12a] sm:$0xff]
        %v1921 = vld [vmem:[#allocation2 + $0x13a] sm:$0xff]
        %v1922 = vld [vmem:[#allocation2 + $0x142] sm:$0xff]
        %v1923 = vld [vmem:[#allocation2 + $0x152] sm:$0xff]
        %v1924 = vld [vmem:[#allocation2 + $0x15a] sm:$0xff]
        %v1925 = vld [vmem:[#allocation2 + $0x16a] sm:$0xff]
        %v1926 = vld [vmem:[#allocation2 + $0x172] sm:$0xff]
        %v1928 = vlaneseq
        %v1929 = vshrl.u32 %v1928, 7
        %v1930 = vsub.s32 0, %v1929
        %v1931 = vrot.slane %v1678, %v1930
        %v1933 = vmul.f32 %v1895, %v1931
        %v1934 = vmul.f32 %v1896, %v1931
        %v1935 = vmul.f32 %v1897, %v1931
        %v1936 = vmul.f32 %v1898, %v1931
        %v1937 = vmul.f32 %v1899, %v1931
        %v1938 = vmul.f32 %v1900, %v1931
        %v1939 = vmul.f32 %v1901, %v1931
        %v1940 = vmul.f32 %v1902, %v1931
        %v1941 = vmul.f32 %v1903, %v1931
        %v1942 = vmul.f32 %v1904, %v1931
        %v1943 = vmul.f32 %v1905, %v1931
        %v1944 = vmul.f32 %v1906, %v1931
        %v1945 = vmul.f32 %v1907, %v1931
        %v1946 = vmul.f32 %v1908, %v1931
        %v1947 = vmul.f32 %v1909, %v1931
        %v1948 = vmul.f32 %v1910, %v1931
        %v1949 = vmul.f32 %v1911, %v1931
        %v1950 = vmul.f32 %v1912, %v1931
        %v1951 = vmul.f32 %v1913, %v1931
        %v1952 = vmul.f32 %v1914, %v1931
        %v1953 = vmul.f32 %v1915, %v1931
        %v1954 = vmul.f32 %v1916, %v1931
        %v1955 = vmul.f32 %v1917, %v1931
        %v1956 = vmul.f32 %v1918, %v1931
        %v1957 = vmul.f32 %v1919, %v1931
        %v1958 = vmul.f32 %v1920, %v1931
        %v1959 = vmul.f32 %v1921, %v1931
        %v1960 = vmul.f32 %v1922, %v1931
        %v1961 = vmul.f32 %v1923, %v1931
        %v1962 = vmul.f32 %v1924, %v1931
        %v1963 = vmul.f32 %v1925, %v1931
        %v1964 = vmul.f32 %v1926, %v1931
        %v1965 = vadd.f32 %v1761, %v1933
        %v1966 = vadd.f32 %v1762, %v1934
        %v1967 = vadd.f32 %v1763, %v1935
        %v1968 = vadd.f32 %v1764, %v1936
        %v1969 = vadd.f32 %v1765, %v1937
        %v1970 = vadd.f32 %v1766, %v1938
        %v1971 = vadd.f32 %v1767, %v1939
        %v1972 = vadd.f32 %v1768, %v1940
        %v1973 = vadd.f32 %v1769, %v1941
        %v1974 = vadd.f32 %v1770, %v1942
        %v1975 = vadd.f32 %v1771, %v1943
        %v1976 = vadd.f32 %v1772, %v1944
        %v1977 = vadd.f32 %v1773, %v1945
        %v1978 = vadd.f32 %v1774, %v1946
        %v1979 = vadd.f32 %v1775, %v1947
        %v1980 = vadd.f32 %v1776, %v1948
        %v1981 = vadd.f32 %v1777, %v1949
        %v1982 = vadd.f32 %v1778, %v1950
        %v1983 = vadd.f32 %v1779, %v1951
        %v1984 = vadd.f32 %v1780, %v1952
        %v1985 = vadd.f32 %v1781, %v1953
        %v1986 = vadd.f32 %v1782, %v1954
        %v1987 = vadd.f32 %v1783, %v1955
        %v1988 = vadd.f32 %v1784, %v1956
        %v1989 = vadd.f32 %v1785, %v1957
        %v1990 = vadd.f32 %v1786, %v1958
        %v1991 = vadd.f32 %v1787, %v1959
        %v1992 = vadd.f32 %v1788, %v1960
        %v1993 = vadd.f32 %v1789, %v1961
        %v1994 = vadd.f32 %v1790, %v1962
        %v1995 = vadd.f32 %v1791, %v1963
        %v1996 = vadd.f32 %v1792, %v1964
        %v1997 = vld [vmem:[%s1643] sm:$0xff]
        %v1998 = vld [vmem:[%s1643 + $0x8] sm:$0xff]
        %v1999 = vld [vmem:[%s1643 + $0x18] sm:$0xff]
        %v2000 = vld [vmem:[%s1643 + $0x20] sm:$0xff]
        %v2001 = vld [vmem:[%s1643 + $0x30] sm:$0xff]
        %v2002 = vld [vmem:[%s1643 + $0x38] sm:$0xff]
        %v2003 = vld [vmem:[%s1643 + $0x48] sm:$0xff]
        %v2004 = vld [vmem:[%s1643 + $0x50] sm:$0xff]
        %v2005 = vld [vmem:[%s1643 + $0x60] sm:$0xff]
        %v2006 = vld [vmem:[%s1643 + $0x68] sm:$0xff]
        %v2007 = vld [vmem:[%s1643 + $0x78] sm:$0xff]
        %v2008 = vld [vmem:[%s1643 + $0x80] sm:$0xff]
        %v2009 = vld [vmem:[%s1643 + $0x90] sm:$0xff]
        %v2010 = vld [vmem:[%s1643 + $0x98] sm:$0xff]
        %v2011 = vld [vmem:[%s1643 + $0xa8] sm:$0xff]
        %v2012 = vld [vmem:[%s1643 + $0xb0] sm:$0xff]
        %v2013 = vld [vmem:[%s1643 + $0xc0] sm:$0xff]
        %v2014 = vld [vmem:[%s1643 + $0xc8] sm:$0xff]
        %v2015 = vld [vmem:[%s1643 + $0xd8] sm:$0xff]
        %v2016 = vld [vmem:[%s1643 + $0xe0] sm:$0xff]
        %v2017 = vld [vmem:[%s1643 + $0xf0] sm:$0xff]
        %v2018 = vld [vmem:[%s1643 + $0xf8] sm:$0xff]
        %v2019 = vld [vmem:[%s1643 + $0x108] sm:$0xff]
        %v2020 = vld [vmem:[%s1643 + $0x110] sm:$0xff]
        %v2021 = vld [vmem:[%s1643 + $0x120] sm:$0xff]
        %v2022 = vld [vmem:[%s1643 + $0x128] sm:$0xff]
        %v2023 = vld [vmem:[%s1643 + $0x138] sm:$0xff]
        %v2024 = vld [vmem:[%s1643 + $0x140] sm:$0xff]
        %v2025 = vld [vmem:[%s1643 + $0x150] sm:$0xff]
        %v2026 = vld [vmem:[%s1643 + $0x158] sm:$0xff]
        %v2027 = vld [vmem:[%s1643 + $0x168] sm:$0xff]
        %v2028 = vld [vmem:[%s1643 + $0x170] sm:$0xff]
        %v2030 = vlaneseq
        %v2031 = vshrl.u32 %v2030, 7
        %v2032 = vsub.s32 0, %v2031
        %v2033 = vrot.slane %v1679, %v2032
        %v2035 = vmul.f32 %v1997, %v2033
        %v2036 = vmul.f32 %v1998, %v2033
        %v2037 = vmul.f32 %v1999, %v2033
        %v2038 = vmul.f32 %v2000, %v2033
        %v2039 = vmul.f32 %v2001, %v2033
        %v2040 = vmul.f32 %v2002, %v2033
        %v2041 = vmul.f32 %v2003, %v2033
        %v2042 = vmul.f32 %v2004, %v2033
        %v2043 = vmul.f32 %v2005, %v2033
        %v2044 = vmul.f32 %v2006, %v2033
        %v2045 = vmul.f32 %v2007, %v2033
        %v2046 = vmul.f32 %v2008, %v2033
        %v2047 = vmul.f32 %v2009, %v2033
        %v2048 = vmul.f32 %v2010, %v2033
        %v2049 = vmul.f32 %v2011, %v2033
        %v2050 = vmul.f32 %v2012, %v2033
        %v2051 = vmul.f32 %v2013, %v2033
        %v2052 = vmul.f32 %v2014, %v2033
        %v2053 = vmul.f32 %v2015, %v2033
        %v2054 = vmul.f32 %v2016, %v2033
        %v2055 = vmul.f32 %v2017, %v2033
        %v2056 = vmul.f32 %v2018, %v2033
        %v2057 = vmul.f32 %v2019, %v2033
        %v2058 = vmul.f32 %v2020, %v2033
        %v2059 = vmul.f32 %v2021, %v2033
        %v2060 = vmul.f32 %v2022, %v2033
        %v2061 = vmul.f32 %v2023, %v2033
        %v2062 = vmul.f32 %v2024, %v2033
        %v2063 = vmul.f32 %v2025, %v2033
        %v2064 = vmul.f32 %v2026, %v2033
        %v2065 = vmul.f32 %v2027, %v2033
        %v2066 = vmul.f32 %v2028, %v2033
        %v2067 = vadd.f32 %v1863, %v2035
        %v2068 = vadd.f32 %v1864, %v2036
        %v2069 = vadd.f32 %v1865, %v2037
        %v2070 = vadd.f32 %v1866, %v2038
        %v2071 = vadd.f32 %v1867, %v2039
        %v2072 = vadd.f32 %v1868, %v2040
        %v2073 = vadd.f32 %v1869, %v2041
        %v2074 = vadd.f32 %v1870, %v2042
        %v2075 = vadd.f32 %v1871, %v2043
        %v2076 = vadd.f32 %v1872, %v2044
        %v2077 = vadd.f32 %v1873, %v2045
        %v2078 = vadd.f32 %v1874, %v2046
        %v2079 = vadd.f32 %v1875, %v2047
        %v2080 = vadd.f32 %v1876, %v2048
        %v2081 = vadd.f32 %v1877, %v2049
        %v2082 = vadd.f32 %v1878, %v2050
        %v2083 = vadd.f32 %v1879, %v2051
        %v2084 = vadd.f32 %v1880, %v2052
        %v2085 = vadd.f32 %v1881, %v2053
        %v2086 = vadd.f32 %v1882, %v2054
        %v2087 = vadd.f32 %v1883, %v2055
        %v2088 = vadd.f32 %v1884, %v2056
        %v2089 = vadd.f32 %v1885, %v2057
        %v2090 = vadd.f32 %v1886, %v2058
        %v2091 = vadd.f32 %v1887, %v2059
        %v2092 = vadd.f32 %v1888, %v2060
        %v2093 = vadd.f32 %v1889, %v2061
        %v2094 = vadd.f32 %v1890, %v2062
        %v2095 = vadd.f32 %v1891, %v2063
        %v2096 = vadd.f32 %v1892, %v2064
        %v2097 = vadd.f32 %v1893, %v2065
        %v2098 = vadd.f32 %v1894, %v2066
        %v2099 = vld [vmem:[%s1643 + $0x2] sm:$0xff]
        %v2100 = vld [vmem:[%s1643 + $0xa] sm:$0xff]
        %v2101 = vld [vmem:[%s1643 + $0x1a] sm:$0xff]
        %v2102 = vld [vmem:[%s1643 + $0x22] sm:$0xff]
        %v2103 = vld [vmem:[%s1643 + $0x32] sm:$0xff]
        %v2104 = vld [vmem:[%s1643 + $0x3a] sm:$0xff]
        %v2105 = vld [vmem:[%s1643 + $0x4a] sm:$0xff]
        %v2106 = vld [vmem:[%s1643 + $0x52] sm:$0xff]
        %v2107 = vld [vmem:[%s1643 + $0x62] sm:$0xff]
        %v2108 = vld [vmem:[%s1643 + $0x6a] sm:$0xff]
        %v2109 = vld [vmem:[%s1643 + $0x7a] sm:$0xff]
        %v2110 = vld [vmem:[%s1643 + $0x82] sm:$0xff]
        %v2111 = vld [vmem:[%s1643 + $0x92] sm:$0xff]
        %v2112 = vld [vmem:[%s1643 + $0x9a] sm:$0xff]
        %v2113 = vld [vmem:[%s1643 + $0xaa] sm:$0xff]
        %v2114 = vld [vmem:[%s1643 + $0xb2] sm:$0xff]
        %v2115 = vld [vmem:[%s1643 + $0xc2] sm:$0xff]
        %v2116 = vld [vmem:[%s1643 + $0xca] sm:$0xff]
        %v2117 = vld [vmem:[%s1643 + $0xda] sm:$0xff]
        %v2118 = vld [vmem:[%s1643 + $0xe2] sm:$0xff]
        %v2119 = vld [vmem:[%s1643 + $0xf2] sm:$0xff]
        %v2120 = vld [vmem:[%s1643 + $0xfa] sm:$0xff]
        %v2121 = vld [vmem:[%s1643 + $0x10a] sm:$0xff]
        %v2122 = vld [vmem:[%s1643 + $0x112] sm:$0xff]
        %v2123 = vld [vmem:[%s1643 + $0x122] sm:$0xff]
        %v2124 = vld [vmem:[%s1643 + $0x12a] sm:$0xff]
        %v2125 = vld [vmem:[%s1643 + $0x13a] sm:$0xff]
        %v2126 = vld [vmem:[%s1643 + $0x142] sm:$0xff]
        %v2127 = vld [vmem:[%s1643 + $0x152] sm:$0xff]
        %v2128 = vld [vmem:[%s1643 + $0x15a] sm:$0xff]
        %v2129 = vld [vmem:[%s1643 + $0x16a] sm:$0xff]
        %v2130 = vld [vmem:[%s1643 + $0x172] sm:$0xff]
        %v2132 = vlaneseq
        %v2133 = vshrl.u32 %v2132, 7
        %v2134 = vsub.s32 0, %v2133
        %v2135 = vrot.slane %v1681, %v2134
        %v2137 = vmul.f32 %v2099, %v2135
        %v2138 = vmul.f32 %v2100, %v2135
        %v2139 = vmul.f32 %v2101, %v2135
        %v2140 = vmul.f32 %v2102, %v2135
        %v2141 = vmul.f32 %v2103, %v2135
        %v2142 = vmul.f32 %v2104, %v2135
        %v2143 = vmul.f32 %v2105, %v2135
        %v2144 = vmul.f32 %v2106, %v2135
        %v2145 = vmul.f32 %v2107, %v2135
        %v2146 = vmul.f32 %v2108, %v2135
        %v2147 = vmul.f32 %v2109, %v2135
        %v2148 = vmul.f32 %v2110, %v2135
        %v2149 = vmul.f32 %v2111, %v2135
        %v2150 = vmul.f32 %v2112, %v2135
        %v2151 = vmul.f32 %v2113, %v2135
        %v2152 = vmul.f32 %v2114, %v2135
        %v2153 = vmul.f32 %v2115, %v2135
        %v2154 = vmul.f32 %v2116, %v2135
        %v2155 = vmul.f32 %v2117, %v2135
        %v2156 = vmul.f32 %v2118, %v2135
        %v2157 = vmul.f32 %v2119, %v2135
        %v2158 = vmul.f32 %v2120, %v2135
        %v2159 = vmul.f32 %v2121, %v2135
        %v2160 = vmul.f32 %v2122, %v2135
        %v2161 = vmul.f32 %v2123, %v2135
        %v2162 = vmul.f32 %v2124, %v2135
        %v2163 = vmul.f32 %v2125, %v2135
        %v2164 = vmul.f32 %v2126, %v2135
        %v2165 = vmul.f32 %v2127, %v2135
        %v2166 = vmul.f32 %v2128, %v2135
        %v2167 = vmul.f32 %v2129, %v2135
        %v2168 = vmul.f32 %v2130, %v2135
        %v2169 = vadd.f32 %v1965, %v2137
        %v2170 = vadd.f32 %v1966, %v2138
        %v2171 = vadd.f32 %v1967, %v2139
        %v2172 = vadd.f32 %v1968, %v2140
        %v2173 = vadd.f32 %v1969, %v2141
        %v2174 = vadd.f32 %v1970, %v2142
        %v2175 = vadd.f32 %v1971, %v2143
        %v2176 = vadd.f32 %v1972, %v2144
        %v2177 = vadd.f32 %v1973, %v2145
        %v2178 = vadd.f32 %v1974, %v2146
        %v2179 = vadd.f32 %v1975, %v2147
        %v2180 = vadd.f32 %v1976, %v2148
        %v2181 = vadd.f32 %v1977, %v2149
        %v2182 = vadd.f32 %v1978, %v2150
        %v2183 = vadd.f32 %v1979, %v2151
        %v2184 = vadd.f32 %v1980, %v2152
        %v2185 = vadd.f32 %v1981, %v2153
        %v2186 = vadd.f32 %v1982, %v2154
        %v2187 = vadd.f32 %v1983, %v2155
        %v2188 = vadd.f32 %v1984, %v2156
        %v2189 = vadd.f32 %v1985, %v2157
        %v2190 = vadd.f32 %v1986, %v2158
        %v2191 = vadd.f32 %v1987, %v2159
        %v2192 = vadd.f32 %v1988, %v2160
        %v2193 = vadd.f32 %v1989, %v2161
        %v2194 = vadd.f32 %v1990, %v2162
        %v2195 = vadd.f32 %v1991, %v2163
        %v2196 = vadd.f32 %v1992, %v2164
        %v2197 = vadd.f32 %v1993, %v2165
        %v2198 = vadd.f32 %v1994, %v2166
        %v2199 = vadd.f32 %v1995, %v2167
        %v2200 = vadd.f32 %v1996, %v2168
        %s2201 = scalar_lea.vmem [#allocation2], 48
        %v2202 = vld [vmem:[%s2201] sm:$0xff]
        %v2203 = vld [vmem:[%s2201 + $0x8] sm:$0xff]
        %v2204 = vld [vmem:[%s2201 + $0x18] sm:$0xff]
        %v2205 = vld [vmem:[%s2201 + $0x20] sm:$0xff]
        %v2206 = vld [vmem:[%s2201 + $0x30] sm:$0xff]
        %v2207 = vld [vmem:[%s2201 + $0x38] sm:$0xff]
        %v2208 = vld [vmem:[%s2201 + $0x48] sm:$0xff]
        %v2209 = vld [vmem:[%s2201 + $0x50] sm:$0xff]
        %v2210 = vld [vmem:[%s2201 + $0x60] sm:$0xff]
        %v2211 = vld [vmem:[%s2201 + $0x68] sm:$0xff]
        %v2212 = vld [vmem:[%s2201 + $0x78] sm:$0xff]
        %v2213 = vld [vmem:[%s2201 + $0x80] sm:$0xff]
        %v2214 = vld [vmem:[%s2201 + $0x90] sm:$0xff]
        %v2215 = vld [vmem:[%s2201 + $0x98] sm:$0xff]
        %v2216 = vld [vmem:[%s2201 + $0xa8] sm:$0xff]
        %v2217 = vld [vmem:[%s2201 + $0xb0] sm:$0xff]
        %v2218 = vld [vmem:[%s2201 + $0xc0] sm:$0xff]
        %v2219 = vld [vmem:[%s2201 + $0xc8] sm:$0xff]
        %v2220 = vld [vmem:[%s2201 + $0xd8] sm:$0xff]
        %v2221 = vld [vmem:[%s2201 + $0xe0] sm:$0xff]
        %v2222 = vld [vmem:[%s2201 + $0xf0] sm:$0xff]
        %v2223 = vld [vmem:[%s2201 + $0xf8] sm:$0xff]
        %v2224 = vld [vmem:[%s2201 + $0x108] sm:$0xff]
        %v2225 = vld [vmem:[%s2201 + $0x110] sm:$0xff]
        %v2226 = vld [vmem:[%s2201 + $0x120] sm:$0xff]
        %v2227 = vld [vmem:[%s2201 + $0x128] sm:$0xff]
        %v2228 = vld [vmem:[%s2201 + $0x138] sm:$0xff]
        %v2229 = vld [vmem:[%s2201 + $0x140] sm:$0xff]
        %v2230 = vld [vmem:[%s2201 + $0x150] sm:$0xff]
        %v2231 = vld [vmem:[%s2201 + $0x158] sm:$0xff]
        %v2232 = vld [vmem:[%s2201 + $0x168] sm:$0xff]
        %v2233 = vld [vmem:[%s2201 + $0x170] sm:$0xff]
        %v2235 = vlaneseq
        %v2236 = vshrl.u32 %v2235, 7
        %v2237 = vsub.s32 0, %v2236
        %v2238 = vrot.slane %v1682, %v2237
        %v2240 = vmul.f32 %v2202, %v2238
        %v2241 = vmul.f32 %v2203, %v2238
        %v2242 = vmul.f32 %v2204, %v2238
        %v2243 = vmul.f32 %v2205, %v2238
        %v2244 = vmul.f32 %v2206, %v2238
        %v2245 = vmul.f32 %v2207, %v2238
        %v2246 = vmul.f32 %v2208, %v2238
        %v2247 = vmul.f32 %v2209, %v2238
        %v2248 = vmul.f32 %v2210, %v2238
        %v2249 = vmul.f32 %v2211, %v2238
        %v2250 = vmul.f32 %v2212, %v2238
        %v2251 = vmul.f32 %v2213, %v2238
        %v2252 = vmul.f32 %v2214, %v2238
        %v2253 = vmul.f32 %v2215, %v2238
        %v2254 = vmul.f32 %v2216, %v2238
        %v2255 = vmul.f32 %v2217, %v2238
        %v2256 = vmul.f32 %v2218, %v2238
        %v2257 = vmul.f32 %v2219, %v2238
        %v2258 = vmul.f32 %v2220, %v2238
        %v2259 = vmul.f32 %v2221, %v2238
        %v2260 = vmul.f32 %v2222, %v2238
        %v2261 = vmul.f32 %v2223, %v2238
        %v2262 = vmul.f32 %v2224, %v2238
        %v2263 = vmul.f32 %v2225, %v2238
        %v2264 = vmul.f32 %v2226, %v2238
        %v2265 = vmul.f32 %v2227, %v2238
        %v2266 = vmul.f32 %v2228, %v2238
        %v2267 = vmul.f32 %v2229, %v2238
        %v2268 = vmul.f32 %v2230, %v2238
        %v2269 = vmul.f32 %v2231, %v2238
        %v2270 = vmul.f32 %v2232, %v2238
        %v2271 = vmul.f32 %v2233, %v2238
        %v2272 = vadd.f32 %v2067, %v2240
        %v2273 = vadd.f32 %v2068, %v2241
        %v2274 = vadd.f32 %v2069, %v2242
        %v2275 = vadd.f32 %v2070, %v2243
        %v2276 = vadd.f32 %v2071, %v2244
        %v2277 = vadd.f32 %v2072, %v2245
        %v2278 = vadd.f32 %v2073, %v2246
        %v2279 = vadd.f32 %v2074, %v2247
        %v2280 = vadd.f32 %v2075, %v2248
        %v2281 = vadd.f32 %v2076, %v2249
        %v2282 = vadd.f32 %v2077, %v2250
        %v2283 = vadd.f32 %v2078, %v2251
        %v2284 = vadd.f32 %v2079, %v2252
        %v2285 = vadd.f32 %v2080, %v2253
        %v2286 = vadd.f32 %v2081, %v2254
        %v2287 = vadd.f32 %v2082, %v2255
        %v2288 = vadd.f32 %v2083, %v2256
        %v2289 = vadd.f32 %v2084, %v2257
        %v2290 = vadd.f32 %v2085, %v2258
        %v2291 = vadd.f32 %v2086, %v2259
        %v2292 = vadd.f32 %v2087, %v2260
        %v2293 = vadd.f32 %v2088, %v2261
        %v2294 = vadd.f32 %v2089, %v2262
        %v2295 = vadd.f32 %v2090, %v2263
        %v2296 = vadd.f32 %v2091, %v2264
        %v2297 = vadd.f32 %v2092, %v2265
        %v2298 = vadd.f32 %v2093, %v2266
        %v2299 = vadd.f32 %v2094, %v2267
        %v2300 = vadd.f32 %v2095, %v2268
        %v2301 = vadd.f32 %v2096, %v2269
        %v2302 = vadd.f32 %v2097, %v2270
        %v2303 = vadd.f32 %v2098, %v2271
        %v2304 = vld [vmem:[%s2201 + $0x1] sm:$0xff]
        %v2305 = vld [vmem:[%s2201 + $0x9] sm:$0xff]
        %v2306 = vld [vmem:[%s2201 + $0x19] sm:$0xff]
        %v2307 = vld [vmem:[%s2201 + $0x21] sm:$0xff]
        %v2308 = vld [vmem:[%s2201 + $0x31] sm:$0xff]
        %v2309 = vld [vmem:[%s2201 + $0x39] sm:$0xff]
        %v2310 = vld [vmem:[%s2201 + $0x49] sm:$0xff]
        %v2311 = vld [vmem:[%s2201 + $0x51] sm:$0xff]
        %v2312 = vld [vmem:[%s2201 + $0x61] sm:$0xff]
        %v2313 = vld [vmem:[%s2201 + $0x69] sm:$0xff]
        %v2314 = vld [vmem:[%s2201 + $0x79] sm:$0xff]
        %v2315 = vld [vmem:[%s2201 + $0x81] sm:$0xff]
        %v2316 = vld [vmem:[%s2201 + $0x91] sm:$0xff]
        %v2317 = vld [vmem:[%s2201 + $0x99] sm:$0xff]
        %v2318 = vld [vmem:[%s2201 + $0xa9] sm:$0xff]
        %v2319 = vld [vmem:[%s2201 + $0xb1] sm:$0xff]
        %v2320 = vld [vmem:[%s2201 + $0xc1] sm:$0xff]
        %v2321 = vld [vmem:[%s2201 + $0xc9] sm:$0xff]
        %v2322 = vld [vmem:[%s2201 + $0xd9] sm:$0xff]
        %v2323 = vld [vmem:[%s2201 + $0xe1] sm:$0xff]
        %v2324 = vld [vmem:[%s2201 + $0xf1] sm:$0xff]
        %v2325 = vld [vmem:[%s2201 + $0xf9] sm:$0xff]
        %v2326 = vld [vmem:[%s2201 + $0x109] sm:$0xff]
        %v2327 = vld [vmem:[%s2201 + $0x111] sm:$0xff]
        %v2328 = vld [vmem:[%s2201 + $0x121] sm:$0xff]
        %v2329 = vld [vmem:[%s2201 + $0x129] sm:$0xff]
        %v2330 = vld [vmem:[%s2201 + $0x139] sm:$0xff]
        %v2331 = vld [vmem:[%s2201 + $0x141] sm:$0xff]
        %v2332 = vld [vmem:[%s2201 + $0x151] sm:$0xff]
        %v2333 = vld [vmem:[%s2201 + $0x159] sm:$0xff]
        %v2334 = vld [vmem:[%s2201 + $0x169] sm:$0xff]
        %v2335 = vld [vmem:[%s2201 + $0x171] sm:$0xff]
        %v2337 = vlaneseq
        %v2338 = vshrl.u32 %v2337, 7
        %v2339 = vsub.s32 0, %v2338
        %v2340 = vrot.slane %v1683, %v2339
        %v2342 = vmul.f32 %v2304, %v2340
        %v2343 = vmul.f32 %v2305, %v2340
        %v2344 = vmul.f32 %v2306, %v2340
        %v2345 = vmul.f32 %v2307, %v2340
        %v2346 = vmul.f32 %v2308, %v2340
        %v2347 = vmul.f32 %v2309, %v2340
        %v2348 = vmul.f32 %v2310, %v2340
        %v2349 = vmul.f32 %v2311, %v2340
        %v2350 = vmul.f32 %v2312, %v2340
        %v2351 = vmul.f32 %v2313, %v2340
        %v2352 = vmul.f32 %v2314, %v2340
        %v2353 = vmul.f32 %v2315, %v2340
        %v2354 = vmul.f32 %v2316, %v2340
        %v2355 = vmul.f32 %v2317, %v2340
        %v2356 = vmul.f32 %v2318, %v2340
        %v2357 = vmul.f32 %v2319, %v2340
        %v2358 = vmul.f32 %v2320, %v2340
        %v2359 = vmul.f32 %v2321, %v2340
        %v2360 = vmul.f32 %v2322, %v2340
        %v2361 = vmul.f32 %v2323, %v2340
        %v2362 = vmul.f32 %v2324, %v2340
        %v2363 = vmul.f32 %v2325, %v2340
        %v2364 = vmul.f32 %v2326, %v2340
        %v2365 = vmul.f32 %v2327, %v2340
        %v2366 = vmul.f32 %v2328, %v2340
        %v2367 = vmul.f32 %v2329, %v2340
        %v2368 = vmul.f32 %v2330, %v2340
        %v2369 = vmul.f32 %v2331, %v2340
        %v2370 = vmul.f32 %v2332, %v2340
        %v2371 = vmul.f32 %v2333, %v2340
        %v2372 = vmul.f32 %v2334, %v2340
        %v2373 = vmul.f32 %v2335, %v2340
        %v2374 = vadd.f32 %v2169, %v2342
        %v2375 = vadd.f32 %v2170, %v2343
        %v2376 = vadd.f32 %v2171, %v2344
        %v2377 = vadd.f32 %v2172, %v2345
        %v2378 = vadd.f32 %v2173, %v2346
        %v2379 = vadd.f32 %v2174, %v2347
        %v2380 = vadd.f32 %v2175, %v2348
        %v2381 = vadd.f32 %v2176, %v2349
        %v2382 = vadd.f32 %v2177, %v2350
        %v2383 = vadd.f32 %v2178, %v2351
        %v2384 = vadd.f32 %v2179, %v2352
        %v2385 = vadd.f32 %v2180, %v2353
        %v2386 = vadd.f32 %v2181, %v2354
        %v2387 = vadd.f32 %v2182, %v2355
        %v2388 = vadd.f32 %v2183, %v2356
        %v2389 = vadd.f32 %v2184, %v2357
        %v2390 = vadd.f32 %v2185, %v2358
        %v2391 = vadd.f32 %v2186, %v2359
        %v2392 = vadd.f32 %v2187, %v2360
        %v2393 = vadd.f32 %v2188, %v2361
        %v2394 = vadd.f32 %v2189, %v2362
        %v2395 = vadd.f32 %v2190, %v2363
        %v2396 = vadd.f32 %v2191, %v2364
        %v2397 = vadd.f32 %v2192, %v2365
        %v2398 = vadd.f32 %v2193, %v2366
        %v2399 = vadd.f32 %v2194, %v2367
        %v2400 = vadd.f32 %v2195, %v2368
        %v2401 = vadd.f32 %v2196, %v2369
        %v2402 = vadd.f32 %v2197, %v2370
        %v2403 = vadd.f32 %v2198, %v2371
        %v2404 = vadd.f32 %v2199, %v2372
        %v2405 = vadd.f32 %v2200, %v2373
        %v2406 = vld [vmem:[%s2201 + $0x2] sm:$0xff]
        %v2407 = vld [vmem:[%s2201 + $0xa] sm:$0xff]
        %v2408 = vld [vmem:[%s2201 + $0x1a] sm:$0xff]
        %v2409 = vld [vmem:[%s2201 + $0x22] sm:$0xff]
        %v2410 = vld [vmem:[%s2201 + $0x32] sm:$0xff]
        %v2411 = vld [vmem:[%s2201 + $0x3a] sm:$0xff]
        %v2412 = vld [vmem:[%s2201 + $0x4a] sm:$0xff]
        %v2413 = vld [vmem:[%s2201 + $0x52] sm:$0xff]
        %v2414 = vld [vmem:[%s2201 + $0x62] sm:$0xff]
        %v2415 = vld [vmem:[%s2201 + $0x6a] sm:$0xff]
        %v2416 = vld [vmem:[%s2201 + $0x7a] sm:$0xff]
        %v2417 = vld [vmem:[%s2201 + $0x82] sm:$0xff]
        %v2418 = vld [vmem:[%s2201 + $0x92] sm:$0xff]
        %v2419 = vld [vmem:[%s2201 + $0x9a] sm:$0xff]
        %v2420 = vld [vmem:[%s2201 + $0xaa] sm:$0xff]
        %v2421 = vld [vmem:[%s2201 + $0xb2] sm:$0xff]
        %v2422 = vld [vmem:[%s2201 + $0xc2] sm:$0xff]
        %v2423 = vld [vmem:[%s2201 + $0xca] sm:$0xff]
        %v2424 = vld [vmem:[%s2201 + $0xda] sm:$0xff]
        %v2425 = vld [vmem:[%s2201 + $0xe2] sm:$0xff]
        %v2426 = vld [vmem:[%s2201 + $0xf2] sm:$0xff]
        %v2427 = vld [vmem:[%s2201 + $0xfa] sm:$0xff]
        %v2428 = vld [vmem:[%s2201 + $0x10a] sm:$0xff]
        %v2429 = vld [vmem:[%s2201 + $0x112] sm:$0xff]
        %v2430 = vld [vmem:[%s2201 + $0x122] sm:$0xff]
        %v2431 = vld [vmem:[%s2201 + $0x12a] sm:$0xff]
        %v2432 = vld [vmem:[%s2201 + $0x13a] sm:$0xff]
        %v2433 = vld [vmem:[%s2201 + $0x142] sm:$0xff]
        %v2434 = vld [vmem:[%s2201 + $0x152] sm:$0xff]
        %v2435 = vld [vmem:[%s2201 + $0x15a] sm:$0xff]
        %v2436 = vld [vmem:[%s2201 + $0x16a] sm:$0xff]
        %v2437 = vld [vmem:[%s2201 + $0x172] sm:$0xff]
        %v2439 = vlaneseq
        %v2440 = vshrl.u32 %v2439, 7
        %v2441 = vsub.s32 0, %v2440
        %v2442 = vrot.slane %v1684, %v2441
        %v2444 = vmul.f32 %v2406, %v2442
        %v2445 = vmul.f32 %v2407, %v2442
        %v2446 = vmul.f32 %v2408, %v2442
        %v2447 = vmul.f32 %v2409, %v2442
        %v2448 = vmul.f32 %v2410, %v2442
        %v2449 = vmul.f32 %v2411, %v2442
        %v2450 = vmul.f32 %v2412, %v2442
        %v2451 = vmul.f32 %v2413, %v2442
        %v2452 = vmul.f32 %v2414, %v2442
        %v2453 = vmul.f32 %v2415, %v2442
        %v2454 = vmul.f32 %v2416, %v2442
        %v2455 = vmul.f32 %v2417, %v2442
        %v2456 = vmul.f32 %v2418, %v2442
        %v2457 = vmul.f32 %v2419, %v2442
        %v2458 = vmul.f32 %v2420, %v2442
        %v2459 = vmul.f32 %v2421, %v2442
        %v2460 = vmul.f32 %v2422, %v2442
        %v2461 = vmul.f32 %v2423, %v2442
        %v2462 = vmul.f32 %v2424, %v2442
        %v2463 = vmul.f32 %v2425, %v2442
        %v2464 = vmul.f32 %v2426, %v2442
        %v2465 = vmul.f32 %v2427, %v2442
        %v2466 = vmul.f32 %v2428, %v2442
        %v2467 = vmul.f32 %v2429, %v2442
        %v2468 = vmul.f32 %v2430, %v2442
        %v2469 = vmul.f32 %v2431, %v2442
        %v2470 = vmul.f32 %v2432, %v2442
        %v2471 = vmul.f32 %v2433, %v2442
        %v2472 = vmul.f32 %v2434, %v2442
        %v2473 = vmul.f32 %v2435, %v2442
        %v2474 = vmul.f32 %v2436, %v2442
        %v2475 = vmul.f32 %v2437, %v2442
        %v2476 = vadd.f32 %v2272, %v2444
        %v2477 = vadd.f32 %v2273, %v2445
        %v2478 = vadd.f32 %v2274, %v2446
        %v2479 = vadd.f32 %v2275, %v2447
        %v2480 = vadd.f32 %v2276, %v2448
        %v2481 = vadd.f32 %v2277, %v2449
        %v2482 = vadd.f32 %v2278, %v2450
        %v2483 = vadd.f32 %v2279, %v2451
        %v2484 = vadd.f32 %v2280, %v2452
        %v2485 = vadd.f32 %v2281, %v2453
        %v2486 = vadd.f32 %v2282, %v2454
        %v2487 = vadd.f32 %v2283, %v2455
        %v2488 = vadd.f32 %v2284, %v2456
        %v2489 = vadd.f32 %v2285, %v2457
        %v2490 = vadd.f32 %v2286, %v2458
        %v2491 = vadd.f32 %v2287, %v2459
        %v2492 = vadd.f32 %v2288, %v2460
        %v2493 = vadd.f32 %v2289, %v2461
        %v2494 = vadd.f32 %v2290, %v2462
        %v2495 = vadd.f32 %v2291, %v2463
        %v2496 = vadd.f32 %v2292, %v2464
        %v2497 = vadd.f32 %v2293, %v2465
        %v2498 = vadd.f32 %v2294, %v2466
        %v2499 = vadd.f32 %v2295, %v2467
        %v2500 = vadd.f32 %v2296, %v2468
        %v2501 = vadd.f32 %v2297, %v2469
        %v2502 = vadd.f32 %v2298, %v2470
        %v2503 = vadd.f32 %v2299, %v2471
        %v2504 = vadd.f32 %v2300, %v2472
        %v2505 = vadd.f32 %v2301, %v2473
        %v2506 = vadd.f32 %v2302, %v2474
        %v2507 = vadd.f32 %v2303, %v2475
        %v2508 = vadd.f32 %v2476, %v2374
        %v2509 = vadd.f32 %v2477, %v2375
        %v2510 = vadd.f32 %v2478, %v2376
        %v2511 = vadd.f32 %v2479, %v2377
        %v2512 = vadd.f32 %v2480, %v2378
        %v2513 = vadd.f32 %v2481, %v2379
        %v2514 = vadd.f32 %v2482, %v2380
        %v2515 = vadd.f32 %v2483, %v2381
        %v2516 = vadd.f32 %v2484, %v2382
        %v2517 = vadd.f32 %v2485, %v2383
        %v2518 = vadd.f32 %v2486, %v2384
        %v2519 = vadd.f32 %v2487, %v2385
        %v2520 = vadd.f32 %v2488, %v2386
        %v2521 = vadd.f32 %v2489, %v2387
        %v2522 = vadd.f32 %v2490, %v2388
        %v2523 = vadd.f32 %v2491, %v2389
        %v2524 = vadd.f32 %v2492, %v2390
        %v2525 = vadd.f32 %v2493, %v2391
        %v2526 = vadd.f32 %v2494, %v2392
        %v2527 = vadd.f32 %v2495, %v2393
        %v2528 = vadd.f32 %v2496, %v2394
        %v2529 = vadd.f32 %v2497, %v2395
        %v2530 = vadd.f32 %v2498, %v2396
        %v2531 = vadd.f32 %v2499, %v2397
        %v2532 = vadd.f32 %v2500, %v2398
        %v2533 = vadd.f32 %v2501, %v2399
        %v2534 = vadd.f32 %v2502, %v2400
        %v2535 = vadd.f32 %v2503, %v2401
        %v2536 = vadd.f32 %v2504, %v2402
        %v2537 = vadd.f32 %v2505, %v2403
        %v2538 = vadd.f32 %v2506, %v2404
        %v2539 = vadd.f32 %v2507, %v2405
        %v2540 = vld [vmem:[%s6] sm:$0x1]
        %v2542 = vlaneseq
        %v2543 = vshrl.u32 %v2542, 7
        %v2544 = vsub.s32 0, %v2543
        %v2545 = vrot.slane %v2540, %v2544
        %v2547 = vadd.f32 %v2508, %v2545
        %v2548 = vadd.f32 %v2509, %v2545
        %v2549 = vadd.f32 %v2510, %v2545
        %v2550 = vadd.f32 %v2511, %v2545
        %v2551 = vadd.f32 %v2512, %v2545
        %v2552 = vadd.f32 %v2513, %v2545
        %v2553 = vadd.f32 %v2514, %v2545
        %v2554 = vadd.f32 %v2515, %v2545
        %v2555 = vadd.f32 %v2516, %v2545
        %v2556 = vadd.f32 %v2517, %v2545
        %v2557 = vadd.f32 %v2518, %v2545
        %v2558 = vadd.f32 %v2519, %v2545
        %v2559 = vadd.f32 %v2520, %v2545
        %v2560 = vadd.f32 %v2521, %v2545
        %v2561 = vadd.f32 %v2522, %v2545
        %v2562 = vadd.f32 %v2523, %v2545
        %v2563 = vadd.f32 %v2524, %v2545
        %v2564 = vadd.f32 %v2525, %v2545
        %v2565 = vadd.f32 %v2526, %v2545
        %v2566 = vadd.f32 %v2527, %v2545
        %v2567 = vadd.f32 %v2528, %v2545
        %v2568 = vadd.f32 %v2529, %v2545
        %v2569 = vadd.f32 %v2530, %v2545
        %v2570 = vadd.f32 %v2531, %v2545
        %v2571 = vadd.f32 %v2532, %v2545
        %v2572 = vadd.f32 %v2533, %v2545
        %v2573 = vadd.f32 %v2534, %v2545
        %v2574 = vadd.f32 %v2535, %v2545
        %v2575 = vadd.f32 %v2536, %v2545
        %v2576 = vadd.f32 %v2537, %v2545
        %v2577 = vadd.f32 %v2538, %v2545
        %v2578 = vadd.f32 %v2539, %v2545
        %v2579 = vmax.f32 %v2547, 0.0
        %v2580 = vmax.f32 %v2548, 0.0
        %v2581 = vmax.f32 %v2549, 0.0
        %v2582 = vmax.f32 %v2550, 0.0
        %v2583 = vmax.f32 %v2551, 0.0
        %v2584 = vmax.f32 %v2552, 0.0
        %v2585 = vmax.f32 %v2553, 0.0
        %v2586 = vmax.f32 %v2554, 0.0
        %v2587 = vmax.f32 %v2555, 0.0
        %v2588 = vmax.f32 %v2556, 0.0
        %v2589 = vmax.f32 %v2557, 0.0
        %v2590 = vmax.f32 %v2558, 0.0
        %v2591 = vmax.f32 %v2559, 0.0
        %v2592 = vmax.f32 %v2560, 0.0
        %v2593 = vmax.f32 %v2561, 0.0
        %v2594 = vmax.f32 %v2562, 0.0
        %v2595 = vmax.f32 %v2563, 0.0
        %v2596 = vmax.f32 %v2564, 0.0
        %v2597 = vmax.f32 %v2565, 0.0
        %v2598 = vmax.f32 %v2566, 0.0
        %v2599 = vmax.f32 %v2567, 0.0
        %v2600 = vmax.f32 %v2568, 0.0
        %v2601 = vmax.f32 %v2569, 0.0
        %v2602 = vmax.f32 %v2570, 0.0
        %v2603 = vmax.f32 %v2571, 0.0
        %v2604 = vmax.f32 %v2572, 0.0
        %v2605 = vmax.f32 %v2573, 0.0
        %v2606 = vmax.f32 %v2574, 0.0
        %v2607 = vmax.f32 %v2575, 0.0
        %v2608 = vmax.f32 %v2576, 0.0
        %v2609 = vmax.f32 %v2577, 0.0
        %v2610 = vmax.f32 %v2578, 0.0
        %v2611 = vpack.c.bf16 %v2580, %v2579
        %v2612 = vpack.c.bf16 %v2582, %v2581
        %v2613 = vpack.c.bf16 %v2584, %v2583
        %v2614 = vpack.c.bf16 %v2586, %v2585
        %v2615 = vpack.c.bf16 %v2588, %v2587
        %v2616 = vpack.c.bf16 %v2590, %v2589
        %v2617 = vpack.c.bf16 %v2592, %v2591
        %v2618 = vpack.c.bf16 %v2594, %v2593
        %v2619 = vpack.c.bf16 %v2596, %v2595
        %v2620 = vpack.c.bf16 %v2598, %v2597
        %v2621 = vpack.c.bf16 %v2600, %v2599
        %v2622 = vpack.c.bf16 %v2602, %v2601
        %v2623 = vpack.c.bf16 %v2604, %v2603
        %v2624 = vpack.c.bf16 %v2606, %v2605
        %v2625 = vpack.c.bf16 %v2608, %v2607
        %v2626 = vpack.c.bf16 %v2610, %v2609
        %v2627 = vpack.c.bf16 %v361, %v360
        %v2628 = vpack.c.bf16 %v363, %v362
        %v2629 = vpack.c.bf16 %v365, %v364
        %v2630 = vpack.c.bf16 %v367, %v366
        %v2631 = vpack.c.bf16 %v369, %v368
        %v2632 = vpack.c.bf16 %v371, %v370
        %v2633 = vpack.c.bf16 %v373, %v372
        %v2634 = vpack.c.bf16 %v375, %v374
        %v2635 = vpack.c.bf16 %v377, %v376
        %v2636 = vpack.c.bf16 %v379, %v378
        %v2637 = vpack.c.bf16 %v381, %v380
        %v2638 = vpack.c.bf16 %v383, %v382
        %v2639 = vpack.c.bf16 %v385, %v384
        %v2640 = vpack.c.bf16 %v387, %v386
        %v2641 = vpack.c.bf16 %v389, %v388
        %v2642 = vpack.c.bf16 %v391, %v390
        %2659 = vrot.lane.b32.xlu0 %v2627, 16
        %v2660 = vpop.permute.xlu0 %2659
        %2661 = vrot.lane.b32.xlu0 %v2628, 16
        %v2662 = vpop.permute.xlu0 %2661
        %2663 = vrot.lane.b32.xlu0 %v2629, 16
        %v2664 = vpop.permute.xlu0 %2663
        %2665 = vrot.lane.b32.xlu0 %v2630, 16
        %v2666 = vpop.permute.xlu0 %2665
        %2667 = vrot.lane.b32.xlu0 %v2631, 16
        %v2668 = vpop.permute.xlu0 %2667
        %2669 = vrot.lane.b32.xlu0 %v2632, 16
        %v2670 = vpop.permute.xlu0 %2669
        %2671 = vrot.lane.b32.xlu0 %v2633, 16
        %v2672 = vpop.permute.xlu0 %2671
        %2673 = vrot.lane.b32.xlu0 %v2634, 16
        %v2674 = vpop.permute.xlu0 %2673
        %2675 = vrot.lane.b32.xlu0 %v2635, 16
        %v2676 = vpop.permute.xlu0 %2675
        %2677 = vrot.lane.b32.xlu0 %v2636, 16
        %v2678 = vpop.permute.xlu0 %2677
        %2679 = vrot.lane.b32.xlu0 %v2637, 16
        %v2680 = vpop.permute.xlu0 %2679
        %2681 = vrot.lane.b32.xlu0 %v2638, 16
        %v2682 = vpop.permute.xlu0 %2681
        %2683 = vrot.lane.b32.xlu0 %v2639, 16
        %v2684 = vpop.permute.xlu0 %2683
        %2685 = vrot.lane.b32.xlu0 %v2640, 16
        %v2686 = vpop.permute.xlu0 %2685
        %2687 = vrot.lane.b32.xlu0 %v2641, 16
        %v2688 = vpop.permute.xlu0 %2687
        %2689 = vrot.lane.b32.xlu0 %v2642, 16
        %v2690 = vpop.permute.xlu0 %2689
        %v2693 = vsel %vm1597, %v2611, %v2660
        %v2696 = vsel %vm1597, %v2612, %v2662
        %v2699 = vsel %vm1597, %v2613, %v2664
        %v2702 = vsel %vm1597, %v2614, %v2666
        %v2705 = vsel %vm1597, %v2615, %v2668
        %v2708 = vsel %vm1597, %v2616, %v2670
        %v2711 = vsel %vm1597, %v2617, %v2672
        %v2714 = vsel %vm1597, %v2618, %v2674
        %v2717 = vsel %vm1597, %v2619, %v2676
        %v2720 = vsel %vm1597, %v2620, %v2678
        %v2723 = vsel %vm1597, %v2621, %v2680
        %v2726 = vsel %vm1597, %v2622, %v2682
        %v2729 = vsel %vm1597, %v2623, %v2684
        %v2732 = vsel %vm1597, %v2624, %v2686
        %v2735 = vsel %vm1597, %v2625, %v2688
        %v2738 = vsel %vm1597, %v2626, %v2690
        %v2739 = vld [vmem:[%s7] sm:$0xf]
        %v2740 = vld [vmem:[%s7 + $0x4] sm:$0xf]
        %v2741 = vld [vmem:[%s7 + $0x8] sm:$0xf]
        %v2742 = vld [vmem:[%s8] sm:$0x1]
        %v2744 = vlaneseq
        %v2745 = vshrl.u32 %v2744, 7
        %v2746 = vsub.s32 0, %v2745
        %v2747 = vrot.slane %v2742, %v2746
        %v2752 = vunpack.c.l.b16 %v2739
        %v2753 = vunpack.c.l.b16 %v2740
        %v2754 = vunpack.c.l.b16 %v2741
        %v2755 = vpack.c.b16 %v2753, %v2752
        %v2756 = vpack.c.b16 %v2754, %v2754
        %vm2758 = vcmask 195584
        %v2759 = vsel %vm2758, %v2693, 0
        %v2761 = vsel %vm2758, %v2696, 0
        %v2763 = vsel %vm2758, %v2699, 0
        %v2765 = vsel %vm2758, %v2702, 0
        %v2767 = vsel %vm2758, %v2705, 0
        %v2769 = vsel %vm2758, %v2708, 0
        %v2771 = vsel %vm2758, %v2711, 0
        %v2773 = vsel %vm2758, %v2714, 0
        %v2775 = vsel %vm2758, %v2717, 0
        %v2777 = vsel %vm2758, %v2720, 0
        %v2779 = vsel %vm2758, %v2723, 0
        %v2781 = vsel %vm2758, %v2726, 0
        %v2783 = vsel %vm2758, %v2729, 0
        %v2785 = vsel %vm2758, %v2732, 0
        %v2787 = vsel %vm2758, %v2735, 0
        %v2789 = vsel %vm2758, %v2738, 0
        %v2792 = vsel %vm1400, %v2756, 0
        %2794 = vmatprep.subr.bf16.mxu0 0
        %2795 = vmatpush1.bf16.msra.mxu0 0
        %2796 = vmatprep.subr.bf16.mxu0 0
        %2797 = vmatpush1.bf16.msra.mxu0 0
        %2798 = vmatprep.subr.bf16.mxu0 0
        %2799 = vmatpush1.bf16.msra.mxu0 0
        %2800 = vmatprep.subr.bf16.mxu0 0
        %2801 = vmatpush1.bf16.msra.mxu0 0
        %2802 = vmatprep.subr.bf16.mxu0 0
        %2803 = vmatpush1.bf16.msra.mxu0 0
        %2804 = vmatprep.subr.bf16.mxu0 0
        %2805 = vmatpush1.bf16.msra.mxu0 0
        %2806 = vmatprep.subr.bf16.mxu0 0
        %2807 = vmatpush1.bf16.msra.mxu0 %v2792
        %2808 = vmatprep.subr.bf16.mxu0 0
        %2809 = vmatpush1.bf16.msra.mxu0 %v2755
        %2810 = vmatprep.subr.bf16.mxu0 0
        %2811 = vmatpush2.bf16.msra.mxu0 0
        %2812 = vmatprep.subr.bf16.mxu0 0
        %2813 = vmatpush2.bf16.msra.mxu0 0
        %2814 = vmatprep.subr.bf16.mxu0 0
        %2815 = vmatpush2.bf16.msra.mxu0 0
        %2816 = vmatprep.subr.bf16.mxu0 0
        %2817 = vmatpush2.bf16.msra.mxu0 0
        %2818 = vmatprep.subr.bf16.mxu0 0
        %2819 = vmatpush2.bf16.msra.mxu0 0
        %2820 = vmatprep.subr.bf16.mxu0 0
        %2821 = vmatpush2.bf16.msra.mxu0 0
        %2822 = vmatprep.subr.bf16.mxu0 0
        %2823 = vmatpush2.bf16.msra.mxu0 0
        %2824 = vmatprep.subr.bf16.mxu0 0
        %2825 = vmatpush2.bf16.msra.mxu0 0
        %2826 = vmatprep.mubr.bf16.mxu0 0
        %2827 = vmatmul.mubr.bf16.gmra.mxu0 %v2759
        %v2828 = vpop.f32.mrf.mxu0
        %v2829 = vadd.f32 %v2747, %v2828
        %v2830 = vpop.f32.mrf.mxu0
        %v2831 = vpop.f32.mrf.mxu0
        %v2832 = vadd.f32 %v2747, %v2831
        %v2833 = vpop.f32.mrf.mxu0
        %2834 = vmatprep.mubr.bf16.mxu0 0
        %2835 = vmatmul.mubr.bf16.gmra.mxu0 %v2761
        %v2836 = vpop.f32.mrf.mxu0
        %v2837 = vadd.f32 %v2747, %v2836
        %v2838 = vpop.f32.mrf.mxu0
        %v2839 = vpop.f32.mrf.mxu0
        %v2840 = vadd.f32 %v2747, %v2839
        %v2841 = vpop.f32.mrf.mxu0
        %2842 = vmatprep.mubr.bf16.mxu0 0
        %2843 = vmatmul.mubr.bf16.gmra.mxu0 %v2763
        %v2844 = vpop.f32.mrf.mxu0
        %v2845 = vadd.f32 %v2747, %v2844
        %v2846 = vpop.f32.mrf.mxu0
        %v2847 = vpop.f32.mrf.mxu0
        %v2848 = vadd.f32 %v2747, %v2847
        %v2849 = vpop.f32.mrf.mxu0
        %2850 = vmatprep.mubr.bf16.mxu0 0
        %2851 = vmatmul.mubr.bf16.gmra.mxu0 %v2765
        %v2852 = vpop.f32.mrf.mxu0
        %v2853 = vadd.f32 %v2747, %v2852
        %v2854 = vpop.f32.mrf.mxu0
        %v2855 = vpop.f32.mrf.mxu0
        %v2856 = vadd.f32 %v2747, %v2855
        %v2857 = vpop.f32.mrf.mxu0
        %2858 = vmatprep.mubr.bf16.mxu0 0
        %2859 = vmatmul.mubr.bf16.gmra.mxu0 %v2767
        %v2860 = vpop.f32.mrf.mxu0
        %v2861 = vadd.f32 %v2747, %v2860
        %v2862 = vpop.f32.mrf.mxu0
        %v2863 = vpop.f32.mrf.mxu0
        %v2864 = vadd.f32 %v2747, %v2863
        %v2865 = vpop.f32.mrf.mxu0
        %2866 = vmatprep.mubr.bf16.mxu0 0
        %2867 = vmatmul.mubr.bf16.gmra.mxu0 %v2769
        %v2868 = vpop.f32.mrf.mxu0
        %v2869 = vadd.f32 %v2747, %v2868
        %v2870 = vpop.f32.mrf.mxu0
        %v2871 = vpop.f32.mrf.mxu0
        %v2872 = vadd.f32 %v2747, %v2871
        %v2873 = vpop.f32.mrf.mxu0
        %2874 = vmatprep.mubr.bf16.mxu0 0
        %2875 = vmatmul.mubr.bf16.gmra.mxu0 %v2771
        %v2876 = vpop.f32.mrf.mxu0
        %v2877 = vadd.f32 %v2747, %v2876
        %v2878 = vpop.f32.mrf.mxu0
        %v2879 = vpop.f32.mrf.mxu0
        %v2880 = vadd.f32 %v2747, %v2879
        %v2881 = vpop.f32.mrf.mxu0
        %2882 = vmatprep.mubr.bf16.mxu0 0
        %2883 = vmatmul.mubr.bf16.gmra.mxu0 %v2773
        %v2884 = vpop.f32.mrf.mxu0
        %v2885 = vadd.f32 %v2747, %v2884
        %v2886 = vpop.f32.mrf.mxu0
        %v2887 = vpop.f32.mrf.mxu0
        %v2888 = vadd.f32 %v2747, %v2887
        %v2889 = vpop.f32.mrf.mxu0
        %2890 = vmatprep.mubr.bf16.mxu0 0
        %2891 = vmatmul.mubr.bf16.gmra.mxu0 %v2775
        %v2892 = vpop.f32.mrf.mxu0
        %v2893 = vadd.f32 %v2747, %v2892
        %v2894 = vpop.f32.mrf.mxu0
        %v2895 = vpop.f32.mrf.mxu0
        %v2896 = vadd.f32 %v2747, %v2895
        %v2897 = vpop.f32.mrf.mxu0
        %2898 = vmatprep.mubr.bf16.mxu0 0
        %2899 = vmatmul.mubr.bf16.gmra.mxu0 %v2777
        %v2900 = vpop.f32.mrf.mxu0
        %v2901 = vadd.f32 %v2747, %v2900
        %v2902 = vpop.f32.mrf.mxu0
        %v2903 = vpop.f32.mrf.mxu0
        %v2904 = vadd.f32 %v2747, %v2903
        %v2905 = vpop.f32.mrf.mxu0
        %2906 = vmatprep.mubr.bf16.mxu0 0
        %2907 = vmatmul.mubr.bf16.gmra.mxu0 %v2779
        %v2908 = vpop.f32.mrf.mxu0
        %v2909 = vadd.f32 %v2747, %v2908
        %v2910 = vpop.f32.mrf.mxu0
        %v2911 = vpop.f32.mrf.mxu0
        %v2912 = vadd.f32 %v2747, %v2911
        %v2913 = vpop.f32.mrf.mxu0
        %2914 = vmatprep.mubr.bf16.mxu0 0
        %2915 = vmatmul.mubr.bf16.gmra.mxu0 %v2781
        %v2916 = vpop.f32.mrf.mxu0
        %v2917 = vadd.f32 %v2747, %v2916
        %v2918 = vpop.f32.mrf.mxu0
        %v2919 = vpop.f32.mrf.mxu0
        %v2920 = vadd.f32 %v2747, %v2919
        %v2921 = vpop.f32.mrf.mxu0
        %2922 = vmatprep.mubr.bf16.mxu0 0
        %2923 = vmatmul.mubr.bf16.gmra.mxu0 %v2783
        %v2924 = vpop.f32.mrf.mxu0
        %v2925 = vadd.f32 %v2747, %v2924
        %v2926 = vpop.f32.mrf.mxu0
        %v2927 = vpop.f32.mrf.mxu0
        %v2928 = vadd.f32 %v2747, %v2927
        %v2929 = vpop.f32.mrf.mxu0
        %2930 = vmatprep.mubr.bf16.mxu0 0
        %2931 = vmatmul.mubr.bf16.gmra.mxu0 %v2785
        %v2932 = vpop.f32.mrf.mxu0
        %v2933 = vadd.f32 %v2747, %v2932
        %v2934 = vpop.f32.mrf.mxu0
        %v2935 = vpop.f32.mrf.mxu0
        %v2936 = vadd.f32 %v2747, %v2935
        %v2937 = vpop.f32.mrf.mxu0
        %2938 = vmatprep.mubr.bf16.mxu0 0
        %2939 = vmatmul.mubr.bf16.gmra.mxu0 %v2787
        %v2940 = vpop.f32.mrf.mxu0
        %v2941 = vadd.f32 %v2747, %v2940
        %v2942 = vpop.f32.mrf.mxu0
        %v2943 = vpop.f32.mrf.mxu0
        %v2944 = vadd.f32 %v2747, %v2943
        %v2945 = vpop.f32.mrf.mxu0
        %2946 = vmatprep.mubr.bf16.mxu0 0
        %2947 = vmatmul.mubr.bf16.gmra.mxu0 %v2789
        %v2948 = vpop.f32.mrf.mxu0
        %v2949 = vadd.f32 %v2747, %v2948
        %v2950 = vpop.f32.mrf.mxu0
        %v2951 = vpop.f32.mrf.mxu0
        %v2952 = vadd.f32 %v2747, %v2951
        %v2953 = vpop.f32.mrf.mxu0
        %2954 = vdwg.mxu0
        %v2955 = vmax.f32 %v2829, 0.0
        %v2956 = vmax.f32 %v2832, 0.0
        %v2957 = vmax.f32 %v2837, 0.0
        %v2958 = vmax.f32 %v2840, 0.0
        %v2959 = vmax.f32 %v2845, 0.0
        %v2960 = vmax.f32 %v2848, 0.0
        %v2961 = vmax.f32 %v2853, 0.0
        %v2962 = vmax.f32 %v2856, 0.0
        %v2963 = vmax.f32 %v2861, 0.0
        %v2964 = vmax.f32 %v2864, 0.0
        %v2965 = vmax.f32 %v2869, 0.0
        %v2966 = vmax.f32 %v2872, 0.0
        %v2967 = vmax.f32 %v2877, 0.0
        %v2968 = vmax.f32 %v2880, 0.0
        %v2969 = vmax.f32 %v2885, 0.0
        %v2970 = vmax.f32 %v2888, 0.0
        %v2971 = vmax.f32 %v2893, 0.0
        %v2972 = vmax.f32 %v2896, 0.0
        %v2973 = vmax.f32 %v2901, 0.0
        %v2974 = vmax.f32 %v2904, 0.0
        %v2975 = vmax.f32 %v2909, 0.0
        %v2976 = vmax.f32 %v2912, 0.0
        %v2977 = vmax.f32 %v2917, 0.0
        %v2978 = vmax.f32 %v2920, 0.0
        %v2979 = vmax.f32 %v2925, 0.0
        %v2980 = vmax.f32 %v2928, 0.0
        %v2981 = vmax.f32 %v2933, 0.0
        %v2982 = vmax.f32 %v2936, 0.0
        %v2983 = vmax.f32 %v2941, 0.0
        %v2984 = vmax.f32 %v2944, 0.0
        %v2985 = vmax.f32 %v2949, 0.0
        %v2986 = vmax.f32 %v2952, 0.0
        %v2987 = vpack.c.bf16 %v2956, %v2955
        %v2988 = vpack.c.bf16 %v2958, %v2957
        %v2989 = vpack.c.bf16 %v2960, %v2959
        %v2990 = vpack.c.bf16 %v2962, %v2961
        %v2991 = vpack.c.bf16 %v2964, %v2963
        %v2992 = vpack.c.bf16 %v2966, %v2965
        %v2993 = vpack.c.bf16 %v2968, %v2967
        %v2994 = vpack.c.bf16 %v2970, %v2969
        %v2995 = vpack.c.bf16 %v2972, %v2971
        %v2996 = vpack.c.bf16 %v2974, %v2973
        %v2997 = vpack.c.bf16 %v2976, %v2975
        %v2998 = vpack.c.bf16 %v2978, %v2977
        %v2999 = vpack.c.bf16 %v2980, %v2979
        %v3000 = vpack.c.bf16 %v2982, %v2981
        %v3001 = vpack.c.bf16 %v2984, %v2983
        %v3002 = vpack.c.bf16 %v2986, %v2985
        %vm3003 = vcmask 125952
        %3004 = vst.msk [vmem:[#allocation3] sm:$0xf] %vm3003, 0
        %3005 = vst.msk [vmem:[#allocation3 + $0x4] sm:$0xf] %vm3003, 0
        %3006 = vst.msk [vmem:[#allocation3 + $0x8] sm:$0x1] %vm1606, 0
        %s3007 = scalar_lea.vmem [#allocation3], 204
        %3008 = vst.msk [vmem:[%s3007] sm:$0xf] %vm3003, 0
        %3009 = vst.msk [vmem:[%s3007 + $0x4] sm:$0xf] %vm3003, 0
        %3010 = vst.msk [vmem:[%s3007 + $0x8] sm:$0x1] %vm1606, 0
        %vm3011 = vcmask 122880
        %vm3012 = vsmask.f32 256
        %vm3013 = vmand %vm3011, %vm3012
        %v3014 = vld [vmem:[#allocation3] sm:$0x1]
        %v3015 = vsel %vm3013, 0, %v3014
        %3016 = vst [vmem:[#allocation3] sm:$0x1] %v3015
        %v3017 = vld [vmem:[#allocation3 + $0xc] sm:$0x1]
        %v3018 = vsel %vm3013, 0, %v3017
        %3019 = vst [vmem:[#allocation3 + $0xc] sm:$0x1] %v3018
        %v3020 = vld [vmem:[#allocation3 + $0x18] sm:$0x1]
        %v3021 = vsel %vm3013, 0, %v3020
        %3022 = vst [vmem:[#allocation3 + $0x18] sm:$0x1] %v3021
        %v3023 = vld [vmem:[#allocation3 + $0x24] sm:$0x1]
        %v3024 = vsel %vm3013, 0, %v3023
        %3025 = vst [vmem:[#allocation3 + $0x24] sm:$0x1] %v3024
        %v3026 = vld [vmem:[#allocation3 + $0x30] sm:$0x1]
        %v3027 = vsel %vm3013, 0, %v3026
        %3028 = vst [vmem:[#allocation3 + $0x30] sm:$0x1] %v3027
        %v3029 = vld [vmem:[#allocation3 + $0x3c] sm:$0x1]
        %v3030 = vsel %vm3013, 0, %v3029
        %3031 = vst [vmem:[#allocation3 + $0x3c] sm:$0x1] %v3030
        %v3032 = vld [vmem:[#allocation3 + $0x48] sm:$0x1]
        %v3033 = vsel %vm3013, 0, %v3032
        %3034 = vst [vmem:[#allocation3 + $0x48] sm:$0x1] %v3033
        %v3035 = vld [vmem:[#allocation3 + $0x54] sm:$0x1]
        %v3036 = vsel %vm3013, 0, %v3035
        %3037 = vst [vmem:[#allocation3 + $0x54] sm:$0x1] %v3036
        %v3038 = vld [vmem:[#allocation3 + $0x60] sm:$0x1]
        %v3039 = vsel %vm3013, 0, %v3038
        %3040 = vst [vmem:[#allocation3 + $0x60] sm:$0x1] %v3039
        %v3041 = vld [vmem:[#allocation3 + $0x6c] sm:$0x1]
        %v3042 = vsel %vm3013, 0, %v3041
        %3043 = vst [vmem:[#allocation3 + $0x6c] sm:$0x1] %v3042
        %v3044 = vld [vmem:[#allocation3 + $0x78] sm:$0x1]
        %v3045 = vsel %vm3013, 0, %v3044
        %3046 = vst [vmem:[#allocation3 + $0x78] sm:$0x1] %v3045
        %v3047 = vld [vmem:[#allocation3 + $0x84] sm:$0x1]
        %v3048 = vsel %vm3013, 0, %v3047
        %3049 = vst [vmem:[#allocation3 + $0x84] sm:$0x1] %v3048
        %v3050 = vld [vmem:[#allocation3 + $0x90] sm:$0x1]
        %v3051 = vsel %vm3013, 0, %v3050
        %3052 = vst [vmem:[#allocation3 + $0x90] sm:$0x1] %v3051
        %v3053 = vld [vmem:[#allocation3 + $0x9c] sm:$0x1]
        %v3054 = vsel %vm3013, 0, %v3053
        %3055 = vst [vmem:[#allocation3 + $0x9c] sm:$0x1] %v3054
        %v3056 = vld [vmem:[#allocation3 + $0xa8] sm:$0x1]
        %v3057 = vsel %vm3013, 0, %v3056
        %3058 = vst [vmem:[#allocation3 + $0xa8] sm:$0x1] %v3057
        %v3059 = vld [vmem:[#allocation3 + $0xb4] sm:$0x1]
        %v3060 = vsel %vm3013, 0, %v3059
        %3061 = vst [vmem:[#allocation3 + $0xb4] sm:$0x1] %v3060
        %v3062 = vld [vmem:[#allocation3 + $0xc0] sm:$0x1]
        %v3063 = vsel %vm3013, 0, %v3062
        %3064 = vst [vmem:[#allocation3 + $0xc0] sm:$0x1] %v3063
        %v3065 = vld [vmem:[#allocation3 + $0xcc] sm:$0x1]
        %v3066 = vsel %vm3013, 0, %v3065
        %3067 = vst [vmem:[#allocation3 + $0xcc] sm:$0x1] %v3066
        %vm3068 = vsmask.f32 7938
        %vm3069 = vmand %vm3011, %vm3068
        %v3070 = vld [vmem:[#allocation3 + $0x8] sm:$0x1]
        %v3071 = vsel %vm3069, 0, %v3070
        %3072 = vst [vmem:[#allocation3 + $0x8] sm:$0x1] %v3071
        %v3073 = vld [vmem:[#allocation3 + $0x14] sm:$0x1]
        %v3074 = vsel %vm3069, 0, %v3073
        %3075 = vst [vmem:[#allocation3 + $0x14] sm:$0x1] %v3074
        %v3076 = vld [vmem:[#allocation3 + $0x20] sm:$0x1]
        %v3077 = vsel %vm3069, 0, %v3076
        %3078 = vst [vmem:[#allocation3 + $0x20] sm:$0x1] %v3077
        %v3079 = vld [vmem:[#allocation3 + $0x2c] sm:$0x1]
        %v3080 = vsel %vm3069, 0, %v3079
        %3081 = vst [vmem:[#allocation3 + $0x2c] sm:$0x1] %v3080
        %v3082 = vld [vmem:[#allocation3 + $0x38] sm:$0x1]
        %v3083 = vsel %vm3069, 0, %v3082
        %3084 = vst [vmem:[#allocation3 + $0x38] sm:$0x1] %v3083
        %v3085 = vld [vmem:[#allocation3 + $0x44] sm:$0x1]
        %v3086 = vsel %vm3069, 0, %v3085
        %3087 = vst [vmem:[#allocation3 + $0x44] sm:$0x1] %v3086
        %v3088 = vld [vmem:[#allocation3 + $0x50] sm:$0x1]
        %v3089 = vsel %vm3069, 0, %v3088
        %3090 = vst [vmem:[#allocation3 + $0x50] sm:$0x1] %v3089
        %v3091 = vld [vmem:[#allocation3 + $0x5c] sm:$0x1]
        %v3092 = vsel %vm3069, 0, %v3091
        %3093 = vst [vmem:[#allocation3 + $0x5c] sm:$0x1] %v3092
        %v3094 = vld [vmem:[#allocation3 + $0x68] sm:$0x1]
        %v3095 = vsel %vm3069, 0, %v3094
        %3096 = vst [vmem:[#allocation3 + $0x68] sm:$0x1] %v3095
        %v3097 = vld [vmem:[#allocation3 + $0x74] sm:$0x1]
        %v3098 = vsel %vm3069, 0, %v3097
        %3099 = vst [vmem:[#allocation3 + $0x74] sm:$0x1] %v3098
        %v3100 = vld [vmem:[#allocation3 + $0x80] sm:$0x1]
        %v3101 = vsel %vm3069, 0, %v3100
        %3102 = vst [vmem:[#allocation3 + $0x80] sm:$0x1] %v3101
        %v3103 = vld [vmem:[#allocation3 + $0x8c] sm:$0x1]
        %v3104 = vsel %vm3069, 0, %v3103
        %3105 = vst [vmem:[#allocation3 + $0x8c] sm:$0x1] %v3104
        %v3106 = vld [vmem:[#allocation3 + $0x98] sm:$0x1]
        %v3107 = vsel %vm3069, 0, %v3106
        %3108 = vst [vmem:[#allocation3 + $0x98] sm:$0x1] %v3107
        %v3109 = vld [vmem:[#allocation3 + $0xa4] sm:$0x1]
        %v3110 = vsel %vm3069, 0, %v3109
        %3111 = vst [vmem:[#allocation3 + $0xa4] sm:$0x1] %v3110
        %v3112 = vld [vmem:[#allocation3 + $0xb0] sm:$0x1]
        %v3113 = vsel %vm3069, 0, %v3112
        %3114 = vst [vmem:[#allocation3 + $0xb0] sm:$0x1] %v3113
        %v3115 = vld [vmem:[#allocation3 + $0xbc] sm:$0x1]
        %v3116 = vsel %vm3069, 0, %v3115
        %3117 = vst [vmem:[#allocation3 + $0xbc] sm:$0x1] %v3116
        %v3118 = vld [vmem:[#allocation3 + $0xc8] sm:$0x1]
        %v3119 = vsel %vm3069, 0, %v3118
        %3120 = vst [vmem:[#allocation3 + $0xc8] sm:$0x1] %v3119
        %v3121 = vld [vmem:[#allocation3 + $0xd4] sm:$0x1]
        %v3122 = vsel %vm3069, 0, %v3121
        %3123 = vst [vmem:[#allocation3 + $0xd4] sm:$0x1] %v3122
        %v3140 = vunpack.c.l.b16 %v2987
        %v3141 = vunpack.c.h.b16 %v2987
        %v3142 = vunpack.c.l.b16 %v2988
        %v3143 = vunpack.c.h.b16 %v2988
        %v3144 = vunpack.c.l.b16 %v2989
        %v3145 = vunpack.c.h.b16 %v2989
        %v3146 = vunpack.c.l.b16 %v2990
        %v3147 = vunpack.c.h.b16 %v2990
        %v3148 = vunpack.c.l.b16 %v2991
        %v3149 = vunpack.c.h.b16 %v2991
        %v3150 = vunpack.c.l.b16 %v2992
        %v3151 = vunpack.c.h.b16 %v2992
        %v3152 = vunpack.c.l.b16 %v2993
        %v3153 = vunpack.c.h.b16 %v2993
        %v3154 = vunpack.c.l.b16 %v2994
        %v3155 = vunpack.c.h.b16 %v2994
        %v3156 = vunpack.c.l.b16 %v2995
        %v3157 = vunpack.c.h.b16 %v2995
        %v3158 = vunpack.c.l.b16 %v2996
        %v3159 = vunpack.c.h.b16 %v2996
        %v3160 = vunpack.c.l.b16 %v2997
        %v3161 = vunpack.c.h.b16 %v2997
        %v3162 = vunpack.c.l.b16 %v2998
        %v3163 = vunpack.c.h.b16 %v2998
        %v3164 = vunpack.c.l.b16 %v2999
        %v3165 = vunpack.c.h.b16 %v2999
        %v3166 = vunpack.c.l.b16 %v3000
        %v3167 = vunpack.c.h.b16 %v3000
        %v3168 = vunpack.c.l.b16 %v3001
        %v3169 = vunpack.c.h.b16 %v3001
        %v3170 = vunpack.c.l.b16 %v3002
        %v3171 = vunpack.c.h.b16 %v3002
        %v3172 = vpack.c.b16 %v3140, %v3140
        %v3173 = vpack.c.b16 %v3141, %v3141
        %v3174 = vpack.c.b16 %v3142, %v3142
        %v3175 = vpack.c.b16 %v3143, %v3143
        %v3176 = vpack.c.b16 %v3144, %v3144
        %v3177 = vpack.c.b16 %v3145, %v3145
        %v3178 = vpack.c.b16 %v3146, %v3146
        %v3179 = vpack.c.b16 %v3147, %v3147
        %v3180 = vpack.c.b16 %v3148, %v3148
        %v3181 = vpack.c.b16 %v3149, %v3149
        %v3182 = vpack.c.b16 %v3150, %v3150
        %v3183 = vpack.c.b16 %v3151, %v3151
        %v3184 = vpack.c.b16 %v3152, %v3152
        %v3185 = vpack.c.b16 %v3153, %v3153
        %v3186 = vpack.c.b16 %v3154, %v3154
        %v3187 = vpack.c.b16 %v3155, %v3155
        %v3188 = vpack.c.b16 %v3156, %v3156
        %v3189 = vpack.c.b16 %v3157, %v3157
        %v3190 = vpack.c.b16 %v3158, %v3158
        %v3191 = vpack.c.b16 %v3159, %v3159
        %v3192 = vpack.c.b16 %v3160, %v3160
        %v3193 = vpack.c.b16 %v3161, %v3161
        %v3194 = vpack.c.b16 %v3162, %v3162
        %v3195 = vpack.c.b16 %v3163, %v3163
        %v3196 = vpack.c.b16 %v3164, %v3164
        %v3197 = vpack.c.b16 %v3165, %v3165
        %v3198 = vpack.c.b16 %v3166, %v3166
        %v3199 = vpack.c.b16 %v3167, %v3167
        %v3200 = vpack.c.b16 %v3168, %v3168
        %v3201 = vpack.c.b16 %v3169, %v3169
        %v3202 = vpack.c.b16 %v3170, %v3170
        %v3203 = vpack.c.b16 %v3171, %v3171
        %vm3204 = vsmask.f32 4368
        %vm3205 = vmor %vm3012, %vm3204
        %v3207 = vshrl.u32 %v3172, 16
        %v3209 = vrot.slane %v3207, 7
        %v3210 = vshll.u32 %v3172, 16
        %v3212 = vor.u32 %v3209, %v3210
        %v3213 = vrot.slane %v3209, 4
        %v3215 = vshrl.u32 %v3173, 16
        %v3217 = vrot.slane %v3215, 7
        %v3218 = vshll.u32 %v3173, 16
        %v3220 = vor.u32 %v3217, %v3218
        %v3221 = vsel %vm3205, %v3213, %v3220
        %v3222 = vrot.slane %v3217, 4
        %v3224 = vshrl.u32 %v3174, 16
        %v3226 = vrot.slane %v3224, 7
        %v3227 = vshll.u32 %v3174, 16
        %v3229 = vor.u32 %v3226, %v3227
        %v3230 = vrot.slane %v3226, 4
        %v3232 = vshrl.u32 %v3175, 16
        %v3234 = vrot.slane %v3232, 7
        %v3235 = vshll.u32 %v3175, 16
        %v3237 = vor.u32 %v3234, %v3235
        %v3238 = vsel %vm3205, %v3230, %v3237
        %v3239 = vrot.slane %v3234, 4
        %v3241 = vshrl.u32 %v3176, 16
        %v3243 = vrot.slane %v3241, 7
        %v3244 = vshll.u32 %v3176, 16
        %v3246 = vor.u32 %v3243, %v3244
        %v3247 = vrot.slane %v3243, 4
        %v3249 = vshrl.u32 %v3177, 16
        %v3251 = vrot.slane %v3249, 7
        %v3252 = vshll.u32 %v3177, 16
        %v3254 = vor.u32 %v3251, %v3252
        %v3255 = vsel %vm3205, %v3247, %v3254
        %v3256 = vrot.slane %v3251, 4
        %v3258 = vshrl.u32 %v3178, 16
        %v3260 = vrot.slane %v3258, 7
        %v3261 = vshll.u32 %v3178, 16
        %v3263 = vor.u32 %v3260, %v3261
        %v3264 = vrot.slane %v3260, 4
        %v3266 = vshrl.u32 %v3179, 16
        %v3268 = vrot.slane %v3266, 7
        %v3269 = vshll.u32 %v3179, 16
        %v3271 = vor.u32 %v3268, %v3269
        %v3272 = vsel %vm3205, %v3264, %v3271
        %v3273 = vrot.slane %v3268, 4
        %v3275 = vshrl.u32 %v3180, 16
        %v3277 = vrot.slane %v3275, 7
        %v3278 = vshll.u32 %v3180, 16
        %v3280 = vor.u32 %v3277, %v3278
        %v3281 = vrot.slane %v3277, 4
        %v3283 = vshrl.u32 %v3181, 16
        %v3285 = vrot.slane %v3283, 7
        %v3286 = vshll.u32 %v3181, 16
        %v3288 = vor.u32 %v3285, %v3286
        %v3289 = vsel %vm3205, %v3281, %v3288
        %v3290 = vrot.slane %v3285, 4
        %v3292 = vshrl.u32 %v3182, 16
        %v3294 = vrot.slane %v3292, 7
        %v3295 = vshll.u32 %v3182, 16
        %v3297 = vor.u32 %v3294, %v3295
        %v3298 = vrot.slane %v3294, 4
        %v3300 = vshrl.u32 %v3183, 16
        %v3302 = vrot.slane %v3300, 7
        %v3303 = vshll.u32 %v3183, 16
        %v3305 = vor.u32 %v3302, %v3303
        %v3306 = vsel %vm3205, %v3298, %v3305
        %v3307 = vrot.slane %v3302, 4
        %v3309 = vshrl.u32 %v3184, 16
        %v3311 = vrot.slane %v3309, 7
        %v3312 = vshll.u32 %v3184, 16
        %v3314 = vor.u32 %v3311, %v3312
        %v3315 = vrot.slane %v3311, 4
        %v3317 = vshrl.u32 %v3185, 16
        %v3319 = vrot.slane %v3317, 7
        %v3320 = vshll.u32 %v3185, 16
        %v3322 = vor.u32 %v3319, %v3320
        %v3323 = vsel %vm3205, %v3315, %v3322
        %v3324 = vrot.slane %v3319, 4
        %v3326 = vshrl.u32 %v3186, 16
        %v3328 = vrot.slane %v3326, 7
        %v3329 = vshll.u32 %v3186, 16
        %v3331 = vor.u32 %v3328, %v3329
        %v3332 = vrot.slane %v3328, 4
        %v3334 = vshrl.u32 %v3187, 16
        %v3336 = vrot.slane %v3334, 7
        %v3337 = vshll.u32 %v3187, 16
        %v3339 = vor.u32 %v3336, %v3337
        %v3340 = vsel %vm3205, %v3332, %v3339
        %v3341 = vrot.slane %v3336, 4
        %v3343 = vshrl.u32 %v3188, 16
        %v3345 = vrot.slane %v3343, 7
        %v3346 = vshll.u32 %v3188, 16
        %v3348 = vor.u32 %v3345, %v3346
        %v3349 = vrot.slane %v3345, 4
        %v3351 = vshrl.u32 %v3189, 16
        %v3353 = vrot.slane %v3351, 7
        %v3354 = vshll.u32 %v3189, 16
        %v3356 = vor.u32 %v3353, %v3354
        %v3357 = vsel %vm3205, %v3349, %v3356
        %v3358 = vrot.slane %v3353, 4
        %v3360 = vshrl.u32 %v3190, 16
        %v3362 = vrot.slane %v3360, 7
        %v3363 = vshll.u32 %v3190, 16
        %v3365 = vor.u32 %v3362, %v3363
        %v3366 = vrot.slane %v3362, 4
        %v3368 = vshrl.u32 %v3191, 16
        %v3370 = vrot.slane %v3368, 7
        %v3371 = vshll.u32 %v3191, 16
        %v3373 = vor.u32 %v3370, %v3371
        %v3374 = vsel %vm3205, %v3366, %v3373
        %v3375 = vrot.slane %v3370, 4
        %v3377 = vshrl.u32 %v3192, 16
        %v3379 = vrot.slane %v3377, 7
        %v3380 = vshll.u32 %v3192, 16
        %v3382 = vor.u32 %v3379, %v3380
        %v3383 = vrot.slane %v3379, 4
        %v3385 = vshrl.u32 %v3193, 16
        %v3387 = vrot.slane %v3385, 7
        %v3388 = vshll.u32 %v3193, 16
        %v3390 = vor.u32 %v3387, %v3388
        %v3391 = vsel %vm3205, %v3383, %v3390
        %v3392 = vrot.slane %v3387, 4
        %v3394 = vshrl.u32 %v3194, 16
        %v3396 = vrot.slane %v3394, 7
        %v3397 = vshll.u32 %v3194, 16
        %v3399 = vor.u32 %v3396, %v3397
        %v3400 = vrot.slane %v3396, 4
        %v3402 = vshrl.u32 %v3195, 16
        %v3404 = vrot.slane %v3402, 7
        %v3405 = vshll.u32 %v3195, 16
        %v3407 = vor.u32 %v3404, %v3405
        %v3408 = vsel %vm3205, %v3400, %v3407
        %v3409 = vrot.slane %v3404, 4
        %v3411 = vshrl.u32 %v3196, 16
        %v3413 = vrot.slane %v3411, 7
        %v3414 = vshll.u32 %v3196, 16
        %v3416 = vor.u32 %v3413, %v3414
        %v3417 = vrot.slane %v3413, 4
        %v3419 = vshrl.u32 %v3197, 16
        %v3421 = vrot.slane %v3419, 7
        %v3422 = vshll.u32 %v3197, 16
        %v3424 = vor.u32 %v3421, %v3422
        %v3425 = vsel %vm3205, %v3417, %v3424
        %v3426 = vrot.slane %v3421, 4
        %v3428 = vshrl.u32 %v3198, 16
        %v3430 = vrot.slane %v3428, 7
        %v3431 = vshll.u32 %v3198, 16
        %v3433 = vor.u32 %v3430, %v3431
        %v3434 = vrot.slane %v3430, 4
        %v3436 = vshrl.u32 %v3199, 16
        %v3438 = vrot.slane %v3436, 7
        %v3439 = vshll.u32 %v3199, 16
        %v3441 = vor.u32 %v3438, %v3439
        %v3442 = vsel %vm3205, %v3434, %v3441
        %v3443 = vrot.slane %v3438, 4
        %v3445 = vshrl.u32 %v3200, 16
        %v3447 = vrot.slane %v3445, 7
        %v3448 = vshll.u32 %v3200, 16
        %v3450 = vor.u32 %v3447, %v3448
        %v3451 = vrot.slane %v3447, 4
        %v3453 = vshrl.u32 %v3201, 16
        %v3455 = vrot.slane %v3453, 7
        %v3456 = vshll.u32 %v3201, 16
        %v3458 = vor.u32 %v3455, %v3456
        %v3459 = vsel %vm3205, %v3451, %v3458
        %v3460 = vrot.slane %v3455, 4
        %v3462 = vshrl.u32 %v3202, 16
        %v3464 = vrot.slane %v3462, 7
        %v3465 = vshll.u32 %v3202, 16
        %v3467 = vor.u32 %v3464, %v3465
        %v3468 = vrot.slane %v3464, 4
        %v3470 = vshrl.u32 %v3203, 16
        %v3472 = vrot.slane %v3470, 7
        %v3473 = vshll.u32 %v3203, 16
        %v3475 = vor.u32 %v3472, %v3473
        %v3476 = vsel %vm3205, %v3468, %v3475
        %v3477 = vrot.slane %v3472, 4
        %s3526 = scalar_lea.vmem [#allocation3], 12
        %vm3527 = vcmask 125952
        %vm3528 = vmand %vm3527, %vm3068
        %v3529 = vld [vmem:[%s3526] sm:$0xf]
        %v3530 = vsel %vm3528, %v3212, %v3529
        %3531 = vst [vmem:[%s3526] sm:$0xf] %v3530
        %3532 = vst.msk [vmem:[%s3526 + $0x4] sm:$0xf] %vm3003, %v3221
        %v3533 = vld [vmem:[%s3526 + $0x8] sm:$0x1]
        %v3534 = vsel %vm3013, %v3222, %v3533
        %3535 = vst [vmem:[%s3526 + $0x8] sm:$0x1] %v3534
        %v3536 = vld [vmem:[%s3526 + $0xc] sm:$0xf]
        %v3537 = vsel %vm3528, %v3229, %v3536
        %3538 = vst [vmem:[%s3526 + $0xc] sm:$0xf] %v3537
        %3539 = vst.msk [vmem:[%s3526 + $0x10] sm:$0xf] %vm3003, %v3238
        %v3540 = vld [vmem:[%s3526 + $0x14] sm:$0x1]
        %v3541 = vsel %vm3013, %v3239, %v3540
        %3542 = vst [vmem:[%s3526 + $0x14] sm:$0x1] %v3541
        %v3543 = vld [vmem:[%s3526 + $0x18] sm:$0xf]
        %v3544 = vsel %vm3528, %v3246, %v3543
        %3545 = vst [vmem:[%s3526 + $0x18] sm:$0xf] %v3544
        %3546 = vst.msk [vmem:[%s3526 + $0x1c] sm:$0xf] %vm3003, %v3255
        %v3547 = vld [vmem:[%s3526 + $0x20] sm:$0x1]
        %v3548 = vsel %vm3013, %v3256, %v3547
        %3549 = vst [vmem:[%s3526 + $0x20] sm:$0x1] %v3548
        %v3550 = vld [vmem:[%s3526 + $0x24] sm:$0xf]
        %v3551 = vsel %vm3528, %v3263, %v3550
        %3552 = vst [vmem:[%s3526 + $0x24] sm:$0xf] %v3551
        %3553 = vst.msk [vmem:[%s3526 + $0x28] sm:$0xf] %vm3003, %v3272
        %v3554 = vld [vmem:[%s3526 + $0x2c] sm:$0x1]
        %v3555 = vsel %vm3013, %v3273, %v3554
        %3556 = vst [vmem:[%s3526 + $0x2c] sm:$0x1] %v3555
        %v3557 = vld [vmem:[%s3526 + $0x30] sm:$0xf]
        %v3558 = vsel %vm3528, %v3280, %v3557
        %3559 = vst [vmem:[%s3526 + $0x30] sm:$0xf] %v3558
        %3560 = vst.msk [vmem:[%s3526 + $0x34] sm:$0xf] %vm3003, %v3289
        %v3561 = vld [vmem:[%s3526 + $0x38] sm:$0x1]
        %v3562 = vsel %vm3013, %v3290, %v3561
        %3563 = vst [vmem:[%s3526 + $0x38] sm:$0x1] %v3562
        %v3564 = vld [vmem:[%s3526 + $0x3c] sm:$0xf]
        %v3565 = vsel %vm3528, %v3297, %v3564
        %3566 = vst [vmem:[%s3526 + $0x3c] sm:$0xf] %v3565
        %3567 = vst.msk [vmem:[%s3526 + $0x40] sm:$0xf] %vm3003, %v3306
        %v3568 = vld [vmem:[%s3526 + $0x44] sm:$0x1]
        %v3569 = vsel %vm3013, %v3307, %v3568
        %3570 = vst [vmem:[%s3526 + $0x44] sm:$0x1] %v3569
        %v3571 = vld [vmem:[%s3526 + $0x48] sm:$0xf]
        %v3572 = vsel %vm3528, %v3314, %v3571
        %3573 = vst [vmem:[%s3526 + $0x48] sm:$0xf] %v3572
        %3574 = vst.msk [vmem:[%s3526 + $0x4c] sm:$0xf] %vm3003, %v3323
        %v3575 = vld [vmem:[%s3526 + $0x50] sm:$0x1]
        %v3576 = vsel %vm3013, %v3324, %v3575
        %3577 = vst [vmem:[%s3526 + $0x50] sm:$0x1] %v3576
        %v3578 = vld [vmem:[%s3526 + $0x54] sm:$0xf]
        %v3579 = vsel %vm3528, %v3331, %v3578
        %3580 = vst [vmem:[%s3526 + $0x54] sm:$0xf] %v3579
        %3581 = vst.msk [vmem:[%s3526 + $0x58] sm:$0xf] %vm3003, %v3340
        %v3582 = vld [vmem:[%s3526 + $0x5c] sm:$0x1]
        %v3583 = vsel %vm3013, %v3341, %v3582
        %3584 = vst [vmem:[%s3526 + $0x5c] sm:$0x1] %v3583
        %v3585 = vld [vmem:[%s3526 + $0x60] sm:$0xf]
        %v3586 = vsel %vm3528, %v3348, %v3585
        %3587 = vst [vmem:[%s3526 + $0x60] sm:$0xf] %v3586
        %3588 = vst.msk [vmem:[%s3526 + $0x64] sm:$0xf] %vm3003, %v3357
        %v3589 = vld [vmem:[%s3526 + $0x68] sm:$0x1]
        %v3590 = vsel %vm3013, %v3358, %v3589
        %3591 = vst [vmem:[%s3526 + $0x68] sm:$0x1] %v3590
        %v3592 = vld [vmem:[%s3526 + $0x6c] sm:$0xf]
        %v3593 = vsel %vm3528, %v3365, %v3592
        %3594 = vst [vmem:[%s3526 + $0x6c] sm:$0xf] %v3593
        %3595 = vst.msk [vmem:[%s3526 + $0x70] sm:$0xf] %vm3003, %v3374
        %v3596 = vld [vmem:[%s3526 + $0x74] sm:$0x1]
        %v3597 = vsel %vm3013, %v3375, %v3596
        %3598 = vst [vmem:[%s3526 + $0x74] sm:$0x1] %v3597
        %v3599 = vld [vmem:[%s3526 + $0x78] sm:$0xf]
        %v3600 = vsel %vm3528, %v3382, %v3599
        %3601 = vst [vmem:[%s3526 + $0x78] sm:$0xf] %v3600
        %3602 = vst.msk [vmem:[%s3526 + $0x7c] sm:$0xf] %vm3003, %v3391
        %v3603 = vld [vmem:[%s3526 + $0x80] sm:$0x1]
        %v3604 = vsel %vm3013, %v3392, %v3603
        %3605 = vst [vmem:[%s3526 + $0x80] sm:$0x1] %v3604
        %v3606 = vld [vmem:[%s3526 + $0x84] sm:$0xf]
        %v3607 = vsel %vm3528, %v3399, %v3606
        %3608 = vst [vmem:[%s3526 + $0x84] sm:$0xf] %v3607
        %3609 = vst.msk [vmem:[%s3526 + $0x88] sm:$0xf] %vm3003, %v3408
        %v3610 = vld [vmem:[%s3526 + $0x8c] sm:$0x1]
        %v3611 = vsel %vm3013, %v3409, %v3610
        %3612 = vst [vmem:[%s3526 + $0x8c] sm:$0x1] %v3611
        %v3613 = vld [vmem:[%s3526 + $0x90] sm:$0xf]
        %v3614 = vsel %vm3528, %v3416, %v3613
        %3615 = vst [vmem:[%s3526 + $0x90] sm:$0xf] %v3614
        %3616 = vst.msk [vmem:[%s3526 + $0x94] sm:$0xf] %vm3003, %v3425
        %v3617 = vld [vmem:[%s3526 + $0x98] sm:$0x1]
        %v3618 = vsel %vm3013, %v3426, %v3617
        %3619 = vst [vmem:[%s3526 + $0x98] sm:$0x1] %v3618
        %v3620 = vld [vmem:[%s3526 + $0x9c] sm:$0xf]
        %v3621 = vsel %vm3528, %v3433, %v3620
        %3622 = vst [vmem:[%s3526 + $0x9c] sm:$0xf] %v3621
        %3623 = vst.msk [vmem:[%s3526 + $0xa0] sm:$0xf] %vm3003, %v3442
        %v3624 = vld [vmem:[%s3526 + $0xa4] sm:$0x1]
        %v3625 = vsel %vm3013, %v3443, %v3624
        %3626 = vst [vmem:[%s3526 + $0xa4] sm:$0x1] %v3625
        %v3627 = vld [vmem:[%s3526 + $0xa8] sm:$0xf]
        %v3628 = vsel %vm3528, %v3450, %v3627
        %3629 = vst [vmem:[%s3526 + $0xa8] sm:$0xf] %v3628
        %3630 = vst.msk [vmem:[%s3526 + $0xac] sm:$0xf] %vm3003, %v3459
        %v3631 = vld [vmem:[%s3526 + $0xb0] sm:$0x1]
        %v3632 = vsel %vm3013, %v3460, %v3631
        %3633 = vst [vmem:[%s3526 + $0xb0] sm:$0x1] %v3632
        %v3634 = vld [vmem:[%s3526 + $0xb4] sm:$0xf]
        %v3635 = vsel %vm3528, %v3467, %v3634
        %3636 = vst [vmem:[%s3526 + $0xb4] sm:$0xf] %v3635
        %3637 = vst.msk [vmem:[%s3526 + $0xb8] sm:$0xf] %vm3003, %v3476
        %v3638 = vld [vmem:[%s3526 + $0xbc] sm:$0x1]
        %v3639 = vsel %vm3013, %v3477, %v3638
        %3640 = vst [vmem:[%s3526 + $0xbc] sm:$0x1] %v3639
        %v3641 = vld [vmem:[#allocation3] sm:$0xf]
        %v3642 = vld [vmem:[#allocation3 + $0x4] sm:$0xf]
        %v3643 = vld [vmem:[#allocation3 + $0xc] sm:$0xf]
        %v3644 = vld [vmem:[#allocation3 + $0x10] sm:$0xf]
        %v3645 = vld [vmem:[#allocation3 + $0x18] sm:$0xf]
        %v3646 = vld [vmem:[#allocation3 + $0x1c] sm:$0xf]
        %v3647 = vld [vmem:[#allocation3 + $0x24] sm:$0xf]
        %v3648 = vld [vmem:[#allocation3 + $0x28] sm:$0xf]
        %v3649 = vld [vmem:[#allocation3 + $0x30] sm:$0xf]
        %v3650 = vld [vmem:[#allocation3 + $0x34] sm:$0xf]
        %v3651 = vld [vmem:[#allocation3 + $0x3c] sm:$0xf]
        %v3652 = vld [vmem:[#allocation3 + $0x40] sm:$0xf]
        %v3653 = vld [vmem:[#allocation3 + $0x48] sm:$0xf]
        %v3654 = vld [vmem:[#allocation3 + $0x4c] sm:$0xf]
        %v3655 = vld [vmem:[#allocation3 + $0x54] sm:$0xf]
        %v3656 = vld [vmem:[#allocation3 + $0x58] sm:$0xf]
        %v3657 = vld [vmem:[#allocation3 + $0x60] sm:$0xf]
        %v3658 = vld [vmem:[#allocation3 + $0x64] sm:$0xf]
        %v3659 = vld [vmem:[#allocation3 + $0x6c] sm:$0xf]
        %v3660 = vld [vmem:[#allocation3 + $0x70] sm:$0xf]
        %v3661 = vld [vmem:[#allocation3 + $0x78] sm:$0xf]
        %v3662 = vld [vmem:[#allocation3 + $0x7c] sm:$0xf]
        %v3663 = vld [vmem:[#allocation3 + $0x84] sm:$0xf]
        %v3664 = vld [vmem:[#allocation3 + $0x88] sm:$0xf]
        %v3665 = vld [vmem:[#allocation3 + $0x90] sm:$0xf]
        %v3666 = vld [vmem:[#allocation3 + $0x94] sm:$0xf]
        %v3667 = vld [vmem:[#allocation3 + $0x9c] sm:$0xf]
        %v3668 = vld [vmem:[#allocation3 + $0xa0] sm:$0xf]
        %v3669 = vld [vmem:[#allocation3 + $0xa8] sm:$0xf]
        %v3670 = vld [vmem:[#allocation3 + $0xac] sm:$0xf]
        %v3671 = vld [vmem:[#allocation3 + $0xb4] sm:$0xf]
        %v3672 = vld [vmem:[#allocation3 + $0xb8] sm:$0xf]
        %v3673 = vld [vmem:[#allocation3 + $0x8] sm:$0x1]
        %v3674 = vld [vmem:[#allocation3 + $0x14] sm:$0x1]
        %v3675 = vld [vmem:[#allocation3 + $0x20] sm:$0x1]
        %v3676 = vld [vmem:[#allocation3 + $0x2c] sm:$0x1]
        %v3677 = vld [vmem:[#allocation3 + $0x38] sm:$0x1]
        %v3678 = vld [vmem:[#allocation3 + $0x44] sm:$0x1]
        %v3679 = vld [vmem:[#allocation3 + $0x50] sm:$0x1]
        %v3680 = vld [vmem:[#allocation3 + $0x5c] sm:$0x1]
        %v3681 = vld [vmem:[#allocation3 + $0x68] sm:$0x1]
        %v3682 = vld [vmem:[#allocation3 + $0x74] sm:$0x1]
        %v3683 = vld [vmem:[#allocation3 + $0x80] sm:$0x1]
        %v3684 = vld [vmem:[#allocation3 + $0x8c] sm:$0x1]
        %v3685 = vld [vmem:[#allocation3 + $0x98] sm:$0x1]
        %v3686 = vld [vmem:[#allocation3 + $0xa4] sm:$0x1]
        %v3687 = vld [vmem:[#allocation3 + $0xb0] sm:$0x1]
        %v3688 = vld [vmem:[#allocation3 + $0xbc] sm:$0x1]
        %vm3689 = vsmask.f32 3328
        %vm3690 = vsmask.f32 7440
        %vm3691 = vmor %vm3689, %vm3690
        %v3693 = vshrl.u32 %v3641, 16
        %v3695 = vrot.slane %v3693, 4
        %v3696 = vshll.u32 %v3641, 16
        %v3698 = vrot.slane %v3696, 5
        %v3699 = vor.u32 %v3695, %v3698
        %v3700 = vrot.slane %v3699, 4
        %v3702 = vshll.u32 %v3642, 16
        %v3704 = vrot.slane %v3702, 5
        %v3705 = vsel %vm3691, %v3700, %v3704
        %v3706 = vshrl.u32 %v3642, 16
        %v3708 = vrot.slane %v3706, 4
        %v3709 = vor.u32 %v3708, %v3704
        %v3710 = vrot.slane %v3709, 4
        %v3712 = vshll.u32 %v3673, 16
        %v3714 = vrot.slane %v3712, 5
        %v3715 = vsel %vm3691, %v3710, %v3714
        %v3717 = vshrl.u32 %v3643, 16
        %v3719 = vrot.slane %v3717, 4
        %v3720 = vshll.u32 %v3643, 16
        %v3722 = vrot.slane %v3720, 5
        %v3723 = vor.u32 %v3719, %v3722
        %v3724 = vrot.slane %v3723, 4
        %v3726 = vshll.u32 %v3644, 16
        %v3728 = vrot.slane %v3726, 5
        %v3729 = vsel %vm3691, %v3724, %v3728
        %v3730 = vshrl.u32 %v3644, 16
        %v3732 = vrot.slane %v3730, 4
        %v3733 = vor.u32 %v3732, %v3728
        %v3734 = vrot.slane %v3733, 4
        %v3736 = vshll.u32 %v3674, 16
        %v3738 = vrot.slane %v3736, 5
        %v3739 = vsel %vm3691, %v3734, %v3738
        %v3741 = vshrl.u32 %v3645, 16
        %v3743 = vrot.slane %v3741, 4
        %v3744 = vshll.u32 %v3645, 16
        %v3746 = vrot.slane %v3744, 5
        %v3747 = vor.u32 %v3743, %v3746
        %v3748 = vrot.slane %v3747, 4
        %v3750 = vshll.u32 %v3646, 16
        %v3752 = vrot.slane %v3750, 5
        %v3753 = vsel %vm3691, %v3748, %v3752
        %v3754 = vshrl.u32 %v3646, 16
        %v3756 = vrot.slane %v3754, 4
        %v3757 = vor.u32 %v3756, %v3752
        %v3758 = vrot.slane %v3757, 4
        %v3760 = vshll.u32 %v3675, 16
        %v3762 = vrot.slane %v3760, 5
        %v3763 = vsel %vm3691, %v3758, %v3762
        %v3765 = vshrl.u32 %v3647, 16
        %v3767 = vrot.slane %v3765, 4
        %v3768 = vshll.u32 %v3647, 16
        %v3770 = vrot.slane %v3768, 5
        %v3771 = vor.u32 %v3767, %v3770
        %v3772 = vrot.slane %v3771, 4
        %v3774 = vshll.u32 %v3648, 16
        %v3776 = vrot.slane %v3774, 5
        %v3777 = vsel %vm3691, %v3772, %v3776
        %v3778 = vshrl.u32 %v3648, 16
        %v3780 = vrot.slane %v3778, 4
        %v3781 = vor.u32 %v3780, %v3776
        %v3782 = vrot.slane %v3781, 4
        %v3784 = vshll.u32 %v3676, 16
        %v3786 = vrot.slane %v3784, 5
        %v3787 = vsel %vm3691, %v3782, %v3786
        %v3789 = vshrl.u32 %v3649, 16
        %v3791 = vrot.slane %v3789, 4
        %v3792 = vshll.u32 %v3649, 16
        %v3794 = vrot.slane %v3792, 5
        %v3795 = vor.u32 %v3791, %v3794
        %v3796 = vrot.slane %v3795, 4
        %v3798 = vshll.u32 %v3650, 16
        %v3800 = vrot.slane %v3798, 5
        %v3801 = vsel %vm3691, %v3796, %v3800
        %v3802 = vshrl.u32 %v3650, 16
        %v3804 = vrot.slane %v3802, 4
        %v3805 = vor.u32 %v3804, %v3800
        %v3806 = vrot.slane %v3805, 4
        %v3808 = vshll.u32 %v3677, 16
        %v3810 = vrot.slane %v3808, 5
        %v3811 = vsel %vm3691, %v3806, %v3810
        %v3813 = vshrl.u32 %v3651, 16
        %v3815 = vrot.slane %v3813, 4
        %v3816 = vshll.u32 %v3651, 16
        %v3818 = vrot.slane %v3816, 5
        %v3819 = vor.u32 %v3815, %v3818
        %v3820 = vrot.slane %v3819, 4
        %v3822 = vshll.u32 %v3652, 16
        %v3824 = vrot.slane %v3822, 5
        %v3825 = vsel %vm3691, %v3820, %v3824
        %v3826 = vshrl.u32 %v3652, 16
        %v3828 = vrot.slane %v3826, 4
        %v3829 = vor.u32 %v3828, %v3824
        %v3830 = vrot.slane %v3829, 4
        %v3832 = vshll.u32 %v3678, 16
        %v3834 = vrot.slane %v3832, 5
        %v3835 = vsel %vm3691, %v3830, %v3834
        %v3837 = vshrl.u32 %v3653, 16
        %v3839 = vrot.slane %v3837, 4
        %v3840 = vshll.u32 %v3653, 16
        %v3842 = vrot.slane %v3840, 5
        %v3843 = vor.u32 %v3839, %v3842
        %v3844 = vrot.slane %v3843, 4
        %v3846 = vshll.u32 %v3654, 16
        %v3848 = vrot.slane %v3846, 5
        %v3849 = vsel %vm3691, %v3844, %v3848
        %v3850 = vshrl.u32 %v3654, 16
        %v3852 = vrot.slane %v3850, 4
        %v3853 = vor.u32 %v3852, %v3848
        %v3854 = vrot.slane %v3853, 4
        %v3856 = vshll.u32 %v3679, 16
        %v3858 = vrot.slane %v3856, 5
        %v3859 = vsel %vm3691, %v3854, %v3858
        %v3861 = vshrl.u32 %v3655, 16
        %v3863 = vrot.slane %v3861, 4
        %v3864 = vshll.u32 %v3655, 16
        %v3866 = vrot.slane %v3864, 5
        %v3867 = vor.u32 %v3863, %v3866
        %v3868 = vrot.slane %v3867, 4
        %v3870 = vshll.u32 %v3656, 16
        %v3872 = vrot.slane %v3870, 5
        %v3873 = vsel %vm3691, %v3868, %v3872
        %v3874 = vshrl.u32 %v3656, 16
        %v3876 = vrot.slane %v3874, 4
        %v3877 = vor.u32 %v3876, %v3872
        %v3878 = vrot.slane %v3877, 4
        %v3880 = vshll.u32 %v3680, 16
        %v3882 = vrot.slane %v3880, 5
        %v3883 = vsel %vm3691, %v3878, %v3882
        %v3885 = vshrl.u32 %v3657, 16
        %v3887 = vrot.slane %v3885, 4
        %v3888 = vshll.u32 %v3657, 16
        %v3890 = vrot.slane %v3888, 5
        %v3891 = vor.u32 %v3887, %v3890
        %v3892 = vrot.slane %v3891, 4
        %v3894 = vshll.u32 %v3658, 16
        %v3896 = vrot.slane %v3894, 5
        %v3897 = vsel %vm3691, %v3892, %v3896
        %v3898 = vshrl.u32 %v3658, 16
        %v3900 = vrot.slane %v3898, 4
        %v3901 = vor.u32 %v3900, %v3896
        %v3902 = vrot.slane %v3901, 4
        %v3904 = vshll.u32 %v3681, 16
        %v3906 = vrot.slane %v3904, 5
        %v3907 = vsel %vm3691, %v3902, %v3906
        %v3909 = vshrl.u32 %v3659, 16
        %v3911 = vrot.slane %v3909, 4
        %v3912 = vshll.u32 %v3659, 16
        %v3914 = vrot.slane %v3912, 5
        %v3915 = vor.u32 %v3911, %v3914
        %v3916 = vrot.slane %v3915, 4
        %v3918 = vshll.u32 %v3660, 16
        %v3920 = vrot.slane %v3918, 5
        %v3921 = vsel %vm3691, %v3916, %v3920
        %v3922 = vshrl.u32 %v3660, 16
        %v3924 = vrot.slane %v3922, 4
        %v3925 = vor.u32 %v3924, %v3920
        %v3926 = vrot.slane %v3925, 4
        %v3928 = vshll.u32 %v3682, 16
        %v3930 = vrot.slane %v3928, 5
        %v3931 = vsel %vm3691, %v3926, %v3930
        %v3933 = vshrl.u32 %v3661, 16
        %v3935 = vrot.slane %v3933, 4
        %v3936 = vshll.u32 %v3661, 16
        %v3938 = vrot.slane %v3936, 5
        %v3939 = vor.u32 %v3935, %v3938
        %v3940 = vrot.slane %v3939, 4
        %v3942 = vshll.u32 %v3662, 16
        %v3944 = vrot.slane %v3942, 5
        %v3945 = vsel %vm3691, %v3940, %v3944
        %v3946 = vshrl.u32 %v3662, 16
        %v3948 = vrot.slane %v3946, 4
        %v3949 = vor.u32 %v3948, %v3944
        %v3950 = vrot.slane %v3949, 4
        %v3952 = vshll.u32 %v3683, 16
        %v3954 = vrot.slane %v3952, 5
        %v3955 = vsel %vm3691, %v3950, %v3954
        %v3957 = vshrl.u32 %v3663, 16
        %v3959 = vrot.slane %v3957, 4
        %v3960 = vshll.u32 %v3663, 16
        %v3962 = vrot.slane %v3960, 5
        %v3963 = vor.u32 %v3959, %v3962
        %v3964 = vrot.slane %v3963, 4
        %v3966 = vshll.u32 %v3664, 16
        %v3968 = vrot.slane %v3966, 5
        %v3969 = vsel %vm3691, %v3964, %v3968
        %v3970 = vshrl.u32 %v3664, 16
        %v3972 = vrot.slane %v3970, 4
        %v3973 = vor.u32 %v3972, %v3968
        %v3974 = vrot.slane %v3973, 4
        %v3976 = vshll.u32 %v3684, 16
        %v3978 = vrot.slane %v3976, 5
        %v3979 = vsel %vm3691, %v3974, %v3978
        %v3981 = vshrl.u32 %v3665, 16
        %v3983 = vrot.slane %v3981, 4
        %v3984 = vshll.u32 %v3665, 16
        %v3986 = vrot.slane %v3984, 5
        %v3987 = vor.u32 %v3983, %v3986
        %v3988 = vrot.slane %v3987, 4
        %v3990 = vshll.u32 %v3666, 16
        %v3992 = vrot.slane %v3990, 5
        %v3993 = vsel %vm3691, %v3988, %v3992
        %v3994 = vshrl.u32 %v3666, 16
        %v3996 = vrot.slane %v3994, 4
        %v3997 = vor.u32 %v3996, %v3992
        %v3998 = vrot.slane %v3997, 4
        %v4000 = vshll.u32 %v3685, 16
        %v4002 = vrot.slane %v4000, 5
        %v4003 = vsel %vm3691, %v3998, %v4002
        %v4005 = vshrl.u32 %v3667, 16
        %v4007 = vrot.slane %v4005, 4
        %v4008 = vshll.u32 %v3667, 16
        %v4010 = vrot.slane %v4008, 5
        %v4011 = vor.u32 %v4007, %v4010
        %v4012 = vrot.slane %v4011, 4
        %v4014 = vshll.u32 %v3668, 16
        %v4016 = vrot.slane %v4014, 5
        %v4017 = vsel %vm3691, %v4012, %v4016
        %v4018 = vshrl.u32 %v3668, 16
        %v4020 = vrot.slane %v4018, 4
        %v4021 = vor.u32 %v4020, %v4016
        %v4022 = vrot.slane %v4021, 4
        %v4024 = vshll.u32 %v3686, 16
        %v4026 = vrot.slane %v4024, 5
        %v4027 = vsel %vm3691, %v4022, %v4026
        %v4029 = vshrl.u32 %v3669, 16
        %v4031 = vrot.slane %v4029, 4
        %v4032 = vshll.u32 %v3669, 16
        %v4034 = vrot.slane %v4032, 5
        %v4035 = vor.u32 %v4031, %v4034
        %v4036 = vrot.slane %v4035, 4
        %v4038 = vshll.u32 %v3670, 16
        %v4040 = vrot.slane %v4038, 5
        %v4041 = vsel %vm3691, %v4036, %v4040
        %v4042 = vshrl.u32 %v3670, 16
        %v4044 = vrot.slane %v4042, 4
        %v4045 = vor.u32 %v4044, %v4040
        %v4046 = vrot.slane %v4045, 4
        %v4048 = vshll.u32 %v3687, 16
        %v4050 = vrot.slane %v4048, 5
        %v4051 = vsel %vm3691, %v4046, %v4050
        %v4053 = vshrl.u32 %v3671, 16
        %v4055 = vrot.slane %v4053, 4
        %v4056 = vshll.u32 %v3671, 16
        %v4058 = vrot.slane %v4056, 5
        %v4059 = vor.u32 %v4055, %v4058
        %v4060 = vrot.slane %v4059, 4
        %v4062 = vshll.u32 %v3672, 16
        %v4064 = vrot.slane %v4062, 5
        %v4065 = vsel %vm3691, %v4060, %v4064
        %v4066 = vshrl.u32 %v3672, 16
        %v4068 = vrot.slane %v4066, 4
        %v4069 = vor.u32 %v4068, %v4064
        %v4070 = vrot.slane %v4069, 4
        %v4072 = vshll.u32 %v3688, 16
        %v4074 = vrot.slane %v4072, 5
        %v4075 = vsel %vm3691, %v4070, %v4074
        %v4076 = vld [vmem:[#allocation3] sm:$0xe]
        %v4077 = vld [vmem:[#allocation3 + $0xc] sm:$0xe]
        %v4078 = vld [vmem:[#allocation3 + $0x18] sm:$0xe]
        %v4079 = vld [vmem:[#allocation3 + $0x24] sm:$0xe]
        %v4080 = vld [vmem:[#allocation3 + $0x30] sm:$0xe]
        %v4081 = vld [vmem:[#allocation3 + $0x3c] sm:$0xe]
        %v4082 = vld [vmem:[#allocation3 + $0x48] sm:$0xe]
        %v4083 = vld [vmem:[#allocation3 + $0x54] sm:$0xe]
        %v4084 = vld [vmem:[#allocation3 + $0x60] sm:$0xe]
        %v4085 = vld [vmem:[#allocation3 + $0x6c] sm:$0xe]
        %v4086 = vld [vmem:[#allocation3 + $0x78] sm:$0xe]
        %v4087 = vld [vmem:[#allocation3 + $0x84] sm:$0xe]
        %v4088 = vld [vmem:[#allocation3 + $0x90] sm:$0xe]
        %v4089 = vld [vmem:[#allocation3 + $0x9c] sm:$0xe]
        %v4090 = vld [vmem:[#allocation3 + $0xa8] sm:$0xe]
        %v4091 = vld [vmem:[#allocation3 + $0xb4] sm:$0xe]
        %vm4140 = vcmask 1042432
        %vm4141 = vcmask 1046532
        %vm4142 = vmor %vm4140, %vm4141
        %v4143 = vrot.slane %v4076, 5
        %v4144 = vrot.slane %v4143, 4
        %v4145 = vrot.slane %v3642, 5
        %v4146 = vsel %vm4142, %v4144, %v4145
        %v4147 = vrot.slane %v4145, 4
        %v4148 = vrot.slane %v3673, 5
        %v4149 = vsel %vm4142, %v4147, %v4148
        %v4150 = vrot.slane %v4077, 5
        %v4151 = vrot.slane %v4150, 4
        %v4152 = vrot.slane %v3644, 5
        %v4153 = vsel %vm4142, %v4151, %v4152
        %v4154 = vrot.slane %v4152, 4
        %v4155 = vrot.slane %v3674, 5
        %v4156 = vsel %vm4142, %v4154, %v4155
        %v4157 = vrot.slane %v4078, 5
        %v4158 = vrot.slane %v4157, 4
        %v4159 = vrot.slane %v3646, 5
        %v4160 = vsel %vm4142, %v4158, %v4159
        %v4161 = vrot.slane %v4159, 4
        %v4162 = vrot.slane %v3675, 5
        %v4163 = vsel %vm4142, %v4161, %v4162
        %v4164 = vrot.slane %v4079, 5
        %v4165 = vrot.slane %v4164, 4
        %v4166 = vrot.slane %v3648, 5
        %v4167 = vsel %vm4142, %v4165, %v4166
        %v4168 = vrot.slane %v4166, 4
        %v4169 = vrot.slane %v3676, 5
        %v4170 = vsel %vm4142, %v4168, %v4169
        %v4171 = vrot.slane %v4080, 5
        %v4172 = vrot.slane %v4171, 4
        %v4173 = vrot.slane %v3650, 5
        %v4174 = vsel %vm4142, %v4172, %v4173
        %v4175 = vrot.slane %v4173, 4
        %v4176 = vrot.slane %v3677, 5
        %v4177 = vsel %vm4142, %v4175, %v4176
        %v4178 = vrot.slane %v4081, 5
        %v4179 = vrot.slane %v4178, 4
        %v4180 = vrot.slane %v3652, 5
        %v4181 = vsel %vm4142, %v4179, %v4180
        %v4182 = vrot.slane %v4180, 4
        %v4183 = vrot.slane %v3678, 5
        %v4184 = vsel %vm4142, %v4182, %v4183
        %v4185 = vrot.slane %v4082, 5
        %v4186 = vrot.slane %v4185, 4
        %v4187 = vrot.slane %v3654, 5
        %v4188 = vsel %vm4142, %v4186, %v4187
        %v4189 = vrot.slane %v4187, 4
        %v4190 = vrot.slane %v3679, 5
        %v4191 = vsel %vm4142, %v4189, %v4190
        %v4192 = vrot.slane %v4083, 5
        %v4193 = vrot.slane %v4192, 4
        %v4194 = vrot.slane %v3656, 5
        %v4195 = vsel %vm4142, %v4193, %v4194
        %v4196 = vrot.slane %v4194, 4
        %v4197 = vrot.slane %v3680, 5
        %v4198 = vsel %vm4142, %v4196, %v4197
        %v4199 = vrot.slane %v4084, 5
        %v4200 = vrot.slane %v4199, 4
        %v4201 = vrot.slane %v3658, 5
        %v4202 = vsel %vm4142, %v4200, %v4201
        %v4203 = vrot.slane %v4201, 4
        %v4204 = vrot.slane %v3681, 5
        %v4205 = vsel %vm4142, %v4203, %v4204
        %v4206 = vrot.slane %v4085, 5
        %v4207 = vrot.slane %v4206, 4
        %v4208 = vrot.slane %v3660, 5
        %v4209 = vsel %vm4142, %v4207, %v4208
        %v4210 = vrot.slane %v4208, 4
        %v4211 = vrot.slane %v3682, 5
        %v4212 = vsel %vm4142, %v4210, %v4211
        %v4213 = vrot.slane %v4086, 5
        %v4214 = vrot.slane %v4213, 4
        %v4215 = vrot.slane %v3662, 5
        %v4216 = vsel %vm4142, %v4214, %v4215
        %v4217 = vrot.slane %v4215, 4
        %v4218 = vrot.slane %v3683, 5
        %v4219 = vsel %vm4142, %v4217, %v4218
        %v4220 = vrot.slane %v4087, 5
        %v4221 = vrot.slane %v4220, 4
        %v4222 = vrot.slane %v3664, 5
        %v4223 = vsel %vm4142, %v4221, %v4222
        %v4224 = vrot.slane %v4222, 4
        %v4225 = vrot.slane %v3684, 5
        %v4226 = vsel %vm4142, %v4224, %v4225
        %v4227 = vrot.slane %v4088, 5
        %v4228 = vrot.slane %v4227, 4
        %v4229 = vrot.slane %v3666, 5
        %v4230 = vsel %vm4142, %v4228, %v4229
        %v4231 = vrot.slane %v4229, 4
        %v4232 = vrot.slane %v3685, 5
        %v4233 = vsel %vm4142, %v4231, %v4232
        %v4234 = vrot.slane %v4089, 5
        %v4235 = vrot.slane %v4234, 4
        %v4236 = vrot.slane %v3668, 5
        %v4237 = vsel %vm4142, %v4235, %v4236
        %v4238 = vrot.slane %v4236, 4
        %v4239 = vrot.slane %v3686, 5
        %v4240 = vsel %vm4142, %v4238, %v4239
        %v4241 = vrot.slane %v4090, 5
        %v4242 = vrot.slane %v4241, 4
        %v4243 = vrot.slane %v3670, 5
        %v4244 = vsel %vm4142, %v4242, %v4243
        %v4245 = vrot.slane %v4243, 4
        %v4246 = vrot.slane %v3687, 5
        %v4247 = vsel %vm4142, %v4245, %v4246
        %v4248 = vrot.slane %v4091, 5
        %v4249 = vrot.slane %v4248, 4
        %v4250 = vrot.slane %v3672, 5
        %v4251 = vsel %vm4142, %v4249, %v4250
        %v4252 = vrot.slane %v4250, 4
        %v4253 = vrot.slane %v3688, 5
        %v4254 = vsel %vm4142, %v4252, %v4253
        %v4255 = vld [vmem:[%s3526] sm:$0xf]
        %v4256 = vld [vmem:[%s3526 + $0x4] sm:$0xf]
        %v4257 = vld [vmem:[%s3526 + $0xc] sm:$0xf]
        %v4258 = vld [vmem:[%s3526 + $0x10] sm:$0xf]
        %v4259 = vld [vmem:[%s3526 + $0x18] sm:$0xf]
        %v4260 = vld [vmem:[%s3526 + $0x1c] sm:$0xf]
        %v4261 = vld [vmem:[%s3526 + $0x24] sm:$0xf]
        %v4262 = vld [vmem:[%s3526 + $0x28] sm:$0xf]
        %v4263 = vld [vmem:[%s3526 + $0x30] sm:$0xf]
        %v4264 = vld [vmem:[%s3526 + $0x34] sm:$0xf]
        %v4265 = vld [vmem:[%s3526 + $0x3c] sm:$0xf]
        %v4266 = vld [vmem:[%s3526 + $0x40] sm:$0xf]
        %v4267 = vld [vmem:[%s3526 + $0x48] sm:$0xf]
        %v4268 = vld [vmem:[%s3526 + $0x4c] sm:$0xf]
        %v4269 = vld [vmem:[%s3526 + $0x54] sm:$0xf]
        %v4270 = vld [vmem:[%s3526 + $0x58] sm:$0xf]
        %v4271 = vld [vmem:[%s3526 + $0x60] sm:$0xf]
        %v4272 = vld [vmem:[%s3526 + $0x64] sm:$0xf]
        %v4273 = vld [vmem:[%s3526 + $0x6c] sm:$0xf]
        %v4274 = vld [vmem:[%s3526 + $0x70] sm:$0xf]
        %v4275 = vld [vmem:[%s3526 + $0x78] sm:$0xf]
        %v4276 = vld [vmem:[%s3526 + $0x7c] sm:$0xf]
        %v4277 = vld [vmem:[%s3526 + $0x84] sm:$0xf]
        %v4278 = vld [vmem:[%s3526 + $0x88] sm:$0xf]
        %v4279 = vld [vmem:[%s3526 + $0x90] sm:$0xf]
        %v4280 = vld [vmem:[%s3526 + $0x94] sm:$0xf]
        %v4281 = vld [vmem:[%s3526 + $0x9c] sm:$0xf]
        %v4282 = vld [vmem:[%s3526 + $0xa0] sm:$0xf]
        %v4283 = vld [vmem:[%s3526 + $0xa8] sm:$0xf]
        %v4284 = vld [vmem:[%s3526 + $0xac] sm:$0xf]
        %v4285 = vld [vmem:[%s3526 + $0xb4] sm:$0xf]
        %v4286 = vld [vmem:[%s3526 + $0xb8] sm:$0xf]
        %v4287 = vld [vmem:[%s3526 + $0x8] sm:$0x1]
        %v4288 = vld [vmem:[%s3526 + $0x14] sm:$0x1]
        %v4289 = vld [vmem:[%s3526 + $0x20] sm:$0x1]
        %v4290 = vld [vmem:[%s3526 + $0x2c] sm:$0x1]
        %v4291 = vld [vmem:[%s3526 + $0x38] sm:$0x1]
        %v4292 = vld [vmem:[%s3526 + $0x44] sm:$0x1]
        %v4293 = vld [vmem:[%s3526 + $0x50] sm:$0x1]
        %v4294 = vld [vmem:[%s3526 + $0x5c] sm:$0x1]
        %v4295 = vld [vmem:[%s3526 + $0x68] sm:$0x1]
        %v4296 = vld [vmem:[%s3526 + $0x74] sm:$0x1]
        %v4297 = vld [vmem:[%s3526 + $0x80] sm:$0x1]
        %v4298 = vld [vmem:[%s3526 + $0x8c] sm:$0x1]
        %v4299 = vld [vmem:[%s3526 + $0x98] sm:$0x1]
        %v4300 = vld [vmem:[%s3526 + $0xa4] sm:$0x1]
        %v4301 = vld [vmem:[%s3526 + $0xb0] sm:$0x1]
        %v4302 = vld [vmem:[%s3526 + $0xbc] sm:$0x1]
        %v4304 = vshrl.u32 %v4255, 16
        %v4306 = vrot.slane %v4304, 4
        %v4307 = vshll.u32 %v4255, 16
        %v4309 = vrot.slane %v4307, 5
        %v4310 = vor.u32 %v4306, %v4309
        %v4311 = vrot.slane %v4310, 4
        %v4313 = vshll.u32 %v4256, 16
        %v4315 = vrot.slane %v4313, 5
        %v4316 = vsel %vm3691, %v4311, %v4315
        %v4317 = vshrl.u32 %v4256, 16
        %v4319 = vrot.slane %v4317, 4
        %v4320 = vor.u32 %v4319, %v4315
        %v4321 = vrot.slane %v4320, 4
        %v4323 = vshll.u32 %v4287, 16
        %v4325 = vrot.slane %v4323, 5
        %v4326 = vsel %vm3691, %v4321, %v4325
        %v4328 = vshrl.u32 %v4257, 16
        %v4330 = vrot.slane %v4328, 4
        %v4331 = vshll.u32 %v4257, 16
        %v4333 = vrot.slane %v4331, 5
        %v4334 = vor.u32 %v4330, %v4333
        %v4335 = vrot.slane %v4334, 4
        %v4337 = vshll.u32 %v4258, 16
        %v4339 = vrot.slane %v4337, 5
        %v4340 = vsel %vm3691, %v4335, %v4339
        %v4341 = vshrl.u32 %v4258, 16
        %v4343 = vrot.slane %v4341, 4
        %v4344 = vor.u32 %v4343, %v4339
        %v4345 = vrot.slane %v4344, 4
        %v4347 = vshll.u32 %v4288, 16
        %v4349 = vrot.slane %v4347, 5
        %v4350 = vsel %vm3691, %v4345, %v4349
        %v4352 = vshrl.u32 %v4259, 16
        %v4354 = vrot.slane %v4352, 4
        %v4355 = vshll.u32 %v4259, 16
        %v4357 = vrot.slane %v4355, 5
        %v4358 = vor.u32 %v4354, %v4357
        %v4359 = vrot.slane %v4358, 4
        %v4361 = vshll.u32 %v4260, 16
        %v4363 = vrot.slane %v4361, 5
        %v4364 = vsel %vm3691, %v4359, %v4363
        %v4365 = vshrl.u32 %v4260, 16
        %v4367 = vrot.slane %v4365, 4
        %v4368 = vor.u32 %v4367, %v4363
        %v4369 = vrot.slane %v4368, 4
        %v4371 = vshll.u32 %v4289, 16
        %v4373 = vrot.slane %v4371, 5
        %v4374 = vsel %vm3691, %v4369, %v4373
        %v4376 = vshrl.u32 %v4261, 16
        %v4378 = vrot.slane %v4376, 4
        %v4379 = vshll.u32 %v4261, 16
        %v4381 = vrot.slane %v4379, 5
        %v4382 = vor.u32 %v4378, %v4381
        %v4383 = vrot.slane %v4382, 4
        %v4385 = vshll.u32 %v4262, 16
        %v4387 = vrot.slane %v4385, 5
        %v4388 = vsel %vm3691, %v4383, %v4387
        %v4389 = vshrl.u32 %v4262, 16
        %v4391 = vrot.slane %v4389, 4
        %v4392 = vor.u32 %v4391, %v4387
        %v4393 = vrot.slane %v4392, 4
        %v4395 = vshll.u32 %v4290, 16
        %v4397 = vrot.slane %v4395, 5
        %v4398 = vsel %vm3691, %v4393, %v4397
        %v4400 = vshrl.u32 %v4263, 16
        %v4402 = vrot.slane %v4400, 4
        %v4403 = vshll.u32 %v4263, 16
        %v4405 = vrot.slane %v4403, 5
        %v4406 = vor.u32 %v4402, %v4405
        %v4407 = vrot.slane %v4406, 4
        %v4409 = vshll.u32 %v4264, 16
        %v4411 = vrot.slane %v4409, 5
        %v4412 = vsel %vm3691, %v4407, %v4411
        %v4413 = vshrl.u32 %v4264, 16
        %v4415 = vrot.slane %v4413, 4
        %v4416 = vor.u32 %v4415, %v4411
        %v4417 = vrot.slane %v4416, 4
        %v4419 = vshll.u32 %v4291, 16
        %v4421 = vrot.slane %v4419, 5
        %v4422 = vsel %vm3691, %v4417, %v4421
        %v4424 = vshrl.u32 %v4265, 16
        %v4426 = vrot.slane %v4424, 4
        %v4427 = vshll.u32 %v4265, 16
        %v4429 = vrot.slane %v4427, 5
        %v4430 = vor.u32 %v4426, %v4429
        %v4431 = vrot.slane %v4430, 4
        %v4433 = vshll.u32 %v4266, 16
        %v4435 = vrot.slane %v4433, 5
        %v4436 = vsel %vm3691, %v4431, %v4435
        %v4437 = vshrl.u32 %v4266, 16
        %v4439 = vrot.slane %v4437, 4
        %v4440 = vor.u32 %v4439, %v4435
        %v4441 = vrot.slane %v4440, 4
        %v4443 = vshll.u32 %v4292, 16
        %v4445 = vrot.slane %v4443, 5
        %v4446 = vsel %vm3691, %v4441, %v4445
        %v4448 = vshrl.u32 %v4267, 16
        %v4450 = vrot.slane %v4448, 4
        %v4451 = vshll.u32 %v4267, 16
        %v4453 = vrot.slane %v4451, 5
        %v4454 = vor.u32 %v4450, %v4453
        %v4455 = vrot.slane %v4454, 4
        %v4457 = vshll.u32 %v4268, 16
        %v4459 = vrot.slane %v4457, 5
        %v4460 = vsel %vm3691, %v4455, %v4459
        %v4461 = vshrl.u32 %v4268, 16
        %v4463 = vrot.slane %v4461, 4
        %v4464 = vor.u32 %v4463, %v4459
        %v4465 = vrot.slane %v4464, 4
        %v4467 = vshll.u32 %v4293, 16
        %v4469 = vrot.slane %v4467, 5
        %v4470 = vsel %vm3691, %v4465, %v4469
        %v4472 = vshrl.u32 %v4269, 16
        %v4474 = vrot.slane %v4472, 4
        %v4475 = vshll.u32 %v4269, 16
        %v4477 = vrot.slane %v4475, 5
        %v4478 = vor.u32 %v4474, %v4477
        %v4479 = vrot.slane %v4478, 4
        %v4481 = vshll.u32 %v4270, 16
        %v4483 = vrot.slane %v4481, 5
        %v4484 = vsel %vm3691, %v4479, %v4483
        %v4485 = vshrl.u32 %v4270, 16
        %v4487 = vrot.slane %v4485, 4
        %v4488 = vor.u32 %v4487, %v4483
        %v4489 = vrot.slane %v4488, 4
        %v4491 = vshll.u32 %v4294, 16
        %v4493 = vrot.slane %v4491, 5
        %v4494 = vsel %vm3691, %v4489, %v4493
        %v4496 = vshrl.u32 %v4271, 16
        %v4498 = vrot.slane %v4496, 4
        %v4499 = vshll.u32 %v4271, 16
        %v4501 = vrot.slane %v4499, 5
        %v4502 = vor.u32 %v4498, %v4501
        %v4503 = vrot.slane %v4502, 4
        %v4505 = vshll.u32 %v4272, 16
        %v4507 = vrot.slane %v4505, 5
        %v4508 = vsel %vm3691, %v4503, %v4507
        %v4509 = vshrl.u32 %v4272, 16
        %v4511 = vrot.slane %v4509, 4
        %v4512 = vor.u32 %v4511, %v4507
        %v4513 = vrot.slane %v4512, 4
        %v4515 = vshll.u32 %v4295, 16
        %v4517 = vrot.slane %v4515, 5
        %v4518 = vsel %vm3691, %v4513, %v4517
        %v4520 = vshrl.u32 %v4273, 16
        %v4522 = vrot.slane %v4520, 4
        %v4523 = vshll.u32 %v4273, 16
        %v4525 = vrot.slane %v4523, 5
        %v4526 = vor.u32 %v4522, %v4525
        %v4527 = vrot.slane %v4526, 4
        %v4529 = vshll.u32 %v4274, 16
        %v4531 = vrot.slane %v4529, 5
        %v4532 = vsel %vm3691, %v4527, %v4531
        %v4533 = vshrl.u32 %v4274, 16
        %v4535 = vrot.slane %v4533, 4
        %v4536 = vor.u32 %v4535, %v4531
        %v4537 = vrot.slane %v4536, 4
        %v4539 = vshll.u32 %v4296, 16
        %v4541 = vrot.slane %v4539, 5
        %v4542 = vsel %vm3691, %v4537, %v4541
        %v4544 = vshrl.u32 %v4275, 16
        %v4546 = vrot.slane %v4544, 4
        %v4547 = vshll.u32 %v4275, 16
        %v4549 = vrot.slane %v4547, 5
        %v4550 = vor.u32 %v4546, %v4549
        %v4551 = vrot.slane %v4550, 4
        %v4553 = vshll.u32 %v4276, 16
        %v4555 = vrot.slane %v4553, 5
        %v4556 = vsel %vm3691, %v4551, %v4555
        %v4557 = vshrl.u32 %v4276, 16
        %v4559 = vrot.slane %v4557, 4
        %v4560 = vor.u32 %v4559, %v4555
        %v4561 = vrot.slane %v4560, 4
        %v4563 = vshll.u32 %v4297, 16
        %v4565 = vrot.slane %v4563, 5
        %v4566 = vsel %vm3691, %v4561, %v4565
        %v4568 = vshrl.u32 %v4277, 16
        %v4570 = vrot.slane %v4568, 4
        %v4571 = vshll.u32 %v4277, 16
        %v4573 = vrot.slane %v4571, 5
        %v4574 = vor.u32 %v4570, %v4573
        %v4575 = vrot.slane %v4574, 4
        %v4577 = vshll.u32 %v4278, 16
        %v4579 = vrot.slane %v4577, 5
        %v4580 = vsel %vm3691, %v4575, %v4579
        %v4581 = vshrl.u32 %v4278, 16
        %v4583 = vrot.slane %v4581, 4
        %v4584 = vor.u32 %v4583, %v4579
        %v4585 = vrot.slane %v4584, 4
        %v4587 = vshll.u32 %v4298, 16
        %v4589 = vrot.slane %v4587, 5
        %v4590 = vsel %vm3691, %v4585, %v4589
        %v4592 = vshrl.u32 %v4279, 16
        %v4594 = vrot.slane %v4592, 4
        %v4595 = vshll.u32 %v4279, 16
        %v4597 = vrot.slane %v4595, 5
        %v4598 = vor.u32 %v4594, %v4597
        %v4599 = vrot.slane %v4598, 4
        %v4601 = vshll.u32 %v4280, 16
        %v4603 = vrot.slane %v4601, 5
        %v4604 = vsel %vm3691, %v4599, %v4603
        %v4605 = vshrl.u32 %v4280, 16
        %v4607 = vrot.slane %v4605, 4
        %v4608 = vor.u32 %v4607, %v4603
        %v4609 = vrot.slane %v4608, 4
        %v4611 = vshll.u32 %v4299, 16
        %v4613 = vrot.slane %v4611, 5
        %v4614 = vsel %vm3691, %v4609, %v4613
        %v4616 = vshrl.u32 %v4281, 16
        %v4618 = vrot.slane %v4616, 4
        %v4619 = vshll.u32 %v4281, 16
        %v4621 = vrot.slane %v4619, 5
        %v4622 = vor.u32 %v4618, %v4621
        %v4623 = vrot.slane %v4622, 4
        %v4625 = vshll.u32 %v4282, 16
        %v4627 = vrot.slane %v4625, 5
        %v4628 = vsel %vm3691, %v4623, %v4627
        %v4629 = vshrl.u32 %v4282, 16
        %v4631 = vrot.slane %v4629, 4
        %v4632 = vor.u32 %v4631, %v4627
        %v4633 = vrot.slane %v4632, 4
        %v4635 = vshll.u32 %v4300, 16
        %v4637 = vrot.slane %v4635, 5
        %v4638 = vsel %vm3691, %v4633, %v4637
        %v4640 = vshrl.u32 %v4283, 16
        %v4642 = vrot.slane %v4640, 4
        %v4643 = vshll.u32 %v4283, 16
        %v4645 = vrot.slane %v4643, 5
        %v4646 = vor.u32 %v4642, %v4645
        %v4647 = vrot.slane %v4646, 4
        %v4649 = vshll.u32 %v4284, 16
        %v4651 = vrot.slane %v4649, 5
        %v4652 = vsel %vm3691, %v4647, %v4651
        %v4653 = vshrl.u32 %v4284, 16
        %v4655 = vrot.slane %v4653, 4
        %v4656 = vor.u32 %v4655, %v4651
        %v4657 = vrot.slane %v4656, 4
        %v4659 = vshll.u32 %v4301, 16
        %v4661 = vrot.slane %v4659, 5
        %v4662 = vsel %vm3691, %v4657, %v4661
        %v4664 = vshrl.u32 %v4285, 16
        %v4666 = vrot.slane %v4664, 4
        %v4667 = vshll.u32 %v4285, 16
        %v4669 = vrot.slane %v4667, 5
        %v4670 = vor.u32 %v4666, %v4669
        %v4671 = vrot.slane %v4670, 4
        %v4673 = vshll.u32 %v4286, 16
        %v4675 = vrot.slane %v4673, 5
        %v4676 = vsel %vm3691, %v4671, %v4675
        %v4677 = vshrl.u32 %v4286, 16
        %v4679 = vrot.slane %v4677, 4
        %v4680 = vor.u32 %v4679, %v4675
        %v4681 = vrot.slane %v4680, 4
        %v4683 = vshll.u32 %v4302, 16
        %v4685 = vrot.slane %v4683, 5
        %v4686 = vsel %vm3691, %v4681, %v4685
        %v4687 = vld [vmem:[%s3526] sm:$0xe]
        %v4688 = vld [vmem:[%s3526 + $0xc] sm:$0xe]
        %v4689 = vld [vmem:[%s3526 + $0x18] sm:$0xe]
        %v4690 = vld [vmem:[%s3526 + $0x24] sm:$0xe]
        %v4691 = vld [vmem:[%s3526 + $0x30] sm:$0xe]
        %v4692 = vld [vmem:[%s3526 + $0x3c] sm:$0xe]
        %v4693 = vld [vmem:[%s3526 + $0x48] sm:$0xe]
        %v4694 = vld [vmem:[%s3526 + $0x54] sm:$0xe]
        %v4695 = vld [vmem:[%s3526 + $0x60] sm:$0xe]
        %v4696 = vld [vmem:[%s3526 + $0x6c] sm:$0xe]
        %v4697 = vld [vmem:[%s3526 + $0x78] sm:$0xe]
        %v4698 = vld [vmem:[%s3526 + $0x84] sm:$0xe]
        %v4699 = vld [vmem:[%s3526 + $0x90] sm:$0xe]
        %v4700 = vld [vmem:[%s3526 + $0x9c] sm:$0xe]
        %v4701 = vld [vmem:[%s3526 + $0xa8] sm:$0xe]
        %v4702 = vld [vmem:[%s3526 + $0xb4] sm:$0xe]
        %v4751 = vrot.slane %v4687, 5
        %v4752 = vrot.slane %v4751, 4
        %v4753 = vrot.slane %v4256, 5
        %v4754 = vsel %vm4142, %v4752, %v4753
        %v4755 = vrot.slane %v4753, 4
        %v4756 = vrot.slane %v4287, 5
        %v4757 = vsel %vm4142, %v4755, %v4756
        %v4758 = vrot.slane %v4688, 5
        %v4759 = vrot.slane %v4758, 4
        %v4760 = vrot.slane %v4258, 5
        %v4761 = vsel %vm4142, %v4759, %v4760
        %v4762 = vrot.slane %v4760, 4
        %v4763 = vrot.slane %v4288, 5
        %v4764 = vsel %vm4142, %v4762, %v4763
        %v4765 = vrot.slane %v4689, 5
        %v4766 = vrot.slane %v4765, 4
        %v4767 = vrot.slane %v4260, 5
        %v4768 = vsel %vm4142, %v4766, %v4767
        %v4769 = vrot.slane %v4767, 4
        %v4770 = vrot.slane %v4289, 5
        %v4771 = vsel %vm4142, %v4769, %v4770
        %v4772 = vrot.slane %v4690, 5
        %v4773 = vrot.slane %v4772, 4
        %v4774 = vrot.slane %v4262, 5
        %v4775 = vsel %vm4142, %v4773, %v4774
        %v4776 = vrot.slane %v4774, 4
        %v4777 = vrot.slane %v4290, 5
        %v4778 = vsel %vm4142, %v4776, %v4777
        %v4779 = vrot.slane %v4691, 5
        %v4780 = vrot.slane %v4779, 4
        %v4781 = vrot.slane %v4264, 5
        %v4782 = vsel %vm4142, %v4780, %v4781
        %v4783 = vrot.slane %v4781, 4
        %v4784 = vrot.slane %v4291, 5
        %v4785 = vsel %vm4142, %v4783, %v4784
        %v4786 = vrot.slane %v4692, 5
        %v4787 = vrot.slane %v4786, 4
        %v4788 = vrot.slane %v4266, 5
        %v4789 = vsel %vm4142, %v4787, %v4788
        %v4790 = vrot.slane %v4788, 4
        %v4791 = vrot.slane %v4292, 5
        %v4792 = vsel %vm4142, %v4790, %v4791
        %v4793 = vrot.slane %v4693, 5
        %v4794 = vrot.slane %v4793, 4
        %v4795 = vrot.slane %v4268, 5
        %v4796 = vsel %vm4142, %v4794, %v4795
        %v4797 = vrot.slane %v4795, 4
        %v4798 = vrot.slane %v4293, 5
        %v4799 = vsel %vm4142, %v4797, %v4798
        %v4800 = vrot.slane %v4694, 5
        %v4801 = vrot.slane %v4800, 4
        %v4802 = vrot.slane %v4270, 5
        %v4803 = vsel %vm4142, %v4801, %v4802
        %v4804 = vrot.slane %v4802, 4
        %v4805 = vrot.slane %v4294, 5
        %v4806 = vsel %vm4142, %v4804, %v4805
        %v4807 = vrot.slane %v4695, 5
        %v4808 = vrot.slane %v4807, 4
        %v4809 = vrot.slane %v4272, 5
        %v4810 = vsel %vm4142, %v4808, %v4809
        %v4811 = vrot.slane %v4809, 4
        %v4812 = vrot.slane %v4295, 5
        %v4813 = vsel %vm4142, %v4811, %v4812
        %v4814 = vrot.slane %v4696, 5
        %v4815 = vrot.slane %v4814, 4
        %v4816 = vrot.slane %v4274, 5
        %v4817 = vsel %vm4142, %v4815, %v4816
        %v4818 = vrot.slane %v4816, 4
        %v4819 = vrot.slane %v4296, 5
        %v4820 = vsel %vm4142, %v4818, %v4819
        %v4821 = vrot.slane %v4697, 5
        %v4822 = vrot.slane %v4821, 4
        %v4823 = vrot.slane %v4276, 5
        %v4824 = vsel %vm4142, %v4822, %v4823
        %v4825 = vrot.slane %v4823, 4
        %v4826 = vrot.slane %v4297, 5
        %v4827 = vsel %vm4142, %v4825, %v4826
        %v4828 = vrot.slane %v4698, 5
        %v4829 = vrot.slane %v4828, 4
        %v4830 = vrot.slane %v4278, 5
        %v4831 = vsel %vm4142, %v4829, %v4830
        %v4832 = vrot.slane %v4830, 4
        %v4833 = vrot.slane %v4298, 5
        %v4834 = vsel %vm4142, %v4832, %v4833
        %v4835 = vrot.slane %v4699, 5
        %v4836 = vrot.slane %v4835, 4
        %v4837 = vrot.slane %v4280, 5
        %v4838 = vsel %vm4142, %v4836, %v4837
        %v4839 = vrot.slane %v4837, 4
        %v4840 = vrot.slane %v4299, 5
        %v4841 = vsel %vm4142, %v4839, %v4840
        %v4842 = vrot.slane %v4700, 5
        %v4843 = vrot.slane %v4842, 4
        %v4844 = vrot.slane %v4282, 5
        %v4845 = vsel %vm4142, %v4843, %v4844
        %v4846 = vrot.slane %v4844, 4
        %v4847 = vrot.slane %v4300, 5
        %v4848 = vsel %vm4142, %v4846, %v4847
        %v4849 = vrot.slane %v4701, 5
        %v4850 = vrot.slane %v4849, 4
        %v4851 = vrot.slane %v4284, 5
        %v4852 = vsel %vm4142, %v4850, %v4851
        %v4853 = vrot.slane %v4851, 4
        %v4854 = vrot.slane %v4301, 5
        %v4855 = vsel %vm4142, %v4853, %v4854
        %v4856 = vrot.slane %v4702, 5
        %v4857 = vrot.slane %v4856, 4
        %v4858 = vrot.slane %v4286, 5
        %v4859 = vsel %vm4142, %v4857, %v4858
        %v4860 = vrot.slane %v4858, 4
        %v4861 = vrot.slane %v4302, 5
        %v4862 = vsel %vm4142, %v4860, %v4861
        %s4863 = scalar_lea.vmem [#allocation3], 24
        %v4864 = vld [vmem:[%s4863] sm:$0xf]
        %v4865 = vld [vmem:[%s4863 + $0x4] sm:$0xf]
        %v4866 = vld [vmem:[%s4863 + $0xc] sm:$0xf]
        %v4867 = vld [vmem:[%s4863 + $0x10] sm:$0xf]
        %v4868 = vld [vmem:[%s4863 + $0x18] sm:$0xf]
        %v4869 = vld [vmem:[%s4863 + $0x1c] sm:$0xf]
        %v4870 = vld [vmem:[%s4863 + $0x24] sm:$0xf]
        %v4871 = vld [vmem:[%s4863 + $0x28] sm:$0xf]
        %v4872 = vld [vmem:[%s4863 + $0x30] sm:$0xf]
        %v4873 = vld [vmem:[%s4863 + $0x34] sm:$0xf]
        %v4874 = vld [vmem:[%s4863 + $0x3c] sm:$0xf]
        %v4875 = vld [vmem:[%s4863 + $0x40] sm:$0xf]
        %v4876 = vld [vmem:[%s4863 + $0x48] sm:$0xf]
        %v4877 = vld [vmem:[%s4863 + $0x4c] sm:$0xf]
        %v4878 = vld [vmem:[%s4863 + $0x54] sm:$0xf]
        %v4879 = vld [vmem:[%s4863 + $0x58] sm:$0xf]
        %v4880 = vld [vmem:[%s4863 + $0x60] sm:$0xf]
        %v4881 = vld [vmem:[%s4863 + $0x64] sm:$0xf]
        %v4882 = vld [vmem:[%s4863 + $0x6c] sm:$0xf]
        %v4883 = vld [vmem:[%s4863 + $0x70] sm:$0xf]
        %v4884 = vld [vmem:[%s4863 + $0x78] sm:$0xf]
        %v4885 = vld [vmem:[%s4863 + $0x7c] sm:$0xf]
        %v4886 = vld [vmem:[%s4863 + $0x84] sm:$0xf]
        %v4887 = vld [vmem:[%s4863 + $0x88] sm:$0xf]
        %v4888 = vld [vmem:[%s4863 + $0x90] sm:$0xf]
        %v4889 = vld [vmem:[%s4863 + $0x94] sm:$0xf]
        %v4890 = vld [vmem:[%s4863 + $0x9c] sm:$0xf]
        %v4891 = vld [vmem:[%s4863 + $0xa0] sm:$0xf]
        %v4892 = vld [vmem:[%s4863 + $0xa8] sm:$0xf]
        %v4893 = vld [vmem:[%s4863 + $0xac] sm:$0xf]
        %v4894 = vld [vmem:[%s4863 + $0xb4] sm:$0xf]
        %v4895 = vld [vmem:[%s4863 + $0xb8] sm:$0xf]
        %v4896 = vld [vmem:[%s4863 + $0x8] sm:$0x1]
        %v4897 = vld [vmem:[%s4863 + $0x14] sm:$0x1]
        %v4898 = vld [vmem:[%s4863 + $0x20] sm:$0x1]
        %v4899 = vld [vmem:[%s4863 + $0x2c] sm:$0x1]
        %v4900 = vld [vmem:[%s4863 + $0x38] sm:$0x1]
        %v4901 = vld [vmem:[%s4863 + $0x44] sm:$0x1]
        %v4902 = vld [vmem:[%s4863 + $0x50] sm:$0x1]
        %v4903 = vld [vmem:[%s4863 + $0x5c] sm:$0x1]
        %v4904 = vld [vmem:[%s4863 + $0x68] sm:$0x1]
        %v4905 = vld [vmem:[%s4863 + $0x74] sm:$0x1]
        %v4906 = vld [vmem:[%s4863 + $0x80] sm:$0x1]
        %v4907 = vld [vmem:[%s4863 + $0x8c] sm:$0x1]
        %v4908 = vld [vmem:[%s4863 + $0x98] sm:$0x1]
        %v4909 = vld [vmem:[%s4863 + $0xa4] sm:$0x1]
        %v4910 = vld [vmem:[%s4863 + $0xb0] sm:$0x1]
        %v4911 = vld [vmem:[%s4863 + $0xbc] sm:$0x1]
        %v4913 = vshrl.u32 %v4864, 16
        %v4915 = vrot.slane %v4913, 4
        %v4916 = vshll.u32 %v4864, 16
        %v4918 = vrot.slane %v4916, 5
        %v4919 = vor.u32 %v4915, %v4918
        %v4920 = vrot.slane %v4919, 4
        %v4922 = vshll.u32 %v4865, 16
        %v4924 = vrot.slane %v4922, 5
        %v4925 = vsel %vm3691, %v4920, %v4924
        %v4926 = vshrl.u32 %v4865, 16
        %v4928 = vrot.slane %v4926, 4
        %v4929 = vor.u32 %v4928, %v4924
        %v4930 = vrot.slane %v4929, 4
        %v4932 = vshll.u32 %v4896, 16
        %v4934 = vrot.slane %v4932, 5
        %v4935 = vsel %vm3691, %v4930, %v4934
        %v4937 = vshrl.u32 %v4866, 16
        %v4939 = vrot.slane %v4937, 4
        %v4940 = vshll.u32 %v4866, 16
        %v4942 = vrot.slane %v4940, 5
        %v4943 = vor.u32 %v4939, %v4942
        %v4944 = vrot.slane %v4943, 4
        %v4946 = vshll.u32 %v4867, 16
        %v4948 = vrot.slane %v4946, 5
        %v4949 = vsel %vm3691, %v4944, %v4948
        %v4950 = vshrl.u32 %v4867, 16
        %v4952 = vrot.slane %v4950, 4
        %v4953 = vor.u32 %v4952, %v4948
        %v4954 = vrot.slane %v4953, 4
        %v4956 = vshll.u32 %v4897, 16
        %v4958 = vrot.slane %v4956, 5
        %v4959 = vsel %vm3691, %v4954, %v4958
        %v4961 = vshrl.u32 %v4868, 16
        %v4963 = vrot.slane %v4961, 4
        %v4964 = vshll.u32 %v4868, 16
        %v4966 = vrot.slane %v4964, 5
        %v4967 = vor.u32 %v4963, %v4966
        %v4968 = vrot.slane %v4967, 4
        %v4970 = vshll.u32 %v4869, 16
        %v4972 = vrot.slane %v4970, 5
        %v4973 = vsel %vm3691, %v4968, %v4972
        %v4974 = vshrl.u32 %v4869, 16
        %v4976 = vrot.slane %v4974, 4
        %v4977 = vor.u32 %v4976, %v4972
        %v4978 = vrot.slane %v4977, 4
        %v4980 = vshll.u32 %v4898, 16
        %v4982 = vrot.slane %v4980, 5
        %v4983 = vsel %vm3691, %v4978, %v4982
        %v4985 = vshrl.u32 %v4870, 16
        %v4987 = vrot.slane %v4985, 4
        %v4988 = vshll.u32 %v4870, 16
        %v4990 = vrot.slane %v4988, 5
        %v4991 = vor.u32 %v4987, %v4990
        %v4992 = vrot.slane %v4991, 4
        %v4994 = vshll.u32 %v4871, 16
        %v4996 = vrot.slane %v4994, 5
        %v4997 = vsel %vm3691, %v4992, %v4996
        %v4998 = vshrl.u32 %v4871, 16
        %v5000 = vrot.slane %v4998, 4
        %v5001 = vor.u32 %v5000, %v4996
        %v5002 = vrot.slane %v5001, 4
        %v5004 = vshll.u32 %v4899, 16
        %v5006 = vrot.slane %v5004, 5
        %v5007 = vsel %vm3691, %v5002, %v5006
        %v5009 = vshrl.u32 %v4872, 16
        %v5011 = vrot.slane %v5009, 4
        %v5012 = vshll.u32 %v4872, 16
        %v5014 = vrot.slane %v5012, 5
        %v5015 = vor.u32 %v5011, %v5014
        %v5016 = vrot.slane %v5015, 4
        %v5018 = vshll.u32 %v4873, 16
        %v5020 = vrot.slane %v5018, 5
        %v5021 = vsel %vm3691, %v5016, %v5020
        %v5022 = vshrl.u32 %v4873, 16
        %v5024 = vrot.slane %v5022, 4
        %v5025 = vor.u32 %v5024, %v5020
        %v5026 = vrot.slane %v5025, 4
        %v5028 = vshll.u32 %v4900, 16
        %v5030 = vrot.slane %v5028, 5
        %v5031 = vsel %vm3691, %v5026, %v5030
        %v5033 = vshrl.u32 %v4874, 16
        %v5035 = vrot.slane %v5033, 4
        %v5036 = vshll.u32 %v4874, 16
        %v5038 = vrot.slane %v5036, 5
        %v5039 = vor.u32 %v5035, %v5038
        %v5040 = vrot.slane %v5039, 4
        %v5042 = vshll.u32 %v4875, 16
        %v5044 = vrot.slane %v5042, 5
        %v5045 = vsel %vm3691, %v5040, %v5044
        %v5046 = vshrl.u32 %v4875, 16
        %v5048 = vrot.slane %v5046, 4
        %v5049 = vor.u32 %v5048, %v5044
        %v5050 = vrot.slane %v5049, 4
        %v5052 = vshll.u32 %v4901, 16
        %v5054 = vrot.slane %v5052, 5
        %v5055 = vsel %vm3691, %v5050, %v5054
        %v5057 = vshrl.u32 %v4876, 16
        %v5059 = vrot.slane %v5057, 4
        %v5060 = vshll.u32 %v4876, 16
        %v5062 = vrot.slane %v5060, 5
        %v5063 = vor.u32 %v5059, %v5062
        %v5064 = vrot.slane %v5063, 4
        %v5066 = vshll.u32 %v4877, 16
        %v5068 = vrot.slane %v5066, 5
        %v5069 = vsel %vm3691, %v5064, %v5068
        %v5070 = vshrl.u32 %v4877, 16
        %v5072 = vrot.slane %v5070, 4
        %v5073 = vor.u32 %v5072, %v5068
        %v5074 = vrot.slane %v5073, 4
        %v5076 = vshll.u32 %v4902, 16
        %v5078 = vrot.slane %v5076, 5
        %v5079 = vsel %vm3691, %v5074, %v5078
        %v5081 = vshrl.u32 %v4878, 16
        %v5083 = vrot.slane %v5081, 4
        %v5084 = vshll.u32 %v4878, 16
        %v5086 = vrot.slane %v5084, 5
        %v5087 = vor.u32 %v5083, %v5086
        %v5088 = vrot.slane %v5087, 4
        %v5090 = vshll.u32 %v4879, 16
        %v5092 = vrot.slane %v5090, 5
        %v5093 = vsel %vm3691, %v5088, %v5092
        %v5094 = vshrl.u32 %v4879, 16
        %v5096 = vrot.slane %v5094, 4
        %v5097 = vor.u32 %v5096, %v5092
        %v5098 = vrot.slane %v5097, 4
        %v5100 = vshll.u32 %v4903, 16
        %v5102 = vrot.slane %v5100, 5
        %v5103 = vsel %vm3691, %v5098, %v5102
        %v5105 = vshrl.u32 %v4880, 16
        %v5107 = vrot.slane %v5105, 4
        %v5108 = vshll.u32 %v4880, 16
        %v5110 = vrot.slane %v5108, 5
        %v5111 = vor.u32 %v5107, %v5110
        %v5112 = vrot.slane %v5111, 4
        %v5114 = vshll.u32 %v4881, 16
        %v5116 = vrot.slane %v5114, 5
        %v5117 = vsel %vm3691, %v5112, %v5116
        %v5118 = vshrl.u32 %v4881, 16
        %v5120 = vrot.slane %v5118, 4
        %v5121 = vor.u32 %v5120, %v5116
        %v5122 = vrot.slane %v5121, 4
        %v5124 = vshll.u32 %v4904, 16
        %v5126 = vrot.slane %v5124, 5
        %v5127 = vsel %vm3691, %v5122, %v5126
        %v5129 = vshrl.u32 %v4882, 16
        %v5131 = vrot.slane %v5129, 4
        %v5132 = vshll.u32 %v4882, 16
        %v5134 = vrot.slane %v5132, 5
        %v5135 = vor.u32 %v5131, %v5134
        %v5136 = vrot.slane %v5135, 4
        %v5138 = vshll.u32 %v4883, 16
        %v5140 = vrot.slane %v5138, 5
        %v5141 = vsel %vm3691, %v5136, %v5140
        %v5142 = vshrl.u32 %v4883, 16
        %v5144 = vrot.slane %v5142, 4
        %v5145 = vor.u32 %v5144, %v5140
        %v5146 = vrot.slane %v5145, 4
        %v5148 = vshll.u32 %v4905, 16
        %v5150 = vrot.slane %v5148, 5
        %v5151 = vsel %vm3691, %v5146, %v5150
        %v5153 = vshrl.u32 %v4884, 16
        %v5155 = vrot.slane %v5153, 4
        %v5156 = vshll.u32 %v4884, 16
        %v5158 = vrot.slane %v5156, 5
        %v5159 = vor.u32 %v5155, %v5158
        %v5160 = vrot.slane %v5159, 4
        %v5162 = vshll.u32 %v4885, 16
        %v5164 = vrot.slane %v5162, 5
        %v5165 = vsel %vm3691, %v5160, %v5164
        %v5166 = vshrl.u32 %v4885, 16
        %v5168 = vrot.slane %v5166, 4
        %v5169 = vor.u32 %v5168, %v5164
        %v5170 = vrot.slane %v5169, 4
        %v5172 = vshll.u32 %v4906, 16
        %v5174 = vrot.slane %v5172, 5
        %v5175 = vsel %vm3691, %v5170, %v5174
        %v5177 = vshrl.u32 %v4886, 16
        %v5179 = vrot.slane %v5177, 4
        %v5180 = vshll.u32 %v4886, 16
        %v5182 = vrot.slane %v5180, 5
        %v5183 = vor.u32 %v5179, %v5182
        %v5184 = vrot.slane %v5183, 4
        %v5186 = vshll.u32 %v4887, 16
        %v5188 = vrot.slane %v5186, 5
        %v5189 = vsel %vm3691, %v5184, %v5188
        %v5190 = vshrl.u32 %v4887, 16
        %v5192 = vrot.slane %v5190, 4
        %v5193 = vor.u32 %v5192, %v5188
        %v5194 = vrot.slane %v5193, 4
        %v5196 = vshll.u32 %v4907, 16
        %v5198 = vrot.slane %v5196, 5
        %v5199 = vsel %vm3691, %v5194, %v5198
        %v5201 = vshrl.u32 %v4888, 16
        %v5203 = vrot.slane %v5201, 4
        %v5204 = vshll.u32 %v4888, 16
        %v5206 = vrot.slane %v5204, 5
        %v5207 = vor.u32 %v5203, %v5206
        %v5208 = vrot.slane %v5207, 4
        %v5210 = vshll.u32 %v4889, 16
        %v5212 = vrot.slane %v5210, 5
        %v5213 = vsel %vm3691, %v5208, %v5212
        %v5214 = vshrl.u32 %v4889, 16
        %v5216 = vrot.slane %v5214, 4
        %v5217 = vor.u32 %v5216, %v5212
        %v5218 = vrot.slane %v5217, 4
        %v5220 = vshll.u32 %v4908, 16
        %v5222 = vrot.slane %v5220, 5
        %v5223 = vsel %vm3691, %v5218, %v5222
        %v5225 = vshrl.u32 %v4890, 16
        %v5227 = vrot.slane %v5225, 4
        %v5228 = vshll.u32 %v4890, 16
        %v5230 = vrot.slane %v5228, 5
        %v5231 = vor.u32 %v5227, %v5230
        %v5232 = vrot.slane %v5231, 4
        %v5234 = vshll.u32 %v4891, 16
        %v5236 = vrot.slane %v5234, 5
        %v5237 = vsel %vm3691, %v5232, %v5236
        %v5238 = vshrl.u32 %v4891, 16
        %v5240 = vrot.slane %v5238, 4
        %v5241 = vor.u32 %v5240, %v5236
        %v5242 = vrot.slane %v5241, 4
        %v5244 = vshll.u32 %v4909, 16
        %v5246 = vrot.slane %v5244, 5
        %v5247 = vsel %vm3691, %v5242, %v5246
        %v5249 = vshrl.u32 %v4892, 16
        %v5251 = vrot.slane %v5249, 4
        %v5252 = vshll.u32 %v4892, 16
        %v5254 = vrot.slane %v5252, 5
        %v5255 = vor.u32 %v5251, %v5254
        %v5256 = vrot.slane %v5255, 4
        %v5258 = vshll.u32 %v4893, 16
        %v5260 = vrot.slane %v5258, 5
        %v5261 = vsel %vm3691, %v5256, %v5260
        %v5262 = vshrl.u32 %v4893, 16
        %v5264 = vrot.slane %v5262, 4
        %v5265 = vor.u32 %v5264, %v5260
        %v5266 = vrot.slane %v5265, 4
        %v5268 = vshll.u32 %v4910, 16
        %v5270 = vrot.slane %v5268, 5
        %v5271 = vsel %vm3691, %v5266, %v5270
        %v5273 = vshrl.u32 %v4894, 16
        %v5275 = vrot.slane %v5273, 4
        %v5276 = vshll.u32 %v4894, 16
        %v5278 = vrot.slane %v5276, 5
        %v5279 = vor.u32 %v5275, %v5278
        %v5280 = vrot.slane %v5279, 4
        %v5282 = vshll.u32 %v4895, 16
        %v5284 = vrot.slane %v5282, 5
        %v5285 = vsel %vm3691, %v5280, %v5284
        %v5286 = vshrl.u32 %v4895, 16
        %v5288 = vrot.slane %v5286, 4
        %v5289 = vor.u32 %v5288, %v5284
        %v5290 = vrot.slane %v5289, 4
        %v5292 = vshll.u32 %v4911, 16
        %v5294 = vrot.slane %v5292, 5
        %v5295 = vsel %vm3691, %v5290, %v5294
        %v5296 = vld [vmem:[%s4863] sm:$0xe]
        %v5297 = vld [vmem:[%s4863 + $0xc] sm:$0xe]
        %v5298 = vld [vmem:[%s4863 + $0x18] sm:$0xe]
        %v5299 = vld [vmem:[%s4863 + $0x24] sm:$0xe]
        %v5300 = vld [vmem:[%s4863 + $0x30] sm:$0xe]
        %v5301 = vld [vmem:[%s4863 + $0x3c] sm:$0xe]
        %v5302 = vld [vmem:[%s4863 + $0x48] sm:$0xe]
        %v5303 = vld [vmem:[%s4863 + $0x54] sm:$0xe]
        %v5304 = vld [vmem:[%s4863 + $0x60] sm:$0xe]
        %v5305 = vld [vmem:[%s4863 + $0x6c] sm:$0xe]
        %v5306 = vld [vmem:[%s4863 + $0x78] sm:$0xe]
        %v5307 = vld [vmem:[%s4863 + $0x84] sm:$0xe]
        %v5308 = vld [vmem:[%s4863 + $0x90] sm:$0xe]
        %v5309 = vld [vmem:[%s4863 + $0x9c] sm:$0xe]
        %v5310 = vld [vmem:[%s4863 + $0xa8] sm:$0xe]
        %v5311 = vld [vmem:[%s4863 + $0xb4] sm:$0xe]
        %v5360 = vrot.slane %v5296, 5
        %v5361 = vrot.slane %v5360, 4
        %v5362 = vrot.slane %v4865, 5
        %v5363 = vsel %vm4142, %v5361, %v5362
        %v5364 = vrot.slane %v5362, 4
        %v5365 = vrot.slane %v4896, 5
        %v5366 = vsel %vm4142, %v5364, %v5365
        %v5367 = vrot.slane %v5297, 5
        %v5368 = vrot.slane %v5367, 4
        %v5369 = vrot.slane %v4867, 5
        %v5370 = vsel %vm4142, %v5368, %v5369
        %v5371 = vrot.slane %v5369, 4
        %v5372 = vrot.slane %v4897, 5
        %v5373 = vsel %vm4142, %v5371, %v5372
        %v5374 = vrot.slane %v5298, 5
        %v5375 = vrot.slane %v5374, 4
        %v5376 = vrot.slane %v4869, 5
        %v5377 = vsel %vm4142, %v5375, %v5376
        %v5378 = vrot.slane %v5376, 4
        %v5379 = vrot.slane %v4898, 5
        %v5380 = vsel %vm4142, %v5378, %v5379
        %v5381 = vrot.slane %v5299, 5
        %v5382 = vrot.slane %v5381, 4
        %v5383 = vrot.slane %v4871, 5
        %v5384 = vsel %vm4142, %v5382, %v5383
        %v5385 = vrot.slane %v5383, 4
        %v5386 = vrot.slane %v4899, 5
        %v5387 = vsel %vm4142, %v5385, %v5386
        %v5388 = vrot.slane %v5300, 5
        %v5389 = vrot.slane %v5388, 4
        %v5390 = vrot.slane %v4873, 5
        %v5391 = vsel %vm4142, %v5389, %v5390
        %v5392 = vrot.slane %v5390, 4
        %v5393 = vrot.slane %v4900, 5
        %v5394 = vsel %vm4142, %v5392, %v5393
        %v5395 = vrot.slane %v5301, 5
        %v5396 = vrot.slane %v5395, 4
        %v5397 = vrot.slane %v4875, 5
        %v5398 = vsel %vm4142, %v5396, %v5397
        %v5399 = vrot.slane %v5397, 4
        %v5400 = vrot.slane %v4901, 5
        %v5401 = vsel %vm4142, %v5399, %v5400
        %v5402 = vrot.slane %v5302, 5
        %v5403 = vrot.slane %v5402, 4
        %v5404 = vrot.slane %v4877, 5
        %v5405 = vsel %vm4142, %v5403, %v5404
        %v5406 = vrot.slane %v5404, 4
        %v5407 = vrot.slane %v4902, 5
        %v5408 = vsel %vm4142, %v5406, %v5407
        %v5409 = vrot.slane %v5303, 5
        %v5410 = vrot.slane %v5409, 4
        %v5411 = vrot.slane %v4879, 5
        %v5412 = vsel %vm4142, %v5410, %v5411
        %v5413 = vrot.slane %v5411, 4
        %v5414 = vrot.slane %v4903, 5
        %v5415 = vsel %vm4142, %v5413, %v5414
        %v5416 = vrot.slane %v5304, 5
        %v5417 = vrot.slane %v5416, 4
        %v5418 = vrot.slane %v4881, 5
        %v5419 = vsel %vm4142, %v5417, %v5418
        %v5420 = vrot.slane %v5418, 4
        %v5421 = vrot.slane %v4904, 5
        %v5422 = vsel %vm4142, %v5420, %v5421
        %v5423 = vrot.slane %v5305, 5
        %v5424 = vrot.slane %v5423, 4
        %v5425 = vrot.slane %v4883, 5
        %v5426 = vsel %vm4142, %v5424, %v5425
        %v5427 = vrot.slane %v5425, 4
        %v5428 = vrot.slane %v4905, 5
        %v5429 = vsel %vm4142, %v5427, %v5428
        %v5430 = vrot.slane %v5306, 5
        %v5431 = vrot.slane %v5430, 4
        %v5432 = vrot.slane %v4885, 5
        %v5433 = vsel %vm4142, %v5431, %v5432
        %v5434 = vrot.slane %v5432, 4
        %v5435 = vrot.slane %v4906, 5
        %v5436 = vsel %vm4142, %v5434, %v5435
        %v5437 = vrot.slane %v5307, 5
        %v5438 = vrot.slane %v5437, 4
        %v5439 = vrot.slane %v4887, 5
        %v5440 = vsel %vm4142, %v5438, %v5439
        %v5441 = vrot.slane %v5439, 4
        %v5442 = vrot.slane %v4907, 5
        %v5443 = vsel %vm4142, %v5441, %v5442
        %v5444 = vrot.slane %v5308, 5
        %v5445 = vrot.slane %v5444, 4
        %v5446 = vrot.slane %v4889, 5
        %v5447 = vsel %vm4142, %v5445, %v5446
        %v5448 = vrot.slane %v5446, 4
        %v5449 = vrot.slane %v4908, 5
        %v5450 = vsel %vm4142, %v5448, %v5449
        %v5451 = vrot.slane %v5309, 5
        %v5452 = vrot.slane %v5451, 4
        %v5453 = vrot.slane %v4891, 5
        %v5454 = vsel %vm4142, %v5452, %v5453
        %v5455 = vrot.slane %v5453, 4
        %v5456 = vrot.slane %v4909, 5
        %v5457 = vsel %vm4142, %v5455, %v5456
        %v5458 = vrot.slane %v5310, 5
        %v5459 = vrot.slane %v5458, 4
        %v5460 = vrot.slane %v4893, 5
        %v5461 = vsel %vm4142, %v5459, %v5460
        %v5462 = vrot.slane %v5460, 4
        %v5463 = vrot.slane %v4910, 5
        %v5464 = vsel %vm4142, %v5462, %v5463
        %v5465 = vrot.slane %v5311, 5
        %v5466 = vrot.slane %v5465, 4
        %v5467 = vrot.slane %v4895, 5
        %v5468 = vsel %vm4142, %v5466, %v5467
        %v5469 = vrot.slane %v5467, 4
        %v5470 = vrot.slane %v4911, 5
        %v5471 = vsel %vm4142, %v5469, %v5470
        %v5488 = vunpack.c.l.b16 %v3641
        %v5489 = vunpack.c.l.b16 %v3642
        %v5490 = vunpack.c.l.b16 %v3643
        %v5491 = vunpack.c.l.b16 %v3644
        %v5492 = vunpack.c.l.b16 %v3645
        %v5493 = vunpack.c.l.b16 %v3646
        %v5494 = vunpack.c.l.b16 %v3647
        %v5495 = vunpack.c.l.b16 %v3648
        %v5496 = vunpack.c.l.b16 %v3649
        %v5497 = vunpack.c.l.b16 %v3650
        %v5498 = vunpack.c.l.b16 %v3651
        %v5499 = vunpack.c.l.b16 %v3652
        %v5500 = vunpack.c.l.b16 %v3653
        %v5501 = vunpack.c.l.b16 %v3654
        %v5502 = vunpack.c.l.b16 %v3655
        %v5503 = vunpack.c.l.b16 %v3656
        %v5504 = vunpack.c.l.b16 %v3657
        %v5505 = vunpack.c.l.b16 %v3658
        %v5506 = vunpack.c.l.b16 %v3659
        %v5507 = vunpack.c.l.b16 %v3660
        %v5508 = vunpack.c.l.b16 %v3661
        %v5509 = vunpack.c.l.b16 %v3662
        %v5510 = vunpack.c.l.b16 %v3663
        %v5511 = vunpack.c.l.b16 %v3664
        %v5512 = vunpack.c.l.b16 %v3665
        %v5513 = vunpack.c.l.b16 %v3666
        %v5514 = vunpack.c.l.b16 %v3667
        %v5515 = vunpack.c.l.b16 %v3668
        %v5516 = vunpack.c.l.b16 %v3669
        %v5517 = vunpack.c.l.b16 %v3670
        %v5518 = vunpack.c.l.b16 %v3671
        %v5519 = vunpack.c.l.b16 %v3672
        %v5520 = vpack.c.b16 %v5489, %v5488
        %v5521 = vpack.c.b16 %v5491, %v5490
        %v5522 = vpack.c.b16 %v5493, %v5492
        %v5523 = vpack.c.b16 %v5495, %v5494
        %v5524 = vpack.c.b16 %v5497, %v5496
        %v5525 = vpack.c.b16 %v5499, %v5498
        %v5526 = vpack.c.b16 %v5501, %v5500
        %v5527 = vpack.c.b16 %v5503, %v5502
        %v5528 = vpack.c.b16 %v5505, %v5504
        %v5529 = vpack.c.b16 %v5507, %v5506
        %v5530 = vpack.c.b16 %v5509, %v5508
        %v5531 = vpack.c.b16 %v5511, %v5510
        %v5532 = vpack.c.b16 %v5513, %v5512
        %v5533 = vpack.c.b16 %v5515, %v5514
        %v5534 = vpack.c.b16 %v5517, %v5516
        %v5535 = vpack.c.b16 %v5519, %v5518
        %v5536 = vunpack.c.l.b16 %v3705
        %v5537 = vunpack.c.l.b16 %v3715
        %v5538 = vunpack.c.l.b16 %v3729
        %v5539 = vunpack.c.l.b16 %v3739
        %v5540 = vunpack.c.l.b16 %v3753
        %v5541 = vunpack.c.l.b16 %v3763
        %v5542 = vunpack.c.l.b16 %v3777
        %v5543 = vunpack.c.l.b16 %v3787
        %v5544 = vunpack.c.l.b16 %v3801
        %v5545 = vunpack.c.l.b16 %v3811
        %v5546 = vunpack.c.l.b16 %v3825
        %v5547 = vunpack.c.l.b16 %v3835
        %v5548 = vunpack.c.l.b16 %v3849
        %v5549 = vunpack.c.l.b16 %v3859
        %v5550 = vunpack.c.l.b16 %v3873
        %v5551 = vunpack.c.l.b16 %v3883
        %v5552 = vunpack.c.l.b16 %v3897
        %v5553 = vunpack.c.l.b16 %v3907
        %v5554 = vunpack.c.l.b16 %v3921
        %v5555 = vunpack.c.l.b16 %v3931
        %v5556 = vunpack.c.l.b16 %v3945
        %v5557 = vunpack.c.l.b16 %v3955
        %v5558 = vunpack.c.l.b16 %v3969
        %v5559 = vunpack.c.l.b16 %v3979
        %v5560 = vunpack.c.l.b16 %v3993
        %v5561 = vunpack.c.l.b16 %v4003
        %v5562 = vunpack.c.l.b16 %v4017
        %v5563 = vunpack.c.l.b16 %v4027
        %v5564 = vunpack.c.l.b16 %v4041
        %v5565 = vunpack.c.l.b16 %v4051
        %v5566 = vunpack.c.l.b16 %v4065
        %v5567 = vunpack.c.l.b16 %v4075
        %v5568 = vpack.c.b16 %v5537, %v5536
        %v5569 = vpack.c.b16 %v5539, %v5538
        %v5570 = vpack.c.b16 %v5541, %v5540
        %v5571 = vpack.c.b16 %v5543, %v5542
        %v5572 = vpack.c.b16 %v5545, %v5544
        %v5573 = vpack.c.b16 %v5547, %v5546
        %v5574 = vpack.c.b16 %v5549, %v5548
        %v5575 = vpack.c.b16 %v5551, %v5550
        %v5576 = vpack.c.b16 %v5553, %v5552
        %v5577 = vpack.c.b16 %v5555, %v5554
        %v5578 = vpack.c.b16 %v5557, %v5556
        %v5579 = vpack.c.b16 %v5559, %v5558
        %v5580 = vpack.c.b16 %v5561, %v5560
        %v5581 = vpack.c.b16 %v5563, %v5562
        %v5582 = vpack.c.b16 %v5565, %v5564
        %v5583 = vpack.c.b16 %v5567, %v5566
        %5584 = vrot.lane.b32.xlu0 %v5568, 16
        %v5585 = vpop.permute.xlu0 %5584
        %5586 = vrot.lane.b32.xlu0 %v5569, 16
        %v5587 = vpop.permute.xlu0 %5586
        %5588 = vrot.lane.b32.xlu0 %v5570, 16
        %v5589 = vpop.permute.xlu0 %5588
        %5590 = vrot.lane.b32.xlu0 %v5571, 16
        %v5591 = vpop.permute.xlu0 %5590
        %5592 = vrot.lane.b32.xlu0 %v5572, 16
        %v5593 = vpop.permute.xlu0 %5592
        %5594 = vrot.lane.b32.xlu0 %v5573, 16
        %v5595 = vpop.permute.xlu0 %5594
        %5596 = vrot.lane.b32.xlu0 %v5574, 16
        %v5597 = vpop.permute.xlu0 %5596
        %5598 = vrot.lane.b32.xlu0 %v5575, 16
        %v5599 = vpop.permute.xlu0 %5598
        %5600 = vrot.lane.b32.xlu0 %v5576, 16
        %v5601 = vpop.permute.xlu0 %5600
        %5602 = vrot.lane.b32.xlu0 %v5577, 16
        %v5603 = vpop.permute.xlu0 %5602
        %5604 = vrot.lane.b32.xlu0 %v5578, 16
        %v5605 = vpop.permute.xlu0 %5604
        %5606 = vrot.lane.b32.xlu0 %v5579, 16
        %v5607 = vpop.permute.xlu0 %5606
        %5608 = vrot.lane.b32.xlu0 %v5580, 16
        %v5609 = vpop.permute.xlu0 %5608
        %5610 = vrot.lane.b32.xlu0 %v5581, 16
        %v5611 = vpop.permute.xlu0 %5610
        %5612 = vrot.lane.b32.xlu0 %v5582, 16
        %v5613 = vpop.permute.xlu0 %5612
        %5614 = vrot.lane.b32.xlu0 %v5583, 16
        %v5615 = vpop.permute.xlu0 %5614
        %v5616 = vunpack.c.l.b16 %v4146
        %v5617 = vunpack.c.l.b16 %v4149
        %v5618 = vunpack.c.l.b16 %v4153
        %v5619 = vunpack.c.l.b16 %v4156
        %v5620 = vunpack.c.l.b16 %v4160
        %v5621 = vunpack.c.l.b16 %v4163
        %v5622 = vunpack.c.l.b16 %v4167
        %v5623 = vunpack.c.l.b16 %v4170
        %v5624 = vunpack.c.l.b16 %v4174
        %v5625 = vunpack.c.l.b16 %v4177
        %v5626 = vunpack.c.l.b16 %v4181
        %v5627 = vunpack.c.l.b16 %v4184
        %v5628 = vunpack.c.l.b16 %v4188
        %v5629 = vunpack.c.l.b16 %v4191
        %v5630 = vunpack.c.l.b16 %v4195
        %v5631 = vunpack.c.l.b16 %v4198
        %v5632 = vunpack.c.l.b16 %v4202
        %v5633 = vunpack.c.l.b16 %v4205
        %v5634 = vunpack.c.l.b16 %v4209
        %v5635 = vunpack.c.l.b16 %v4212
        %v5636 = vunpack.c.l.b16 %v4216
        %v5637 = vunpack.c.l.b16 %v4219
        %v5638 = vunpack.c.l.b16 %v4223
        %v5639 = vunpack.c.l.b16 %v4226
        %v5640 = vunpack.c.l.b16 %v4230
        %v5641 = vunpack.c.l.b16 %v4233
        %v5642 = vunpack.c.l.b16 %v4237
        %v5643 = vunpack.c.l.b16 %v4240
        %v5644 = vunpack.c.l.b16 %v4244
        %v5645 = vunpack.c.l.b16 %v4247
        %v5646 = vunpack.c.l.b16 %v4251
        %v5647 = vunpack.c.l.b16 %v4254
        %v5648 = vpack.c.b16 %v5617, %v5616
        %v5649 = vpack.c.b16 %v5619, %v5618
        %v5650 = vpack.c.b16 %v5621, %v5620
        %v5651 = vpack.c.b16 %v5623, %v5622
        %v5652 = vpack.c.b16 %v5625, %v5624
        %v5653 = vpack.c.b16 %v5627, %v5626
        %v5654 = vpack.c.b16 %v5629, %v5628
        %v5655 = vpack.c.b16 %v5631, %v5630
        %v5656 = vpack.c.b16 %v5633, %v5632
        %v5657 = vpack.c.b16 %v5635, %v5634
        %v5658 = vpack.c.b16 %v5637, %v5636
        %v5659 = vpack.c.b16 %v5639, %v5638
        %v5660 = vpack.c.b16 %v5641, %v5640
        %v5661 = vpack.c.b16 %v5643, %v5642
        %v5662 = vpack.c.b16 %v5645, %v5644
        %v5663 = vpack.c.b16 %v5647, %v5646
        %5664 = vrot.lane.b32.xlu0 %v5648, 32
        %v5665 = vpop.permute.xlu0 %5664
        %5666 = vrot.lane.b32.xlu0 %v5649, 32
        %v5667 = vpop.permute.xlu0 %5666
        %5668 = vrot.lane.b32.xlu0 %v5650, 32
        %v5669 = vpop.permute.xlu0 %5668
        %5670 = vrot.lane.b32.xlu0 %v5651, 32
        %v5671 = vpop.permute.xlu0 %5670
        %5672 = vrot.lane.b32.xlu0 %v5652, 32
        %v5673 = vpop.permute.xlu0 %5672
        %5674 = vrot.lane.b32.xlu0 %v5653, 32
        %v5675 = vpop.permute.xlu0 %5674
        %5676 = vrot.lane.b32.xlu0 %v5654, 32
        %v5677 = vpop.permute.xlu0 %5676
        %5678 = vrot.lane.b32.xlu0 %v5655, 32
        %v5679 = vpop.permute.xlu0 %5678
        %5680 = vrot.lane.b32.xlu0 %v5656, 32
        %v5681 = vpop.permute.xlu0 %5680
        %5682 = vrot.lane.b32.xlu0 %v5657, 32
        %v5683 = vpop.permute.xlu0 %5682
        %5684 = vrot.lane.b32.xlu0 %v5658, 32
        %v5685 = vpop.permute.xlu0 %5684
        %5686 = vrot.lane.b32.xlu0 %v5659, 32
        %v5687 = vpop.permute.xlu0 %5686
        %5688 = vrot.lane.b32.xlu0 %v5660, 32
        %v5689 = vpop.permute.xlu0 %5688
        %5690 = vrot.lane.b32.xlu0 %v5661, 32
        %v5691 = vpop.permute.xlu0 %5690
        %5692 = vrot.lane.b32.xlu0 %v5662, 32
        %v5693 = vpop.permute.xlu0 %5692
        %5694 = vrot.lane.b32.xlu0 %v5663, 32
        %v5695 = vpop.permute.xlu0 %5694
        %v5712 = vunpack.c.l.b16 %v4255
        %v5713 = vunpack.c.l.b16 %v4256
        %v5714 = vunpack.c.l.b16 %v4257
        %v5715 = vunpack.c.l.b16 %v4258
        %v5716 = vunpack.c.l.b16 %v4259
        %v5717 = vunpack.c.l.b16 %v4260
        %v5718 = vunpack.c.l.b16 %v4261
        %v5719 = vunpack.c.l.b16 %v4262
        %v5720 = vunpack.c.l.b16 %v4263
        %v5721 = vunpack.c.l.b16 %v4264
        %v5722 = vunpack.c.l.b16 %v4265
        %v5723 = vunpack.c.l.b16 %v4266
        %v5724 = vunpack.c.l.b16 %v4267
        %v5725 = vunpack.c.l.b16 %v4268
        %v5726 = vunpack.c.l.b16 %v4269
        %v5727 = vunpack.c.l.b16 %v4270
        %v5728 = vunpack.c.l.b16 %v4271
        %v5729 = vunpack.c.l.b16 %v4272
        %v5730 = vunpack.c.l.b16 %v4273
        %v5731 = vunpack.c.l.b16 %v4274
        %v5732 = vunpack.c.l.b16 %v4275
        %v5733 = vunpack.c.l.b16 %v4276
        %v5734 = vunpack.c.l.b16 %v4277
        %v5735 = vunpack.c.l.b16 %v4278
        %v5736 = vunpack.c.l.b16 %v4279
        %v5737 = vunpack.c.l.b16 %v4280
        %v5738 = vunpack.c.l.b16 %v4281
        %v5739 = vunpack.c.l.b16 %v4282
        %v5740 = vunpack.c.l.b16 %v4283
        %v5741 = vunpack.c.l.b16 %v4284
        %v5742 = vunpack.c.l.b16 %v4285
        %v5743 = vunpack.c.l.b16 %v4286
        %v5744 = vpack.c.b16 %v5713, %v5712
        %v5745 = vpack.c.b16 %v5715, %v5714
        %v5746 = vpack.c.b16 %v5717, %v5716
        %v5747 = vpack.c.b16 %v5719, %v5718
        %v5748 = vpack.c.b16 %v5721, %v5720
        %v5749 = vpack.c.b16 %v5723, %v5722
        %v5750 = vpack.c.b16 %v5725, %v5724
        %v5751 = vpack.c.b16 %v5727, %v5726
        %v5752 = vpack.c.b16 %v5729, %v5728
        %v5753 = vpack.c.b16 %v5731, %v5730
        %v5754 = vpack.c.b16 %v5733, %v5732
        %v5755 = vpack.c.b16 %v5735, %v5734
        %v5756 = vpack.c.b16 %v5737, %v5736
        %v5757 = vpack.c.b16 %v5739, %v5738
        %v5758 = vpack.c.b16 %v5741, %v5740
        %v5759 = vpack.c.b16 %v5743, %v5742
        %5760 = vrot.lane.b32.xlu0 %v5744, 48
        %v5761 = vpop.permute.xlu0 %5760
        %5762 = vrot.lane.b32.xlu0 %v5745, 48
        %v5763 = vpop.permute.xlu0 %5762
        %5764 = vrot.lane.b32.xlu0 %v5746, 48
        %v5765 = vpop.permute.xlu0 %5764
        %5766 = vrot.lane.b32.xlu0 %v5747, 48
        %v5767 = vpop.permute.xlu0 %5766
        %5768 = vrot.lane.b32.xlu0 %v5748, 48
        %v5769 = vpop.permute.xlu0 %5768
        %5770 = vrot.lane.b32.xlu0 %v5749, 48
        %v5771 = vpop.permute.xlu0 %5770
        %5772 = vrot.lane.b32.xlu0 %v5750, 48
        %v5773 = vpop.permute.xlu0 %5772
        %5774 = vrot.lane.b32.xlu0 %v5751, 48
        %v5775 = vpop.permute.xlu0 %5774
        %5776 = vrot.lane.b32.xlu0 %v5752, 48
        %v5777 = vpop.permute.xlu0 %5776
        %5778 = vrot.lane.b32.xlu0 %v5753, 48
        %v5779 = vpop.permute.xlu0 %5778
        %5780 = vrot.lane.b32.xlu0 %v5754, 48
        %v5781 = vpop.permute.xlu0 %5780
        %5782 = vrot.lane.b32.xlu0 %v5755, 48
        %v5783 = vpop.permute.xlu0 %5782
        %5784 = vrot.lane.b32.xlu0 %v5756, 48
        %v5785 = vpop.permute.xlu0 %5784
        %5786 = vrot.lane.b32.xlu0 %v5757, 48
        %v5787 = vpop.permute.xlu0 %5786
        %5788 = vrot.lane.b32.xlu0 %v5758, 48
        %v5789 = vpop.permute.xlu0 %5788
        %5790 = vrot.lane.b32.xlu0 %v5759, 48
        %v5791 = vpop.permute.xlu0 %5790
        %v5792 = vunpack.c.l.b16 %v4316
        %v5793 = vunpack.c.l.b16 %v4326
        %v5794 = vunpack.c.l.b16 %v4340
        %v5795 = vunpack.c.l.b16 %v4350
        %v5796 = vunpack.c.l.b16 %v4364
        %v5797 = vunpack.c.l.b16 %v4374
        %v5798 = vunpack.c.l.b16 %v4388
        %v5799 = vunpack.c.l.b16 %v4398
        %v5800 = vunpack.c.l.b16 %v4412
        %v5801 = vunpack.c.l.b16 %v4422
        %v5802 = vunpack.c.l.b16 %v4436
        %v5803 = vunpack.c.l.b16 %v4446
        %v5804 = vunpack.c.l.b16 %v4460
        %v5805 = vunpack.c.l.b16 %v4470
        %v5806 = vunpack.c.l.b16 %v4484
        %v5807 = vunpack.c.l.b16 %v4494
        %v5808 = vunpack.c.l.b16 %v4508
        %v5809 = vunpack.c.l.b16 %v4518
        %v5810 = vunpack.c.l.b16 %v4532
        %v5811 = vunpack.c.l.b16 %v4542
        %v5812 = vunpack.c.l.b16 %v4556
        %v5813 = vunpack.c.l.b16 %v4566
        %v5814 = vunpack.c.l.b16 %v4580
        %v5815 = vunpack.c.l.b16 %v4590
        %v5816 = vunpack.c.l.b16 %v4604
        %v5817 = vunpack.c.l.b16 %v4614
        %v5818 = vunpack.c.l.b16 %v4628
        %v5819 = vunpack.c.l.b16 %v4638
        %v5820 = vunpack.c.l.b16 %v4652
        %v5821 = vunpack.c.l.b16 %v4662
        %v5822 = vunpack.c.l.b16 %v4676
        %v5823 = vunpack.c.l.b16 %v4686
        %v5824 = vpack.c.b16 %v5793, %v5792
        %v5825 = vpack.c.b16 %v5795, %v5794
        %v5826 = vpack.c.b16 %v5797, %v5796
        %v5827 = vpack.c.b16 %v5799, %v5798
        %v5828 = vpack.c.b16 %v5801, %v5800
        %v5829 = vpack.c.b16 %v5803, %v5802
        %v5830 = vpack.c.b16 %v5805, %v5804
        %v5831 = vpack.c.b16 %v5807, %v5806
        %v5832 = vpack.c.b16 %v5809, %v5808
        %v5833 = vpack.c.b16 %v5811, %v5810
        %v5834 = vpack.c.b16 %v5813, %v5812
        %v5835 = vpack.c.b16 %v5815, %v5814
        %v5836 = vpack.c.b16 %v5817, %v5816
        %v5837 = vpack.c.b16 %v5819, %v5818
        %v5838 = vpack.c.b16 %v5821, %v5820
        %v5839 = vpack.c.b16 %v5823, %v5822
        %5840 = vrot.lane.b32.xlu0 %v5824, 64
        %v5841 = vpop.permute.xlu0 %5840
        %5842 = vrot.lane.b32.xlu0 %v5825, 64
        %v5843 = vpop.permute.xlu0 %5842
        %5844 = vrot.lane.b32.xlu0 %v5826, 64
        %v5845 = vpop.permute.xlu0 %5844
        %5846 = vrot.lane.b32.xlu0 %v5827, 64
        %v5847 = vpop.permute.xlu0 %5846
        %5848 = vrot.lane.b32.xlu0 %v5828, 64
        %v5849 = vpop.permute.xlu0 %5848
        %5850 = vrot.lane.b32.xlu0 %v5829, 64
        %v5851 = vpop.permute.xlu0 %5850
        %5852 = vrot.lane.b32.xlu0 %v5830, 64
        %v5853 = vpop.permute.xlu0 %5852
        %5854 = vrot.lane.b32.xlu0 %v5831, 64
        %v5855 = vpop.permute.xlu0 %5854
        %5856 = vrot.lane.b32.xlu0 %v5832, 64
        %v5857 = vpop.permute.xlu0 %5856
        %5858 = vrot.lane.b32.xlu0 %v5833, 64
        %v5859 = vpop.permute.xlu0 %5858
        %5860 = vrot.lane.b32.xlu0 %v5834, 64
        %v5861 = vpop.permute.xlu0 %5860
        %5862 = vrot.lane.b32.xlu0 %v5835, 64
        %v5863 = vpop.permute.xlu0 %5862
        %5864 = vrot.lane.b32.xlu0 %v5836, 64
        %v5865 = vpop.permute.xlu0 %5864
        %5866 = vrot.lane.b32.xlu0 %v5837, 64
        %v5867 = vpop.permute.xlu0 %5866
        %5868 = vrot.lane.b32.xlu0 %v5838, 64
        %v5869 = vpop.permute.xlu0 %5868
        %5870 = vrot.lane.b32.xlu0 %v5839, 64
        %v5871 = vpop.permute.xlu0 %5870
        %v5872 = vunpack.c.l.b16 %v4754
        %v5873 = vunpack.c.l.b16 %v4757
        %v5874 = vunpack.c.l.b16 %v4761
        %v5875 = vunpack.c.l.b16 %v4764
        %v5876 = vunpack.c.l.b16 %v4768
        %v5877 = vunpack.c.l.b16 %v4771
        %v5878 = vunpack.c.l.b16 %v4775
        %v5879 = vunpack.c.l.b16 %v4778
        %v5880 = vunpack.c.l.b16 %v4782
        %v5881 = vunpack.c.l.b16 %v4785
        %v5882 = vunpack.c.l.b16 %v4789
        %v5883 = vunpack.c.l.b16 %v4792
        %v5884 = vunpack.c.l.b16 %v4796
        %v5885 = vunpack.c.l.b16 %v4799
        %v5886 = vunpack.c.l.b16 %v4803
        %v5887 = vunpack.c.l.b16 %v4806
        %v5888 = vunpack.c.l.b16 %v4810
        %v5889 = vunpack.c.l.b16 %v4813
        %v5890 = vunpack.c.l.b16 %v4817
        %v5891 = vunpack.c.l.b16 %v4820
        %v5892 = vunpack.c.l.b16 %v4824
        %v5893 = vunpack.c.l.b16 %v4827
        %v5894 = vunpack.c.l.b16 %v4831
        %v5895 = vunpack.c.l.b16 %v4834
        %v5896 = vunpack.c.l.b16 %v4838
        %v5897 = vunpack.c.l.b16 %v4841
        %v5898 = vunpack.c.l.b16 %v4845
        %v5899 = vunpack.c.l.b16 %v4848
        %v5900 = vunpack.c.l.b16 %v4852
        %v5901 = vunpack.c.l.b16 %v4855
        %v5902 = vunpack.c.l.b16 %v4859
        %v5903 = vunpack.c.l.b16 %v4862
        %v5904 = vpack.c.b16 %v5873, %v5872
        %v5905 = vpack.c.b16 %v5875, %v5874
        %v5906 = vpack.c.b16 %v5877, %v5876
        %v5907 = vpack.c.b16 %v5879, %v5878
        %v5908 = vpack.c.b16 %v5881, %v5880
        %v5909 = vpack.c.b16 %v5883, %v5882
        %v5910 = vpack.c.b16 %v5885, %v5884
        %v5911 = vpack.c.b16 %v5887, %v5886
        %v5912 = vpack.c.b16 %v5889, %v5888
        %v5913 = vpack.c.b16 %v5891, %v5890
        %v5914 = vpack.c.b16 %v5893, %v5892
        %v5915 = vpack.c.b16 %v5895, %v5894
        %v5916 = vpack.c.b16 %v5897, %v5896
        %v5917 = vpack.c.b16 %v5899, %v5898
        %v5918 = vpack.c.b16 %v5901, %v5900
        %v5919 = vpack.c.b16 %v5903, %v5902
        %5920 = vrot.lane.b32.xlu0 %v5904, 80
        %v5921 = vpop.permute.xlu0 %5920
        %5922 = vrot.lane.b32.xlu0 %v5905, 80
        %v5923 = vpop.permute.xlu0 %5922
        %5924 = vrot.lane.b32.xlu0 %v5906, 80
        %v5925 = vpop.permute.xlu0 %5924
        %5926 = vrot.lane.b32.xlu0 %v5907, 80
        %v5927 = vpop.permute.xlu0 %5926
        %5928 = vrot.lane.b32.xlu0 %v5908, 80
        %v5929 = vpop.permute.xlu0 %5928
        %5930 = vrot.lane.b32.xlu0 %v5909, 80
        %v5931 = vpop.permute.xlu0 %5930
        %5932 = vrot.lane.b32.xlu0 %v5910, 80
        %v5933 = vpop.permute.xlu0 %5932
        %5934 = vrot.lane.b32.xlu0 %v5911, 80
        %v5935 = vpop.permute.xlu0 %5934
        %5936 = vrot.lane.b32.xlu0 %v5912, 80
        %v5937 = vpop.permute.xlu0 %5936
        %5938 = vrot.lane.b32.xlu0 %v5913, 80
        %v5939 = vpop.permute.xlu0 %5938
        %5940 = vrot.lane.b32.xlu0 %v5914, 80
        %v5941 = vpop.permute.xlu0 %5940
        %5942 = vrot.lane.b32.xlu0 %v5915, 80
        %v5943 = vpop.permute.xlu0 %5942
        %5944 = vrot.lane.b32.xlu0 %v5916, 80
        %v5945 = vpop.permute.xlu0 %5944
        %5946 = vrot.lane.b32.xlu0 %v5917, 80
        %v5947 = vpop.permute.xlu0 %5946
        %5948 = vrot.lane.b32.xlu0 %v5918, 80
        %v5949 = vpop.permute.xlu0 %5948
        %5950 = vrot.lane.b32.xlu0 %v5919, 80
        %v5951 = vpop.permute.xlu0 %5950
        %v5968 = vunpack.c.l.b16 %v4864
        %v5969 = vunpack.c.l.b16 %v4865
        %v5970 = vunpack.c.l.b16 %v4866
        %v5971 = vunpack.c.l.b16 %v4867
        %v5972 = vunpack.c.l.b16 %v4868
        %v5973 = vunpack.c.l.b16 %v4869
        %v5974 = vunpack.c.l.b16 %v4870
        %v5975 = vunpack.c.l.b16 %v4871
        %v5976 = vunpack.c.l.b16 %v4872
        %v5977 = vunpack.c.l.b16 %v4873
        %v5978 = vunpack.c.l.b16 %v4874
        %v5979 = vunpack.c.l.b16 %v4875
        %v5980 = vunpack.c.l.b16 %v4876
        %v5981 = vunpack.c.l.b16 %v4877
        %v5982 = vunpack.c.l.b16 %v4878
        %v5983 = vunpack.c.l.b16 %v4879
        %v5984 = vunpack.c.l.b16 %v4880
        %v5985 = vunpack.c.l.b16 %v4881
        %v5986 = vunpack.c.l.b16 %v4882
        %v5987 = vunpack.c.l.b16 %v4883
        %v5988 = vunpack.c.l.b16 %v4884
        %v5989 = vunpack.c.l.b16 %v4885
        %v5990 = vunpack.c.l.b16 %v4886
        %v5991 = vunpack.c.l.b16 %v4887
        %v5992 = vunpack.c.l.b16 %v4888
        %v5993 = vunpack.c.l.b16 %v4889
        %v5994 = vunpack.c.l.b16 %v4890
        %v5995 = vunpack.c.l.b16 %v4891
        %v5996 = vunpack.c.l.b16 %v4892
        %v5997 = vunpack.c.l.b16 %v4893
        %v5998 = vunpack.c.l.b16 %v4894
        %v5999 = vunpack.c.l.b16 %v4895
        %v6000 = vpack.c.b16 %v5969, %v5968
        %v6001 = vpack.c.b16 %v5971, %v5970
        %v6002 = vpack.c.b16 %v5973, %v5972
        %v6003 = vpack.c.b16 %v5975, %v5974
        %v6004 = vpack.c.b16 %v5977, %v5976
        %v6005 = vpack.c.b16 %v5979, %v5978
        %v6006 = vpack.c.b16 %v5981, %v5980
        %v6007 = vpack.c.b16 %v5983, %v5982
        %v6008 = vpack.c.b16 %v5985, %v5984
        %v6009 = vpack.c.b16 %v5987, %v5986
        %v6010 = vpack.c.b16 %v5989, %v5988
        %v6011 = vpack.c.b16 %v5991, %v5990
        %v6012 = vpack.c.b16 %v5993, %v5992
        %v6013 = vpack.c.b16 %v5995, %v5994
        %v6014 = vpack.c.b16 %v5997, %v5996
        %v6015 = vpack.c.b16 %v5999, %v5998
        %6016 = vrot.lane.b32.xlu0 %v6000, 96
        %v6017 = vpop.permute.xlu0 %6016
        %6018 = vrot.lane.b32.xlu0 %v6001, 96
        %v6019 = vpop.permute.xlu0 %6018
        %6020 = vrot.lane.b32.xlu0 %v6002, 96
        %v6021 = vpop.permute.xlu0 %6020
        %6022 = vrot.lane.b32.xlu0 %v6003, 96
        %v6023 = vpop.permute.xlu0 %6022
        %6024 = vrot.lane.b32.xlu0 %v6004, 96
        %v6025 = vpop.permute.xlu0 %6024
        %6026 = vrot.lane.b32.xlu0 %v6005, 96
        %v6027 = vpop.permute.xlu0 %6026
        %6028 = vrot.lane.b32.xlu0 %v6006, 96
        %v6029 = vpop.permute.xlu0 %6028
        %6030 = vrot.lane.b32.xlu0 %v6007, 96
        %v6031 = vpop.permute.xlu0 %6030
        %6032 = vrot.lane.b32.xlu0 %v6008, 96
        %v6033 = vpop.permute.xlu0 %6032
        %6034 = vrot.lane.b32.xlu0 %v6009, 96
        %v6035 = vpop.permute.xlu0 %6034
        %6036 = vrot.lane.b32.xlu0 %v6010, 96
        %v6037 = vpop.permute.xlu0 %6036
        %6038 = vrot.lane.b32.xlu0 %v6011, 96
        %v6039 = vpop.permute.xlu0 %6038
        %6040 = vrot.lane.b32.xlu0 %v6012, 96
        %v6041 = vpop.permute.xlu0 %6040
        %6042 = vrot.lane.b32.xlu0 %v6013, 96
        %v6043 = vpop.permute.xlu0 %6042
        %6044 = vrot.lane.b32.xlu0 %v6014, 96
        %v6045 = vpop.permute.xlu0 %6044
        %6046 = vrot.lane.b32.xlu0 %v6015, 96
        %v6047 = vpop.permute.xlu0 %6046
        %v6048 = vunpack.c.l.b16 %v4925
        %v6049 = vunpack.c.l.b16 %v4935
        %v6050 = vunpack.c.l.b16 %v4949
        %v6051 = vunpack.c.l.b16 %v4959
        %v6052 = vunpack.c.l.b16 %v4973
        %v6053 = vunpack.c.l.b16 %v4983
        %v6054 = vunpack.c.l.b16 %v4997
        %v6055 = vunpack.c.l.b16 %v5007
        %v6056 = vunpack.c.l.b16 %v5021
        %v6057 = vunpack.c.l.b16 %v5031
        %v6058 = vunpack.c.l.b16 %v5045
        %v6059 = vunpack.c.l.b16 %v5055
        %v6060 = vunpack.c.l.b16 %v5069
        %v6061 = vunpack.c.l.b16 %v5079
        %v6062 = vunpack.c.l.b16 %v5093
        %v6063 = vunpack.c.l.b16 %v5103
        %v6064 = vunpack.c.l.b16 %v5117
        %v6065 = vunpack.c.l.b16 %v5127
        %v6066 = vunpack.c.l.b16 %v5141
        %v6067 = vunpack.c.l.b16 %v5151
        %v6068 = vunpack.c.l.b16 %v5165
        %v6069 = vunpack.c.l.b16 %v5175
        %v6070 = vunpack.c.l.b16 %v5189
        %v6071 = vunpack.c.l.b16 %v5199
        %v6072 = vunpack.c.l.b16 %v5213
        %v6073 = vunpack.c.l.b16 %v5223
        %v6074 = vunpack.c.l.b16 %v5237
        %v6075 = vunpack.c.l.b16 %v5247
        %v6076 = vunpack.c.l.b16 %v5261
        %v6077 = vunpack.c.l.b16 %v5271
        %v6078 = vunpack.c.l.b16 %v5285
        %v6079 = vunpack.c.l.b16 %v5295
        %v6080 = vpack.c.b16 %v6049, %v6048
        %v6081 = vpack.c.b16 %v6051, %v6050
        %v6082 = vpack.c.b16 %v6053, %v6052
        %v6083 = vpack.c.b16 %v6055, %v6054
        %v6084 = vpack.c.b16 %v6057, %v6056
        %v6085 = vpack.c.b16 %v6059, %v6058
        %v6086 = vpack.c.b16 %v6061, %v6060
        %v6087 = vpack.c.b16 %v6063, %v6062
        %v6088 = vpack.c.b16 %v6065, %v6064
        %v6089 = vpack.c.b16 %v6067, %v6066
        %v6090 = vpack.c.b16 %v6069, %v6068
        %v6091 = vpack.c.b16 %v6071, %v6070
        %v6092 = vpack.c.b16 %v6073, %v6072
        %v6093 = vpack.c.b16 %v6075, %v6074
        %v6094 = vpack.c.b16 %v6077, %v6076
        %v6095 = vpack.c.b16 %v6079, %v6078
        %6096 = vrot.lane.b32.xlu0 %v6080, 112
        %v6097 = vpop.permute.xlu0 %6096
        %6098 = vrot.lane.b32.xlu0 %v6081, 112
        %v6099 = vpop.permute.xlu0 %6098
        %6100 = vrot.lane.b32.xlu0 %v6082, 112
        %v6101 = vpop.permute.xlu0 %6100
        %6102 = vrot.lane.b32.xlu0 %v6083, 112
        %v6103 = vpop.permute.xlu0 %6102
        %6104 = vrot.lane.b32.xlu0 %v6084, 112
        %v6105 = vpop.permute.xlu0 %6104
        %6106 = vrot.lane.b32.xlu0 %v6085, 112
        %v6107 = vpop.permute.xlu0 %6106
        %6108 = vrot.lane.b32.xlu0 %v6086, 112
        %v6109 = vpop.permute.xlu0 %6108
        %6110 = vrot.lane.b32.xlu0 %v6087, 112
        %v6111 = vpop.permute.xlu0 %6110
        %6112 = vrot.lane.b32.xlu0 %v6088, 112
        %v6113 = vpop.permute.xlu0 %6112
        %6114 = vrot.lane.b32.xlu0 %v6089, 112
        %v6115 = vpop.permute.xlu0 %6114
        %6116 = vrot.lane.b32.xlu0 %v6090, 112
        %v6117 = vpop.permute.xlu0 %6116
        %6118 = vrot.lane.b32.xlu0 %v6091, 112
        %v6119 = vpop.permute.xlu0 %6118
        %6120 = vrot.lane.b32.xlu0 %v6092, 112
        %v6121 = vpop.permute.xlu0 %6120
        %6122 = vrot.lane.b32.xlu0 %v6093, 112
        %v6123 = vpop.permute.xlu0 %6122
        %6124 = vrot.lane.b32.xlu0 %v6094, 112
        %v6125 = vpop.permute.xlu0 %6124
        %6126 = vrot.lane.b32.xlu0 %v6095, 112
        %v6127 = vpop.permute.xlu0 %6126
        %v6128 = vunpack.c.l.b16 %v5363
        %v6129 = vunpack.c.l.b16 %v5366
        %v6130 = vunpack.c.l.b16 %v5370
        %v6131 = vunpack.c.l.b16 %v5373
        %v6132 = vunpack.c.l.b16 %v5377
        %v6133 = vunpack.c.l.b16 %v5380
        %v6134 = vunpack.c.l.b16 %v5384
        %v6135 = vunpack.c.l.b16 %v5387
        %v6136 = vunpack.c.l.b16 %v5391
        %v6137 = vunpack.c.l.b16 %v5394
        %v6138 = vunpack.c.l.b16 %v5398
        %v6139 = vunpack.c.l.b16 %v5401
        %v6140 = vunpack.c.l.b16 %v5405
        %v6141 = vunpack.c.l.b16 %v5408
        %v6142 = vunpack.c.l.b16 %v5412
        %v6143 = vunpack.c.l.b16 %v5415
        %v6144 = vunpack.c.l.b16 %v5419
        %v6145 = vunpack.c.l.b16 %v5422
        %v6146 = vunpack.c.l.b16 %v5426
        %v6147 = vunpack.c.l.b16 %v5429
        %v6148 = vunpack.c.l.b16 %v5433
        %v6149 = vunpack.c.l.b16 %v5436
        %v6150 = vunpack.c.l.b16 %v5440
        %v6151 = vunpack.c.l.b16 %v5443
        %v6152 = vunpack.c.l.b16 %v5447
        %v6153 = vunpack.c.l.b16 %v5450
        %v6154 = vunpack.c.l.b16 %v5454
        %v6155 = vunpack.c.l.b16 %v5457
        %v6156 = vunpack.c.l.b16 %v5461
        %v6157 = vunpack.c.l.b16 %v5464
        %v6158 = vunpack.c.l.b16 %v5468
        %v6159 = vunpack.c.l.b16 %v5471
        %v6160 = vpack.c.b16 %v6129, %v6128
        %v6161 = vpack.c.b16 %v6131, %v6130
        %v6162 = vpack.c.b16 %v6133, %v6132
        %v6163 = vpack.c.b16 %v6135, %v6134
        %v6164 = vpack.c.b16 %v6137, %v6136
        %v6165 = vpack.c.b16 %v6139, %v6138
        %v6166 = vpack.c.b16 %v6141, %v6140
        %v6167 = vpack.c.b16 %v6143, %v6142
        %v6168 = vpack.c.b16 %v6145, %v6144
        %v6169 = vpack.c.b16 %v6147, %v6146
        %v6170 = vpack.c.b16 %v6149, %v6148
        %v6171 = vpack.c.b16 %v6151, %v6150
        %v6172 = vpack.c.b16 %v6153, %v6152
        %v6173 = vpack.c.b16 %v6155, %v6154
        %v6174 = vpack.c.b16 %v6157, %v6156
        %v6175 = vpack.c.b16 %v6159, %v6158
        %v6178 = vsel %vm1597, %v5520, %v5585
        %v6181 = vsel %vm1597, %v5521, %v5587
        %v6184 = vsel %vm1597, %v5522, %v5589
        %v6187 = vsel %vm1597, %v5523, %v5591
        %v6190 = vsel %vm1597, %v5524, %v5593
        %v6193 = vsel %vm1597, %v5525, %v5595
        %v6196 = vsel %vm1597, %v5526, %v5597
        %v6199 = vsel %vm1597, %v5527, %v5599
        %v6202 = vsel %vm1597, %v5528, %v5601
        %v6205 = vsel %vm1597, %v5529, %v5603
        %v6208 = vsel %vm1597, %v5530, %v5605
        %v6211 = vsel %vm1597, %v5531, %v5607
        %v6214 = vsel %vm1597, %v5532, %v5609
        %v6217 = vsel %vm1597, %v5533, %v5611
        %v6220 = vsel %vm1597, %v5534, %v5613
        %v6223 = vsel %vm1597, %v5535, %v5615
        %vm6224 = vcmask 261120
        %v6226 = vsel %vm6224, %v6178, %v5665
        %v6228 = vsel %vm6224, %v6181, %v5667
        %v6230 = vsel %vm6224, %v6184, %v5669
        %v6232 = vsel %vm6224, %v6187, %v5671
        %v6234 = vsel %vm6224, %v6190, %v5673
        %v6236 = vsel %vm6224, %v6193, %v5675
        %v6238 = vsel %vm6224, %v6196, %v5677
        %v6240 = vsel %vm6224, %v6199, %v5679
        %v6242 = vsel %vm6224, %v6202, %v5681
        %v6244 = vsel %vm6224, %v6205, %v5683
        %v6246 = vsel %vm6224, %v6208, %v5685
        %v6248 = vsel %vm6224, %v6211, %v5687
        %v6250 = vsel %vm6224, %v6214, %v5689
        %v6252 = vsel %vm6224, %v6217, %v5691
        %v6254 = vsel %vm6224, %v6220, %v5693
        %v6256 = vsel %vm6224, %v6223, %v5695
        %vm6257 = vcmask 392192
        %v6259 = vsel %vm6257, %v6226, %v5761
        %v6261 = vsel %vm6257, %v6228, %v5763
        %v6263 = vsel %vm6257, %v6230, %v5765
        %v6265 = vsel %vm6257, %v6232, %v5767
        %v6267 = vsel %vm6257, %v6234, %v5769
        %v6269 = vsel %vm6257, %v6236, %v5771
        %v6271 = vsel %vm6257, %v6238, %v5773
        %v6273 = vsel %vm6257, %v6240, %v5775
        %v6275 = vsel %vm6257, %v6242, %v5777
        %v6277 = vsel %vm6257, %v6244, %v5779
        %v6279 = vsel %vm6257, %v6246, %v5781
        %v6281 = vsel %vm6257, %v6248, %v5783
        %v6283 = vsel %vm6257, %v6250, %v5785
        %v6285 = vsel %vm6257, %v6252, %v5787
        %v6287 = vsel %vm6257, %v6254, %v5789
        %v6289 = vsel %vm6257, %v6256, %v5791
        %vm6290 = vcmask 523264
        %v6292 = vsel %vm6290, %v6259, %v5841
        %v6294 = vsel %vm6290, %v6261, %v5843
        %v6296 = vsel %vm6290, %v6263, %v5845
        %v6298 = vsel %vm6290, %v6265, %v5847
        %v6300 = vsel %vm6290, %v6267, %v5849
        %v6302 = vsel %vm6290, %v6269, %v5851
        %v6304 = vsel %vm6290, %v6271, %v5853
        %v6306 = vsel %vm6290, %v6273, %v5855
        %v6308 = vsel %vm6290, %v6275, %v5857
        %v6310 = vsel %vm6290, %v6277, %v5859
        %v6312 = vsel %vm6290, %v6279, %v5861
        %v6314 = vsel %vm6290, %v6281, %v5863
        %v6316 = vsel %vm6290, %v6283, %v5865
        %v6318 = vsel %vm6290, %v6285, %v5867
        %v6320 = vsel %vm6290, %v6287, %v5869
        %v6322 = vsel %vm6290, %v6289, %v5871
        %vm6323 = vcmask 654336
        %v6325 = vsel %vm6323, %v6292, %v5921
        %v6327 = vsel %vm6323, %v6294, %v5923
        %v6329 = vsel %vm6323, %v6296, %v5925
        %v6331 = vsel %vm6323, %v6298, %v5927
        %v6333 = vsel %vm6323, %v6300, %v5929
        %v6335 = vsel %vm6323, %v6302, %v5931
        %v6337 = vsel %vm6323, %v6304, %v5933
        %v6339 = vsel %vm6323, %v6306, %v5935
        %v6341 = vsel %vm6323, %v6308, %v5937
        %v6343 = vsel %vm6323, %v6310, %v5939
        %v6345 = vsel %vm6323, %v6312, %v5941
        %v6347 = vsel %vm6323, %v6314, %v5943
        %v6349 = vsel %vm6323, %v6316, %v5945
        %v6351 = vsel %vm6323, %v6318, %v5947
        %v6353 = vsel %vm6323, %v6320, %v5949
        %v6355 = vsel %vm6323, %v6322, %v5951
        %vm6356 = vcmask 785408
        %v6358 = vsel %vm6356, %v6325, %v6017
        %v6360 = vsel %vm6356, %v6327, %v6019
        %v6362 = vsel %vm6356, %v6329, %v6021
        %v6364 = vsel %vm6356, %v6331, %v6023
        %v6366 = vsel %vm6356, %v6333, %v6025
        %v6368 = vsel %vm6356, %v6335, %v6027
        %v6370 = vsel %vm6356, %v6337, %v6029
        %v6372 = vsel %vm6356, %v6339, %v6031
        %v6374 = vsel %vm6356, %v6341, %v6033
        %v6376 = vsel %vm6356, %v6343, %v6035
        %v6378 = vsel %vm6356, %v6345, %v6037
        %v6380 = vsel %vm6356, %v6347, %v6039
        %v6382 = vsel %vm6356, %v6349, %v6041
        %v6384 = vsel %vm6356, %v6351, %v6043
        %v6386 = vsel %vm6356, %v6353, %v6045
        %v6388 = vsel %vm6356, %v6355, %v6047
        %vm6389 = vcmask 916480
        %v6391 = vsel %vm6389, %v6358, %v6097
        %v6394 = vsel %vm6389, %v6360, %v6099
        %v6397 = vsel %vm6389, %v6362, %v6101
        %v6400 = vsel %vm6389, %v6364, %v6103
        %v6403 = vsel %vm6389, %v6366, %v6105
        %v6406 = vsel %vm6389, %v6368, %v6107
        %v6409 = vsel %vm6389, %v6370, %v6109
        %v6412 = vsel %vm6389, %v6372, %v6111
        %v6415 = vsel %vm6389, %v6374, %v6113
        %v6418 = vsel %vm6389, %v6376, %v6115
        %v6421 = vsel %vm6389, %v6378, %v6117
        %v6424 = vsel %vm6389, %v6380, %v6119
        %v6427 = vsel %vm6389, %v6382, %v6121
        %v6430 = vsel %vm6389, %v6384, %v6123
        %v6433 = vsel %vm6389, %v6386, %v6125
        %v6436 = vsel %vm6389, %v6388, %v6127
        %v6438 = vld [vmem:[%s9] sm:$0xf]
        %v6439 = vld [vmem:[%s9 + $0x4] sm:$0xf]
        %v6440 = vld [vmem:[%s9 + $0x8] sm:$0xf]
        %v6441 = vld [vmem:[%s9 + $0xc] sm:$0xf]
        %v6442 = vld [vmem:[%s9 + $0x10] sm:$0xf]
        %v6443 = vld [vmem:[%s9 + $0x14] sm:$0xf]
        %v6444 = vld [vmem:[%s9 + $0x18] sm:$0xf]
        %v6445 = vld [vmem:[%s9 + $0x1c] sm:$0xf]
        %v6446 = vld [vmem:[%s9 + $0x20] sm:$0xf]
        %v6447 = vld [vmem:[%s9 + $0x24] sm:$0xf]
        %v6448 = vld [vmem:[%s9 + $0x28] sm:$0xf]
        %v6449 = vld [vmem:[%s9 + $0x2c] sm:$0xf]
        %v6450 = vld [vmem:[%s9 + $0x30] sm:$0xf]
        %v6451 = vld [vmem:[%s9 + $0x34] sm:$0xf]
        %v6452 = vld [vmem:[%s9 + $0x38] sm:$0xf]
        %v6453 = vld [vmem:[%s9 + $0x3c] sm:$0xf]
        %v6454 = vld [vmem:[%s9 + $0x40] sm:$0xf]
        %v6455 = vld [vmem:[%s9 + $0x44] sm:$0xf]
        %v6474 = vunpack.c.l.b16 %v6438
        %v6475 = vunpack.c.l.b16 %v6439
        %v6476 = vunpack.c.l.b16 %v6440
        %v6477 = vunpack.c.l.b16 %v6441
        %v6478 = vunpack.c.l.b16 %v6442
        %v6479 = vunpack.c.l.b16 %v6443
        %v6480 = vunpack.c.l.b16 %v6444
        %v6481 = vunpack.c.l.b16 %v6445
        %v6482 = vunpack.c.l.b16 %v6446
        %v6483 = vunpack.c.l.b16 %v6447
        %v6484 = vunpack.c.l.b16 %v6448
        %v6485 = vunpack.c.l.b16 %v6449
        %v6486 = vunpack.c.l.b16 %v6450
        %v6487 = vunpack.c.l.b16 %v6451
        %v6488 = vunpack.c.l.b16 %v6452
        %v6489 = vunpack.c.l.b16 %v6453
        %v6490 = vunpack.c.l.b16 %v6454
        %v6491 = vunpack.c.l.b16 %v6455
        %v6492 = vpack.c.b16 %v6475, %v6474
        %v6493 = vpack.c.b16 %v6477, %v6476
        %v6494 = vpack.c.b16 %v6479, %v6478
        %v6495 = vpack.c.b16 %v6481, %v6480
        %v6496 = vpack.c.b16 %v6483, %v6482
        %v6497 = vpack.c.b16 %v6485, %v6484
        %v6498 = vpack.c.b16 %v6487, %v6486
        %v6499 = vpack.c.b16 %v6489, %v6488
        %v6500 = vpack.c.b16 %v6491, %v6490
        %v6511 = vsel %vm1597, %v6160, 0
        %v6514 = vsel %vm1597, %v6161, 0
        %v6517 = vsel %vm1597, %v6162, 0
        %v6520 = vsel %vm1597, %v6163, 0
        %v6523 = vsel %vm1597, %v6164, 0
        %v6526 = vsel %vm1597, %v6165, 0
        %v6529 = vsel %vm1597, %v6166, 0
        %v6532 = vsel %vm1597, %v6167, 0
        %v6535 = vsel %vm1597, %v6168, 0
        %v6538 = vsel %vm1597, %v6169, 0
        %v6541 = vsel %vm1597, %v6170, 0
        %v6544 = vsel %vm1597, %v6171, 0
        %v6547 = vsel %vm1597, %v6172, 0
        %v6550 = vsel %vm1597, %v6173, 0
        %v6553 = vsel %vm1597, %v6174, 0
        %v6556 = vsel %vm1597, %v6175, 0
        %6558 = vmatprep.subr.bf16.mxu0 0
        %6559 = vmatpush1.bf16.msra.mxu0 %v6499
        %6560 = vmatprep.subr.bf16.mxu0 0
        %6561 = vmatpush1.bf16.msra.mxu0 %v6498
        %6562 = vmatprep.subr.bf16.mxu0 0
        %6563 = vmatpush1.bf16.msra.mxu0 %v6497
        %6564 = vmatprep.subr.bf16.mxu0 0
        %6565 = vmatpush1.bf16.msra.mxu0 %v6496
        %6566 = vmatprep.subr.bf16.mxu0 0
        %6567 = vmatpush1.bf16.msra.mxu0 %v6495
        %6568 = vmatprep.subr.bf16.mxu0 0
        %6569 = vmatpush1.bf16.msra.mxu0 %v6494
        %6570 = vmatprep.subr.bf16.mxu0 0
        %6571 = vmatpush1.bf16.msra.mxu0 %v6493
        %6572 = vmatprep.subr.bf16.mxu0 0
        %6573 = vmatpush1.bf16.msra.mxu0 %v6492
        %6574 = vmatprep.subr.bf16.mxu0 0
        %6575 = vmatpush2.bf16.msra.mxu0 0
        %6576 = vmatprep.subr.bf16.mxu0 0
        %6577 = vmatpush2.bf16.msra.mxu0 0
        %6578 = vmatprep.subr.bf16.mxu0 0
        %6579 = vmatpush2.bf16.msra.mxu0 0
        %6580 = vmatprep.subr.bf16.mxu0 0
        %6581 = vmatpush2.bf16.msra.mxu0 0
        %6582 = vmatprep.subr.bf16.mxu0 0
        %6583 = vmatpush2.bf16.msra.mxu0 0
        %6584 = vmatprep.subr.bf16.mxu0 0
        %6585 = vmatpush2.bf16.msra.mxu0 0
        %6586 = vmatprep.subr.bf16.mxu0 0
        %6587 = vmatpush2.bf16.msra.mxu0 0
        %6588 = vmatprep.subr.bf16.mxu0 0
        %6589 = vmatpush2.bf16.msra.mxu0 %v6500
        %6590 = vmatprep.mubr.bf16.mxu0 %v6511
        %6591 = vmatmul.mubr.bf16.gmra.mxu0 %v6391
        %v6592 = vpop.f32.mrf.mxu0
        %v6593 = vadd.f32 0.0, %v6592
        %v6594 = vpop.f32.mrf.mxu0
        %v6595 = vpop.f32.mrf.mxu0
        %v6596 = vadd.f32 0.0, %v6595
        %v6597 = vpop.f32.mrf.mxu0
        %6598 = vmatprep.mubr.bf16.mxu0 %v6514
        %6599 = vmatmul.mubr.bf16.gmra.mxu0 %v6394
        %v6600 = vpop.f32.mrf.mxu0
        %v6601 = vadd.f32 0.0, %v6600
        %v6602 = vpop.f32.mrf.mxu0
        %v6603 = vpop.f32.mrf.mxu0
        %v6604 = vadd.f32 0.0, %v6603
        %v6605 = vpop.f32.mrf.mxu0
        %6606 = vmatprep.mubr.bf16.mxu0 %v6517
        %6607 = vmatmul.mubr.bf16.gmra.mxu0 %v6397
        %v6608 = vpop.f32.mrf.mxu0
        %v6609 = vadd.f32 0.0, %v6608
        %v6610 = vpop.f32.mrf.mxu0
        %v6611 = vpop.f32.mrf.mxu0
        %v6612 = vadd.f32 0.0, %v6611
        %v6613 = vpop.f32.mrf.mxu0
        %6614 = vmatprep.mubr.bf16.mxu0 %v6520
        %6615 = vmatmul.mubr.bf16.gmra.mxu0 %v6400
        %v6616 = vpop.f32.mrf.mxu0
        %v6617 = vadd.f32 0.0, %v6616
        %v6618 = vpop.f32.mrf.mxu0
        %v6619 = vpop.f32.mrf.mxu0
        %v6620 = vadd.f32 0.0, %v6619
        %v6621 = vpop.f32.mrf.mxu0
        %6622 = vmatprep.mubr.bf16.mxu0 %v6523
        %6623 = vmatmul.mubr.bf16.gmra.mxu0 %v6403
        %v6624 = vpop.f32.mrf.mxu0
        %v6625 = vadd.f32 0.0, %v6624
        %v6626 = vpop.f32.mrf.mxu0
        %v6627 = vpop.f32.mrf.mxu0
        %v6628 = vadd.f32 0.0, %v6627
        %v6629 = vpop.f32.mrf.mxu0
        %6630 = vmatprep.mubr.bf16.mxu0 %v6526
        %6631 = vmatmul.mubr.bf16.gmra.mxu0 %v6406
        %v6632 = vpop.f32.mrf.mxu0
        %v6633 = vadd.f32 0.0, %v6632
        %v6634 = vpop.f32.mrf.mxu0
        %v6635 = vpop.f32.mrf.mxu0
        %v6636 = vadd.f32 0.0, %v6635
        %v6637 = vpop.f32.mrf.mxu0
        %6638 = vmatprep.mubr.bf16.mxu0 %v6529
        %6639 = vmatmul.mubr.bf16.gmra.mxu0 %v6409
        %v6640 = vpop.f32.mrf.mxu0
        %v6641 = vadd.f32 0.0, %v6640
        %v6642 = vpop.f32.mrf.mxu0
        %v6643 = vpop.f32.mrf.mxu0
        %v6644 = vadd.f32 0.0, %v6643
        %v6645 = vpop.f32.mrf.mxu0
        %6646 = vmatprep.mubr.bf16.mxu0 %v6532
        %6647 = vmatmul.mubr.bf16.gmra.mxu0 %v6412
        %v6648 = vpop.f32.mrf.mxu0
        %v6649 = vadd.f32 0.0, %v6648
        %v6650 = vpop.f32.mrf.mxu0
        %v6651 = vpop.f32.mrf.mxu0
        %v6652 = vadd.f32 0.0, %v6651
        %v6653 = vpop.f32.mrf.mxu0
        %6654 = vmatprep.mubr.bf16.mxu0 %v6535
        %6655 = vmatmul.mubr.bf16.gmra.mxu0 %v6415
        %v6656 = vpop.f32.mrf.mxu0
        %v6657 = vadd.f32 0.0, %v6656
        %v6658 = vpop.f32.mrf.mxu0
        %v6659 = vpop.f32.mrf.mxu0
        %v6660 = vadd.f32 0.0, %v6659
        %v6661 = vpop.f32.mrf.mxu0
        %6662 = vmatprep.mubr.bf16.mxu0 %v6538
        %6663 = vmatmul.mubr.bf16.gmra.mxu0 %v6418
        %v6664 = vpop.f32.mrf.mxu0
        %v6665 = vadd.f32 0.0, %v6664
        %v6666 = vpop.f32.mrf.mxu0
        %v6667 = vpop.f32.mrf.mxu0
        %v6668 = vadd.f32 0.0, %v6667
        %v6669 = vpop.f32.mrf.mxu0
        %6670 = vmatprep.mubr.bf16.mxu0 %v6541
        %6671 = vmatmul.mubr.bf16.gmra.mxu0 %v6421
        %v6672 = vpop.f32.mrf.mxu0
        %v6673 = vadd.f32 0.0, %v6672
        %v6674 = vpop.f32.mrf.mxu0
        %v6675 = vpop.f32.mrf.mxu0
        %v6676 = vadd.f32 0.0, %v6675
        %v6677 = vpop.f32.mrf.mxu0
        %6678 = vmatprep.mubr.bf16.mxu0 %v6544
        %6679 = vmatmul.mubr.bf16.gmra.mxu0 %v6424
        %v6680 = vpop.f32.mrf.mxu0
        %v6681 = vadd.f32 0.0, %v6680
        %v6682 = vpop.f32.mrf.mxu0
        %v6683 = vpop.f32.mrf.mxu0
        %v6684 = vadd.f32 0.0, %v6683
        %v6685 = vpop.f32.mrf.mxu0
        %6686 = vmatprep.mubr.bf16.mxu0 %v6547
        %6687 = vmatmul.mubr.bf16.gmra.mxu0 %v6427
        %v6688 = vpop.f32.mrf.mxu0
        %v6689 = vadd.f32 0.0, %v6688
        %v6690 = vpop.f32.mrf.mxu0
        %v6691 = vpop.f32.mrf.mxu0
        %v6692 = vadd.f32 0.0, %v6691
        %v6693 = vpop.f32.mrf.mxu0
        %6694 = vmatprep.mubr.bf16.mxu0 %v6550
        %6695 = vmatmul.mubr.bf16.gmra.mxu0 %v6430
        %v6696 = vpop.f32.mrf.mxu0
        %v6697 = vadd.f32 0.0, %v6696
        %v6698 = vpop.f32.mrf.mxu0
        %v6699 = vpop.f32.mrf.mxu0
        %v6700 = vadd.f32 0.0, %v6699
        %v6701 = vpop.f32.mrf.mxu0
        %6702 = vmatprep.mubr.bf16.mxu0 %v6553
        %6703 = vmatmul.mubr.bf16.gmra.mxu0 %v6433
        %v6704 = vpop.f32.mrf.mxu0
        %v6705 = vadd.f32 0.0, %v6704
        %v6706 = vpop.f32.mrf.mxu0
        %v6707 = vpop.f32.mrf.mxu0
        %v6708 = vadd.f32 0.0, %v6707
        %v6709 = vpop.f32.mrf.mxu0
        %6710 = vmatprep.mubr.bf16.mxu0 %v6556
        %6711 = vmatmul.mubr.bf16.gmra.mxu0 %v6436
        %v6712 = vpop.f32.mrf.mxu0
        %v6713 = vadd.f32 0.0, %v6712
        %v6714 = vpop.f32.mrf.mxu0
        %v6715 = vpop.f32.mrf.mxu0
        %v6716 = vadd.f32 0.0, %v6715
        %v6717 = vpop.f32.mrf.mxu0
        %6718 = vdwg.mxu0
        %6719 = vst [vmem:[%s352] sm:$0xff] %v6593
        %6720 = vst [vmem:[%s352 + $0x8] sm:$0xff] %v6596
        %6721 = vst [vmem:[%s352 + $0x10] sm:$0xff] %v6601
        %6722 = vst [vmem:[%s352 + $0x18] sm:$0xff] %v6604
        %6723 = vst [vmem:[%s352 + $0x20] sm:$0xff] %v6609
        %6724 = vst [vmem:[%s352 + $0x28] sm:$0xff] %v6612
        %6725 = vst [vmem:[%s352 + $0x30] sm:$0xff] %v6617
        %6726 = vst [vmem:[%s352 + $0x38] sm:$0xff] %v6620
        %6727 = vst [vmem:[%s352 + $0x40] sm:$0xff] %v6625
        %6728 = vst [vmem:[%s352 + $0x48] sm:$0xff] %v6628
        %6729 = vst [vmem:[%s352 + $0x50] sm:$0xff] %v6633
        %6730 = vst [vmem:[%s352 + $0x58] sm:$0xff] %v6636
        %6731 = vst [vmem:[%s352 + $0x60] sm:$0xff] %v6641
        %6732 = vst [vmem:[%s352 + $0x68] sm:$0xff] %v6644
        %6733 = vst [vmem:[%s352 + $0x70] sm:$0xff] %v6649
        %6734 = vst [vmem:[%s352 + $0x78] sm:$0xff] %v6652
        %6735 = vst [vmem:[%s352 + $0x80] sm:$0xff] %v6657
        %6736 = vst [vmem:[%s352 + $0x88] sm:$0xff] %v6660
        %6737 = vst [vmem:[%s352 + $0x90] sm:$0xff] %v6665
        %6738 = vst [vmem:[%s352 + $0x98] sm:$0xff] %v6668
        %6739 = vst [vmem:[%s352 + $0xa0] sm:$0xff] %v6673
        %6740 = vst [vmem:[%s352 + $0xa8] sm:$0xff] %v6676
        %6741 = vst [vmem:[%s352 + $0xb0] sm:$0xff] %v6681
        %6742 = vst [vmem:[%s352 + $0xb8] sm:$0xff] %v6684
        %6743 = vst [vmem:[%s352 + $0xc0] sm:$0xff] %v6689
        %6744 = vst [vmem:[%s352 + $0xc8] sm:$0xff] %v6692
        %6745 = vst [vmem:[%s352 + $0xd0] sm:$0xff] %v6697
        %6746 = vst [vmem:[%s352 + $0xd8] sm:$0xff] %v6700
        %6747 = vst [vmem:[%s352 + $0xe0] sm:$0xff] %v6705
        %6748 = vst [vmem:[%s352 + $0xe8] sm:$0xff] %v6708
        %6749 = vst [vmem:[%s352 + $0xf0] sm:$0xff] %v6713
        %6750 = vst [vmem:[%s352 + $0xf8] sm:$0xff] %v6716
        %s6751 = sand.u32 %s247, 1
        %s6752 = scalar_lea.sflag [#allocation5], %s6751
        %s6753 = sand.u32 %s247, 1
        %s6754 = smul.addr %s6753, 256
        %s6755 = scalar_lea.vmem [#allocation4], %s6754
        // Predicated region
        $region61: #{tpu_custom_call.1} parent=59 // pred_check
          %p6756 = pneg %p257
        $region62: #{tpu_custom_call.1} parent=59 // pred_check_branch
          %6758 = sbr.rel (%p6756) target = $region64
        $region63: #{tpu_custom_call.1} parent=59 // pred_region
          %s6760 = ssub.s32 4096, 4096
          %6761 = vsyncadd %s6752, %s6760
          %s6762 = smul.addr %s24, 32
          %s6763 = smul.addr %s6762, 128
          %s6764 = scalar_lea.hbm %s10, %s6763
          %s6765 = sshll.u32 %s6755, 4
          %s6766 = int_to_ptr.vmem [resolvable:$true] %s6765
          %6771 = dma.vmem_to_hbm [thread:$0]  %s6766, 4096, %s6764, %s6752, 128, 128, 8
        $region64: #{tpu_custom_call.1} parent=59 // pred_fallthru
          _
      $region60: #{tpu_custom_call.1} parent=5 // pred_fallthru
        _
      %p6772 = scmp.le.s32.totalorder 2, %s19
      // Predicated region
      $region65: #{tpu_custom_call.1} parent=5 // pred_check
        %p6773 = pneg %p6772
      $region66: #{tpu_custom_call.1} parent=5 // pred_check_branch
        %6775 = sbr.rel (%p6773) target = $region68
      $region67: #{tpu_custom_call.1} parent=5 // pred_region
        %s6776 = ssub.s32 %s19, 2
        // Predicated region
        $region69: #{tpu_custom_call.1} parent=67 // pred_check
          %p6777 = pneg %p263
        $region70: #{tpu_custom_call.1} parent=67 // pred_check_branch
          %6779 = sbr.rel (%p6777) target = $region72
        $region71: #{tpu_custom_call.1} parent=67 // pred_region
          %s6780 = sand.u32 %s248, 1
          %s6781 = scalar_lea.sflag [#allocation5], %s6780
          %s6782 = sand.u32 %s248, 1
          %s6783 = smul.addr %s6782, 256
          %s6784 = scalar_lea.vmem [#allocation4], %s6783
          %6785 = dma.done %s6781, 4096
        $region72: #{tpu_custom_call.1} parent=67 // pred_fallthru
          _
      $region68: #{tpu_custom_call.1} parent=5 // pred_fallthru
        _
    $region6: #{tpu_custom_call.1} parent=1 // loop_footer
      %s23 = sadd.s32 1, %s19
    $region7: #{tpu_custom_call.1} parent=1 // loop_footer_branch
      %18 = sbr.rel target = $region3
    $region8: #{tpu_custom_call.1} parent=1 // loop_exit
      _
    %6786 = vsyncpa [#allocation5], 1
    %s6787 = scalar_lea.sflag [#allocation5], 1
    %6788 = vsyncpa %s6787, 1

</llo_original>
